<compile_context>
chip_gen: v6e
topology: v6e:2x2x1
jax: 0.10.0
libtpu: 0.0.40
codegen_flags: <defaults>
</compile_context>

<pallas_src>
import math

import jax
import jax.numpy as jnp
from jax.experimental import pallas as pl
from jax.experimental.pallas import tpu as pltpu

SLOPE = 0.01  # nn.LeakyReLU default negative_slope


def _round_up(x, m):
    return (x + m - 1) // m * m


# ----------------------------------------------------------------------------
# Pallas conv kernel
#   out[r, :] = epilogue( bias + sum_t  x[p_t, r + off_t, :] @ W_t )
# where r runs over the row-flattened (phase-split) spatial grid and
# (p_t, off_t) are compile-time constants per kernel-tap.
# ----------------------------------------------------------------------------
def _make_conv_kernel(taps, act, slope, has_gdn, gdn_inverse):
    def kernel(*refs):
        if has_gdn:
            x0_ref, x1_ref, w_ref, b_ref, g_ref, gb_ref, o_ref, xbuf = refs
        else:
            x0_ref, x1_ref, w_ref, b_ref, o_ref, xbuf = refs

        tr = o_ref.shape[0]
        cout = o_ref.shape[-1]

        # Stage the current row block + the small halo block contiguously in a
        # VMEM scratch so every tap window is a plain static slice.
        xbuf[:, :tr, :] = x0_ref[...]
        xbuf[:, tr:, :] = x1_ref[...]

        # Accumulator initialized with the (broadcast) bias -> no epilogue add.
        acc = jnp.broadcast_to(b_ref[...], (tr, cout)).astype(jnp.float32)
        for t, (p, off) in enumerate(taps):
            win = xbuf[p, off:off + tr, :]                       # (tr, Cin) bf16
            acc = acc + jnp.dot(win, w_ref[t],
                                preferred_element_type=jnp.float32)

        out = acc
        if act == "leaky_relu":
            out = jnp.where(out >= 0.0, out, slope * out)
        if has_gdn:
            sq = (out * out).astype(jnp.bfloat16)
            norm = jnp.dot(sq, g_ref[...],
                           preferred_element_type=jnp.float32) + gb_ref[...]
            out = out * (jnp.sqrt(norm) if gdn_inverse else jax.lax.rsqrt(norm))
        o_ref[...] = out.astype(o_ref.dtype)

    return kernel


def conv2d(x, w, b, *, stride=1, padding=0, act="none", gdn=None,
           gdn_inverse=False, out_dtype=jnp.bfloat16, tile_rows=512):
    """2-D convolution on the MXU with fused bias + LeakyReLU / GDN epilogue.

    x: (B, H, W, Cin) any float dtype; w: (Kh, Kw, Cin, Cout); b: (Cout,).
    padding: int (symmetric) or (top, bottom, left, right).
    gdn: optional {"gamma": (Cout, Cout), "beta": (Cout,)} fused after the conv.
    """
    B, H, W, Cin = x.shape
    Kh, Kw = int(w.shape[0]), int(w.shape[1])
    Cout = int(w.shape[3])
    s = int(stride)
    if isinstance(padding, int):
        pt = pb = pleft = pright = padding
    else:
        pt, pb, pleft, pright = padding

    Hp, Wp = H + pt + pb, W + pleft + pright
    Ho, Wo = (Hp - Kh) // s + 1, (Wp - Kw) // s + 1
    Hq, Wq = -(-Hp // s), -(-Wp // s)

    # --- pad + (for stride > 1) split into s*s phases, flatten spatial --------
    xb = x.astype(jnp.bfloat16)
    xp = jnp.pad(xb, ((0, 0), (pt, pb + Hq * s - Hp),
                      (pleft, pright + Wq * s - Wp), (0, 0)))
    if s == 1:
        xflat = xp.reshape(1, B * Hq * Wq, Cin)
    else:
        xflat = xp.reshape(B, Hq, s, Wq, s, Cin)
        xflat = jnp.transpose(xflat, (2, 4, 0, 1, 3, 5))
        xflat = xflat.reshape(s * s, B * Hq * Wq, Cin)
    s2 = int(xflat.shape[0])

    # tap -> (phase index, flattened row offset); all compile-time constants.
    taps = tuple(((kh % s) * s + (kw % s), (kh // s) * Wq + (kw // s))
                 for kh in range(Kh) for kw in range(Kw))
    off_max = max(off for _, off in taps)

    rows = B * Hq * Wq
    halo = max(8, _round_up(off_max, 8))              # rows of halo per tile
    tr = min(tile_rows, _round_up(rows, 8))
    tr = _round_up(max(tr, halo), halo)               # tile is a multiple of halo
    rat = tr // halo
    n_tiles = -(-rows // tr)
    rows_out = n_tiles * tr
    rows_in = rows_out + halo
    xflat = jnp.pad(xflat, ((0, 0), (0, rows_in - rows), (0, 0)))

    wt = w.reshape(Kh * Kw, Cin, Cout).astype(jnp.bfloat16)
    bt = b.reshape(1, Cout).astype(jnp.float32)

    inputs = [xflat, xflat, wt, bt]
    in_specs = [
        pl.BlockSpec((s2, tr, Cin), lambda i: (0, i, 0)),             # current
        pl.BlockSpec((s2, halo, Cin), lambda i: (0, (i + 1) * rat, 0)),  # halo
        pl.BlockSpec((Kh * Kw, Cin, Cout), lambda i: (0, 0, 0)),      # resident W
        pl.BlockSpec((1, Cout), lambda i: (0, 0)),                    # resident b
    ]
    has_gdn = gdn is not None
    if has_gdn:
        # norm_i = sum_j gamma[i, j] * x_j^2  ->  x^2 @ gamma.T
        inputs += [gdn["gamma"].T.astype(jnp.bfloat16),
                   gdn["beta"].reshape(1, Cout).astype(jnp.float32)]
        in_specs += [pl.BlockSpec((Cout, Cout), lambda i: (0, 0)),
                     pl.BlockSpec((1, Cout), lambda i: (0, 0))]

    kernel = _make_conv_kernel(taps, act, SLOPE, has_gdn, gdn_inverse)
    out = pl.pallas_call(
        kernel,
        out_shape=jax.ShapeDtypeStruct((rows_out, Cout), out_dtype),
        grid_spec=pltpu.PrefetchScalarGridSpec(
            num_scalar_prefetch=0,
            grid=(n_tiles,),
            in_specs=in_specs,
            out_specs=pl.BlockSpec((tr, Cout), lambda i: (i, 0)),
            scratch_shapes=[pltpu.VMEM((s2, tr + halo, Cin), jnp.bfloat16)],
        ),
        compiler_params=pltpu.CompilerParams(
            dimension_semantics=("parallel",),
            vmem_limit_bytes=32 * 1024 * 1024),
    )(*inputs)

    out = out[:rows].reshape(B, Hq, Wq, Cout)[:, :Ho, :Wo, :]
    return out


# ----------------------------------------------------------------------------
# Transposed convolution via sub-pixel (output-phase) decomposition
# ----------------------------------------------------------------------------
def _deconv_phase(q, p, s, K):
    """Tap k-indices + (lo, hi) padding for output phase q of a stride-s
    ConvTranspose (weight index convention: out[o] += x[i] * w[k], o+p = i*s+k).
    """
    r = (q + p) % s
    ks = [k for k in range(K) if k % s == r][::-1]    # descending k <-> increasing input offset
    d_hi = (q + p - r) // s                           # largest input offset
    d_lo = d_hi - (len(ks) - 1)
    assert ks and d_lo <= 0, "unsupported transposed-conv geometry"
    return ks, -d_lo, max(0, d_hi)


def deconv2d(x, w, b, *, stride=2, padding=2, output_padding=1, act="none",
             gdn=None, gdn_inverse=False, out_dtype=jnp.bfloat16):
    """ConvTranspose2d.  w layout (K, K, Cin, Cout) == torch (Cin, Cout, K, K)
    permuted (NOT spatially flipped)."""
    B, Hi, Wi, Cin = x.shape
    K = int(w.shape[0])
    s, p, op = int(stride), int(padding), int(output_padding)
    Hout = (Hi - 1) * s - 2 * p + K + op
    Wout = (Wi - 1) * s - 2 * p + K + op

    if s == 1 or op != s - 1 or Hout != s * Hi or Wout != s * Wi:
        # Fallback: zero-dilate the input + stride-1 conv with the flipped
        # kernel (exact ConvTranspose2d semantics, but with zero-MACs).
        xd = jax.lax.pad(x.astype(jnp.bfloat16), jnp.zeros((), jnp.bfloat16),
                         ((0, 0, 0), (0, 0, s - 1), (0, 0, s - 1), (0, 0, 0)))
        lo, hi = K - 1 - p, K - 1 - p + op
        return conv2d(xd, w[::-1, ::-1], b, stride=1, padding=(lo, hi, lo, hi),
                      act=act, gdn=gdn, gdn_inverse=gdn_inverse,
                      out_dtype=out_dtype)

    # Sub-pixel decomposition: every one of the s*s output phases is a small
    # stride-1 conv on the original (non-dilated) input, so all
    # multiply-by-zero taps of the dilated formulation are skipped.
    phase_rows = []
    for qh in range(s):
        khs, pt_, pb_ = _deconv_phase(qh, p, s, K)
        cols = []
        for qw in range(s):
            kws, pl_, pr_ = _deconv_phase(qw, p, s, K)
            subw = w[jnp.asarray(khs)][:, jnp.asarray(kws)]   # (Th, Tw, Cin, Cout)
            o = conv2d(x, subw, b, stride=1, padding=(pt_, pb_, pl_, pr_),
                       act=act, gdn=gdn, gdn_inverse=gdn_inverse,
                       out_dtype=out_dtype)
            cols.append(o[:, :Hi, :Wi, :])
        phase_rows.append(jnp.stack(cols, axis=3))    # (B, Hi, Wi, s, Cout)
    y = jnp.stack(phase_rows, axis=2)                 # (B, Hi, s, Wi, s, Cout)
    Cout = y.shape[-1]
    return y.reshape(B, s * Hi, s * Wi, Cout)


# ----------------------------------------------------------------------------
# Network pieces (every conv / deconv phase below is one fused Pallas kernel)
# ----------------------------------------------------------------------------
def g_a_apply(p, x):
    c, g = p["convs"], p["gdns"]
    x = conv2d(x, c[0]["w"], c[0]["b"], stride=2, padding=2, gdn=g[0])
    x = conv2d(x, c[1]["w"], c[1]["b"], stride=2, padding=2, gdn=g[1])
    x = conv2d(x, c[2]["w"], c[2]["b"], stride=2, padding=2, gdn=g[2])
    x = conv2d(x, c[3]["w"], c[3]["b"], stride=2, padding=2,
               out_dtype=jnp.float32)
    return x


def g_s_apply(p, y_hat):
    c, g = p["convs"], p["gdns"]
    x = deconv2d(y_hat, c[0]["w"], c[0]["b"], gdn=g[0], gdn_inverse=True)
    x = deconv2d(x, c[1]["w"], c[1]["b"], gdn=g[1], gdn_inverse=True)
    x = deconv2d(x, c[2]["w"], c[2]["b"], gdn=g[2], gdn_inverse=True)
    x = deconv2d(x, c[3]["w"], c[3]["b"], out_dtype=jnp.float32)
    return x


def h_a_apply(p, y):
    x = conv2d(y, p[0]["w"], p[0]["b"], stride=1, padding=1, act="leaky_relu")
    x = conv2d(x, p[1]["w"], p[1]["b"], stride=2, padding=2, act="leaky_relu")
    x = conv2d(x, p[2]["w"], p[2]["b"], stride=2, padding=2,
               out_dtype=jnp.float32)
    return x


def h_s_apply(p, z_hat):
    x = deconv2d(z_hat, p[0]["w"], p[0]["b"], act="leaky_relu")
    x = deconv2d(x, p[1]["w"], p[1]["b"], act="leaky_relu")
    x = conv2d(x, p[2]["w"], p[2]["b"], stride=1, padding=1)
    return x


def entropy_parameters_apply(p, x):
    x = conv2d(x, p[0]["w"], p[0]["b"], stride=1, padding=0, act="leaky_relu")
    x = conv2d(x, p[1]["w"], p[1]["b"], stride=1, padding=0, act="leaky_relu")
    x = conv2d(x, p[2]["w"], p[2]["b"], stride=1, padding=0,
               out_dtype=jnp.float32)
    return x


def context_prediction_apply(p, y_hat):
    # MaskedConv2d type 'A': the constant mask is folded into the weights once
    # at parameter-construction time.
    return conv2d(y_hat, p["w"], p["b"], stride=1, padding=2)


# ----------------------------------------------------------------------------
# Entropy models (tiny per-channel / elementwise math -> plain JAX glue)
# ----------------------------------------------------------------------------
def _logits_cumulative(eb, x, n_filters):
    logits = x                                           # (C, 1, L)
    for i in range(n_filters + 1):
        m = jax.nn.softplus(eb["matrices"][i])           # (C, f_{i+1}, f_i)
        logits = jnp.einsum("cij,cjl->cil", m, logits) + eb["biases"][i]
        if i < n_filters:
            logits = logits + jnp.tanh(eb["factors"][i]) * jnp.tanh(logits)
    return logits


def entropy_bottleneck_forward(eb, z):
    """z: NHWC float32.  Returns (z_hat, z_likelihoods), eval-mode."""
    B, H, W, C = z.shape
    medians = eb["quantiles"][:, 0, 1]                   # (C,)
    z_hat = jnp.round(z - medians) + medians
    n_filters = len(eb["factors"])
    v = jnp.moveaxis(z_hat, -1, 0).reshape(C, 1, -1)
    lower = _logits_cumulative(eb, v - 0.5, n_filters)
    upper = _logits_cumulative(eb, v + 0.5, n_filters)
    sign = -jnp.sign(lower + upper)
    lik = jnp.abs(jax.nn.sigmoid(sign * upper) - jax.nn.sigmoid(sign * lower))
    lik = jnp.maximum(lik, 1e-9)                         # likelihood lower bound
    lik = jnp.moveaxis(lik.reshape(C, B, H, W), 0, -1)
    return z_hat, lik


def gaussian_conditional_likelihood(y, scales, means):
    """Eval-mode GaussianConditional likelihood (scale_bound = 0.11)."""
    values = jnp.round(y - means)            # quantize('dequantize', means) - means
    s = jnp.maximum(scales, 0.11)
    v = jnp.abs(values)
    inv_sqrt2 = 1.0 / jnp.sqrt(2.0)
    upper = 0.5 * jax.scipy.special.erfc(-(0.5 - v) / s * inv_sqrt2)
    lower = 0.5 * jax.scipy.special.erfc(-(-0.5 - v) / s * inv_sqrt2)
    return jnp.maximum(upper - lower, 1e-9)


# ----------------------------------------------------------------------------
# Full model forward (eval mode)
# ----------------------------------------------------------------------------
def joint_autoregressive_forward(P, x_nchw, M):
    x = jnp.transpose(x_nchw, (0, 2, 3, 1))              # NCHW -> NHWC
    y = g_a_apply(P["g_a"], x)                           # f32 (B, H/16, W/16, M)
    z = h_a_apply(P["h_a"], y)                           # f32 (B, H/64, W/64, N)
    z_hat, z_lik = entropy_bottleneck_forward(P["entropy_bottleneck"], z)
    params = h_s_apply(P["h_s"], z_hat)                  # bf16 (B, H/16, W/16, 2M)
    y_hat = jnp.round(y)                                 # quantize('dequantize')
    ctx = context_prediction_apply(P["context_prediction"], y_hat)
    gp = entropy_parameters_apply(
        P["entropy_parameters"], jnp.concatenate([params, ctx], axis=-1))
    scales_hat, means_hat = gp[..., :M], gp[..., M:]     # chunk(2, channel)
    y_lik = gaussian_conditional_likelihood(y, scales_hat, means_hat)
    x_hat = g_s_apply(P["g_s"], y_hat)
    to_nchw = lambda t: jnp.transpose(t, (0, 3, 1, 2))
    return to_nchw(x_hat), to_nchw(y_lik), to_nchw(z_lik)


# ----------------------------------------------------------------------------
# Deterministic synthetic parameter initialization
# ----------------------------------------------------------------------------
class KeyGen:
    def __init__(self, seed):
        self.key = jax.random.PRNGKey(seed)

    def __call__(self):
        self.key, sub = jax.random.split(self.key)
        return sub


def conv_init(kg, k, cin, cout):
    bnd = 1.0 / math.sqrt(cin * k * k)
    return {"w": jax.random.uniform(kg(), (k, k, cin, cout), jnp.float32, -bnd, bnd),
            "b": jax.random.uniform(kg(), (cout,), jnp.float32, -bnd, bnd)}


def gdn_init(C):
    return {"gamma": 0.1 * jnp.eye(C, dtype=jnp.float32),
            "beta": jnp.ones((C,), jnp.float32)}


def eb_init(kg, C, filters=(3, 3, 3, 3), init_scale=10.0):
    fext = (1,) + filters + (1,)
    scale = init_scale ** (1.0 / (len(filters) + 1))
    matrices, biases, factors = [], [], []
    for i in range(len(filters) + 1):
        init = math.log(math.expm1(1.0 / scale / fext[i + 1]))
        matrices.append(jnp.full((C, fext[i + 1], fext[i]), init, jnp.float32))
        biases.append(jax.random.uniform(kg(), (C, fext[i + 1], 1),
                                         jnp.float32, -0.5, 0.5))
        if i < len(filters):
            factors.append(jnp.zeros((C, fext[i + 1], 1), jnp.float32))
    quantiles = jnp.tile(jnp.array([[-init_scale, 0.0, init_scale]],
                                   jnp.float32), (C, 1)).reshape(C, 1, 3)
    return {"matrices": matrices, "biases": biases, "factors": factors,
            "quantiles": quantiles}


def make_model_params(seed, in_ch, N, M, out_ch):
    kg = KeyGen(seed)
    P = {}
    P["g_a"] = {"convs": [conv_init(kg, 5, in_ch, N), conv_init(kg, 5, N, N),
                          conv_init(kg, 5, N, N), conv_init(kg, 5, N, M)],
                "gdns": [gdn_init(N) for _ in range(3)]}
    P["g_s"] = {"convs": [conv_init(kg, 5, M, N), conv_init(kg, 5, N, N),
                          conv_init(kg, 5, N, N), conv_init(kg, 5, N, out_ch)],
                "gdns": [gdn_init(N) for _ in range(3)]}
    P["h_a"] = [conv_init(kg, 3, M, N), conv_init(kg, 5, N, N),
                conv_init(kg, 5, N, N)]
    P["h_s"] = [conv_init(kg, 5, N, M), conv_init(kg, 5, M, M * 3 // 2),
                conv_init(kg, 3, M * 3 // 2, M * 2)]
    P["entropy_parameters"] = [
        conv_init(kg, 1, M * 12 // 3, M * 10 // 3),
        conv_init(kg, 1, M * 10 // 3, M * 8 // 3),
        conv_init(kg, 1, M * 8 // 3, M * 6 // 3)]
    cp = conv_init(kg, 5, M, 2 * M)
    mask = jnp.ones((5, 5, 1, 1), jnp.float32)            # MaskedConv2d type 'A'
    mask = mask.at[2, 2:].set(0.0)
    mask = mask.at[3:].set(0.0)
    cp["w"] = cp["w"] * mask                               # fold constant mask once
    P["context_prediction"] = cp
    P["entropy_bottleneck"] = eb_init(kg, M)
    return P


# ----------------------------------------------------------------------------
# Lightweight correctness checks of the Pallas conv paths against XLA's conv
# ----------------------------------------------------------------------------
def _ref_conv(x, w, b, stride, padding4, act="none", gdn=None, gdn_inverse=False):
    pt, pb, pleft, pright = padding4
    out = jax.lax.conv_general_dilated(
        x, w, window_strides=(stride, stride),
        padding=((pt, pb), (pleft, pright)),
        dimension_numbers=("NHWC", "HWIO", "NHWC"))
    out = out + b
    if act == "leaky_relu":
        out = jnp.where(out >= 0, out, SLOPE * out)
    if gdn is not None:
        norm = jnp.einsum("bhwj,ij->bhwi", out * out, gdn["gamma"]) + gdn["beta"]
        out = out * (jnp.sqrt(norm) if gdn_inverse else jax.lax.rsqrt(norm))
    return out


def _ref_deconv_lin(x, w, b):
    # K=5, s=2, p=2, op=1 ConvTranspose2d == dilated conv with flipped kernel.
    return jax.lax.conv_general_dilated(
        x, w[::-1, ::-1], window_strides=(1, 1),
        padding=((2, 3), (2, 3)), lhs_dilation=(2, 2),
        dimension_numbers=("NHWC", "HWIO", "NHWC")) + b


def _assert_close(got, ref, name, tol=0.05):
    err = float(jnp.max(jnp.abs(got - ref)))
    scale = float(jnp.max(jnp.abs(ref))) + 1e-3
    assert err < tol * scale, f"{name} mismatch: err={err}, scale={scale}"


def _self_check():
    k1, k2, k3, k4 = jax.random.split(jax.random.PRNGKey(42), 4)
    xt = jax.random.uniform(k1, (2, 16, 16, 8), jnp.float32)
    w5 = jax.random.uniform(k2, (5, 5, 8, 16), jnp.float32, -0.2, 0.2)
    bt = jax.random.uniform(k3, (16,), jnp.float32, -0.2, 0.2)
    gdn_t = {"gamma": 0.1 * jnp.eye(16, dtype=jnp.float32) + 0.01,
             "beta": jnp.ones((16,), jnp.float32)}

    got = conv2d(xt, w5, bt, stride=2, padding=2, gdn=gdn_t,
                 out_dtype=jnp.float32)
    ref = _ref_conv(xt, w5, bt, 2, (2, 2, 2, 2), gdn=gdn_t)
    _assert_close(got, ref, "5x5 stride-2 conv + GDN")

    w3 = jax.random.uniform(k4, (3, 3, 8, 8), jnp.float32, -0.2, 0.2)
    got = conv2d(xt, w3, bt[:8], stride=1, padding=1, act="leaky_relu",
                 out_dtype=jnp.float32)
    ref = _ref_conv(xt, w3, bt[:8], 1, (1, 1, 1, 1), act="leaky_relu")
    _assert_close(got, ref, "3x3 stride-1 conv + LeakyReLU")

    got = deconv2d(xt, w5, bt, out_dtype=jnp.float32)
    ref = _ref_deconv_lin(xt, w5, bt)
    _assert_close(got, ref, "5x5 stride-2 transposed conv (sub-pixel)")

    got = deconv2d(xt, w5, bt, gdn=gdn_t, gdn_inverse=True,
                   out_dtype=jnp.float32)
    lin = _ref_deconv_lin(xt, w5, bt)
    norm = jnp.einsum("bhwj,ij->bhwi", lin * lin, gdn_t["gamma"]) + gdn_t["beta"]
    _assert_close(got, lin * jnp.sqrt(norm), "5x5 stride-2 deconv + IGDN")


# ----------------------------------------------------------------------------
if __name__ == "__main__":
    _self_check()

    in_ch, N, M, out_ch = 3, 32, 32, 3          # small synthetic config
    B, H, W = 2, 64, 64                         # spatial must be divisible by 64

    params = make_model_params(seed=1234, in_ch=in_ch, N=N, M=M, out_ch=out_ch)
    x = jax.random.uniform(jax.random.PRNGKey(0), (B, in_ch, H, W), jnp.float32)

    fwd = jax.jit(lambda p, xx: joint_autoregressive_forward(p, xx, M=M))
    x_hat, y_lik, z_lik = fwd(params, x)
    x_hat, y_lik, z_lik = jax.block_until_ready((x_hat, y_lik, z_lik))

    assert x_hat.shape == (B, out_ch, H, W)
    assert y_lik.shape == (B, M, H // 16, W // 16)
    assert z_lik.shape == (B, N, H // 64, W // 64)
    assert bool(jnp.all(jnp.isfinite(x_hat)))
    assert bool(jnp.all(jnp.isfinite(y_lik))) and bool(jnp.all(y_lik > 0))
    assert bool(jnp.all(jnp.isfinite(z_lik))) and bool(jnp.all(z_lik > 0))
    print("KERNEL_OK")
</pallas_src>

<mosaic_0001>
module attributes {stable_mosaic.version = 11 : i64} {
  func.func @kernel(%arg0: i32, %arg1: memref<4x216x8xbf16, #tpu.memory_space<vmem>>, %arg2: memref<4x24x8xbf16, #tpu.memory_space<vmem>>, %arg3: memref<25x8x16xbf16, #tpu.memory_space<vmem>>, %arg4: memref<1x16xf32, #tpu.memory_space<vmem>>, %arg5: memref<16x16xbf16, #tpu.memory_space<vmem>>, %arg6: memref<1x16xf32, #tpu.memory_space<vmem>>, %arg7: memref<216x16xf32, #tpu.memory_space<vmem>>, %arg8: memref<4x240x8xbf16, #tpu.memory_space<vmem>>) attributes {dimension_semantics = [#tpu.dimension_semantics<parallel>], iteration_bounds = array<i64: 1>, scalar_prefetch = 0 : i64, scratch_operands = 1 : i64, tpu.core_type = #tpu.core_type<tc>, window_params = [{transform_indices = @transform_0, window_bounds = array<i64: 4, 216, 8>}, {transform_indices = @transform_1, window_bounds = array<i64: 4, 24, 8>}, {pipeline_mode = #tpu.pipeline_mode<synchronous>, transform_indices = @transform_2, window_bounds = array<i64: 25, 8, 16>}, {pipeline_mode = #tpu.pipeline_mode<synchronous>, transform_indices = @transform_3, window_bounds = array<i64: 1, 16>}, {pipeline_mode = #tpu.pipeline_mode<synchronous>, transform_indices = @transform_4, window_bounds = array<i64: 16, 16>}, {pipeline_mode = #tpu.pipeline_mode<synchronous>, transform_indices = @transform_5, window_bounds = array<i64: 1, 16>}, {transform_indices = @transform_6, window_bounds = array<i64: 216, 16>}]} {
    %c0 = arith.constant 0 : index
    %c0_0 = arith.constant 0 : index
    %c0_1 = arith.constant 0 : index
    %0 = vector.load %arg1[%c0, %c0_0, %c0_1] : memref<4x216x8xbf16, #tpu.memory_space<vmem>>, vector<4x216x8xbf16>
    %c0_2 = arith.constant 0 : index
    %c0_3 = arith.constant 0 : index
    %c0_4 = arith.constant 0 : index
    %1 = vector.load %arg8[%c0_2, %c0_3, %c0_4] : memref<4x240x8xbf16, #tpu.memory_space<vmem>>, vector<4x216x8xbf16>
    tpu.vector_store %arg8[%c0_2, %c0_3, %c0_4], %0 {strides = array<i32>} : memref<4x240x8xbf16, #tpu.memory_space<vmem>>, vector<4x216x8xbf16>,
    %c0_5 = arith.constant 0 : index
    %c0_6 = arith.constant 0 : index
    %c0_7 = arith.constant 0 : index
    %2 = vector.load %arg2[%c0_5, %c0_6, %c0_7] : memref<4x24x8xbf16, #tpu.memory_space<vmem>>, vector<4x24x8xbf16>
    %c0_8 = arith.constant 0 : index
    %c216 = arith.constant 216 : index
    %c0_9 = arith.constant 0 : index
    %3 = vector.load %arg8[%c0_8, %c216, %c0_9] : memref<4x240x8xbf16, #tpu.memory_space<vmem>>, vector<4x24x8xbf16>
    tpu.vector_store %arg8[%c0_8, %c216, %c0_9], %2 {strides = array<i32>} : memref<4x240x8xbf16, #tpu.memory_space<vmem>>, vector<4x24x8xbf16>,
    %c0_10 = arith.constant 0 : index
    %c0_11 = arith.constant 0 : index
    %4 = vector.load %arg4[%c0_10, %c0_11] : memref<1x16xf32, #tpu.memory_space<vmem>>, vector<1x16xf32>
    %5 = vector.shape_cast %4 : vector<1x16xf32> to vector<1x16xf32>
    %6 = vector.broadcast %5 : vector<1x16xf32> to vector<216x16xf32>
    %c0_12 = arith.constant 0 : index
    %c0_13 = arith.constant 0 : index
    %c0_14 = arith.constant 0 : index
    %7 = vector.load %arg8[%c0_12, %c0_13, %c0_14] : memref<4x240x8xbf16, #tpu.memory_space<vmem>>, vector<1x216x8xbf16>
    %8 = vector.shape_cast %7 : vector<1x216x8xbf16> to vector<216x8xbf16>
    %c0_15 = arith.constant 0 : index
    %c0_16 = arith.constant 0 : index
    %c0_17 = arith.constant 0 : index
    %9 = vector.load %arg3[%c0_15, %c0_16, %c0_17] : memref<25x8x16xbf16, #tpu.memory_space<vmem>>, vector<1x8x16xbf16>
    %10 = vector.shape_cast %9 : vector<1x8x16xbf16> to vector<8x16xbf16>
    %cst = arith.constant dense<0.000000e+00> : vector<216x16xf32>
    %11 = tpu.matmul %8, %10, %cst {dimension_numbers = #tpu.dot_dimension_numbers<[1], [0], [0], [1], [0, 0, 1, 1], [], []>} : vector<216x8xbf16>, vector<8x16xbf16>, vector<216x16xf32> -> vector<216x16xf32>
    %12 = arith.addf %6, %11 : vector<216x16xf32>
    %c1 = arith.constant 1 : index
    %c0_18 = arith.constant 0 : index
    %c0_19 = arith.constant 0 : index
    %13 = vector.load %arg8[%c1, %c0_18, %c0_19] : memref<4x240x8xbf16, #tpu.memory_space<vmem>>, vector<1x216x8xbf16>
    %14 = vector.shape_cast %13 : vector<1x216x8xbf16> to vector<216x8xbf16>
    %c1_20 = arith.constant 1 : index
    %c0_21 = arith.constant 0 : index
    %c0_22 = arith.constant 0 : index
    %15 = vector.load %arg3[%c1_20, %c0_21, %c0_22] : memref<25x8x16xbf16, #tpu.memory_space<vmem>>, vector<1x8x16xbf16>
    %16 = vector.shape_cast %15 : vector<1x8x16xbf16> to vector<8x16xbf16>
    %cst_23 = arith.constant dense<0.000000e+00> : vector<216x16xf32>
    %17 = tpu.matmul %14, %16, %cst_23 {dimension_numbers = #tpu.dot_dimension_numbers<[1], [0], [0], [1], [0, 0, 1, 1], [], []>} : vector<216x8xbf16>, vector<8x16xbf16>, vector<216x16xf32> -> vector<216x16xf32>
    %18 = arith.addf %12, %17 : vector<216x16xf32>
    %c0_24 = arith.constant 0 : index
    %c1_25 = arith.constant 1 : index
    %c0_26 = arith.constant 0 : index
    %19 = vector.load %arg8[%c0_24, %c1_25, %c0_26] : memref<4x240x8xbf16, #tpu.memory_space<vmem>>, vector<1x216x8xbf16>
    %20 = vector.shape_cast %19 : vector<1x216x8xbf16> to vector<216x8xbf16>
    %c2 = arith.constant 2 : index
    %c0_27 = arith.constant 0 : index
    %c0_28 = arith.constant 0 : index
    %21 = vector.load %arg3[%c2, %c0_27, %c0_28] : memref<25x8x16xbf16, #tpu.memory_space<vmem>>, vector<1x8x16xbf16>
    %22 = vector.shape_cast %21 : vector<1x8x16xbf16> to vector<8x16xbf16>
    %cst_29 = arith.constant dense<0.000000e+00> : vector<216x16xf32>
    %23 = tpu.matmul %20, %22, %cst_29 {dimension_numbers = #tpu.dot_dimension_numbers<[1], [0], [0], [1], [0, 0, 1, 1], [], []>} : vector<216x8xbf16>, vector<8x16xbf16>, vector<216x16xf32> -> vector<216x16xf32>
    %24 = arith.addf %18, %23 : vector<216x16xf32>
    %c1_30 = arith.constant 1 : index
    %c1_31 = arith.constant 1 : index
    %c0_32 = arith.constant 0 : index
    %25 = vector.load %arg8[%c1_30, %c1_31, %c0_32] : memref<4x240x8xbf16, #tpu.memory_space<vmem>>, vector<1x216x8xbf16>
    %26 = vector.shape_cast %25 : vector<1x216x8xbf16> to vector<216x8xbf16>
    %c3 = arith.constant 3 : index
    %c0_33 = arith.constant 0 : index
    %c0_34 = arith.constant 0 : index
    %27 = vector.load %arg3[%c3, %c0_33, %c0_34] : memref<25x8x16xbf16, #tpu.memory_space<vmem>>, vector<1x8x16xbf16>
    %28 = vector.shape_cast %27 : vector<1x8x16xbf16> to vector<8x16xbf16>
    %cst_35 = arith.constant dense<0.000000e+00> : vector<216x16xf32>
    %29 = tpu.matmul %26, %28, %cst_35 {dimension_numbers = #tpu.dot_dimension_numbers<[1], [0], [0], [1], [0, 0, 1, 1], [], []>} : vector<216x8xbf16>, vector<8x16xbf16>, vector<216x16xf32> -> vector<216x16xf32>
    %30 = arith.addf %24, %29 : vector<216x16xf32>
    %c0_36 = arith.constant 0 : index
    %c2_37 = arith.constant 2 : index
    %c0_38 = arith.constant 0 : index
    %31 = vector.load %arg8[%c0_36, %c2_37, %c0_38] : memref<4x240x8xbf16, #tpu.memory_space<vmem>>, vector<1x216x8xbf16>
    %32 = vector.shape_cast %31 : vector<1x216x8xbf16> to vector<216x8xbf16>
    %c4 = arith.constant 4 : index
    %c0_39 = arith.constant 0 : index
    %c0_40 = arith.constant 0 : index
    %33 = vector.load %arg3[%c4, %c0_39, %c0_40] : memref<25x8x16xbf16, #tpu.memory_space<vmem>>, vector<1x8x16xbf16>
    %34 = vector.shape_cast %33 : vector<1x8x16xbf16> to vector<8x16xbf16>
    %cst_41 = arith.constant dense<0.000000e+00> : vector<216x16xf32>
    %35 = tpu.matmul %32, %34, %cst_41 {dimension_numbers = #tpu.dot_dimension_numbers<[1], [0], [0], [1], [0, 0, 1, 1], [], []>} : vector<216x8xbf16>, vector<8x16xbf16>, vector<216x16xf32> -> vector<216x16xf32>
    %36 = arith.addf %30, %35 : vector<216x16xf32>
    %c2_42 = arith.constant 2 : index
    %c0_43 = arith.constant 0 : index
    %c0_44 = arith.constant 0 : index
    %37 = vector.load %arg8[%c2_42, %c0_43, %c0_44] : memref<4x240x8xbf16, #tpu.memory_space<vmem>>, vector<1x216x8xbf16>
    %38 = vector.shape_cast %37 : vector<1x216x8xbf16> to vector<216x8xbf16>
    %c5 = arith.constant 5 : index
    %c0_45 = arith.constant 0 : index
    %c0_46 = arith.constant 0 : index
    %39 = vector.load %arg3[%c5, %c0_45, %c0_46] : memref<25x8x16xbf16, #tpu.memory_space<vmem>>, vector<1x8x16xbf16>
    %40 = vector.shape_cast %39 : vector<1x8x16xbf16> to vector<8x16xbf16>
    %cst_47 = arith.constant dense<0.000000e+00> : vector<216x16xf32>
    %41 = tpu.matmul %38, %40, %cst_47 {dimension_numbers = #tpu.dot_dimension_numbers<[1], [0], [0], [1], [0, 0, 1, 1], [], []>} : vector<216x8xbf16>, vector<8x16xbf16>, vector<216x16xf32> -> vector<216x16xf32>
    %42 = arith.addf %36, %41 : vector<216x16xf32>
    %c3_48 = arith.constant 3 : index
    %c0_49 = arith.constant 0 : index
    %c0_50 = arith.constant 0 : index
    %43 = vector.load %arg8[%c3_48, %c0_49, %c0_50] : memref<4x240x8xbf16, #tpu.memory_space<vmem>>, vector<1x216x8xbf16>
    %44 = vector.shape_cast %43 : vector<1x216x8xbf16> to vector<216x8xbf16>
    %c6 = arith.constant 6 : index
    %c0_51 = arith.constant 0 : index
    %c0_52 = arith.constant 0 : index
    %45 = vector.load %arg3[%c6, %c0_51, %c0_52] : memref<25x8x16xbf16, #tpu.memory_space<vmem>>, vector<1x8x16xbf16>
    %46 = vector.shape_cast %45 : vector<1x8x16xbf16> to vector<8x16xbf16>
    %cst_53 = arith.constant dense<0.000000e+00> : vector<216x16xf32>
    %47 = tpu.matmul %44, %46, %cst_53 {dimension_numbers = #tpu.dot_dimension_numbers<[1], [0], [0], [1], [0, 0, 1, 1], [], []>} : vector<216x8xbf16>, vector<8x16xbf16>, vector<216x16xf32> -> vector<216x16xf32>
    %48 = arith.addf %42, %47 : vector<216x16xf32>
    %c2_54 = arith.constant 2 : index
    %c1_55 = arith.constant 1 : index
    %c0_56 = arith.constant 0 : index
    %49 = vector.load %arg8[%c2_54, %c1_55, %c0_56] : memref<4x240x8xbf16, #tpu.memory_space<vmem>>, vector<1x216x8xbf16>
    %50 = vector.shape_cast %49 : vector<1x216x8xbf16> to vector<216x8xbf16>
    %c7 = arith.constant 7 : index
    %c0_57 = arith.constant 0 : index
    %c0_58 = arith.constant 0 : index
    %51 = vector.load %arg3[%c7, %c0_57, %c0_58] : memref<25x8x16xbf16, #tpu.memory_space<vmem>>, vector<1x8x16xbf16>
    %52 = vector.shape_cast %51 : vector<1x8x16xbf16> to vector<8x16xbf16>
    %cst_59 = arith.constant dense<0.000000e+00> : vector<216x16xf32>
    %53 = tpu.matmul %50, %52, %cst_59 {dimension_numbers = #tpu.dot_dimension_numbers<[1], [0], [0], [1], [0, 0, 1, 1], [], []>} : vector<216x8xbf16>, vector<8x16xbf16>, vector<216x16xf32> -> vector<216x16xf32>
    %54 = arith.addf %48, %53 : vector<216x16xf32>
    %c3_60 = arith.constant 3 : index
    %c1_61 = arith.constant 1 : index
    %c0_62 = arith.constant 0 : index
    %55 = vector.load %arg8[%c3_60, %c1_61, %c0_62] : memref<4x240x8xbf16, #tpu.memory_space<vmem>>, vector<1x216x8xbf16>
    %56 = vector.shape_cast %55 : vector<1x216x8xbf16> to vector<216x8xbf16>
    %c8 = arith.constant 8 : index
    %c0_63 = arith.constant 0 : index
    %c0_64 = arith.constant 0 : index
    %57 = vector.load %arg3[%c8, %c0_63, %c0_64] : memref<25x8x16xbf16, #tpu.memory_space<vmem>>, vector<1x8x16xbf16>
    %58 = vector.shape_cast %57 : vector<1x8x16xbf16> to vector<8x16xbf16>
    %cst_65 = arith.constant dense<0.000000e+00> : vector<216x16xf32>
    %59 = tpu.matmul %56, %58, %cst_65 {dimension_numbers = #tpu.dot_dimension_numbers<[1], [0], [0], [1], [0, 0, 1, 1], [], []>} : vector<216x8xbf16>, vector<8x16xbf16>, vector<216x16xf32> -> vector<216x16xf32>
    %60 = arith.addf %54, %59 : vector<216x16xf32>
    %c2_66 = arith.constant 2 : index
    %c2_67 = arith.constant 2 : index
    %c0_68 = arith.constant 0 : index
    %61 = vector.load %arg8[%c2_66, %c2_67, %c0_68] : memref<4x240x8xbf16, #tpu.memory_space<vmem>>, vector<1x216x8xbf16>
    %62 = vector.shape_cast %61 : vector<1x216x8xbf16> to vector<216x8xbf16>
    %c9 = arith.constant 9 : index
    %c0_69 = arith.constant 0 : index
    %c0_70 = arith.constant 0 : index
    %63 = vector.load %arg3[%c9, %c0_69, %c0_70] : memref<25x8x16xbf16, #tpu.memory_space<vmem>>, vector<1x8x16xbf16>
    %64 = vector.shape_cast %63 : vector<1x8x16xbf16> to vector<8x16xbf16>
    %cst_71 = arith.constant dense<0.000000e+00> : vector<216x16xf32>
    %65 = tpu.matmul %62, %64, %cst_71 {dimension_numbers = #tpu.dot_dimension_numbers<[1], [0], [0], [1], [0, 0, 1, 1], [], []>} : vector<216x8xbf16>, vector<8x16xbf16>, vector<216x16xf32> -> vector<216x16xf32>
    %66 = arith.addf %60, %65 : vector<216x16xf32>
    %c0_72 = arith.constant 0 : index
    %c10 = arith.constant 10 : index
    %c0_73 = arith.constant 0 : index
    %67 = vector.load %arg8[%c0_72, %c10, %c0_73] : memref<4x240x8xbf16, #tpu.memory_space<vmem>>, vector<1x216x8xbf16>
    %68 = vector.shape_cast %67 : vector<1x216x8xbf16> to vector<216x8xbf16>
    %c10_74 = arith.constant 10 : index
    %c0_75 = arith.constant 0 : index
    %c0_76 = arith.constant 0 : index
    %69 = vector.load %arg3[%c10_74, %c0_75, %c0_76] : memref<25x8x16xbf16, #tpu.memory_space<vmem>>, vector<1x8x16xbf16>
    %70 = vector.shape_cast %69 : vector<1x8x16xbf16> to vector<8x16xbf16>
    %cst_77 = arith.constant dense<0.000000e+00> : vector<216x16xf32>
    %71 = tpu.matmul %68, %70, %cst_77 {dimension_numbers = #tpu.dot_dimension_numbers<[1], [0], [0], [1], [0, 0, 1, 1], [], []>} : vector<216x8xbf16>, vector<8x16xbf16>, vector<216x16xf32> -> vector<216x16xf32>
    %72 = arith.addf %66, %71 : vector<216x16xf32>
    %c1_78 = arith.constant 1 : index
    %c10_79 = arith.constant 10 : index
    %c0_80 = arith.constant 0 : index
    %73 = vector.load %arg8[%c1_78, %c10_79, %c0_80] : memref<4x240x8xbf16, #tpu.memory_space<vmem>>, vector<1x216x8xbf16>
    %74 = vector.shape_cast %73 : vector<1x216x8xbf16> to vector<216x8xbf16>
    %c11 = arith.constant 11 : index
    %c0_81 = arith.constant 0 : index
    %c0_82 = arith.constant 0 : index
    %75 = vector.load %arg3[%c11, %c0_81, %c0_82] : memref<25x8x16xbf16, #tpu.memory_space<vmem>>, vector<1x8x16xbf16>
    %76 = vector.shape_cast %75 : vector<1x8x16xbf16> to vector<8x16xbf16>
    %cst_83 = arith.constant dense<0.000000e+00> : vector<216x16xf32>
    %77 = tpu.matmul %74, %76, %cst_83 {dimension_numbers = #tpu.dot_dimension_numbers<[1], [0], [0], [1], [0, 0, 1, 1], [], []>} : vector<216x8xbf16>, vector<8x16xbf16>, vector<216x16xf32> -> vector<216x16xf32>
    %78 = arith.addf %72, %77 : vector<216x16xf32>
    %c0_84 = arith.constant 0 : index
    %c11_85 = arith.constant 11 : index
    %c0_86 = arith.constant 0 : index
    %79 = vector.load %arg8[%c0_84, %c11_85, %c0_86] : memref<4x240x8xbf16, #tpu.memory_space<vmem>>, vector<1x216x8xbf16>
    %80 = vector.shape_cast %79 : vector<1x216x8xbf16> to vector<216x8xbf16>
    %c12 = arith.constant 12 : index
    %c0_87 = arith.constant 0 : index
    %c0_88 = arith.constant 0 : index
    %81 = vector.load %arg3[%c12, %c0_87, %c0_88] : memref<25x8x16xbf16, #tpu.memory_space<vmem>>, vector<1x8x16xbf16>
    %82 = vector.shape_cast %81 : vector<1x8x16xbf16> to vector<8x16xbf16>
    %cst_89 = arith.constant dense<0.000000e+00> : vector<216x16xf32>
    %83 = tpu.matmul %80, %82, %cst_89 {dimension_numbers = #tpu.dot_dimension_numbers<[1], [0], [0], [1], [0, 0, 1, 1], [], []>} : vector<216x8xbf16>, vector<8x16xbf16>, vector<216x16xf32> -> vector<216x16xf32>
    %84 = arith.addf %78, %83 : vector<216x16xf32>
    %c1_90 = arith.constant 1 : index
    %c11_91 = arith.constant 11 : index
    %c0_92 = arith.constant 0 : index
    %85 = vector.load %arg8[%c1_90, %c11_91, %c0_92] : memref<4x240x8xbf16, #tpu.memory_space<vmem>>, vector<1x216x8xbf16>
    %86 = vector.shape_cast %85 : vector<1x216x8xbf16> to vector<216x8xbf16>
    %c13 = arith.constant 13 : index
    %c0_93 = arith.constant 0 : index
    %c0_94 = arith.constant 0 : index
    %87 = vector.load %arg3[%c13, %c0_93, %c0_94] : memref<25x8x16xbf16, #tpu.memory_space<vmem>>, vector<1x8x16xbf16>
    %88 = vector.shape_cast %87 : vector<1x8x16xbf16> to vector<8x16xbf16>
    %cst_95 = arith.constant dense<0.000000e+00> : vector<216x16xf32>
    %89 = tpu.matmul %86, %88, %cst_95 {dimension_numbers = #tpu.dot_dimension_numbers<[1], [0], [0], [1], [0, 0, 1, 1], [], []>} : vector<216x8xbf16>, vector<8x16xbf16>, vector<216x16xf32> -> vector<216x16xf32>
    %90 = arith.addf %84, %89 : vector<216x16xf32>
    %c0_96 = arith.constant 0 : index
    %c12_97 = arith.constant 12 : index
    %c0_98 = arith.constant 0 : index
    %91 = vector.load %arg8[%c0_96, %c12_97, %c0_98] : memref<4x240x8xbf16, #tpu.memory_space<vmem>>, vector<1x216x8xbf16>
    %92 = vector.shape_cast %91 : vector<1x216x8xbf16> to vector<216x8xbf16>
    %c14 = arith.constant 14 : index
    %c0_99 = arith.constant 0 : index
    %c0_100 = arith.constant 0 : index
    %93 = vector.load %arg3[%c14, %c0_99, %c0_100] : memref<25x8x16xbf16, #tpu.memory_space<vmem>>, vector<1x8x16xbf16>
    %94 = vector.shape_cast %93 : vector<1x8x16xbf16> to vector<8x16xbf16>
    %cst_101 = arith.constant dense<0.000000e+00> : vector<216x16xf32>
    %95 = tpu.matmul %92, %94, %cst_101 {dimension_numbers = #tpu.dot_dimension_numbers<[1], [0], [0], [1], [0, 0, 1, 1], [], []>} : vector<216x8xbf16>, vector<8x16xbf16>, vector<216x16xf32> -> vector<216x16xf32>
    %96 = arith.addf %90, %95 : vector<216x16xf32>
    %c2_102 = arith.constant 2 : index
    %c10_103 = arith.constant 10 : index
    %c0_104 = arith.constant 0 : index
    %97 = vector.load %arg8[%c2_102, %c10_103, %c0_104] : memref<4x240x8xbf16, #tpu.memory_space<vmem>>, vector<1x216x8xbf16>
    %98 = vector.shape_cast %97 : vector<1x216x8xbf16> to vector<216x8xbf16>
    %c15 = arith.constant 15 : index
    %c0_105 = arith.constant 0 : index
    %c0_106 = arith.constant 0 : index
    %99 = vector.load %arg3[%c15, %c0_105, %c0_106] : memref<25x8x16xbf16, #tpu.memory_space<vmem>>, vector<1x8x16xbf16>
    %100 = vector.shape_cast %99 : vector<1x8x16xbf16> to vector<8x16xbf16>
    %cst_107 = arith.constant dense<0.000000e+00> : vector<216x16xf32>
    %101 = tpu.matmul %98, %100, %cst_107 {dimension_numbers = #tpu.dot_dimension_numbers<[1], [0], [0], [1], [0, 0, 1, 1], [], []>} : vector<216x8xbf16>, vector<8x16xbf16>, vector<216x16xf32> -> vector<216x16xf32>
    %102 = arith.addf %96, %101 : vector<216x16xf32>
    %c3_108 = arith.constant 3 : index
    %c10_109 = arith.constant 10 : index
    %c0_110 = arith.constant 0 : index
    %103 = vector.load %arg8[%c3_108, %c10_109, %c0_110] : memref<4x240x8xbf16, #tpu.memory_space<vmem>>, vector<1x216x8xbf16>
    %104 = vector.shape_cast %103 : vector<1x216x8xbf16> to vector<216x8xbf16>
    %c16 = arith.constant 16 : index
    %c0_111 = arith.constant 0 : index
    %c0_112 = arith.constant 0 : index
    %105 = vector.load %arg3[%c16, %c0_111, %c0_112] : memref<25x8x16xbf16, #tpu.memory_space<vmem>>, vector<1x8x16xbf16>
    %106 = vector.shape_cast %105 : vector<1x8x16xbf16> to vector<8x16xbf16>
    %cst_113 = arith.constant dense<0.000000e+00> : vector<216x16xf32>
    %107 = tpu.matmul %104, %106, %cst_113 {dimension_numbers = #tpu.dot_dimension_numbers<[1], [0], [0], [1], [0, 0, 1, 1], [], []>} : vector<216x8xbf16>, vector<8x16xbf16>, vector<216x16xf32> -> vector<216x16xf32>
    %108 = arith.addf %102, %107 : vector<216x16xf32>
    %c2_114 = arith.constant 2 : index
    %c11_115 = arith.constant 11 : index
    %c0_116 = arith.constant 0 : index
    %109 = vector.load %arg8[%c2_114, %c11_115, %c0_116] : memref<4x240x8xbf16, #tpu.memory_space<vmem>>, vector<1x216x8xbf16>
    %110 = vector.shape_cast %109 : vector<1x216x8xbf16> to vector<216x8xbf16>
    %c17 = arith.constant 17 : index
    %c0_117 = arith.constant 0 : index
    %c0_118 = arith.constant 0 : index
    %111 = vector.load %arg3[%c17, %c0_117, %c0_118] : memref<25x8x16xbf16, #tpu.memory_space<vmem>>, vector<1x8x16xbf16>
    %112 = vector.shape_cast %111 : vector<1x8x16xbf16> to vector<8x16xbf16>
    %cst_119 = arith.constant dense<0.000000e+00> : vector<216x16xf32>
    %113 = tpu.matmul %110, %112, %cst_119 {dimension_numbers = #tpu.dot_dimension_numbers<[1], [0], [0], [1], [0, 0, 1, 1], [], []>} : vector<216x8xbf16>, vector<8x16xbf16>, vector<216x16xf32> -> vector<216x16xf32>
    %114 = arith.addf %108, %113 : vector<216x16xf32>
    %c3_120 = arith.constant 3 : index
    %c11_121 = arith.constant 11 : index
    %c0_122 = arith.constant 0 : index
    %115 = vector.load %arg8[%c3_120, %c11_121, %c0_122] : memref<4x240x8xbf16, #tpu.memory_space<vmem>>, vector<1x216x8xbf16>
    %116 = vector.shape_cast %115 : vector<1x216x8xbf16> to vector<216x8xbf16>
    %c18 = arith.constant 18 : index
    %c0_123 = arith.constant 0 : index
    %c0_124 = arith.constant 0 : index
    %117 = vector.load %arg3[%c18, %c0_123, %c0_124] : memref<25x8x16xbf16, #tpu.memory_space<vmem>>, vector<1x8x16xbf16>
    %118 = vector.shape_cast %117 : vector<1x8x16xbf16> to vector<8x16xbf16>
    %cst_125 = arith.constant dense<0.000000e+00> : vector<216x16xf32>
    %119 = tpu.matmul %116, %118, %cst_125 {dimension_numbers = #tpu.dot_dimension_numbers<[1], [0], [0], [1], [0, 0, 1, 1], [], []>} : vector<216x8xbf16>, vector<8x16xbf16>, vector<216x16xf32> -> vector<216x16xf32>
    %120 = arith.addf %114, %119 : vector<216x16xf32>
    %c2_126 = arith.constant 2 : index
    %c12_127 = arith.constant 12 : index
    %c0_128 = arith.constant 0 : index
    %121 = vector.load %arg8[%c2_126, %c12_127, %c0_128] : memref<4x240x8xbf16, #tpu.memory_space<vmem>>, vector<1x216x8xbf16>
    %122 = vector.shape_cast %121 : vector<1x216x8xbf16> to vector<216x8xbf16>
    %c19 = arith.constant 19 : index
    %c0_129 = arith.constant 0 : index
    %c0_130 = arith.constant 0 : index
    %123 = vector.load %arg3[%c19, %c0_129, %c0_130] : memref<25x8x16xbf16, #tpu.memory_space<vmem>>, vector<1x8x16xbf16>
    %124 = vector.shape_cast %123 : vector<1x8x16xbf16> to vector<8x16xbf16>
    %cst_131 = arith.constant dense<0.000000e+00> : vector<216x16xf32>
    %125 = tpu.matmul %122, %124, %cst_131 {dimension_numbers = #tpu.dot_dimension_numbers<[1], [0], [0], [1], [0, 0, 1, 1], [], []>} : vector<216x8xbf16>, vector<8x16xbf16>, vector<216x16xf32> -> vector<216x16xf32>
    %126 = arith.addf %120, %125 : vector<216x16xf32>
    %c0_132 = arith.constant 0 : index
    %c20 = arith.constant 20 : index
    %c0_133 = arith.constant 0 : index
    %127 = vector.load %arg8[%c0_132, %c20, %c0_133] : memref<4x240x8xbf16, #tpu.memory_space<vmem>>, vector<1x216x8xbf16>
    %128 = vector.shape_cast %127 : vector<1x216x8xbf16> to vector<216x8xbf16>
    %c20_134 = arith.constant 20 : index
    %c0_135 = arith.constant 0 : index
    %c0_136 = arith.constant 0 : index
    %129 = vector.load %arg3[%c20_134, %c0_135, %c0_136] : memref<25x8x16xbf16, #tpu.memory_space<vmem>>, vector<1x8x16xbf16>
    %130 = vector.shape_cast %129 : vector<1x8x16xbf16> to vector<8x16xbf16>
    %cst_137 = arith.constant dense<0.000000e+00> : vector<216x16xf32>
    %131 = tpu.matmul %128, %130, %cst_137 {dimension_numbers = #tpu.dot_dimension_numbers<[1], [0], [0], [1], [0, 0, 1, 1], [], []>} : vector<216x8xbf16>, vector<8x16xbf16>, vector<216x16xf32> -> vector<216x16xf32>
    %132 = arith.addf %126, %131 : vector<216x16xf32>
    %c1_138 = arith.constant 1 : index
    %c20_139 = arith.constant 20 : index
    %c0_140 = arith.constant 0 : index
    %133 = vector.load %arg8[%c1_138, %c20_139, %c0_140] : memref<4x240x8xbf16, #tpu.memory_space<vmem>>, vector<1x216x8xbf16>
    %134 = vector.shape_cast %133 : vector<1x216x8xbf16> to vector<216x8xbf16>
    %c21 = arith.constant 21 : index
    %c0_141 = arith.constant 0 : index
    %c0_142 = arith.constant 0 : index
    %135 = vector.load %arg3[%c21, %c0_141, %c0_142] : memref<25x8x16xbf16, #tpu.memory_space<vmem>>, vector<1x8x16xbf16>
    %136 = vector.shape_cast %135 : vector<1x8x16xbf16> to vector<8x16xbf16>
    %cst_143 = arith.constant dense<0.000000e+00> : vector<216x16xf32>
    %137 = tpu.matmul %134, %136, %cst_143 {dimension_numbers = #tpu.dot_dimension_numbers<[1], [0], [0], [1], [0, 0, 1, 1], [], []>} : vector<216x8xbf16>, vector<8x16xbf16>, vector<216x16xf32> -> vector<216x16xf32>
    %138 = arith.addf %132, %137 : vector<216x16xf32>
    %c0_144 = arith.constant 0 : index
    %c21_145 = arith.constant 21 : index
    %c0_146 = arith.constant 0 : index
    %139 = vector.load %arg8[%c0_144, %c21_145, %c0_146] : memref<4x240x8xbf16, #tpu.memory_space<vmem>>, vector<1x216x8xbf16>
    %140 = vector.shape_cast %139 : vector<1x216x8xbf16> to vector<216x8xbf16>
    %c22 = arith.constant 22 : index
    %c0_147 = arith.constant 0 : index
    %c0_148 = arith.constant 0 : index
    %141 = vector.load %arg3[%c22, %c0_147, %c0_148] : memref<25x8x16xbf16, #tpu.memory_space<vmem>>, vector<1x8x16xbf16>
    %142 = vector.shape_cast %141 : vector<1x8x16xbf16> to vector<8x16xbf16>
    %cst_149 = arith.constant dense<0.000000e+00> : vector<216x16xf32>
    %143 = tpu.matmul %140, %142, %cst_149 {dimension_numbers = #tpu.dot_dimension_numbers<[1], [0], [0], [1], [0, 0, 1, 1], [], []>} : vector<216x8xbf16>, vector<8x16xbf16>, vector<216x16xf32> -> vector<216x16xf32>
    %144 = arith.addf %138, %143 : vector<216x16xf32>
    %c1_150 = arith.constant 1 : index
    %c21_151 = arith.constant 21 : index
    %c0_152 = arith.constant 0 : index
    %145 = vector.load %arg8[%c1_150, %c21_151, %c0_152] : memref<4x240x8xbf16, #tpu.memory_space<vmem>>, vector<1x216x8xbf16>
    %146 = vector.shape_cast %145 : vector<1x216x8xbf16> to vector<216x8xbf16>
    %c23 = arith.constant 23 : index
    %c0_153 = arith.constant 0 : index
    %c0_154 = arith.constant 0 : index
    %147 = vector.load %arg3[%c23, %c0_153, %c0_154] : memref<25x8x16xbf16, #tpu.memory_space<vmem>>, vector<1x8x16xbf16>
    %148 = vector.shape_cast %147 : vector<1x8x16xbf16> to vector<8x16xbf16>
    %cst_155 = arith.constant dense<0.000000e+00> : vector<216x16xf32>
    %149 = tpu.matmul %146, %148, %cst_155 {dimension_numbers = #tpu.dot_dimension_numbers<[1], [0], [0], [1], [0, 0, 1, 1], [], []>} : vector<216x8xbf16>, vector<8x16xbf16>, vector<216x16xf32> -> vector<216x16xf32>
    %150 = arith.addf %144, %149 : vector<216x16xf32>
    %c0_156 = arith.constant 0 : index
    %c22_157 = arith.constant 22 : index
    %c0_158 = arith.constant 0 : index
    %151 = vector.load %arg8[%c0_156, %c22_157, %c0_158] : memref<4x240x8xbf16, #tpu.memory_space<vmem>>, vector<1x216x8xbf16>
    %152 = vector.shape_cast %151 : vector<1x216x8xbf16> to vector<216x8xbf16>
    %c24 = arith.constant 24 : index
    %c0_159 = arith.constant 0 : index
    %c0_160 = arith.constant 0 : index
    %153 = vector.load %arg3[%c24, %c0_159, %c0_160] : memref<25x8x16xbf16, #tpu.memory_space<vmem>>, vector<1x8x16xbf16>
    %154 = vector.shape_cast %153 : vector<1x8x16xbf16> to vector<8x16xbf16>
    %cst_161 = arith.constant dense<0.000000e+00> : vector<216x16xf32>
    %155 = tpu.matmul %152, %154, %cst_161 {dimension_numbers = #tpu.dot_dimension_numbers<[1], [0], [0], [1], [0, 0, 1, 1], [], []>} : vector<216x8xbf16>, vector<8x16xbf16>, vector<216x16xf32> -> vector<216x16xf32>
    %156 = arith.addf %150, %155 : vector<216x16xf32>
    %157 = arith.mulf %156, %156 : vector<216x16xf32>
    %158 = arith.truncf %157 : vector<216x16xf32> to vector<216x16xbf16>
    %c0_162 = arith.constant 0 : index
    %c0_163 = arith.constant 0 : index
    %159 = vector.load %arg5[%c0_162, %c0_163] : memref<16x16xbf16, #tpu.memory_space<vmem>>, vector<16x16xbf16>
    %cst_164 = arith.constant dense<0.000000e+00> : vector<216x16xf32>
    %160 = tpu.matmul %158, %159, %cst_164 {dimension_numbers = #tpu.dot_dimension_numbers<[1], [0], [0], [1], [0, 0, 1, 1], [], []>} : vector<216x16xbf16>, vector<16x16xbf16>, vector<216x16xf32> -> vector<216x16xf32>
    %c0_165 = arith.constant 0 : index
    %c0_166 = arith.constant 0 : index
    %161 = vector.load %arg6[%c0_165, %c0_166] : memref<1x16xf32, #tpu.memory_space<vmem>>, vector<1x16xf32>
    %162 = vector.broadcast %161 : vector<1x16xf32> to vector<216x16xf32>
    %163 = arith.addf %160, %162 : vector<216x16xf32>
    %164 = math.rsqrt %163 : vector<216x16xf32>
    %165 = arith.mulf %156, %164 : vector<216x16xf32>
    %c0_167 = arith.constant 0 : index
    %c0_168 = arith.constant 0 : index
    %166 = vector.load %arg7[%c0_167, %c0_168] : memref<216x16xf32, #tpu.memory_space<vmem>>, vector<216x16xf32>
    tpu.vector_store %arg7[%c0_167, %c0_168], %165 {strides = array<i32>} : memref<216x16xf32, #tpu.memory_space<vmem>>, vector<216x16xf32>,
    return
  }
  func.func @transform_0(%arg0: i32) -> (i32, i32, i32) {
    %c0_i32 = arith.constant 0 : i32
    %c0_i32_0 = arith.constant 0 : i32
    %c0_i32_1 = arith.constant 0 : i32
    return %c0_i32, %arg0, %c0_i32_0 : i32, i32, i32
  }
  func.func @transform_1(%arg0: i32) -> (i32, i32, i32) {
    %c1_i32 = arith.constant 1 : i32
    %0 = arith.addi %arg0, %c1_i32 : i32
    %c9_i32 = arith.constant 9 : i32
    %1 = arith.muli %0, %c9_i32 : i32
    %c0_i32 = arith.constant 0 : i32
    %c0_i32_0 = arith.constant 0 : i32
    %c0_i32_1 = arith.constant 0 : i32
    return %c0_i32, %1, %c0_i32_0 : i32, i32, i32
  }
  func.func @transform_2(%arg0: i32) -> (i32, i32, i32) {
    %c0_i32 = arith.constant 0 : i32
    %c0_i32_0 = arith.constant 0 : i32
    %c0_i32_1 = arith.constant 0 : i32
    %c0_i32_2 = arith.constant 0 : i32
    return %c0_i32, %c0_i32_0, %c0_i32_1 : i32, i32, i32
  }
  func.func @transform_3(%arg0: i32) -> (i32, i32) {
    %c0_i32 = arith.constant 0 : i32
    %c0_i32_0 = arith.constant 0 : i32
    %c0_i32_1 = arith.constant 0 : i32
    return %c0_i32, %c0_i32_0 : i32, i32
  }
  func.func @transform_4(%arg0: i32) -> (i32, i32) {
    %c0_i32 = arith.constant 0 : i32
    %c0_i32_0 = arith.constant 0 : i32
    %c0_i32_1 = arith.constant 0 : i32
    return %c0_i32, %c0_i32_0 : i32, i32
  }
  func.func @transform_5(%arg0: i32) -> (i32, i32) {
    %c0_i32 = arith.constant 0 : i32
    %c0_i32_0 = arith.constant 0 : i32
    %c0_i32_1 = arith.constant 0 : i32
    return %c0_i32, %c0_i32_0 : i32, i32
  }
  func.func @transform_6(%arg0: i32) -> (i32, i32) {
    %c0_i32 = arith.constant 0 : i32
    %c0_i32_0 = arith.constant 0 : i32
    return %arg0, %c0_i32 : i32, i32
  }
}

</mosaic_0001>

<llo_original>
// kernel: tpu_custom_call.1
$region0: #{tpu_custom_call.1}
  #allocation0 [shape = 'u32[]', space=smem, size = 0x4, offset = 0x4, fixed_abs, tag = 'smem constant byte address 0x4 - core index']
  #allocation1 [shape = 'u32[144,128]{1,0:T(1,128)}', space=vmem, size = 0x12000, scoped, tag = 'internal scratch']
  #allocation2 [shape = 'bf16[4,240,8]{2,1,0:T(8,128)(2,1)}', space=vmem, size = 0x3c000, scoped, tag = 'scratch operand']
  %s0 = inlined_call_operand.vmem [shape: bf16[4,240,8], index: 0, kind: input, shape index: {}]
  %s1 = inlined_call_operand.vmem [shape: bf16[4,240,8], index: 1, kind: input, shape index: {}]
  %s2 = inlined_call_operand.vmem [shape: bf16[25,8,16], index: 2, kind: input, shape index: {}]
  %s3 = inlined_call_operand.vmem [shape: f32[1,16], index: 3, kind: input, shape index: {}]
  %s4 = inlined_call_operand.vmem [shape: bf16[16,16], index: 4, kind: input, shape index: {}]
  %s5 = inlined_call_operand.vmem [shape: f32[1,16], index: 5, kind: input, shape index: {}]
  %s6 = inlined_call_operand.vmem [shape: f32[216,16], index: 6, kind: output, shape index: {}]
  %s7 = sld [smem:[#allocation0]]
  $region116: #{tpu_custom_call.1} parent=0
    _
  %s9 = ssub.s32 1, %s7
  %s10 = scalar_select 0, %s9, %s7
  $region1: #{tpu_custom_call.1} parent=0
    #allocation3 [shape = 'u8[221184]{0}', space=vmem, size = 0x36000, scoped, tag = 'input window, operand 0, single buffered']
    #allocation4 [shape = 'u8[24576]{0}', space=vmem, size = 0x6000, scoped, tag = 'input window, operand 1, single buffered']
    // Predicated region
    $region2: #{tpu_custom_call.1} parent=1 // pred_check
      _
    $region3: #{tpu_custom_call.1} parent=1 // pred_check_branch
      %12 = sbr.rel (0) target = $region5
    $region4: #{tpu_custom_call.1} parent=1 // pred_region
      // Predicated region
      $region6: #{tpu_custom_call.1} parent=4 // pred_check
        _
      $region7: #{tpu_custom_call.1} parent=4 // pred_check_branch
        %14 = sbr.rel (0) target = $region9
      $region8: #{tpu_custom_call.1} parent=4 // pred_region
        // Predicated region
        $region10: #{tpu_custom_call.1} parent=8 // pred_check
          _
        $region11: #{tpu_custom_call.1} parent=8 // pred_check_branch
          %16 = sbr.rel target = $region13
        $region12: #{tpu_custom_call.1} parent=8 // pred_region
          // Predicated region
          $region25: #{tpu_custom_call.1} parent=12 // pred_check
            _
          $region26: #{tpu_custom_call.1} parent=12 // pred_check_branch
            %246 = sbr.rel (0) target = $region28
          $region27: #{tpu_custom_call.1} parent=12 // pred_region
            loop: start=0, step=1, limit=1
            $region29: #{tpu_custom_call.1} parent=27 // loop_pre_header
              _
            $region30: #{tpu_custom_call.1} parent=27 // loop_header
              %s248 = sphi 0, %s252
              %p249 = scmp.ge.s32.totalorder %s248, 1
              %s253 = sphi %s0, %s0
              %s254 = sphi [#allocation3], [#allocation3]
            $region31: #{tpu_custom_call.1} parent=27 // loop_header_branch
              %251 = sbr.rel (%p249) target = $region35
            $region32: #{tpu_custom_call.1} parent=27 // loop_body
              _
            $region33: #{tpu_custom_call.1} parent=27 // loop_footer
              %s252 = sadd.s32 1, %s248
            $region34: #{tpu_custom_call.1} parent=27 // loop_footer_branch
              %247 = sbr.rel target = $region30
            $region35: #{tpu_custom_call.1} parent=27 // loop_exit
              _
            %s256 = ssub.s32 16, 1
            loop: start=0, step=1, limit=1
            $region36: #{tpu_custom_call.1} parent=27 // loop_pre_header
              _
            $region37: #{tpu_custom_call.1} parent=27 // loop_header
              %s258 = sphi 0, %s262
              %p259 = scmp.ge.s32.totalorder %s258, 1
              %s263 = sphi %s0, %s0
              %s264 = sphi [#allocation3], [#allocation3]
            $region38: #{tpu_custom_call.1} parent=27 // loop_header_branch
              %261 = sbr.rel (%p259) target = $region42
            $region39: #{tpu_custom_call.1} parent=27 // loop_body
              %v265 = vld [vmem:[%s263] sm:%s256]
              %266 = vst [vmem:[%s264] sm:%s256] %v265
              %v267 = vld [vmem:[%s263 + $0x4] sm:%s256]
              %268 = vst [vmem:[%s264 + $0x4] sm:%s256] %v267
              %v269 = vld [vmem:[%s263 + $0x8] sm:%s256]
              %270 = vst [vmem:[%s264 + $0x8] sm:%s256] %v269
              %v271 = vld [vmem:[%s263 + $0xc] sm:%s256]
              %272 = vst [vmem:[%s264 + $0xc] sm:%s256] %v271
              %v273 = vld [vmem:[%s263 + $0x10] sm:%s256]
              %274 = vst [vmem:[%s264 + $0x10] sm:%s256] %v273
              %v275 = vld [vmem:[%s263 + $0x14] sm:%s256]
              %276 = vst [vmem:[%s264 + $0x14] sm:%s256] %v275
              %v277 = vld [vmem:[%s263 + $0x18] sm:%s256]
              %278 = vst [vmem:[%s264 + $0x18] sm:%s256] %v277
              %v279 = vld [vmem:[%s263 + $0x1c] sm:%s256]
              %280 = vst [vmem:[%s264 + $0x1c] sm:%s256] %v279
              %v281 = vld [vmem:[%s263 + $0x20] sm:%s256]
              %282 = vst [vmem:[%s264 + $0x20] sm:%s256] %v281
              %v283 = vld [vmem:[%s263 + $0x24] sm:%s256]
              %284 = vst [vmem:[%s264 + $0x24] sm:%s256] %v283
              %v285 = vld [vmem:[%s263 + $0x28] sm:%s256]
              %286 = vst [vmem:[%s264 + $0x28] sm:%s256] %v285
              %v287 = vld [vmem:[%s263 + $0x2c] sm:%s256]
              %288 = vst [vmem:[%s264 + $0x2c] sm:%s256] %v287
              %v289 = vld [vmem:[%s263 + $0x30] sm:%s256]
              %290 = vst [vmem:[%s264 + $0x30] sm:%s256] %v289
              %v291 = vld [vmem:[%s263 + $0x34] sm:%s256]
              %292 = vst [vmem:[%s264 + $0x34] sm:%s256] %v291
              %v293 = vld [vmem:[%s263 + $0x38] sm:%s256]
              %294 = vst [vmem:[%s264 + $0x38] sm:%s256] %v293
              %v295 = vld [vmem:[%s263 + $0x3c] sm:%s256]
              %296 = vst [vmem:[%s264 + $0x3c] sm:%s256] %v295
              %v297 = vld [vmem:[%s263 + $0x40] sm:%s256]
              %298 = vst [vmem:[%s264 + $0x40] sm:%s256] %v297
              %v299 = vld [vmem:[%s263 + $0x44] sm:%s256]
              %300 = vst [vmem:[%s264 + $0x44] sm:%s256] %v299
              %v301 = vld [vmem:[%s263 + $0x48] sm:%s256]
              %302 = vst [vmem:[%s264 + $0x48] sm:%s256] %v301
              %v303 = vld [vmem:[%s263 + $0x4c] sm:%s256]
              %304 = vst [vmem:[%s264 + $0x4c] sm:%s256] %v303
              %v305 = vld [vmem:[%s263 + $0x50] sm:%s256]
              %306 = vst [vmem:[%s264 + $0x50] sm:%s256] %v305
              %v307 = vld [vmem:[%s263 + $0x54] sm:%s256]
              %308 = vst [vmem:[%s264 + $0x54] sm:%s256] %v307
              %v309 = vld [vmem:[%s263 + $0x58] sm:%s256]
              %310 = vst [vmem:[%s264 + $0x58] sm:%s256] %v309
              %v311 = vld [vmem:[%s263 + $0x5c] sm:%s256]
              %312 = vst [vmem:[%s264 + $0x5c] sm:%s256] %v311
              %v313 = vld [vmem:[%s263 + $0x60] sm:%s256]
              %314 = vst [vmem:[%s264 + $0x60] sm:%s256] %v313
              %v315 = vld [vmem:[%s263 + $0x64] sm:%s256]
              %316 = vst [vmem:[%s264 + $0x64] sm:%s256] %v315
              %v317 = vld [vmem:[%s263 + $0x68] sm:%s256]
              %318 = vst [vmem:[%s264 + $0x68] sm:%s256] %v317
              %v319 = vld [vmem:[%s263 + $0x78] sm:%s256]
              %320 = vst [vmem:[%s264 + $0x6c] sm:%s256] %v319
              %v321 = vld [vmem:[%s263 + $0x7c] sm:%s256]
              %322 = vst [vmem:[%s264 + $0x70] sm:%s256] %v321
              %v323 = vld [vmem:[%s263 + $0x80] sm:%s256]
              %324 = vst [vmem:[%s264 + $0x74] sm:%s256] %v323
              %v325 = vld [vmem:[%s263 + $0x84] sm:%s256]
              %326 = vst [vmem:[%s264 + $0x78] sm:%s256] %v325
              %v327 = vld [vmem:[%s263 + $0x88] sm:%s256]
              %328 = vst [vmem:[%s264 + $0x7c] sm:%s256] %v327
              %v329 = vld [vmem:[%s263 + $0x8c] sm:%s256]
              %330 = vst [vmem:[%s264 + $0x80] sm:%s256] %v329
              %v331 = vld [vmem:[%s263 + $0x90] sm:%s256]
              %332 = vst [vmem:[%s264 + $0x84] sm:%s256] %v331
              %v333 = vld [vmem:[%s263 + $0x94] sm:%s256]
              %334 = vst [vmem:[%s264 + $0x88] sm:%s256] %v333
              %v335 = vld [vmem:[%s263 + $0x98] sm:%s256]
              %336 = vst [vmem:[%s264 + $0x8c] sm:%s256] %v335
              %v337 = vld [vmem:[%s263 + $0x9c] sm:%s256]
              %338 = vst [vmem:[%s264 + $0x90] sm:%s256] %v337
              %v339 = vld [vmem:[%s263 + $0xa0] sm:%s256]
              %340 = vst [vmem:[%s264 + $0x94] sm:%s256] %v339
              %v341 = vld [vmem:[%s263 + $0xa4] sm:%s256]
              %342 = vst [vmem:[%s264 + $0x98] sm:%s256] %v341
              %v343 = vld [vmem:[%s263 + $0xa8] sm:%s256]
              %344 = vst [vmem:[%s264 + $0x9c] sm:%s256] %v343
              %v345 = vld [vmem:[%s263 + $0xac] sm:%s256]
              %346 = vst [vmem:[%s264 + $0xa0] sm:%s256] %v345
              %v347 = vld [vmem:[%s263 + $0xb0] sm:%s256]
              %348 = vst [vmem:[%s264 + $0xa4] sm:%s256] %v347
              %v349 = vld [vmem:[%s263 + $0xb4] sm:%s256]
              %350 = vst [vmem:[%s264 + $0xa8] sm:%s256] %v349
              %v351 = vld [vmem:[%s263 + $0xb8] sm:%s256]
              %352 = vst [vmem:[%s264 + $0xac] sm:%s256] %v351
              %v353 = vld [vmem:[%s263 + $0xbc] sm:%s256]
              %354 = vst [vmem:[%s264 + $0xb0] sm:%s256] %v353
              %v355 = vld [vmem:[%s263 + $0xc0] sm:%s256]
              %356 = vst [vmem:[%s264 + $0xb4] sm:%s256] %v355
              %v357 = vld [vmem:[%s263 + $0xc4] sm:%s256]
              %358 = vst [vmem:[%s264 + $0xb8] sm:%s256] %v357
              %v359 = vld [vmem:[%s263 + $0xc8] sm:%s256]
              %360 = vst [vmem:[%s264 + $0xbc] sm:%s256] %v359
              %v361 = vld [vmem:[%s263 + $0xcc] sm:%s256]
              %362 = vst [vmem:[%s264 + $0xc0] sm:%s256] %v361
              %v363 = vld [vmem:[%s263 + $0xd0] sm:%s256]
              %364 = vst [vmem:[%s264 + $0xc4] sm:%s256] %v363
              %v365 = vld [vmem:[%s263 + $0xd4] sm:%s256]
              %366 = vst [vmem:[%s264 + $0xc8] sm:%s256] %v365
              %v367 = vld [vmem:[%s263 + $0xd8] sm:%s256]
              %368 = vst [vmem:[%s264 + $0xcc] sm:%s256] %v367
              %v369 = vld [vmem:[%s263 + $0xdc] sm:%s256]
              %370 = vst [vmem:[%s264 + $0xd0] sm:%s256] %v369
              %v371 = vld [vmem:[%s263 + $0xe0] sm:%s256]
              %372 = vst [vmem:[%s264 + $0xd4] sm:%s256] %v371
              %v373 = vld [vmem:[%s263 + $0xf0] sm:%s256]
              %374 = vst [vmem:[%s264 + $0xd8] sm:%s256] %v373
              %v375 = vld [vmem:[%s263 + $0xf4] sm:%s256]
              %376 = vst [vmem:[%s264 + $0xdc] sm:%s256] %v375
              %v377 = vld [vmem:[%s263 + $0xf8] sm:%s256]
              %378 = vst [vmem:[%s264 + $0xe0] sm:%s256] %v377
              %v379 = vld [vmem:[%s263 + $0xfc] sm:%s256]
              %380 = vst [vmem:[%s264 + $0xe4] sm:%s256] %v379
              %v381 = vld [vmem:[%s263 + $0x100] sm:%s256]
              %382 = vst [vmem:[%s264 + $0xe8] sm:%s256] %v381
              %v383 = vld [vmem:[%s263 + $0x104] sm:%s256]
              %384 = vst [vmem:[%s264 + $0xec] sm:%s256] %v383
              %v385 = vld [vmem:[%s263 + $0x108] sm:%s256]
              %386 = vst [vmem:[%s264 + $0xf0] sm:%s256] %v385
              %v387 = vld [vmem:[%s263 + $0x10c] sm:%s256]
              %388 = vst [vmem:[%s264 + $0xf4] sm:%s256] %v387
              %v389 = vld [vmem:[%s263 + $0x110] sm:%s256]
              %390 = vst [vmem:[%s264 + $0xf8] sm:%s256] %v389
              %v391 = vld [vmem:[%s263 + $0x114] sm:%s256]
              %392 = vst [vmem:[%s264 + $0xfc] sm:%s256] %v391
              %v393 = vld [vmem:[%s263 + $0x118] sm:%s256]
              %394 = vst [vmem:[%s264 + $0x100] sm:%s256] %v393
              %v395 = vld [vmem:[%s263 + $0x11c] sm:%s256]
              %396 = vst [vmem:[%s264 + $0x104] sm:%s256] %v395
              %v397 = vld [vmem:[%s263 + $0x120] sm:%s256]
              %398 = vst [vmem:[%s264 + $0x108] sm:%s256] %v397
              %v399 = vld [vmem:[%s263 + $0x124] sm:%s256]
              %400 = vst [vmem:[%s264 + $0x10c] sm:%s256] %v399
              %v401 = vld [vmem:[%s263 + $0x128] sm:%s256]
              %402 = vst [vmem:[%s264 + $0x110] sm:%s256] %v401
              %v403 = vld [vmem:[%s263 + $0x12c] sm:%s256]
              %404 = vst [vmem:[%s264 + $0x114] sm:%s256] %v403
              %v405 = vld [vmem:[%s263 + $0x130] sm:%s256]
              %406 = vst [vmem:[%s264 + $0x118] sm:%s256] %v405
              %v407 = vld [vmem:[%s263 + $0x134] sm:%s256]
              %408 = vst [vmem:[%s264 + $0x11c] sm:%s256] %v407
              %v409 = vld [vmem:[%s263 + $0x138] sm:%s256]
              %410 = vst [vmem:[%s264 + $0x120] sm:%s256] %v409
              %v411 = vld [vmem:[%s263 + $0x13c] sm:%s256]
              %412 = vst [vmem:[%s264 + $0x124] sm:%s256] %v411
              %v413 = vld [vmem:[%s263 + $0x140] sm:%s256]
              %414 = vst [vmem:[%s264 + $0x128] sm:%s256] %v413
              %v415 = vld [vmem:[%s263 + $0x144] sm:%s256]
              %416 = vst [vmem:[%s264 + $0x12c] sm:%s256] %v415
              %v417 = vld [vmem:[%s263 + $0x148] sm:%s256]
              %418 = vst [vmem:[%s264 + $0x130] sm:%s256] %v417
              %v419 = vld [vmem:[%s263 + $0x14c] sm:%s256]
              %420 = vst [vmem:[%s264 + $0x134] sm:%s256] %v419
              %v421 = vld [vmem:[%s263 + $0x150] sm:%s256]
              %422 = vst [vmem:[%s264 + $0x138] sm:%s256] %v421
              %v423 = vld [vmem:[%s263 + $0x154] sm:%s256]
              %424 = vst [vmem:[%s264 + $0x13c] sm:%s256] %v423
              %v425 = vld [vmem:[%s263 + $0x158] sm:%s256]
              %426 = vst [vmem:[%s264 + $0x140] sm:%s256] %v425
              %v427 = vld [vmem:[%s263 + $0x168] sm:%s256]
              %428 = vst [vmem:[%s264 + $0x144] sm:%s256] %v427
              %v429 = vld [vmem:[%s263 + $0x16c] sm:%s256]
              %430 = vst [vmem:[%s264 + $0x148] sm:%s256] %v429
              %v431 = vld [vmem:[%s263 + $0x170] sm:%s256]
              %432 = vst [vmem:[%s264 + $0x14c] sm:%s256] %v431
              %v433 = vld [vmem:[%s263 + $0x174] sm:%s256]
              %434 = vst [vmem:[%s264 + $0x150] sm:%s256] %v433
              %v435 = vld [vmem:[%s263 + $0x178] sm:%s256]
              %436 = vst [vmem:[%s264 + $0x154] sm:%s256] %v435
              %v437 = vld [vmem:[%s263 + $0x17c] sm:%s256]
              %438 = vst [vmem:[%s264 + $0x158] sm:%s256] %v437
              %v439 = vld [vmem:[%s263 + $0x180] sm:%s256]
              %440 = vst [vmem:[%s264 + $0x15c] sm:%s256] %v439
              %v441 = vld [vmem:[%s263 + $0x184] sm:%s256]
              %442 = vst [vmem:[%s264 + $0x160] sm:%s256] %v441
              %v443 = vld [vmem:[%s263 + $0x188] sm:%s256]
              %444 = vst [vmem:[%s264 + $0x164] sm:%s256] %v443
              %v445 = vld [vmem:[%s263 + $0x18c] sm:%s256]
              %446 = vst [vmem:[%s264 + $0x168] sm:%s256] %v445
              %v447 = vld [vmem:[%s263 + $0x190] sm:%s256]
              %448 = vst [vmem:[%s264 + $0x16c] sm:%s256] %v447
              %v449 = vld [vmem:[%s263 + $0x194] sm:%s256]
              %450 = vst [vmem:[%s264 + $0x170] sm:%s256] %v449
              %v451 = vld [vmem:[%s263 + $0x198] sm:%s256]
              %452 = vst [vmem:[%s264 + $0x174] sm:%s256] %v451
              %v453 = vld [vmem:[%s263 + $0x19c] sm:%s256]
              %454 = vst [vmem:[%s264 + $0x178] sm:%s256] %v453
              %v455 = vld [vmem:[%s263 + $0x1a0] sm:%s256]
              %456 = vst [vmem:[%s264 + $0x17c] sm:%s256] %v455
              %v457 = vld [vmem:[%s263 + $0x1a4] sm:%s256]
              %458 = vst [vmem:[%s264 + $0x180] sm:%s256] %v457
              %v459 = vld [vmem:[%s263 + $0x1a8] sm:%s256]
              %460 = vst [vmem:[%s264 + $0x184] sm:%s256] %v459
              %v461 = vld [vmem:[%s263 + $0x1ac] sm:%s256]
              %462 = vst [vmem:[%s264 + $0x188] sm:%s256] %v461
              %v463 = vld [vmem:[%s263 + $0x1b0] sm:%s256]
              %464 = vst [vmem:[%s264 + $0x18c] sm:%s256] %v463
              %v465 = vld [vmem:[%s263 + $0x1b4] sm:%s256]
              %466 = vst [vmem:[%s264 + $0x190] sm:%s256] %v465
              %v467 = vld [vmem:[%s263 + $0x1b8] sm:%s256]
              %468 = vst [vmem:[%s264 + $0x194] sm:%s256] %v467
              %v469 = vld [vmem:[%s263 + $0x1bc] sm:%s256]
              %470 = vst [vmem:[%s264 + $0x198] sm:%s256] %v469
              %v471 = vld [vmem:[%s263 + $0x1c0] sm:%s256]
              %472 = vst [vmem:[%s264 + $0x19c] sm:%s256] %v471
              %v473 = vld [vmem:[%s263 + $0x1c4] sm:%s256]
              %474 = vst [vmem:[%s264 + $0x1a0] sm:%s256] %v473
              %v475 = vld [vmem:[%s263 + $0x1c8] sm:%s256]
              %476 = vst [vmem:[%s264 + $0x1a4] sm:%s256] %v475
              %v477 = vld [vmem:[%s263 + $0x1cc] sm:%s256]
              %478 = vst [vmem:[%s264 + $0x1a8] sm:%s256] %v477
              %v479 = vld [vmem:[%s263 + $0x1d0] sm:%s256]
              %480 = vst [vmem:[%s264 + $0x1ac] sm:%s256] %v479
            $region40: #{tpu_custom_call.1} parent=27 // loop_footer
              %s262 = sadd.s32 1, %s258
            $region41: #{tpu_custom_call.1} parent=27 // loop_footer_branch
              %257 = sbr.rel target = $region37
            $region42: #{tpu_custom_call.1} parent=27 // loop_exit
              _
          $region28: #{tpu_custom_call.1} parent=12 // pred_fallthru
            _
        $region13: #{tpu_custom_call.1} parent=8 // pred_fallthru
          _
        // Predicated region
        $region14: #{tpu_custom_call.1} parent=8 // pred_check
          _
        $region15: #{tpu_custom_call.1} parent=8 // pred_check_branch
          %18 = sbr.rel (0) target = $region17
        $region16: #{tpu_custom_call.1} parent=8 // pred_region
          %s20 = ssub.s32 16, 1
          loop: start=0, step=1, limit=1
          $region18: #{tpu_custom_call.1} parent=16 // loop_pre_header
            _
          $region19: #{tpu_custom_call.1} parent=16 // loop_header
            %s22 = sphi 0, %s26
            %p23 = scmp.ge.s32.totalorder %s22, 1
            %s27 = sphi %s0, %s0
            %s28 = sphi [#allocation3], [#allocation3]
          $region20: #{tpu_custom_call.1} parent=16 // loop_header_branch
            %25 = sbr.rel (%p23) target = $region24
          $region21: #{tpu_custom_call.1} parent=16 // loop_body
            %v29 = vld [vmem:[%s27] sm:%s20]
            %30 = vst [vmem:[%s28] sm:%s20] %v29
            %v31 = vld [vmem:[%s27 + $0x4] sm:%s20]
            %32 = vst [vmem:[%s28 + $0x4] sm:%s20] %v31
            %v33 = vld [vmem:[%s27 + $0x8] sm:%s20]
            %34 = vst [vmem:[%s28 + $0x8] sm:%s20] %v33
            %v35 = vld [vmem:[%s27 + $0xc] sm:%s20]
            %36 = vst [vmem:[%s28 + $0xc] sm:%s20] %v35
            %v37 = vld [vmem:[%s27 + $0x10] sm:%s20]
            %38 = vst [vmem:[%s28 + $0x10] sm:%s20] %v37
            %v39 = vld [vmem:[%s27 + $0x14] sm:%s20]
            %40 = vst [vmem:[%s28 + $0x14] sm:%s20] %v39
            %v41 = vld [vmem:[%s27 + $0x18] sm:%s20]
            %42 = vst [vmem:[%s28 + $0x18] sm:%s20] %v41
            %v43 = vld [vmem:[%s27 + $0x1c] sm:%s20]
            %44 = vst [vmem:[%s28 + $0x1c] sm:%s20] %v43
            %v45 = vld [vmem:[%s27 + $0x20] sm:%s20]
            %46 = vst [vmem:[%s28 + $0x20] sm:%s20] %v45
            %v47 = vld [vmem:[%s27 + $0x24] sm:%s20]
            %48 = vst [vmem:[%s28 + $0x24] sm:%s20] %v47
            %v49 = vld [vmem:[%s27 + $0x28] sm:%s20]
            %50 = vst [vmem:[%s28 + $0x28] sm:%s20] %v49
            %v51 = vld [vmem:[%s27 + $0x2c] sm:%s20]
            %52 = vst [vmem:[%s28 + $0x2c] sm:%s20] %v51
            %v53 = vld [vmem:[%s27 + $0x30] sm:%s20]
            %54 = vst [vmem:[%s28 + $0x30] sm:%s20] %v53
            %v55 = vld [vmem:[%s27 + $0x34] sm:%s20]
            %56 = vst [vmem:[%s28 + $0x34] sm:%s20] %v55
            %v57 = vld [vmem:[%s27 + $0x38] sm:%s20]
            %58 = vst [vmem:[%s28 + $0x38] sm:%s20] %v57
            %v59 = vld [vmem:[%s27 + $0x3c] sm:%s20]
            %60 = vst [vmem:[%s28 + $0x3c] sm:%s20] %v59
            %v61 = vld [vmem:[%s27 + $0x40] sm:%s20]
            %62 = vst [vmem:[%s28 + $0x40] sm:%s20] %v61
            %v63 = vld [vmem:[%s27 + $0x44] sm:%s20]
            %64 = vst [vmem:[%s28 + $0x44] sm:%s20] %v63
            %v65 = vld [vmem:[%s27 + $0x48] sm:%s20]
            %66 = vst [vmem:[%s28 + $0x48] sm:%s20] %v65
            %v67 = vld [vmem:[%s27 + $0x4c] sm:%s20]
            %68 = vst [vmem:[%s28 + $0x4c] sm:%s20] %v67
            %v69 = vld [vmem:[%s27 + $0x50] sm:%s20]
            %70 = vst [vmem:[%s28 + $0x50] sm:%s20] %v69
            %v71 = vld [vmem:[%s27 + $0x54] sm:%s20]
            %72 = vst [vmem:[%s28 + $0x54] sm:%s20] %v71
            %v73 = vld [vmem:[%s27 + $0x58] sm:%s20]
            %74 = vst [vmem:[%s28 + $0x58] sm:%s20] %v73
            %v75 = vld [vmem:[%s27 + $0x5c] sm:%s20]
            %76 = vst [vmem:[%s28 + $0x5c] sm:%s20] %v75
            %v77 = vld [vmem:[%s27 + $0x60] sm:%s20]
            %78 = vst [vmem:[%s28 + $0x60] sm:%s20] %v77
            %v79 = vld [vmem:[%s27 + $0x64] sm:%s20]
            %80 = vst [vmem:[%s28 + $0x64] sm:%s20] %v79
            %v81 = vld [vmem:[%s27 + $0x68] sm:%s20]
            %82 = vst [vmem:[%s28 + $0x68] sm:%s20] %v81
            %v83 = vld [vmem:[%s27 + $0x78] sm:%s20]
            %84 = vst [vmem:[%s28 + $0x6c] sm:%s20] %v83
            %v85 = vld [vmem:[%s27 + $0x7c] sm:%s20]
            %86 = vst [vmem:[%s28 + $0x70] sm:%s20] %v85
            %v87 = vld [vmem:[%s27 + $0x80] sm:%s20]
            %88 = vst [vmem:[%s28 + $0x74] sm:%s20] %v87
            %v89 = vld [vmem:[%s27 + $0x84] sm:%s20]
            %90 = vst [vmem:[%s28 + $0x78] sm:%s20] %v89
            %v91 = vld [vmem:[%s27 + $0x88] sm:%s20]
            %92 = vst [vmem:[%s28 + $0x7c] sm:%s20] %v91
            %v93 = vld [vmem:[%s27 + $0x8c] sm:%s20]
            %94 = vst [vmem:[%s28 + $0x80] sm:%s20] %v93
            %v95 = vld [vmem:[%s27 + $0x90] sm:%s20]
            %96 = vst [vmem:[%s28 + $0x84] sm:%s20] %v95
            %v97 = vld [vmem:[%s27 + $0x94] sm:%s20]
            %98 = vst [vmem:[%s28 + $0x88] sm:%s20] %v97
            %v99 = vld [vmem:[%s27 + $0x98] sm:%s20]
            %100 = vst [vmem:[%s28 + $0x8c] sm:%s20] %v99
            %v101 = vld [vmem:[%s27 + $0x9c] sm:%s20]
            %102 = vst [vmem:[%s28 + $0x90] sm:%s20] %v101
            %v103 = vld [vmem:[%s27 + $0xa0] sm:%s20]
            %104 = vst [vmem:[%s28 + $0x94] sm:%s20] %v103
            %v105 = vld [vmem:[%s27 + $0xa4] sm:%s20]
            %106 = vst [vmem:[%s28 + $0x98] sm:%s20] %v105
            %v107 = vld [vmem:[%s27 + $0xa8] sm:%s20]
            %108 = vst [vmem:[%s28 + $0x9c] sm:%s20] %v107
            %v109 = vld [vmem:[%s27 + $0xac] sm:%s20]
            %110 = vst [vmem:[%s28 + $0xa0] sm:%s20] %v109
            %v111 = vld [vmem:[%s27 + $0xb0] sm:%s20]
            %112 = vst [vmem:[%s28 + $0xa4] sm:%s20] %v111
            %v113 = vld [vmem:[%s27 + $0xb4] sm:%s20]
            %114 = vst [vmem:[%s28 + $0xa8] sm:%s20] %v113
            %v115 = vld [vmem:[%s27 + $0xb8] sm:%s20]
            %116 = vst [vmem:[%s28 + $0xac] sm:%s20] %v115
            %v117 = vld [vmem:[%s27 + $0xbc] sm:%s20]
            %118 = vst [vmem:[%s28 + $0xb0] sm:%s20] %v117
            %v119 = vld [vmem:[%s27 + $0xc0] sm:%s20]
            %120 = vst [vmem:[%s28 + $0xb4] sm:%s20] %v119
            %v121 = vld [vmem:[%s27 + $0xc4] sm:%s20]
            %122 = vst [vmem:[%s28 + $0xb8] sm:%s20] %v121
            %v123 = vld [vmem:[%s27 + $0xc8] sm:%s20]
            %124 = vst [vmem:[%s28 + $0xbc] sm:%s20] %v123
            %v125 = vld [vmem:[%s27 + $0xcc] sm:%s20]
            %126 = vst [vmem:[%s28 + $0xc0] sm:%s20] %v125
            %v127 = vld [vmem:[%s27 + $0xd0] sm:%s20]
            %128 = vst [vmem:[%s28 + $0xc4] sm:%s20] %v127
            %v129 = vld [vmem:[%s27 + $0xd4] sm:%s20]
            %130 = vst [vmem:[%s28 + $0xc8] sm:%s20] %v129
            %v131 = vld [vmem:[%s27 + $0xd8] sm:%s20]
            %132 = vst [vmem:[%s28 + $0xcc] sm:%s20] %v131
            %v133 = vld [vmem:[%s27 + $0xdc] sm:%s20]
            %134 = vst [vmem:[%s28 + $0xd0] sm:%s20] %v133
            %v135 = vld [vmem:[%s27 + $0xe0] sm:%s20]
            %136 = vst [vmem:[%s28 + $0xd4] sm:%s20] %v135
            %v137 = vld [vmem:[%s27 + $0xf0] sm:%s20]
            %138 = vst [vmem:[%s28 + $0xd8] sm:%s20] %v137
            %v139 = vld [vmem:[%s27 + $0xf4] sm:%s20]
            %140 = vst [vmem:[%s28 + $0xdc] sm:%s20] %v139
            %v141 = vld [vmem:[%s27 + $0xf8] sm:%s20]
            %142 = vst [vmem:[%s28 + $0xe0] sm:%s20] %v141
            %v143 = vld [vmem:[%s27 + $0xfc] sm:%s20]
            %144 = vst [vmem:[%s28 + $0xe4] sm:%s20] %v143
            %v145 = vld [vmem:[%s27 + $0x100] sm:%s20]
            %146 = vst [vmem:[%s28 + $0xe8] sm:%s20] %v145
            %v147 = vld [vmem:[%s27 + $0x104] sm:%s20]
            %148 = vst [vmem:[%s28 + $0xec] sm:%s20] %v147
            %v149 = vld [vmem:[%s27 + $0x108] sm:%s20]
            %150 = vst [vmem:[%s28 + $0xf0] sm:%s20] %v149
            %v151 = vld [vmem:[%s27 + $0x10c] sm:%s20]
            %152 = vst [vmem:[%s28 + $0xf4] sm:%s20] %v151
            %v153 = vld [vmem:[%s27 + $0x110] sm:%s20]
            %154 = vst [vmem:[%s28 + $0xf8] sm:%s20] %v153
            %v155 = vld [vmem:[%s27 + $0x114] sm:%s20]
            %156 = vst [vmem:[%s28 + $0xfc] sm:%s20] %v155
            %v157 = vld [vmem:[%s27 + $0x118] sm:%s20]
            %158 = vst [vmem:[%s28 + $0x100] sm:%s20] %v157
            %v159 = vld [vmem:[%s27 + $0x11c] sm:%s20]
            %160 = vst [vmem:[%s28 + $0x104] sm:%s20] %v159
            %v161 = vld [vmem:[%s27 + $0x120] sm:%s20]
            %162 = vst [vmem:[%s28 + $0x108] sm:%s20] %v161
            %v163 = vld [vmem:[%s27 + $0x124] sm:%s20]
            %164 = vst [vmem:[%s28 + $0x10c] sm:%s20] %v163
            %v165 = vld [vmem:[%s27 + $0x128] sm:%s20]
            %166 = vst [vmem:[%s28 + $0x110] sm:%s20] %v165
            %v167 = vld [vmem:[%s27 + $0x12c] sm:%s20]
            %168 = vst [vmem:[%s28 + $0x114] sm:%s20] %v167
            %v169 = vld [vmem:[%s27 + $0x130] sm:%s20]
            %170 = vst [vmem:[%s28 + $0x118] sm:%s20] %v169
            %v171 = vld [vmem:[%s27 + $0x134] sm:%s20]
            %172 = vst [vmem:[%s28 + $0x11c] sm:%s20] %v171
            %v173 = vld [vmem:[%s27 + $0x138] sm:%s20]
            %174 = vst [vmem:[%s28 + $0x120] sm:%s20] %v173
            %v175 = vld [vmem:[%s27 + $0x13c] sm:%s20]
            %176 = vst [vmem:[%s28 + $0x124] sm:%s20] %v175
            %v177 = vld [vmem:[%s27 + $0x140] sm:%s20]
            %178 = vst [vmem:[%s28 + $0x128] sm:%s20] %v177
            %v179 = vld [vmem:[%s27 + $0x144] sm:%s20]
            %180 = vst [vmem:[%s28 + $0x12c] sm:%s20] %v179
            %v181 = vld [vmem:[%s27 + $0x148] sm:%s20]
            %182 = vst [vmem:[%s28 + $0x130] sm:%s20] %v181
            %v183 = vld [vmem:[%s27 + $0x14c] sm:%s20]
            %184 = vst [vmem:[%s28 + $0x134] sm:%s20] %v183
            %v185 = vld [vmem:[%s27 + $0x150] sm:%s20]
            %186 = vst [vmem:[%s28 + $0x138] sm:%s20] %v185
            %v187 = vld [vmem:[%s27 + $0x154] sm:%s20]
            %188 = vst [vmem:[%s28 + $0x13c] sm:%s20] %v187
            %v189 = vld [vmem:[%s27 + $0x158] sm:%s20]
            %190 = vst [vmem:[%s28 + $0x140] sm:%s20] %v189
            %v191 = vld [vmem:[%s27 + $0x168] sm:%s20]
            %192 = vst [vmem:[%s28 + $0x144] sm:%s20] %v191
            %v193 = vld [vmem:[%s27 + $0x16c] sm:%s20]
            %194 = vst [vmem:[%s28 + $0x148] sm:%s20] %v193
            %v195 = vld [vmem:[%s27 + $0x170] sm:%s20]
            %196 = vst [vmem:[%s28 + $0x14c] sm:%s20] %v195
            %v197 = vld [vmem:[%s27 + $0x174] sm:%s20]
            %198 = vst [vmem:[%s28 + $0x150] sm:%s20] %v197
            %v199 = vld [vmem:[%s27 + $0x178] sm:%s20]
            %200 = vst [vmem:[%s28 + $0x154] sm:%s20] %v199
            %v201 = vld [vmem:[%s27 + $0x17c] sm:%s20]
            %202 = vst [vmem:[%s28 + $0x158] sm:%s20] %v201
            %v203 = vld [vmem:[%s27 + $0x180] sm:%s20]
            %204 = vst [vmem:[%s28 + $0x15c] sm:%s20] %v203
            %v205 = vld [vmem:[%s27 + $0x184] sm:%s20]
            %206 = vst [vmem:[%s28 + $0x160] sm:%s20] %v205
            %v207 = vld [vmem:[%s27 + $0x188] sm:%s20]
            %208 = vst [vmem:[%s28 + $0x164] sm:%s20] %v207
            %v209 = vld [vmem:[%s27 + $0x18c] sm:%s20]
            %210 = vst [vmem:[%s28 + $0x168] sm:%s20] %v209
            %v211 = vld [vmem:[%s27 + $0x190] sm:%s20]
            %212 = vst [vmem:[%s28 + $0x16c] sm:%s20] %v211
            %v213 = vld [vmem:[%s27 + $0x194] sm:%s20]
            %214 = vst [vmem:[%s28 + $0x170] sm:%s20] %v213
            %v215 = vld [vmem:[%s27 + $0x198] sm:%s20]
            %216 = vst [vmem:[%s28 + $0x174] sm:%s20] %v215
            %v217 = vld [vmem:[%s27 + $0x19c] sm:%s20]
            %218 = vst [vmem:[%s28 + $0x178] sm:%s20] %v217
            %v219 = vld [vmem:[%s27 + $0x1a0] sm:%s20]
            %220 = vst [vmem:[%s28 + $0x17c] sm:%s20] %v219
            %v221 = vld [vmem:[%s27 + $0x1a4] sm:%s20]
            %222 = vst [vmem:[%s28 + $0x180] sm:%s20] %v221
            %v223 = vld [vmem:[%s27 + $0x1a8] sm:%s20]
            %224 = vst [vmem:[%s28 + $0x184] sm:%s20] %v223
            %v225 = vld [vmem:[%s27 + $0x1ac] sm:%s20]
            %226 = vst [vmem:[%s28 + $0x188] sm:%s20] %v225
            %v227 = vld [vmem:[%s27 + $0x1b0] sm:%s20]
            %228 = vst [vmem:[%s28 + $0x18c] sm:%s20] %v227
            %v229 = vld [vmem:[%s27 + $0x1b4] sm:%s20]
            %230 = vst [vmem:[%s28 + $0x190] sm:%s20] %v229
            %v231 = vld [vmem:[%s27 + $0x1b8] sm:%s20]
            %232 = vst [vmem:[%s28 + $0x194] sm:%s20] %v231
            %v233 = vld [vmem:[%s27 + $0x1bc] sm:%s20]
            %234 = vst [vmem:[%s28 + $0x198] sm:%s20] %v233
            %v235 = vld [vmem:[%s27 + $0x1c0] sm:%s20]
            %236 = vst [vmem:[%s28 + $0x19c] sm:%s20] %v235
            %v237 = vld [vmem:[%s27 + $0x1c4] sm:%s20]
            %238 = vst [vmem:[%s28 + $0x1a0] sm:%s20] %v237
            %v239 = vld [vmem:[%s27 + $0x1c8] sm:%s20]
            %240 = vst [vmem:[%s28 + $0x1a4] sm:%s20] %v239
            %v241 = vld [vmem:[%s27 + $0x1cc] sm:%s20]
            %242 = vst [vmem:[%s28 + $0x1a8] sm:%s20] %v241
            %v243 = vld [vmem:[%s27 + $0x1d0] sm:%s20]
            %244 = vst [vmem:[%s28 + $0x1ac] sm:%s20] %v243
          $region22: #{tpu_custom_call.1} parent=16 // loop_footer
            %s26 = sadd.s32 1, %s22
          $region23: #{tpu_custom_call.1} parent=16 // loop_footer_branch
            %21 = sbr.rel target = $region19
          $region24: #{tpu_custom_call.1} parent=16 // loop_exit
            _
        $region17: #{tpu_custom_call.1} parent=8 // pred_fallthru
          _
      $region9: #{tpu_custom_call.1} parent=4 // pred_fallthru
        _
      %481 = vnop
    $region5: #{tpu_custom_call.1} parent=1 // pred_fallthru
      _
    // Predicated region
    $region43: #{tpu_custom_call.1} parent=1 // pred_check
      _
    $region44: #{tpu_custom_call.1} parent=1 // pred_check_branch
      %483 = sbr.rel (0) target = $region46
    $region45: #{tpu_custom_call.1} parent=1 // pred_region
      %s484 = sadd.s32 0, 1
      %s485 = smul.u32 %s484, 9
      %s486 = smul.u32 3, %s485
      %s487 = smul.addr %s486, 4
      %s488 = scalar_lea.vmem %s1, %s487
      // Predicated region
      $region47: #{tpu_custom_call.1} parent=45 // pred_check
        _
      $region48: #{tpu_custom_call.1} parent=45 // pred_check_branch
        %490 = sbr.rel (0) target = $region50
      $region49: #{tpu_custom_call.1} parent=45 // pred_region
        // Predicated region
        $region51: #{tpu_custom_call.1} parent=49 // pred_check
          _
        $region52: #{tpu_custom_call.1} parent=49 // pred_check_branch
          %492 = sbr.rel target = $region54
        $region53: #{tpu_custom_call.1} parent=49 // pred_region
          // Predicated region
          $region66: #{tpu_custom_call.1} parent=53 // pred_check
            _
          $region67: #{tpu_custom_call.1} parent=53 // pred_check_branch
            %530 = sbr.rel (0) target = $region69
          $region68: #{tpu_custom_call.1} parent=53 // pred_region
            loop: start=0, step=1, limit=1
            $region70: #{tpu_custom_call.1} parent=68 // loop_pre_header
              _
            $region71: #{tpu_custom_call.1} parent=68 // loop_header
              %s532 = sphi 0, %s536
              %p533 = scmp.ge.s32.totalorder %s532, 1
              %s537 = sphi %s488, %s488
              %s538 = sphi [#allocation4], [#allocation4]
            $region72: #{tpu_custom_call.1} parent=68 // loop_header_branch
              %535 = sbr.rel (%p533) target = $region76
            $region73: #{tpu_custom_call.1} parent=68 // loop_body
              _
            $region74: #{tpu_custom_call.1} parent=68 // loop_footer
              %s536 = sadd.s32 1, %s532
            $region75: #{tpu_custom_call.1} parent=68 // loop_footer_branch
              %531 = sbr.rel target = $region71
            $region76: #{tpu_custom_call.1} parent=68 // loop_exit
              _
            %s540 = ssub.s32 16, 1
            loop: start=0, step=1, limit=1
            $region77: #{tpu_custom_call.1} parent=68 // loop_pre_header
              _
            $region78: #{tpu_custom_call.1} parent=68 // loop_header
              %s542 = sphi 0, %s546
              %p543 = scmp.ge.s32.totalorder %s542, 1
              %s547 = sphi %s488, %s488
              %s548 = sphi [#allocation4], [#allocation4]
            $region79: #{tpu_custom_call.1} parent=68 // loop_header_branch
              %545 = sbr.rel (%p543) target = $region83
            $region80: #{tpu_custom_call.1} parent=68 // loop_body
              %v549 = vld [vmem:[%s547] sm:%s540]
              %550 = vst [vmem:[%s548] sm:%s540] %v549
              %v551 = vld [vmem:[%s547 + $0x4] sm:%s540]
              %552 = vst [vmem:[%s548 + $0x4] sm:%s540] %v551
              %v553 = vld [vmem:[%s547 + $0x8] sm:%s540]
              %554 = vst [vmem:[%s548 + $0x8] sm:%s540] %v553
              %v555 = vld [vmem:[%s547 + $0x78] sm:%s540]
              %556 = vst [vmem:[%s548 + $0xc] sm:%s540] %v555
              %v557 = vld [vmem:[%s547 + $0x7c] sm:%s540]
              %558 = vst [vmem:[%s548 + $0x10] sm:%s540] %v557
              %v559 = vld [vmem:[%s547 + $0x80] sm:%s540]
              %560 = vst [vmem:[%s548 + $0x14] sm:%s540] %v559
              %v561 = vld [vmem:[%s547 + $0xf0] sm:%s540]
              %562 = vst [vmem:[%s548 + $0x18] sm:%s540] %v561
              %v563 = vld [vmem:[%s547 + $0xf4] sm:%s540]
              %564 = vst [vmem:[%s548 + $0x1c] sm:%s540] %v563
              %v565 = vld [vmem:[%s547 + $0xf8] sm:%s540]
              %566 = vst [vmem:[%s548 + $0x20] sm:%s540] %v565
              %v567 = vld [vmem:[%s547 + $0x168] sm:%s540]
              %568 = vst [vmem:[%s548 + $0x24] sm:%s540] %v567
              %v569 = vld [vmem:[%s547 + $0x16c] sm:%s540]
              %570 = vst [vmem:[%s548 + $0x28] sm:%s540] %v569
              %v571 = vld [vmem:[%s547 + $0x170] sm:%s540]
              %572 = vst [vmem:[%s548 + $0x2c] sm:%s540] %v571
            $region81: #{tpu_custom_call.1} parent=68 // loop_footer
              %s546 = sadd.s32 1, %s542
            $region82: #{tpu_custom_call.1} parent=68 // loop_footer_branch
              %541 = sbr.rel target = $region78
            $region83: #{tpu_custom_call.1} parent=68 // loop_exit
              _
          $region69: #{tpu_custom_call.1} parent=53 // pred_fallthru
            _
        $region54: #{tpu_custom_call.1} parent=49 // pred_fallthru
          _
        // Predicated region
        $region55: #{tpu_custom_call.1} parent=49 // pred_check
          _
        $region56: #{tpu_custom_call.1} parent=49 // pred_check_branch
          %494 = sbr.rel (0) target = $region58
        $region57: #{tpu_custom_call.1} parent=49 // pred_region
          %s496 = ssub.s32 16, 1
          loop: start=0, step=1, limit=1
          $region59: #{tpu_custom_call.1} parent=57 // loop_pre_header
            _
          $region60: #{tpu_custom_call.1} parent=57 // loop_header
            %s498 = sphi 0, %s502
            %p499 = scmp.ge.s32.totalorder %s498, 1
            %s503 = sphi %s488, %s488
            %s504 = sphi [#allocation4], [#allocation4]
          $region61: #{tpu_custom_call.1} parent=57 // loop_header_branch
            %501 = sbr.rel (%p499) target = $region65
          $region62: #{tpu_custom_call.1} parent=57 // loop_body
            %v505 = vld [vmem:[%s503] sm:%s496]
            %506 = vst [vmem:[%s504] sm:%s496] %v505
            %v507 = vld [vmem:[%s503 + $0x4] sm:%s496]
            %508 = vst [vmem:[%s504 + $0x4] sm:%s496] %v507
            %v509 = vld [vmem:[%s503 + $0x8] sm:%s496]
            %510 = vst [vmem:[%s504 + $0x8] sm:%s496] %v509
            %v511 = vld [vmem:[%s503 + $0x78] sm:%s496]
            %512 = vst [vmem:[%s504 + $0xc] sm:%s496] %v511
            %v513 = vld [vmem:[%s503 + $0x7c] sm:%s496]
            %514 = vst [vmem:[%s504 + $0x10] sm:%s496] %v513
            %v515 = vld [vmem:[%s503 + $0x80] sm:%s496]
            %516 = vst [vmem:[%s504 + $0x14] sm:%s496] %v515
            %v517 = vld [vmem:[%s503 + $0xf0] sm:%s496]
            %518 = vst [vmem:[%s504 + $0x18] sm:%s496] %v517
            %v519 = vld [vmem:[%s503 + $0xf4] sm:%s496]
            %520 = vst [vmem:[%s504 + $0x1c] sm:%s496] %v519
            %v521 = vld [vmem:[%s503 + $0xf8] sm:%s496]
            %522 = vst [vmem:[%s504 + $0x20] sm:%s496] %v521
            %v523 = vld [vmem:[%s503 + $0x168] sm:%s496]
            %524 = vst [vmem:[%s504 + $0x24] sm:%s496] %v523
            %v525 = vld [vmem:[%s503 + $0x16c] sm:%s496]
            %526 = vst [vmem:[%s504 + $0x28] sm:%s496] %v525
            %v527 = vld [vmem:[%s503 + $0x170] sm:%s496]
            %528 = vst [vmem:[%s504 + $0x2c] sm:%s496] %v527
          $region63: #{tpu_custom_call.1} parent=57 // loop_footer
            %s502 = sadd.s32 1, %s498
          $region64: #{tpu_custom_call.1} parent=57 // loop_footer_branch
            %497 = sbr.rel target = $region60
          $region65: #{tpu_custom_call.1} parent=57 // loop_exit
            _
        $region58: #{tpu_custom_call.1} parent=49 // pred_fallthru
          _
      $region50: #{tpu_custom_call.1} parent=45 // pred_fallthru
        _
      %573 = vnop
    $region46: #{tpu_custom_call.1} parent=1 // pred_fallthru
      _
    // Predicated region
    $region84: #{tpu_custom_call.1} parent=1 // pred_check
      _
    $region85: #{tpu_custom_call.1} parent=1 // pred_check_branch
      %575 = sbr.rel (0) target = $region87
    $region86: #{tpu_custom_call.1} parent=1 // pred_region
      _
    $region87: #{tpu_custom_call.1} parent=1 // pred_fallthru
      _
    // Predicated region
    $region88: #{tpu_custom_call.1} parent=1 // pred_check
      _
    $region89: #{tpu_custom_call.1} parent=1 // pred_check_branch
      %577 = sbr.rel (0) target = $region91
    $region90: #{tpu_custom_call.1} parent=1 // pred_region
      _
    $region91: #{tpu_custom_call.1} parent=1 // pred_fallthru
      _
    // Predicated region
    $region92: #{tpu_custom_call.1} parent=1 // pred_check
      _
    $region93: #{tpu_custom_call.1} parent=1 // pred_check_branch
      %579 = sbr.rel (0) target = $region95
    $region94: #{tpu_custom_call.1} parent=1 // pred_region
      _
    $region95: #{tpu_custom_call.1} parent=1 // pred_fallthru
      _
    // Predicated region
    $region96: #{tpu_custom_call.1} parent=1 // pred_check
      _
    $region97: #{tpu_custom_call.1} parent=1 // pred_check_branch
      %581 = sbr.rel (0) target = $region99
    $region98: #{tpu_custom_call.1} parent=1 // pred_region
      _
    $region99: #{tpu_custom_call.1} parent=1 // pred_fallthru
      _
    // Predicated region
    $region100: #{tpu_custom_call.1} parent=1 // pred_check
      _
    $region101: #{tpu_custom_call.1} parent=1 // pred_check_branch
      %583 = sbr.rel (0) target = $region103
    $region102: #{tpu_custom_call.1} parent=1 // pred_region
      _
    $region103: #{tpu_custom_call.1} parent=1 // pred_fallthru
      _
    // Predicated region
    $region104: #{tpu_custom_call.1} parent=1 // pred_check
      _
    $region105: #{tpu_custom_call.1} parent=1 // pred_check_branch
      %585 = sbr.rel (0) target = $region107
    $region106: #{tpu_custom_call.1} parent=1 // pred_region
      _
    $region107: #{tpu_custom_call.1} parent=1 // pred_fallthru
      _
    %s586 = sadd.s32 0, 1
    %s587 = smul.u32 %s586, 9
    %s588 = smul.u32 3, %s587
    %v590 = vld [vmem:[#allocation3] sm:$0xf]
    %v591 = vld [vmem:[#allocation3 + $0x4] sm:$0xf]
    %v592 = vld [vmem:[#allocation3 + $0x8] sm:$0xf]
    %v593 = vld [vmem:[#allocation3 + $0xc] sm:$0xf]
    %v594 = vld [vmem:[#allocation3 + $0x10] sm:$0xf]
    %v595 = vld [vmem:[#allocation3 + $0x14] sm:$0xf]
    %v596 = vld [vmem:[#allocation3 + $0x18] sm:$0xf]
    %v597 = vld [vmem:[#allocation3 + $0x1c] sm:$0xf]
    %v598 = vld [vmem:[#allocation3 + $0x20] sm:$0xf]
    %v599 = vld [vmem:[#allocation3 + $0x24] sm:$0xf]
    %v600 = vld [vmem:[#allocation3 + $0x28] sm:$0xf]
    %v601 = vld [vmem:[#allocation3 + $0x2c] sm:$0xf]
    %v602 = vld [vmem:[#allocation3 + $0x30] sm:$0xf]
    %v603 = vld [vmem:[#allocation3 + $0x34] sm:$0xf]
    %v604 = vld [vmem:[#allocation3 + $0x38] sm:$0xf]
    %v605 = vld [vmem:[#allocation3 + $0x3c] sm:$0xf]
    %v606 = vld [vmem:[#allocation3 + $0x40] sm:$0xf]
    %v607 = vld [vmem:[#allocation3 + $0x44] sm:$0xf]
    %v608 = vld [vmem:[#allocation3 + $0x48] sm:$0xf]
    %v609 = vld [vmem:[#allocation3 + $0x4c] sm:$0xf]
    %v610 = vld [vmem:[#allocation3 + $0x50] sm:$0xf]
    %v611 = vld [vmem:[#allocation3 + $0x54] sm:$0xf]
    %v612 = vld [vmem:[#allocation3 + $0x58] sm:$0xf]
    %v613 = vld [vmem:[#allocation3 + $0x5c] sm:$0xf]
    %v614 = vld [vmem:[#allocation3 + $0x60] sm:$0xf]
    %v615 = vld [vmem:[#allocation3 + $0x64] sm:$0xf]
    %v616 = vld [vmem:[#allocation3 + $0x68] sm:$0xf]
    %v617 = vld [vmem:[#allocation3 + $0x6c] sm:$0xf]
    %v618 = vld [vmem:[#allocation3 + $0x70] sm:$0xf]
    %v619 = vld [vmem:[#allocation3 + $0x74] sm:$0xf]
    %v620 = vld [vmem:[#allocation3 + $0x78] sm:$0xf]
    %v621 = vld [vmem:[#allocation3 + $0x7c] sm:$0xf]
    %v622 = vld [vmem:[#allocation3 + $0x80] sm:$0xf]
    %v623 = vld [vmem:[#allocation3 + $0x84] sm:$0xf]
    %v624 = vld [vmem:[#allocation3 + $0x88] sm:$0xf]
    %v625 = vld [vmem:[#allocation3 + $0x8c] sm:$0xf]
    %v626 = vld [vmem:[#allocation3 + $0x90] sm:$0xf]
    %v627 = vld [vmem:[#allocation3 + $0x94] sm:$0xf]
    %v628 = vld [vmem:[#allocation3 + $0x98] sm:$0xf]
    %v629 = vld [vmem:[#allocation3 + $0x9c] sm:$0xf]
    %v630 = vld [vmem:[#allocation3 + $0xa0] sm:$0xf]
    %v631 = vld [vmem:[#allocation3 + $0xa4] sm:$0xf]
    %v632 = vld [vmem:[#allocation3 + $0xa8] sm:$0xf]
    %v633 = vld [vmem:[#allocation3 + $0xac] sm:$0xf]
    %v634 = vld [vmem:[#allocation3 + $0xb0] sm:$0xf]
    %v635 = vld [vmem:[#allocation3 + $0xb4] sm:$0xf]
    %v636 = vld [vmem:[#allocation3 + $0xb8] sm:$0xf]
    %v637 = vld [vmem:[#allocation3 + $0xbc] sm:$0xf]
    %v638 = vld [vmem:[#allocation3 + $0xc0] sm:$0xf]
    %v639 = vld [vmem:[#allocation3 + $0xc4] sm:$0xf]
    %v640 = vld [vmem:[#allocation3 + $0xc8] sm:$0xf]
    %v641 = vld [vmem:[#allocation3 + $0xcc] sm:$0xf]
    %v642 = vld [vmem:[#allocation3 + $0xd0] sm:$0xf]
    %v643 = vld [vmem:[#allocation3 + $0xd4] sm:$0xf]
    %v644 = vld [vmem:[#allocation3 + $0xd8] sm:$0xf]
    %v645 = vld [vmem:[#allocation3 + $0xdc] sm:$0xf]
    %v646 = vld [vmem:[#allocation3 + $0xe0] sm:$0xf]
    %v647 = vld [vmem:[#allocation3 + $0xe4] sm:$0xf]
    %v648 = vld [vmem:[#allocation3 + $0xe8] sm:$0xf]
    %v649 = vld [vmem:[#allocation3 + $0xec] sm:$0xf]
    %v650 = vld [vmem:[#allocation3 + $0xf0] sm:$0xf]
    %v651 = vld [vmem:[#allocation3 + $0xf4] sm:$0xf]
    %v652 = vld [vmem:[#allocation3 + $0xf8] sm:$0xf]
    %v653 = vld [vmem:[#allocation3 + $0xfc] sm:$0xf]
    %v654 = vld [vmem:[#allocation3 + $0x100] sm:$0xf]
    %v655 = vld [vmem:[#allocation3 + $0x104] sm:$0xf]
    %v656 = vld [vmem:[#allocation3 + $0x108] sm:$0xf]
    %v657 = vld [vmem:[#allocation3 + $0x10c] sm:$0xf]
    %v658 = vld [vmem:[#allocation3 + $0x110] sm:$0xf]
    %v659 = vld [vmem:[#allocation3 + $0x114] sm:$0xf]
    %v660 = vld [vmem:[#allocation3 + $0x118] sm:$0xf]
    %v661 = vld [vmem:[#allocation3 + $0x11c] sm:$0xf]
    %v662 = vld [vmem:[#allocation3 + $0x120] sm:$0xf]
    %v663 = vld [vmem:[#allocation3 + $0x124] sm:$0xf]
    %v664 = vld [vmem:[#allocation3 + $0x128] sm:$0xf]
    %v665 = vld [vmem:[#allocation3 + $0x12c] sm:$0xf]
    %v666 = vld [vmem:[#allocation3 + $0x130] sm:$0xf]
    %v667 = vld [vmem:[#allocation3 + $0x134] sm:$0xf]
    %v668 = vld [vmem:[#allocation3 + $0x138] sm:$0xf]
    %v669 = vld [vmem:[#allocation3 + $0x13c] sm:$0xf]
    %v670 = vld [vmem:[#allocation3 + $0x140] sm:$0xf]
    %v671 = vld [vmem:[#allocation3 + $0x144] sm:$0xf]
    %v672 = vld [vmem:[#allocation3 + $0x148] sm:$0xf]
    %v673 = vld [vmem:[#allocation3 + $0x14c] sm:$0xf]
    %v674 = vld [vmem:[#allocation3 + $0x150] sm:$0xf]
    %v675 = vld [vmem:[#allocation3 + $0x154] sm:$0xf]
    %v676 = vld [vmem:[#allocation3 + $0x158] sm:$0xf]
    %v677 = vld [vmem:[#allocation3 + $0x15c] sm:$0xf]
    %v678 = vld [vmem:[#allocation3 + $0x160] sm:$0xf]
    %v679 = vld [vmem:[#allocation3 + $0x164] sm:$0xf]
    %v680 = vld [vmem:[#allocation3 + $0x168] sm:$0xf]
    %v681 = vld [vmem:[#allocation3 + $0x16c] sm:$0xf]
    %v682 = vld [vmem:[#allocation3 + $0x170] sm:$0xf]
    %v683 = vld [vmem:[#allocation3 + $0x174] sm:$0xf]
    %v684 = vld [vmem:[#allocation3 + $0x178] sm:$0xf]
    %v685 = vld [vmem:[#allocation3 + $0x17c] sm:$0xf]
    %v686 = vld [vmem:[#allocation3 + $0x180] sm:$0xf]
    %v687 = vld [vmem:[#allocation3 + $0x184] sm:$0xf]
    %v688 = vld [vmem:[#allocation3 + $0x188] sm:$0xf]
    %v689 = vld [vmem:[#allocation3 + $0x18c] sm:$0xf]
    %v690 = vld [vmem:[#allocation3 + $0x190] sm:$0xf]
    %v691 = vld [vmem:[#allocation3 + $0x194] sm:$0xf]
    %v692 = vld [vmem:[#allocation3 + $0x198] sm:$0xf]
    %v693 = vld [vmem:[#allocation3 + $0x19c] sm:$0xf]
    %v694 = vld [vmem:[#allocation3 + $0x1a0] sm:$0xf]
    %v695 = vld [vmem:[#allocation3 + $0x1a4] sm:$0xf]
    %v696 = vld [vmem:[#allocation3 + $0x1a8] sm:$0xf]
    %v697 = vld [vmem:[#allocation3 + $0x1ac] sm:$0xf]
    %vm698 = vcmask 60416
    %699 = vst.msk [vmem:[#allocation2] sm:$0xf] %vm698, %v590
    %700 = vst.msk [vmem:[#allocation2 + $0x4] sm:$0xf] %vm698, %v591
    %701 = vst.msk [vmem:[#allocation2 + $0x8] sm:$0xf] %vm698, %v592
    %702 = vst.msk [vmem:[#allocation2 + $0xc] sm:$0xf] %vm698, %v593
    %703 = vst.msk [vmem:[#allocation2 + $0x10] sm:$0xf] %vm698, %v594
    %704 = vst.msk [vmem:[#allocation2 + $0x14] sm:$0xf] %vm698, %v595
    %705 = vst.msk [vmem:[#allocation2 + $0x18] sm:$0xf] %vm698, %v596
    %706 = vst.msk [vmem:[#allocation2 + $0x1c] sm:$0xf] %vm698, %v597
    %707 = vst.msk [vmem:[#allocation2 + $0x20] sm:$0xf] %vm698, %v598
    %708 = vst.msk [vmem:[#allocation2 + $0x24] sm:$0xf] %vm698, %v599
    %709 = vst.msk [vmem:[#allocation2 + $0x28] sm:$0xf] %vm698, %v600
    %710 = vst.msk [vmem:[#allocation2 + $0x2c] sm:$0xf] %vm698, %v601
    %711 = vst.msk [vmem:[#allocation2 + $0x30] sm:$0xf] %vm698, %v602
    %712 = vst.msk [vmem:[#allocation2 + $0x34] sm:$0xf] %vm698, %v603
    %713 = vst.msk [vmem:[#allocation2 + $0x38] sm:$0xf] %vm698, %v604
    %714 = vst.msk [vmem:[#allocation2 + $0x3c] sm:$0xf] %vm698, %v605
    %715 = vst.msk [vmem:[#allocation2 + $0x40] sm:$0xf] %vm698, %v606
    %716 = vst.msk [vmem:[#allocation2 + $0x44] sm:$0xf] %vm698, %v607
    %717 = vst.msk [vmem:[#allocation2 + $0x48] sm:$0xf] %vm698, %v608
    %718 = vst.msk [vmem:[#allocation2 + $0x4c] sm:$0xf] %vm698, %v609
    %719 = vst.msk [vmem:[#allocation2 + $0x50] sm:$0xf] %vm698, %v610
    %720 = vst.msk [vmem:[#allocation2 + $0x54] sm:$0xf] %vm698, %v611
    %721 = vst.msk [vmem:[#allocation2 + $0x58] sm:$0xf] %vm698, %v612
    %722 = vst.msk [vmem:[#allocation2 + $0x5c] sm:$0xf] %vm698, %v613
    %723 = vst.msk [vmem:[#allocation2 + $0x60] sm:$0xf] %vm698, %v614
    %724 = vst.msk [vmem:[#allocation2 + $0x64] sm:$0xf] %vm698, %v615
    %725 = vst.msk [vmem:[#allocation2 + $0x68] sm:$0xf] %vm698, %v616
    %726 = vst.msk [vmem:[#allocation2 + $0x78] sm:$0xf] %vm698, %v617
    %727 = vst.msk [vmem:[#allocation2 + $0x7c] sm:$0xf] %vm698, %v618
    %728 = vst.msk [vmem:[#allocation2 + $0x80] sm:$0xf] %vm698, %v619
    %729 = vst.msk [vmem:[#allocation2 + $0x84] sm:$0xf] %vm698, %v620
    %730 = vst.msk [vmem:[#allocation2 + $0x88] sm:$0xf] %vm698, %v621
    %731 = vst.msk [vmem:[#allocation2 + $0x8c] sm:$0xf] %vm698, %v622
    %732 = vst.msk [vmem:[#allocation2 + $0x90] sm:$0xf] %vm698, %v623
    %733 = vst.msk [vmem:[#allocation2 + $0x94] sm:$0xf] %vm698, %v624
    %734 = vst.msk [vmem:[#allocation2 + $0x98] sm:$0xf] %vm698, %v625
    %735 = vst.msk [vmem:[#allocation2 + $0x9c] sm:$0xf] %vm698, %v626
    %736 = vst.msk [vmem:[#allocation2 + $0xa0] sm:$0xf] %vm698, %v627
    %737 = vst.msk [vmem:[#allocation2 + $0xa4] sm:$0xf] %vm698, %v628
    %738 = vst.msk [vmem:[#allocation2 + $0xa8] sm:$0xf] %vm698, %v629
    %739 = vst.msk [vmem:[#allocation2 + $0xac] sm:$0xf] %vm698, %v630
    %740 = vst.msk [vmem:[#allocation2 + $0xb0] sm:$0xf] %vm698, %v631
    %741 = vst.msk [vmem:[#allocation2 + $0xb4] sm:$0xf] %vm698, %v632
    %742 = vst.msk [vmem:[#allocation2 + $0xb8] sm:$0xf] %vm698, %v633
    %743 = vst.msk [vmem:[#allocation2 + $0xbc] sm:$0xf] %vm698, %v634
    %744 = vst.msk [vmem:[#allocation2 + $0xc0] sm:$0xf] %vm698, %v635
    %745 = vst.msk [vmem:[#allocation2 + $0xc4] sm:$0xf] %vm698, %v636
    %746 = vst.msk [vmem:[#allocation2 + $0xc8] sm:$0xf] %vm698, %v637
    %747 = vst.msk [vmem:[#allocation2 + $0xcc] sm:$0xf] %vm698, %v638
    %748 = vst.msk [vmem:[#allocation2 + $0xd0] sm:$0xf] %vm698, %v639
    %749 = vst.msk [vmem:[#allocation2 + $0xd4] sm:$0xf] %vm698, %v640
    %750 = vst.msk [vmem:[#allocation2 + $0xd8] sm:$0xf] %vm698, %v641
    %751 = vst.msk [vmem:[#allocation2 + $0xdc] sm:$0xf] %vm698, %v642
    %752 = vst.msk [vmem:[#allocation2 + $0xe0] sm:$0xf] %vm698, %v643
    %753 = vst.msk [vmem:[#allocation2 + $0xf0] sm:$0xf] %vm698, %v644
    %754 = vst.msk [vmem:[#allocation2 + $0xf4] sm:$0xf] %vm698, %v645
    %755 = vst.msk [vmem:[#allocation2 + $0xf8] sm:$0xf] %vm698, %v646
    %756 = vst.msk [vmem:[#allocation2 + $0xfc] sm:$0xf] %vm698, %v647
    %757 = vst.msk [vmem:[#allocation2 + $0x100] sm:$0xf] %vm698, %v648
    %758 = vst.msk [vmem:[#allocation2 + $0x104] sm:$0xf] %vm698, %v649
    %759 = vst.msk [vmem:[#allocation2 + $0x108] sm:$0xf] %vm698, %v650
    %760 = vst.msk [vmem:[#allocation2 + $0x10c] sm:$0xf] %vm698, %v651
    %761 = vst.msk [vmem:[#allocation2 + $0x110] sm:$0xf] %vm698, %v652
    %762 = vst.msk [vmem:[#allocation2 + $0x114] sm:$0xf] %vm698, %v653
    %763 = vst.msk [vmem:[#allocation2 + $0x118] sm:$0xf] %vm698, %v654
    %764 = vst.msk [vmem:[#allocation2 + $0x11c] sm:$0xf] %vm698, %v655
    %765 = vst.msk [vmem:[#allocation2 + $0x120] sm:$0xf] %vm698, %v656
    %766 = vst.msk [vmem:[#allocation2 + $0x124] sm:$0xf] %vm698, %v657
    %767 = vst.msk [vmem:[#allocation2 + $0x128] sm:$0xf] %vm698, %v658
    %768 = vst.msk [vmem:[#allocation2 + $0x12c] sm:$0xf] %vm698, %v659
    %769 = vst.msk [vmem:[#allocation2 + $0x130] sm:$0xf] %vm698, %v660
    %770 = vst.msk [vmem:[#allocation2 + $0x134] sm:$0xf] %vm698, %v661
    %771 = vst.msk [vmem:[#allocation2 + $0x138] sm:$0xf] %vm698, %v662
    %772 = vst.msk [vmem:[#allocation2 + $0x13c] sm:$0xf] %vm698, %v663
    %773 = vst.msk [vmem:[#allocation2 + $0x140] sm:$0xf] %vm698, %v664
    %774 = vst.msk [vmem:[#allocation2 + $0x144] sm:$0xf] %vm698, %v665
    %775 = vst.msk [vmem:[#allocation2 + $0x148] sm:$0xf] %vm698, %v666
    %776 = vst.msk [vmem:[#allocation2 + $0x14c] sm:$0xf] %vm698, %v667
    %777 = vst.msk [vmem:[#allocation2 + $0x150] sm:$0xf] %vm698, %v668
    %778 = vst.msk [vmem:[#allocation2 + $0x154] sm:$0xf] %vm698, %v669
    %779 = vst.msk [vmem:[#allocation2 + $0x158] sm:$0xf] %vm698, %v670
    %780 = vst.msk [vmem:[#allocation2 + $0x168] sm:$0xf] %vm698, %v671
    %781 = vst.msk [vmem:[#allocation2 + $0x16c] sm:$0xf] %vm698, %v672
    %782 = vst.msk [vmem:[#allocation2 + $0x170] sm:$0xf] %vm698, %v673
    %783 = vst.msk [vmem:[#allocation2 + $0x174] sm:$0xf] %vm698, %v674
    %784 = vst.msk [vmem:[#allocation2 + $0x178] sm:$0xf] %vm698, %v675
    %785 = vst.msk [vmem:[#allocation2 + $0x17c] sm:$0xf] %vm698, %v676
    %786 = vst.msk [vmem:[#allocation2 + $0x180] sm:$0xf] %vm698, %v677
    %787 = vst.msk [vmem:[#allocation2 + $0x184] sm:$0xf] %vm698, %v678
    %788 = vst.msk [vmem:[#allocation2 + $0x188] sm:$0xf] %vm698, %v679
    %789 = vst.msk [vmem:[#allocation2 + $0x18c] sm:$0xf] %vm698, %v680
    %790 = vst.msk [vmem:[#allocation2 + $0x190] sm:$0xf] %vm698, %v681
    %791 = vst.msk [vmem:[#allocation2 + $0x194] sm:$0xf] %vm698, %v682
    %792 = vst.msk [vmem:[#allocation2 + $0x198] sm:$0xf] %vm698, %v683
    %793 = vst.msk [vmem:[#allocation2 + $0x19c] sm:$0xf] %vm698, %v684
    %794 = vst.msk [vmem:[#allocation2 + $0x1a0] sm:$0xf] %vm698, %v685
    %795 = vst.msk [vmem:[#allocation2 + $0x1a4] sm:$0xf] %vm698, %v686
    %796 = vst.msk [vmem:[#allocation2 + $0x1a8] sm:$0xf] %vm698, %v687
    %797 = vst.msk [vmem:[#allocation2 + $0x1ac] sm:$0xf] %vm698, %v688
    %798 = vst.msk [vmem:[#allocation2 + $0x1b0] sm:$0xf] %vm698, %v689
    %799 = vst.msk [vmem:[#allocation2 + $0x1b4] sm:$0xf] %vm698, %v690
    %800 = vst.msk [vmem:[#allocation2 + $0x1b8] sm:$0xf] %vm698, %v691
    %801 = vst.msk [vmem:[#allocation2 + $0x1bc] sm:$0xf] %vm698, %v692
    %802 = vst.msk [vmem:[#allocation2 + $0x1c0] sm:$0xf] %vm698, %v693
    %803 = vst.msk [vmem:[#allocation2 + $0x1c4] sm:$0xf] %vm698, %v694
    %804 = vst.msk [vmem:[#allocation2 + $0x1c8] sm:$0xf] %vm698, %v695
    %805 = vst.msk [vmem:[#allocation2 + $0x1cc] sm:$0xf] %vm698, %v696
    %806 = vst.msk [vmem:[#allocation2 + $0x1d0] sm:$0xf] %vm698, %v697
    %v807 = vld [vmem:[#allocation4] sm:$0xf]
    %v808 = vld [vmem:[#allocation4 + $0x4] sm:$0xf]
    %v809 = vld [vmem:[#allocation4 + $0x8] sm:$0xf]
    %v810 = vld [vmem:[#allocation4 + $0xc] sm:$0xf]
    %v811 = vld [vmem:[#allocation4 + $0x10] sm:$0xf]
    %v812 = vld [vmem:[#allocation4 + $0x14] sm:$0xf]
    %v813 = vld [vmem:[#allocation4 + $0x18] sm:$0xf]
    %v814 = vld [vmem:[#allocation4 + $0x1c] sm:$0xf]
    %v815 = vld [vmem:[#allocation4 + $0x20] sm:$0xf]
    %v816 = vld [vmem:[#allocation4 + $0x24] sm:$0xf]
    %v817 = vld [vmem:[#allocation4 + $0x28] sm:$0xf]
    %v818 = vld [vmem:[#allocation4 + $0x2c] sm:$0xf]
    %819 = vst.msk [vmem:[#allocation2 + $0x6c] sm:$0xf] %vm698, %v807
    %820 = vst.msk [vmem:[#allocation2 + $0x70] sm:$0xf] %vm698, %v808
    %821 = vst.msk [vmem:[#allocation2 + $0x74] sm:$0xf] %vm698, %v809
    %822 = vst.msk [vmem:[#allocation2 + $0xe4] sm:$0xf] %vm698, %v810
    %823 = vst.msk [vmem:[#allocation2 + $0xe8] sm:$0xf] %vm698, %v811
    %824 = vst.msk [vmem:[#allocation2 + $0xec] sm:$0xf] %vm698, %v812
    %825 = vst.msk [vmem:[#allocation2 + $0x15c] sm:$0xf] %vm698, %v813
    %826 = vst.msk [vmem:[#allocation2 + $0x160] sm:$0xf] %vm698, %v814
    %827 = vst.msk [vmem:[#allocation2 + $0x164] sm:$0xf] %vm698, %v815
    %828 = vst.msk [vmem:[#allocation2 + $0x1d4] sm:$0xf] %vm698, %v816
    %829 = vst.msk [vmem:[#allocation2 + $0x1d8] sm:$0xf] %vm698, %v817
    %830 = vst.msk [vmem:[#allocation2 + $0x1dc] sm:$0xf] %vm698, %v818
    %v831 = vld [vmem:[%s3] sm:$0x1]
    %v833 = vlaneseq
    %v834 = vshrl.u32 %v833, 7
    %v835 = vsub.s32 0, %v834
    %v836 = vrot.slane %v831, %v835
    %v838 = vld [vmem:[#allocation2] sm:$0xf]
    %v839 = vld [vmem:[#allocation2 + $0x4] sm:$0xf]
    %v840 = vld [vmem:[#allocation2 + $0x8] sm:$0xf]
    %v841 = vld [vmem:[#allocation2 + $0xc] sm:$0xf]
    %v842 = vld [vmem:[#allocation2 + $0x10] sm:$0xf]
    %v843 = vld [vmem:[#allocation2 + $0x14] sm:$0xf]
    %v844 = vld [vmem:[#allocation2 + $0x18] sm:$0xf]
    %v845 = vld [vmem:[#allocation2 + $0x1c] sm:$0xf]
    %v846 = vld [vmem:[#allocation2 + $0x20] sm:$0xf]
    %v847 = vld [vmem:[#allocation2 + $0x24] sm:$0xf]
    %v848 = vld [vmem:[#allocation2 + $0x28] sm:$0xf]
    %v849 = vld [vmem:[#allocation2 + $0x2c] sm:$0xf]
    %v850 = vld [vmem:[#allocation2 + $0x30] sm:$0xf]
    %v851 = vld [vmem:[#allocation2 + $0x34] sm:$0xf]
    %v852 = vld [vmem:[#allocation2 + $0x38] sm:$0xf]
    %v853 = vld [vmem:[#allocation2 + $0x3c] sm:$0xf]
    %v854 = vld [vmem:[#allocation2 + $0x40] sm:$0xf]
    %v855 = vld [vmem:[#allocation2 + $0x44] sm:$0xf]
    %v856 = vld [vmem:[#allocation2 + $0x48] sm:$0xf]
    %v857 = vld [vmem:[#allocation2 + $0x4c] sm:$0xf]
    %v858 = vld [vmem:[#allocation2 + $0x50] sm:$0xf]
    %v859 = vld [vmem:[#allocation2 + $0x54] sm:$0xf]
    %v860 = vld [vmem:[#allocation2 + $0x58] sm:$0xf]
    %v861 = vld [vmem:[#allocation2 + $0x5c] sm:$0xf]
    %v862 = vld [vmem:[#allocation2 + $0x60] sm:$0xf]
    %v863 = vld [vmem:[#allocation2 + $0x64] sm:$0xf]
    %v864 = vld [vmem:[#allocation2 + $0x68] sm:$0xf]
    %v865 = vld [vmem:[%s2] sm:$0xf]
    %v893 = vunpack.c.l.b16 %v838
    %v894 = vunpack.c.l.b16 %v839
    %v895 = vunpack.c.l.b16 %v840
    %v896 = vunpack.c.l.b16 %v841
    %v897 = vunpack.c.l.b16 %v842
    %v898 = vunpack.c.l.b16 %v843
    %v899 = vunpack.c.l.b16 %v844
    %v900 = vunpack.c.l.b16 %v845
    %v901 = vunpack.c.l.b16 %v846
    %v902 = vunpack.c.l.b16 %v847
    %v903 = vunpack.c.l.b16 %v848
    %v904 = vunpack.c.l.b16 %v849
    %v905 = vunpack.c.l.b16 %v850
    %v906 = vunpack.c.l.b16 %v851
    %v907 = vunpack.c.l.b16 %v852
    %v908 = vunpack.c.l.b16 %v853
    %v909 = vunpack.c.l.b16 %v854
    %v910 = vunpack.c.l.b16 %v855
    %v911 = vunpack.c.l.b16 %v856
    %v912 = vunpack.c.l.b16 %v857
    %v913 = vunpack.c.l.b16 %v858
    %v914 = vunpack.c.l.b16 %v859
    %v915 = vunpack.c.l.b16 %v860
    %v916 = vunpack.c.l.b16 %v861
    %v917 = vunpack.c.l.b16 %v862
    %v918 = vunpack.c.l.b16 %v863
    %v919 = vunpack.c.l.b16 %v864
    %v920 = vpack.c.b16 %v894, %v893
    %v921 = vpack.c.b16 %v896, %v895
    %v922 = vpack.c.b16 %v898, %v897
    %v923 = vpack.c.b16 %v900, %v899
    %v924 = vpack.c.b16 %v902, %v901
    %v925 = vpack.c.b16 %v904, %v903
    %v926 = vpack.c.b16 %v906, %v905
    %v927 = vpack.c.b16 %v908, %v907
    %v928 = vpack.c.b16 %v910, %v909
    %v929 = vpack.c.b16 %v912, %v911
    %v930 = vpack.c.b16 %v914, %v913
    %v931 = vpack.c.b16 %v916, %v915
    %v932 = vpack.c.b16 %v918, %v917
    %v933 = vpack.c.b16 %v919, %v919
    %vm934 = vcmask 64512
    %v936 = vsel %vm934, %v920, 0
    %v939 = vsel %vm934, %v921, 0
    %v942 = vsel %vm934, %v922, 0
    %v945 = vsel %vm934, %v923, 0
    %v948 = vsel %vm934, %v924, 0
    %v951 = vsel %vm934, %v925, 0
    %v954 = vsel %vm934, %v926, 0
    %v957 = vsel %vm934, %v927, 0
    %v960 = vsel %vm934, %v928, 0
    %v963 = vsel %vm934, %v929, 0
    %v966 = vsel %vm934, %v930, 0
    %v969 = vsel %vm934, %v931, 0
    %v972 = vsel %vm934, %v932, 0
    %v975 = vsel %vm934, %v933, 0
    %vm977 = vcmask 1043456
    %v979 = vsel %vm977, %v865, 0
    %981 = vmatprep.subr.bf16.mxu0 0
    %982 = vmatpush1.bf16.msra.mxu0 0
    %983 = vmatprep.subr.bf16.mxu0 0
    %984 = vmatpush1.bf16.msra.mxu0 0
    %985 = vmatprep.subr.bf16.mxu0 0
    %986 = vmatpush1.bf16.msra.mxu0 0
    %987 = vmatprep.subr.bf16.mxu0 0
    %988 = vmatpush1.bf16.msra.mxu0 0
    %989 = vmatprep.subr.bf16.mxu0 0
    %990 = vmatpush1.bf16.msra.mxu0 0
    %991 = vmatprep.subr.bf16.mxu0 0
    %992 = vmatpush1.bf16.msra.mxu0 0
    %993 = vmatprep.subr.bf16.mxu0 0
    %994 = vmatpush1.bf16.msra.mxu0 0
    %995 = vmatprep.subr.bf16.mxu0 0
    %996 = vmatpush1.bf16.msra.mxu0 %v979
    %997 = vmatprep.subr.bf16.mxu0 0
    %998 = vmatpush2.bf16.msra.mxu0 0
    %999 = vmatprep.subr.bf16.mxu0 0
    %1000 = vmatpush2.bf16.msra.mxu0 0
    %1001 = vmatprep.subr.bf16.mxu0 0
    %1002 = vmatpush2.bf16.msra.mxu0 0
    %1003 = vmatprep.subr.bf16.mxu0 0
    %1004 = vmatpush2.bf16.msra.mxu0 0
    %1005 = vmatprep.subr.bf16.mxu0 0
    %1006 = vmatpush2.bf16.msra.mxu0 0
    %1007 = vmatprep.subr.bf16.mxu0 0
    %1008 = vmatpush2.bf16.msra.mxu0 0
    %1009 = vmatprep.subr.bf16.mxu0 0
    %1010 = vmatpush2.bf16.msra.mxu0 0
    %1011 = vmatprep.subr.bf16.mxu0 0
    %1012 = vmatpush2.bf16.msra.mxu0 0
    %1013 = vmatprep.mubr.bf16.mxu0 0
    %1014 = vmatmul.mubr.bf16.gmra.mxu0 %v936
    %v1015 = vpop.f32.mrf.mxu0
    %v1016 = vadd.f32 0.0, %v1015
    %v1017 = vpop.f32.mrf.mxu0
    %v1018 = vpop.f32.mrf.mxu0
    %v1019 = vadd.f32 0.0, %v1018
    %v1020 = vpop.f32.mrf.mxu0
    %1021 = vmatprep.mubr.bf16.mxu0 0
    %1022 = vmatmul.mubr.bf16.gmra.mxu0 %v939
    %v1023 = vpop.f32.mrf.mxu0
    %v1024 = vadd.f32 0.0, %v1023
    %v1025 = vpop.f32.mrf.mxu0
    %v1026 = vpop.f32.mrf.mxu0
    %v1027 = vadd.f32 0.0, %v1026
    %v1028 = vpop.f32.mrf.mxu0
    %1029 = vmatprep.mubr.bf16.mxu0 0
    %1030 = vmatmul.mubr.bf16.gmra.mxu0 %v942
    %v1031 = vpop.f32.mrf.mxu0
    %v1032 = vadd.f32 0.0, %v1031
    %v1033 = vpop.f32.mrf.mxu0
    %v1034 = vpop.f32.mrf.mxu0
    %v1035 = vadd.f32 0.0, %v1034
    %v1036 = vpop.f32.mrf.mxu0
    %1037 = vmatprep.mubr.bf16.mxu0 0
    %1038 = vmatmul.mubr.bf16.gmra.mxu0 %v945
    %v1039 = vpop.f32.mrf.mxu0
    %v1040 = vadd.f32 0.0, %v1039
    %v1041 = vpop.f32.mrf.mxu0
    %v1042 = vpop.f32.mrf.mxu0
    %v1043 = vadd.f32 0.0, %v1042
    %v1044 = vpop.f32.mrf.mxu0
    %1045 = vmatprep.mubr.bf16.mxu0 0
    %1046 = vmatmul.mubr.bf16.gmra.mxu0 %v948
    %v1047 = vpop.f32.mrf.mxu0
    %v1048 = vadd.f32 0.0, %v1047
    %v1049 = vpop.f32.mrf.mxu0
    %v1050 = vpop.f32.mrf.mxu0
    %v1051 = vadd.f32 0.0, %v1050
    %v1052 = vpop.f32.mrf.mxu0
    %1053 = vmatprep.mubr.bf16.mxu0 0
    %1054 = vmatmul.mubr.bf16.gmra.mxu0 %v951
    %v1055 = vpop.f32.mrf.mxu0
    %v1056 = vadd.f32 0.0, %v1055
    %v1057 = vpop.f32.mrf.mxu0
    %v1058 = vpop.f32.mrf.mxu0
    %v1059 = vadd.f32 0.0, %v1058
    %v1060 = vpop.f32.mrf.mxu0
    %1061 = vmatprep.mubr.bf16.mxu0 0
    %1062 = vmatmul.mubr.bf16.gmra.mxu0 %v954
    %v1063 = vpop.f32.mrf.mxu0
    %v1064 = vadd.f32 0.0, %v1063
    %v1065 = vpop.f32.mrf.mxu0
    %v1066 = vpop.f32.mrf.mxu0
    %v1067 = vadd.f32 0.0, %v1066
    %v1068 = vpop.f32.mrf.mxu0
    %1069 = vmatprep.mubr.bf16.mxu0 0
    %1070 = vmatmul.mubr.bf16.gmra.mxu0 %v957
    %v1071 = vpop.f32.mrf.mxu0
    %v1072 = vadd.f32 0.0, %v1071
    %v1073 = vpop.f32.mrf.mxu0
    %v1074 = vpop.f32.mrf.mxu0
    %v1075 = vadd.f32 0.0, %v1074
    %v1076 = vpop.f32.mrf.mxu0
    %1077 = vmatprep.mubr.bf16.mxu0 0
    %1078 = vmatmul.mubr.bf16.gmra.mxu0 %v960
    %v1079 = vpop.f32.mrf.mxu0
    %v1080 = vadd.f32 0.0, %v1079
    %v1081 = vpop.f32.mrf.mxu0
    %v1082 = vpop.f32.mrf.mxu0
    %v1083 = vadd.f32 0.0, %v1082
    %v1084 = vpop.f32.mrf.mxu0
    %1085 = vmatprep.mubr.bf16.mxu0 0
    %1086 = vmatmul.mubr.bf16.gmra.mxu0 %v963
    %v1087 = vpop.f32.mrf.mxu0
    %v1088 = vadd.f32 0.0, %v1087
    %v1089 = vpop.f32.mrf.mxu0
    %v1090 = vpop.f32.mrf.mxu0
    %v1091 = vadd.f32 0.0, %v1090
    %v1092 = vpop.f32.mrf.mxu0
    %1093 = vmatprep.mubr.bf16.mxu0 0
    %1094 = vmatmul.mubr.bf16.gmra.mxu0 %v966
    %v1095 = vpop.f32.mrf.mxu0
    %v1096 = vadd.f32 0.0, %v1095
    %v1097 = vpop.f32.mrf.mxu0
    %v1098 = vpop.f32.mrf.mxu0
    %v1099 = vadd.f32 0.0, %v1098
    %v1100 = vpop.f32.mrf.mxu0
    %1101 = vmatprep.mubr.bf16.mxu0 0
    %1102 = vmatmul.mubr.bf16.gmra.mxu0 %v969
    %v1103 = vpop.f32.mrf.mxu0
    %v1104 = vadd.f32 0.0, %v1103
    %v1105 = vpop.f32.mrf.mxu0
    %v1106 = vpop.f32.mrf.mxu0
    %v1107 = vadd.f32 0.0, %v1106
    %v1108 = vpop.f32.mrf.mxu0
    %1109 = vmatprep.mubr.bf16.mxu0 0
    %1110 = vmatmul.mubr.bf16.gmra.mxu0 %v972
    %v1111 = vpop.f32.mrf.mxu0
    %v1112 = vadd.f32 0.0, %v1111
    %v1113 = vpop.f32.mrf.mxu0
    %v1114 = vpop.f32.mrf.mxu0
    %v1115 = vadd.f32 0.0, %v1114
    %v1116 = vpop.f32.mrf.mxu0
    %1117 = vmatprep.mubr.bf16.mxu0 0
    %1118 = vmatmul.mubr.bf16.gmra.mxu0 %v975
    %v1119 = vpop.f32.mrf.mxu0
    %v1120 = vadd.f32 0.0, %v1119
    %v1121 = vpop.f32.mrf.mxu0
    %v1122 = vpop.f32.mrf.mxu0
    %v1123 = vpop.f32.mrf.mxu0
    %1124 = vdwg.mxu0
    %v1125 = vadd.f32 %v836, %v1016
    %v1126 = vadd.f32 %v836, %v1019
    %v1127 = vadd.f32 %v836, %v1024
    %v1128 = vadd.f32 %v836, %v1027
    %v1129 = vadd.f32 %v836, %v1032
    %v1130 = vadd.f32 %v836, %v1035
    %v1131 = vadd.f32 %v836, %v1040
    %v1132 = vadd.f32 %v836, %v1043
    %v1133 = vadd.f32 %v836, %v1048
    %v1134 = vadd.f32 %v836, %v1051
    %v1135 = vadd.f32 %v836, %v1056
    %v1136 = vadd.f32 %v836, %v1059
    %v1137 = vadd.f32 %v836, %v1064
    %v1138 = vadd.f32 %v836, %v1067
    %v1139 = vadd.f32 %v836, %v1072
    %v1140 = vadd.f32 %v836, %v1075
    %v1141 = vadd.f32 %v836, %v1080
    %v1142 = vadd.f32 %v836, %v1083
    %v1143 = vadd.f32 %v836, %v1088
    %v1144 = vadd.f32 %v836, %v1091
    %v1145 = vadd.f32 %v836, %v1096
    %v1146 = vadd.f32 %v836, %v1099
    %v1147 = vadd.f32 %v836, %v1104
    %v1148 = vadd.f32 %v836, %v1107
    %v1149 = vadd.f32 %v836, %v1112
    %v1150 = vadd.f32 %v836, %v1115
    %v1151 = vadd.f32 %v836, %v1120
    %s1152 = scalar_lea.vmem [#allocation2], 120
    %v1153 = vld [vmem:[%s1152] sm:$0xf]
    %v1154 = vld [vmem:[%s1152 + $0x4] sm:$0xf]
    %v1155 = vld [vmem:[%s1152 + $0x8] sm:$0xf]
    %v1156 = vld [vmem:[%s1152 + $0xc] sm:$0xf]
    %v1157 = vld [vmem:[%s1152 + $0x10] sm:$0xf]
    %v1158 = vld [vmem:[%s1152 + $0x14] sm:$0xf]
    %v1159 = vld [vmem:[%s1152 + $0x18] sm:$0xf]
    %v1160 = vld [vmem:[%s1152 + $0x1c] sm:$0xf]
    %v1161 = vld [vmem:[%s1152 + $0x20] sm:$0xf]
    %v1162 = vld [vmem:[%s1152 + $0x24] sm:$0xf]
    %v1163 = vld [vmem:[%s1152 + $0x28] sm:$0xf]
    %v1164 = vld [vmem:[%s1152 + $0x2c] sm:$0xf]
    %v1165 = vld [vmem:[%s1152 + $0x30] sm:$0xf]
    %v1166 = vld [vmem:[%s1152 + $0x34] sm:$0xf]
    %v1167 = vld [vmem:[%s1152 + $0x38] sm:$0xf]
    %v1168 = vld [vmem:[%s1152 + $0x3c] sm:$0xf]
    %v1169 = vld [vmem:[%s1152 + $0x40] sm:$0xf]
    %v1170 = vld [vmem:[%s1152 + $0x44] sm:$0xf]
    %v1171 = vld [vmem:[%s1152 + $0x48] sm:$0xf]
    %v1172 = vld [vmem:[%s1152 + $0x4c] sm:$0xf]
    %v1173 = vld [vmem:[%s1152 + $0x50] sm:$0xf]
    %v1174 = vld [vmem:[%s1152 + $0x54] sm:$0xf]
    %v1175 = vld [vmem:[%s1152 + $0x58] sm:$0xf]
    %v1176 = vld [vmem:[%s1152 + $0x5c] sm:$0xf]
    %v1177 = vld [vmem:[%s1152 + $0x60] sm:$0xf]
    %v1178 = vld [vmem:[%s1152 + $0x64] sm:$0xf]
    %v1179 = vld [vmem:[%s1152 + $0x68] sm:$0xf]
    %s1180 = scalar_lea.vmem %s2, 4
    %v1181 = vld [vmem:[%s1180] sm:$0xf]
    %v1209 = vunpack.c.l.b16 %v1153
    %v1210 = vunpack.c.l.b16 %v1154
    %v1211 = vunpack.c.l.b16 %v1155
    %v1212 = vunpack.c.l.b16 %v1156
    %v1213 = vunpack.c.l.b16 %v1157
    %v1214 = vunpack.c.l.b16 %v1158
    %v1215 = vunpack.c.l.b16 %v1159
    %v1216 = vunpack.c.l.b16 %v1160
    %v1217 = vunpack.c.l.b16 %v1161
    %v1218 = vunpack.c.l.b16 %v1162
    %v1219 = vunpack.c.l.b16 %v1163
    %v1220 = vunpack.c.l.b16 %v1164
    %v1221 = vunpack.c.l.b16 %v1165
    %v1222 = vunpack.c.l.b16 %v1166
    %v1223 = vunpack.c.l.b16 %v1167
    %v1224 = vunpack.c.l.b16 %v1168
    %v1225 = vunpack.c.l.b16 %v1169
    %v1226 = vunpack.c.l.b16 %v1170
    %v1227 = vunpack.c.l.b16 %v1171
    %v1228 = vunpack.c.l.b16 %v1172
    %v1229 = vunpack.c.l.b16 %v1173
    %v1230 = vunpack.c.l.b16 %v1174
    %v1231 = vunpack.c.l.b16 %v1175
    %v1232 = vunpack.c.l.b16 %v1176
    %v1233 = vunpack.c.l.b16 %v1177
    %v1234 = vunpack.c.l.b16 %v1178
    %v1235 = vunpack.c.l.b16 %v1179
    %v1236 = vpack.c.b16 %v1210, %v1209
    %v1237 = vpack.c.b16 %v1212, %v1211
    %v1238 = vpack.c.b16 %v1214, %v1213
    %v1239 = vpack.c.b16 %v1216, %v1215
    %v1240 = vpack.c.b16 %v1218, %v1217
    %v1241 = vpack.c.b16 %v1220, %v1219
    %v1242 = vpack.c.b16 %v1222, %v1221
    %v1243 = vpack.c.b16 %v1224, %v1223
    %v1244 = vpack.c.b16 %v1226, %v1225
    %v1245 = vpack.c.b16 %v1228, %v1227
    %v1246 = vpack.c.b16 %v1230, %v1229
    %v1247 = vpack.c.b16 %v1232, %v1231
    %v1248 = vpack.c.b16 %v1234, %v1233
    %v1249 = vpack.c.b16 %v1235, %v1235
    %v1251 = vsel %vm934, %v1236, 0
    %v1254 = vsel %vm934, %v1237, 0
    %v1257 = vsel %vm934, %v1238, 0
    %v1260 = vsel %vm934, %v1239, 0
    %v1263 = vsel %vm934, %v1240, 0
    %v1266 = vsel %vm934, %v1241, 0
    %v1269 = vsel %vm934, %v1242, 0
    %v1272 = vsel %vm934, %v1243, 0
    %v1275 = vsel %vm934, %v1244, 0
    %v1278 = vsel %vm934, %v1245, 0
    %v1281 = vsel %vm934, %v1246, 0
    %v1284 = vsel %vm934, %v1247, 0
    %v1287 = vsel %vm934, %v1248, 0
    %v1290 = vsel %vm934, %v1249, 0
    %v1293 = vsel %vm977, %v1181, 0
    %1295 = vmatprep.subr.bf16.mxu0 0
    %1296 = vmatpush1.bf16.msra.mxu0 0
    %1297 = vmatprep.subr.bf16.mxu0 0
    %1298 = vmatpush1.bf16.msra.mxu0 0
    %1299 = vmatprep.subr.bf16.mxu0 0
    %1300 = vmatpush1.bf16.msra.mxu0 0
    %1301 = vmatprep.subr.bf16.mxu0 0
    %1302 = vmatpush1.bf16.msra.mxu0 0
    %1303 = vmatprep.subr.bf16.mxu0 0
    %1304 = vmatpush1.bf16.msra.mxu0 0
    %1305 = vmatprep.subr.bf16.mxu0 0
    %1306 = vmatpush1.bf16.msra.mxu0 0
    %1307 = vmatprep.subr.bf16.mxu0 0
    %1308 = vmatpush1.bf16.msra.mxu0 0
    %1309 = vmatprep.subr.bf16.mxu0 0
    %1310 = vmatpush1.bf16.msra.mxu0 %v1293
    %1311 = vmatprep.subr.bf16.mxu0 0
    %1312 = vmatpush2.bf16.msra.mxu0 0
    %1313 = vmatprep.subr.bf16.mxu0 0
    %1314 = vmatpush2.bf16.msra.mxu0 0
    %1315 = vmatprep.subr.bf16.mxu0 0
    %1316 = vmatpush2.bf16.msra.mxu0 0
    %1317 = vmatprep.subr.bf16.mxu0 0
    %1318 = vmatpush2.bf16.msra.mxu0 0
    %1319 = vmatprep.subr.bf16.mxu0 0
    %1320 = vmatpush2.bf16.msra.mxu0 0
    %1321 = vmatprep.subr.bf16.mxu0 0
    %1322 = vmatpush2.bf16.msra.mxu0 0
    %1323 = vmatprep.subr.bf16.mxu0 0
    %1324 = vmatpush2.bf16.msra.mxu0 0
    %1325 = vmatprep.subr.bf16.mxu0 0
    %1326 = vmatpush2.bf16.msra.mxu0 0
    %1327 = vmatprep.mubr.bf16.mxu0 0
    %1328 = vmatmul.mubr.bf16.gmra.mxu0 %v1251
    %v1329 = vpop.f32.mrf.mxu0
    %v1330 = vadd.f32 0.0, %v1329
    %v1331 = vpop.f32.mrf.mxu0
    %v1332 = vpop.f32.mrf.mxu0
    %v1333 = vadd.f32 0.0, %v1332
    %v1334 = vpop.f32.mrf.mxu0
    %1335 = vmatprep.mubr.bf16.mxu0 0
    %1336 = vmatmul.mubr.bf16.gmra.mxu0 %v1254
    %v1337 = vpop.f32.mrf.mxu0
    %v1338 = vadd.f32 0.0, %v1337
    %v1339 = vpop.f32.mrf.mxu0
    %v1340 = vpop.f32.mrf.mxu0
    %v1341 = vadd.f32 0.0, %v1340
    %v1342 = vpop.f32.mrf.mxu0
    %1343 = vmatprep.mubr.bf16.mxu0 0
    %1344 = vmatmul.mubr.bf16.gmra.mxu0 %v1257
    %v1345 = vpop.f32.mrf.mxu0
    %v1346 = vadd.f32 0.0, %v1345
    %v1347 = vpop.f32.mrf.mxu0
    %v1348 = vpop.f32.mrf.mxu0
    %v1349 = vadd.f32 0.0, %v1348
    %v1350 = vpop.f32.mrf.mxu0
    %1351 = vmatprep.mubr.bf16.mxu0 0
    %1352 = vmatmul.mubr.bf16.gmra.mxu0 %v1260
    %v1353 = vpop.f32.mrf.mxu0
    %v1354 = vadd.f32 0.0, %v1353
    %v1355 = vpop.f32.mrf.mxu0
    %v1356 = vpop.f32.mrf.mxu0
    %v1357 = vadd.f32 0.0, %v1356
    %v1358 = vpop.f32.mrf.mxu0
    %1359 = vmatprep.mubr.bf16.mxu0 0
    %1360 = vmatmul.mubr.bf16.gmra.mxu0 %v1263
    %v1361 = vpop.f32.mrf.mxu0
    %v1362 = vadd.f32 0.0, %v1361
    %v1363 = vpop.f32.mrf.mxu0
    %v1364 = vpop.f32.mrf.mxu0
    %v1365 = vadd.f32 0.0, %v1364
    %v1366 = vpop.f32.mrf.mxu0
    %1367 = vmatprep.mubr.bf16.mxu0 0
    %1368 = vmatmul.mubr.bf16.gmra.mxu0 %v1266
    %v1369 = vpop.f32.mrf.mxu0
    %v1370 = vadd.f32 0.0, %v1369
    %v1371 = vpop.f32.mrf.mxu0
    %v1372 = vpop.f32.mrf.mxu0
    %v1373 = vadd.f32 0.0, %v1372
    %v1374 = vpop.f32.mrf.mxu0
    %1375 = vmatprep.mubr.bf16.mxu0 0
    %1376 = vmatmul.mubr.bf16.gmra.mxu0 %v1269
    %v1377 = vpop.f32.mrf.mxu0
    %v1378 = vadd.f32 0.0, %v1377
    %v1379 = vpop.f32.mrf.mxu0
    %v1380 = vpop.f32.mrf.mxu0
    %v1381 = vadd.f32 0.0, %v1380
    %v1382 = vpop.f32.mrf.mxu0
    %1383 = vmatprep.mubr.bf16.mxu0 0
    %1384 = vmatmul.mubr.bf16.gmra.mxu0 %v1272
    %v1385 = vpop.f32.mrf.mxu0
    %v1386 = vadd.f32 0.0, %v1385
    %v1387 = vpop.f32.mrf.mxu0
    %v1388 = vpop.f32.mrf.mxu0
    %v1389 = vadd.f32 0.0, %v1388
    %v1390 = vpop.f32.mrf.mxu0
    %1391 = vmatprep.mubr.bf16.mxu0 0
    %1392 = vmatmul.mubr.bf16.gmra.mxu0 %v1275
    %v1393 = vpop.f32.mrf.mxu0
    %v1394 = vadd.f32 0.0, %v1393
    %v1395 = vpop.f32.mrf.mxu0
    %v1396 = vpop.f32.mrf.mxu0
    %v1397 = vadd.f32 0.0, %v1396
    %v1398 = vpop.f32.mrf.mxu0
    %1399 = vmatprep.mubr.bf16.mxu0 0
    %1400 = vmatmul.mubr.bf16.gmra.mxu0 %v1278
    %v1401 = vpop.f32.mrf.mxu0
    %v1402 = vadd.f32 0.0, %v1401
    %v1403 = vpop.f32.mrf.mxu0
    %v1404 = vpop.f32.mrf.mxu0
    %v1405 = vadd.f32 0.0, %v1404
    %v1406 = vpop.f32.mrf.mxu0
    %1407 = vmatprep.mubr.bf16.mxu0 0
    %1408 = vmatmul.mubr.bf16.gmra.mxu0 %v1281
    %v1409 = vpop.f32.mrf.mxu0
    %v1410 = vadd.f32 0.0, %v1409
    %v1411 = vpop.f32.mrf.mxu0
    %v1412 = vpop.f32.mrf.mxu0
    %v1413 = vadd.f32 0.0, %v1412
    %v1414 = vpop.f32.mrf.mxu0
    %1415 = vmatprep.mubr.bf16.mxu0 0
    %1416 = vmatmul.mubr.bf16.gmra.mxu0 %v1284
    %v1417 = vpop.f32.mrf.mxu0
    %v1418 = vadd.f32 0.0, %v1417
    %v1419 = vpop.f32.mrf.mxu0
    %v1420 = vpop.f32.mrf.mxu0
    %v1421 = vadd.f32 0.0, %v1420
    %v1422 = vpop.f32.mrf.mxu0
    %1423 = vmatprep.mubr.bf16.mxu0 0
    %1424 = vmatmul.mubr.bf16.gmra.mxu0 %v1287
    %v1425 = vpop.f32.mrf.mxu0
    %v1426 = vadd.f32 0.0, %v1425
    %v1427 = vpop.f32.mrf.mxu0
    %v1428 = vpop.f32.mrf.mxu0
    %v1429 = vadd.f32 0.0, %v1428
    %v1430 = vpop.f32.mrf.mxu0
    %1431 = vmatprep.mubr.bf16.mxu0 0
    %1432 = vmatmul.mubr.bf16.gmra.mxu0 %v1290
    %v1433 = vpop.f32.mrf.mxu0
    %v1434 = vadd.f32 0.0, %v1433
    %v1435 = vpop.f32.mrf.mxu0
    %v1436 = vpop.f32.mrf.mxu0
    %v1437 = vpop.f32.mrf.mxu0
    %1438 = vdwg.mxu0
    %v1439 = vadd.f32 %v1125, %v1330
    %v1440 = vadd.f32 %v1126, %v1333
    %v1441 = vadd.f32 %v1127, %v1338
    %v1442 = vadd.f32 %v1128, %v1341
    %v1443 = vadd.f32 %v1129, %v1346
    %v1444 = vadd.f32 %v1130, %v1349
    %v1445 = vadd.f32 %v1131, %v1354
    %v1446 = vadd.f32 %v1132, %v1357
    %v1447 = vadd.f32 %v1133, %v1362
    %v1448 = vadd.f32 %v1134, %v1365
    %v1449 = vadd.f32 %v1135, %v1370
    %v1450 = vadd.f32 %v1136, %v1373
    %v1451 = vadd.f32 %v1137, %v1378
    %v1452 = vadd.f32 %v1138, %v1381
    %v1453 = vadd.f32 %v1139, %v1386
    %v1454 = vadd.f32 %v1140, %v1389
    %v1455 = vadd.f32 %v1141, %v1394
    %v1456 = vadd.f32 %v1142, %v1397
    %v1457 = vadd.f32 %v1143, %v1402
    %v1458 = vadd.f32 %v1144, %v1405
    %v1459 = vadd.f32 %v1145, %v1410
    %v1460 = vadd.f32 %v1146, %v1413
    %v1461 = vadd.f32 %v1147, %v1418
    %v1462 = vadd.f32 %v1148, %v1421
    %v1463 = vadd.f32 %v1149, %v1426
    %v1464 = vadd.f32 %v1150, %v1429
    %v1465 = vadd.f32 %v1151, %v1434
    %v1466 = vld [vmem:[#allocation2] sm:$0xf]
    %v1467 = vld [vmem:[#allocation2 + $0x4] sm:$0xf]
    %v1468 = vld [vmem:[#allocation2 + $0x8] sm:$0xf]
    %v1469 = vld [vmem:[#allocation2 + $0xc] sm:$0xf]
    %v1470 = vld [vmem:[#allocation2 + $0x10] sm:$0xf]
    %v1471 = vld [vmem:[#allocation2 + $0x14] sm:$0xf]
    %v1472 = vld [vmem:[#allocation2 + $0x18] sm:$0xf]
    %v1473 = vld [vmem:[#allocation2 + $0x1c] sm:$0xf]
    %v1474 = vld [vmem:[#allocation2 + $0x20] sm:$0xf]
    %v1475 = vld [vmem:[#allocation2 + $0x24] sm:$0xf]
    %v1476 = vld [vmem:[#allocation2 + $0x28] sm:$0xf]
    %v1477 = vld [vmem:[#allocation2 + $0x2c] sm:$0xf]
    %v1478 = vld [vmem:[#allocation2 + $0x30] sm:$0xf]
    %v1479 = vld [vmem:[#allocation2 + $0x34] sm:$0xf]
    %v1480 = vld [vmem:[#allocation2 + $0x38] sm:$0xf]
    %v1481 = vld [vmem:[#allocation2 + $0x3c] sm:$0xf]
    %v1482 = vld [vmem:[#allocation2 + $0x40] sm:$0xf]
    %v1483 = vld [vmem:[#allocation2 + $0x44] sm:$0xf]
    %v1484 = vld [vmem:[#allocation2 + $0x48] sm:$0xf]
    %v1485 = vld [vmem:[#allocation2 + $0x4c] sm:$0xf]
    %v1486 = vld [vmem:[#allocation2 + $0x50] sm:$0xf]
    %v1487 = vld [vmem:[#allocation2 + $0x54] sm:$0xf]
    %v1488 = vld [vmem:[#allocation2 + $0x58] sm:$0xf]
    %v1489 = vld [vmem:[#allocation2 + $0x5c] sm:$0xf]
    %v1490 = vld [vmem:[#allocation2 + $0x60] sm:$0xf]
    %v1491 = vld [vmem:[#allocation2 + $0x64] sm:$0xf]
    %v1492 = vld [vmem:[#allocation2 + $0x68] sm:$0xf]
    %v1493 = vld [vmem:[#allocation2 + $0x6c] sm:$0x1]
    %s1494 = scalar_lea.vmem %s2, 8
    %v1495 = vld [vmem:[%s1494] sm:$0xf]
    %v1524 = vunpack.c.l.b16 %v1466
    %v1525 = vunpack.c.l.b16 %v1467
    %v1526 = vunpack.c.l.b16 %v1468
    %v1527 = vunpack.c.l.b16 %v1469
    %v1528 = vunpack.c.l.b16 %v1470
    %v1529 = vunpack.c.l.b16 %v1471
    %v1530 = vunpack.c.l.b16 %v1472
    %v1531 = vunpack.c.l.b16 %v1473
    %v1532 = vunpack.c.l.b16 %v1474
    %v1533 = vunpack.c.l.b16 %v1475
    %v1534 = vunpack.c.l.b16 %v1476
    %v1535 = vunpack.c.l.b16 %v1477
    %v1536 = vunpack.c.l.b16 %v1478
    %v1537 = vunpack.c.l.b16 %v1479
    %v1538 = vunpack.c.l.b16 %v1480
    %v1539 = vunpack.c.l.b16 %v1481
    %v1540 = vunpack.c.l.b16 %v1482
    %v1541 = vunpack.c.l.b16 %v1483
    %v1542 = vunpack.c.l.b16 %v1484
    %v1543 = vunpack.c.l.b16 %v1485
    %v1544 = vunpack.c.l.b16 %v1486
    %v1545 = vunpack.c.l.b16 %v1487
    %v1546 = vunpack.c.l.b16 %v1488
    %v1547 = vunpack.c.l.b16 %v1489
    %v1548 = vunpack.c.l.b16 %v1490
    %v1549 = vunpack.c.l.b16 %v1491
    %v1550 = vunpack.c.l.b16 %v1492
    %v1551 = vunpack.c.l.b16 %v1493
    %v1552 = vpack.c.b16 %v1525, %v1524
    %v1553 = vpack.c.b16 %v1527, %v1526
    %v1554 = vpack.c.b16 %v1529, %v1528
    %v1555 = vpack.c.b16 %v1531, %v1530
    %v1556 = vpack.c.b16 %v1533, %v1532
    %v1557 = vpack.c.b16 %v1535, %v1534
    %v1558 = vpack.c.b16 %v1537, %v1536
    %v1559 = vpack.c.b16 %v1539, %v1538
    %v1560 = vpack.c.b16 %v1541, %v1540
    %v1561 = vpack.c.b16 %v1543, %v1542
    %v1562 = vpack.c.b16 %v1545, %v1544
    %v1563 = vpack.c.b16 %v1547, %v1546
    %v1564 = vpack.c.b16 %v1549, %v1548
    %v1565 = vpack.c.b16 %v1551, %v1550
    %vm1566 = vsmask.f32 7424
    %v1568 = vshrl.u32 %v1552, 16
    %v1570 = vshll.u32 %v1552, 16
    %v1572 = vrot.slane %v1570, 1
    %v1573 = vor.u32 %v1568, %v1572
    %v1575 = vshll.u32 %v1553, 16
    %v1577 = vrot.slane %v1575, 1
    %v1578 = vsel %vm1566, %v1573, %v1577
    %v1579 = vshrl.u32 %v1553, 16
    %v1581 = vor.u32 %v1579, %v1577
    %v1583 = vshll.u32 %v1554, 16
    %v1585 = vrot.slane %v1583, 1
    %v1586 = vsel %vm1566, %v1581, %v1585
    %v1587 = vshrl.u32 %v1554, 16
    %v1589 = vor.u32 %v1587, %v1585
    %v1591 = vshll.u32 %v1555, 16
    %v1593 = vrot.slane %v1591, 1
    %v1594 = vsel %vm1566, %v1589, %v1593
    %v1595 = vshrl.u32 %v1555, 16
    %v1597 = vor.u32 %v1595, %v1593
    %v1599 = vshll.u32 %v1556, 16
    %v1601 = vrot.slane %v1599, 1
    %v1602 = vsel %vm1566, %v1597, %v1601
    %v1603 = vshrl.u32 %v1556, 16
    %v1605 = vor.u32 %v1603, %v1601
    %v1607 = vshll.u32 %v1557, 16
    %v1609 = vrot.slane %v1607, 1
    %v1610 = vsel %vm1566, %v1605, %v1609
    %v1611 = vshrl.u32 %v1557, 16
    %v1613 = vor.u32 %v1611, %v1609
    %v1615 = vshll.u32 %v1558, 16
    %v1617 = vrot.slane %v1615, 1
    %v1618 = vsel %vm1566, %v1613, %v1617
    %v1619 = vshrl.u32 %v1558, 16
    %v1621 = vor.u32 %v1619, %v1617
    %v1623 = vshll.u32 %v1559, 16
    %v1625 = vrot.slane %v1623, 1
    %v1626 = vsel %vm1566, %v1621, %v1625
    %v1627 = vshrl.u32 %v1559, 16
    %v1629 = vor.u32 %v1627, %v1625
    %v1631 = vshll.u32 %v1560, 16
    %v1633 = vrot.slane %v1631, 1
    %v1634 = vsel %vm1566, %v1629, %v1633
    %v1635 = vshrl.u32 %v1560, 16
    %v1637 = vor.u32 %v1635, %v1633
    %v1639 = vshll.u32 %v1561, 16
    %v1641 = vrot.slane %v1639, 1
    %v1642 = vsel %vm1566, %v1637, %v1641
    %v1643 = vshrl.u32 %v1561, 16
    %v1645 = vor.u32 %v1643, %v1641
    %v1647 = vshll.u32 %v1562, 16
    %v1649 = vrot.slane %v1647, 1
    %v1650 = vsel %vm1566, %v1645, %v1649
    %v1651 = vshrl.u32 %v1562, 16
    %v1653 = vor.u32 %v1651, %v1649
    %v1655 = vshll.u32 %v1563, 16
    %v1657 = vrot.slane %v1655, 1
    %v1658 = vsel %vm1566, %v1653, %v1657
    %v1659 = vshrl.u32 %v1563, 16
    %v1661 = vor.u32 %v1659, %v1657
    %v1663 = vshll.u32 %v1564, 16
    %v1665 = vrot.slane %v1663, 1
    %v1666 = vsel %vm1566, %v1661, %v1665
    %v1667 = vshrl.u32 %v1564, 16
    %v1669 = vor.u32 %v1667, %v1665
    %v1671 = vshll.u32 %v1565, 16
    %v1673 = vrot.slane %v1671, 1
    %v1674 = vsel %vm1566, %v1669, %v1673
    %v1675 = vshrl.u32 %v1565, 16
    %v1677 = vor.u32 %v1675, %v1673
    %v1679 = vsel %vm934, %v1578, 0
    %v1682 = vsel %vm934, %v1586, 0
    %v1685 = vsel %vm934, %v1594, 0
    %v1688 = vsel %vm934, %v1602, 0
    %v1691 = vsel %vm934, %v1610, 0
    %v1694 = vsel %vm934, %v1618, 0
    %v1697 = vsel %vm934, %v1626, 0
    %v1700 = vsel %vm934, %v1634, 0
    %v1703 = vsel %vm934, %v1642, 0
    %v1706 = vsel %vm934, %v1650, 0
    %v1709 = vsel %vm934, %v1658, 0
    %v1712 = vsel %vm934, %v1666, 0
    %v1715 = vsel %vm934, %v1674, 0
    %v1718 = vsel %vm934, %v1677, 0
    %v1721 = vsel %vm977, %v1495, 0
    %1723 = vmatprep.subr.bf16.mxu0 0
    %1724 = vmatpush1.bf16.msra.mxu0 0
    %1725 = vmatprep.subr.bf16.mxu0 0
    %1726 = vmatpush1.bf16.msra.mxu0 0
    %1727 = vmatprep.subr.bf16.mxu0 0
    %1728 = vmatpush1.bf16.msra.mxu0 0
    %1729 = vmatprep.subr.bf16.mxu0 0
    %1730 = vmatpush1.bf16.msra.mxu0 0
    %1731 = vmatprep.subr.bf16.mxu0 0
    %1732 = vmatpush1.bf16.msra.mxu0 0
    %1733 = vmatprep.subr.bf16.mxu0 0
    %1734 = vmatpush1.bf16.msra.mxu0 0
    %1735 = vmatprep.subr.bf16.mxu0 0
    %1736 = vmatpush1.bf16.msra.mxu0 0
    %1737 = vmatprep.subr.bf16.mxu0 0
    %1738 = vmatpush1.bf16.msra.mxu0 %v1721
    %1739 = vmatprep.subr.bf16.mxu0 0
    %1740 = vmatpush2.bf16.msra.mxu0 0
    %1741 = vmatprep.subr.bf16.mxu0 0
    %1742 = vmatpush2.bf16.msra.mxu0 0
    %1743 = vmatprep.subr.bf16.mxu0 0
    %1744 = vmatpush2.bf16.msra.mxu0 0
    %1745 = vmatprep.subr.bf16.mxu0 0
    %1746 = vmatpush2.bf16.msra.mxu0 0
    %1747 = vmatprep.subr.bf16.mxu0 0
    %1748 = vmatpush2.bf16.msra.mxu0 0
    %1749 = vmatprep.subr.bf16.mxu0 0
    %1750 = vmatpush2.bf16.msra.mxu0 0
    %1751 = vmatprep.subr.bf16.mxu0 0
    %1752 = vmatpush2.bf16.msra.mxu0 0
    %1753 = vmatprep.subr.bf16.mxu0 0
    %1754 = vmatpush2.bf16.msra.mxu0 0
    %1755 = vmatprep.mubr.bf16.mxu0 0
    %1756 = vmatmul.mubr.bf16.gmra.mxu0 %v1679
    %v1757 = vpop.f32.mrf.mxu0
    %v1758 = vadd.f32 0.0, %v1757
    %v1759 = vpop.f32.mrf.mxu0
    %v1760 = vpop.f32.mrf.mxu0
    %v1761 = vadd.f32 0.0, %v1760
    %v1762 = vpop.f32.mrf.mxu0
    %1763 = vmatprep.mubr.bf16.mxu0 0
    %1764 = vmatmul.mubr.bf16.gmra.mxu0 %v1682
    %v1765 = vpop.f32.mrf.mxu0
    %v1766 = vadd.f32 0.0, %v1765
    %v1767 = vpop.f32.mrf.mxu0
    %v1768 = vpop.f32.mrf.mxu0
    %v1769 = vadd.f32 0.0, %v1768
    %v1770 = vpop.f32.mrf.mxu0
    %1771 = vmatprep.mubr.bf16.mxu0 0
    %1772 = vmatmul.mubr.bf16.gmra.mxu0 %v1685
    %v1773 = vpop.f32.mrf.mxu0
    %v1774 = vadd.f32 0.0, %v1773
    %v1775 = vpop.f32.mrf.mxu0
    %v1776 = vpop.f32.mrf.mxu0
    %v1777 = vadd.f32 0.0, %v1776
    %v1778 = vpop.f32.mrf.mxu0
    %1779 = vmatprep.mubr.bf16.mxu0 0
    %1780 = vmatmul.mubr.bf16.gmra.mxu0 %v1688
    %v1781 = vpop.f32.mrf.mxu0
    %v1782 = vadd.f32 0.0, %v1781
    %v1783 = vpop.f32.mrf.mxu0
    %v1784 = vpop.f32.mrf.mxu0
    %v1785 = vadd.f32 0.0, %v1784
    %v1786 = vpop.f32.mrf.mxu0
    %1787 = vmatprep.mubr.bf16.mxu0 0
    %1788 = vmatmul.mubr.bf16.gmra.mxu0 %v1691
    %v1789 = vpop.f32.mrf.mxu0
    %v1790 = vadd.f32 0.0, %v1789
    %v1791 = vpop.f32.mrf.mxu0
    %v1792 = vpop.f32.mrf.mxu0
    %v1793 = vadd.f32 0.0, %v1792
    %v1794 = vpop.f32.mrf.mxu0
    %1795 = vmatprep.mubr.bf16.mxu0 0
    %1796 = vmatmul.mubr.bf16.gmra.mxu0 %v1694
    %v1797 = vpop.f32.mrf.mxu0
    %v1798 = vadd.f32 0.0, %v1797
    %v1799 = vpop.f32.mrf.mxu0
    %v1800 = vpop.f32.mrf.mxu0
    %v1801 = vadd.f32 0.0, %v1800
    %v1802 = vpop.f32.mrf.mxu0
    %1803 = vmatprep.mubr.bf16.mxu0 0
    %1804 = vmatmul.mubr.bf16.gmra.mxu0 %v1697
    %v1805 = vpop.f32.mrf.mxu0
    %v1806 = vadd.f32 0.0, %v1805
    %v1807 = vpop.f32.mrf.mxu0
    %v1808 = vpop.f32.mrf.mxu0
    %v1809 = vadd.f32 0.0, %v1808
    %v1810 = vpop.f32.mrf.mxu0
    %1811 = vmatprep.mubr.bf16.mxu0 0
    %1812 = vmatmul.mubr.bf16.gmra.mxu0 %v1700
    %v1813 = vpop.f32.mrf.mxu0
    %v1814 = vadd.f32 0.0, %v1813
    %v1815 = vpop.f32.mrf.mxu0
    %v1816 = vpop.f32.mrf.mxu0
    %v1817 = vadd.f32 0.0, %v1816
    %v1818 = vpop.f32.mrf.mxu0
    %1819 = vmatprep.mubr.bf16.mxu0 0
    %1820 = vmatmul.mubr.bf16.gmra.mxu0 %v1703
    %v1821 = vpop.f32.mrf.mxu0
    %v1822 = vadd.f32 0.0, %v1821
    %v1823 = vpop.f32.mrf.mxu0
    %v1824 = vpop.f32.mrf.mxu0
    %v1825 = vadd.f32 0.0, %v1824
    %v1826 = vpop.f32.mrf.mxu0
    %1827 = vmatprep.mubr.bf16.mxu0 0
    %1828 = vmatmul.mubr.bf16.gmra.mxu0 %v1706
    %v1829 = vpop.f32.mrf.mxu0
    %v1830 = vadd.f32 0.0, %v1829
    %v1831 = vpop.f32.mrf.mxu0
    %v1832 = vpop.f32.mrf.mxu0
    %v1833 = vadd.f32 0.0, %v1832
    %v1834 = vpop.f32.mrf.mxu0
    %1835 = vmatprep.mubr.bf16.mxu0 0
    %1836 = vmatmul.mubr.bf16.gmra.mxu0 %v1709
    %v1837 = vpop.f32.mrf.mxu0
    %v1838 = vadd.f32 0.0, %v1837
    %v1839 = vpop.f32.mrf.mxu0
    %v1840 = vpop.f32.mrf.mxu0
    %v1841 = vadd.f32 0.0, %v1840
    %v1842 = vpop.f32.mrf.mxu0
    %1843 = vmatprep.mubr.bf16.mxu0 0
    %1844 = vmatmul.mubr.bf16.gmra.mxu0 %v1712
    %v1845 = vpop.f32.mrf.mxu0
    %v1846 = vadd.f32 0.0, %v1845
    %v1847 = vpop.f32.mrf.mxu0
    %v1848 = vpop.f32.mrf.mxu0
    %v1849 = vadd.f32 0.0, %v1848
    %v1850 = vpop.f32.mrf.mxu0
    %1851 = vmatprep.mubr.bf16.mxu0 0
    %1852 = vmatmul.mubr.bf16.gmra.mxu0 %v1715
    %v1853 = vpop.f32.mrf.mxu0
    %v1854 = vadd.f32 0.0, %v1853
    %v1855 = vpop.f32.mrf.mxu0
    %v1856 = vpop.f32.mrf.mxu0
    %v1857 = vadd.f32 0.0, %v1856
    %v1858 = vpop.f32.mrf.mxu0
    %1859 = vmatprep.mubr.bf16.mxu0 0
    %1860 = vmatmul.mubr.bf16.gmra.mxu0 %v1718
    %v1861 = vpop.f32.mrf.mxu0
    %v1862 = vadd.f32 0.0, %v1861
    %v1863 = vpop.f32.mrf.mxu0
    %v1864 = vpop.f32.mrf.mxu0
    %v1865 = vpop.f32.mrf.mxu0
    %1866 = vdwg.mxu0
    %v1867 = vadd.f32 %v1439, %v1758
    %v1868 = vadd.f32 %v1440, %v1761
    %v1869 = vadd.f32 %v1441, %v1766
    %v1870 = vadd.f32 %v1442, %v1769
    %v1871 = vadd.f32 %v1443, %v1774
    %v1872 = vadd.f32 %v1444, %v1777
    %v1873 = vadd.f32 %v1445, %v1782
    %v1874 = vadd.f32 %v1446, %v1785
    %v1875 = vadd.f32 %v1447, %v1790
    %v1876 = vadd.f32 %v1448, %v1793
    %v1877 = vadd.f32 %v1449, %v1798
    %v1878 = vadd.f32 %v1450, %v1801
    %v1879 = vadd.f32 %v1451, %v1806
    %v1880 = vadd.f32 %v1452, %v1809
    %v1881 = vadd.f32 %v1453, %v1814
    %v1882 = vadd.f32 %v1454, %v1817
    %v1883 = vadd.f32 %v1455, %v1822
    %v1884 = vadd.f32 %v1456, %v1825
    %v1885 = vadd.f32 %v1457, %v1830
    %v1886 = vadd.f32 %v1458, %v1833
    %v1887 = vadd.f32 %v1459, %v1838
    %v1888 = vadd.f32 %v1460, %v1841
    %v1889 = vadd.f32 %v1461, %v1846
    %v1890 = vadd.f32 %v1462, %v1849
    %v1891 = vadd.f32 %v1463, %v1854
    %v1892 = vadd.f32 %v1464, %v1857
    %v1893 = vadd.f32 %v1465, %v1862
    %v1894 = vld [vmem:[%s1152] sm:$0xf]
    %v1895 = vld [vmem:[%s1152 + $0x4] sm:$0xf]
    %v1896 = vld [vmem:[%s1152 + $0x8] sm:$0xf]
    %v1897 = vld [vmem:[%s1152 + $0xc] sm:$0xf]
    %v1898 = vld [vmem:[%s1152 + $0x10] sm:$0xf]
    %v1899 = vld [vmem:[%s1152 + $0x14] sm:$0xf]
    %v1900 = vld [vmem:[%s1152 + $0x18] sm:$0xf]
    %v1901 = vld [vmem:[%s1152 + $0x1c] sm:$0xf]
    %v1902 = vld [vmem:[%s1152 + $0x20] sm:$0xf]
    %v1903 = vld [vmem:[%s1152 + $0x24] sm:$0xf]
    %v1904 = vld [vmem:[%s1152 + $0x28] sm:$0xf]
    %v1905 = vld [vmem:[%s1152 + $0x2c] sm:$0xf]
    %v1906 = vld [vmem:[%s1152 + $0x30] sm:$0xf]
    %v1907 = vld [vmem:[%s1152 + $0x34] sm:$0xf]
    %v1908 = vld [vmem:[%s1152 + $0x38] sm:$0xf]
    %v1909 = vld [vmem:[%s1152 + $0x3c] sm:$0xf]
    %v1910 = vld [vmem:[%s1152 + $0x40] sm:$0xf]
    %v1911 = vld [vmem:[%s1152 + $0x44] sm:$0xf]
    %v1912 = vld [vmem:[%s1152 + $0x48] sm:$0xf]
    %v1913 = vld [vmem:[%s1152 + $0x4c] sm:$0xf]
    %v1914 = vld [vmem:[%s1152 + $0x50] sm:$0xf]
    %v1915 = vld [vmem:[%s1152 + $0x54] sm:$0xf]
    %v1916 = vld [vmem:[%s1152 + $0x58] sm:$0xf]
    %v1917 = vld [vmem:[%s1152 + $0x5c] sm:$0xf]
    %v1918 = vld [vmem:[%s1152 + $0x60] sm:$0xf]
    %v1919 = vld [vmem:[%s1152 + $0x64] sm:$0xf]
    %v1920 = vld [vmem:[%s1152 + $0x68] sm:$0xf]
    %v1921 = vld [vmem:[%s1152 + $0x6c] sm:$0x1]
    %s1922 = scalar_lea.vmem %s2, 12
    %v1923 = vld [vmem:[%s1922] sm:$0xf]
    %v1952 = vunpack.c.l.b16 %v1894
    %v1953 = vunpack.c.l.b16 %v1895
    %v1954 = vunpack.c.l.b16 %v1896
    %v1955 = vunpack.c.l.b16 %v1897
    %v1956 = vunpack.c.l.b16 %v1898
    %v1957 = vunpack.c.l.b16 %v1899
    %v1958 = vunpack.c.l.b16 %v1900
    %v1959 = vunpack.c.l.b16 %v1901
    %v1960 = vunpack.c.l.b16 %v1902
    %v1961 = vunpack.c.l.b16 %v1903
    %v1962 = vunpack.c.l.b16 %v1904
    %v1963 = vunpack.c.l.b16 %v1905
    %v1964 = vunpack.c.l.b16 %v1906
    %v1965 = vunpack.c.l.b16 %v1907
    %v1966 = vunpack.c.l.b16 %v1908
    %v1967 = vunpack.c.l.b16 %v1909
    %v1968 = vunpack.c.l.b16 %v1910
    %v1969 = vunpack.c.l.b16 %v1911
    %v1970 = vunpack.c.l.b16 %v1912
    %v1971 = vunpack.c.l.b16 %v1913
    %v1972 = vunpack.c.l.b16 %v1914
    %v1973 = vunpack.c.l.b16 %v1915
    %v1974 = vunpack.c.l.b16 %v1916
    %v1975 = vunpack.c.l.b16 %v1917
    %v1976 = vunpack.c.l.b16 %v1918
    %v1977 = vunpack.c.l.b16 %v1919
    %v1978 = vunpack.c.l.b16 %v1920
    %v1979 = vunpack.c.l.b16 %v1921
    %v1980 = vpack.c.b16 %v1953, %v1952
    %v1981 = vpack.c.b16 %v1955, %v1954
    %v1982 = vpack.c.b16 %v1957, %v1956
    %v1983 = vpack.c.b16 %v1959, %v1958
    %v1984 = vpack.c.b16 %v1961, %v1960
    %v1985 = vpack.c.b16 %v1963, %v1962
    %v1986 = vpack.c.b16 %v1965, %v1964
    %v1987 = vpack.c.b16 %v1967, %v1966
    %v1988 = vpack.c.b16 %v1969, %v1968
    %v1989 = vpack.c.b16 %v1971, %v1970
    %v1990 = vpack.c.b16 %v1973, %v1972
    %v1991 = vpack.c.b16 %v1975, %v1974
    %v1992 = vpack.c.b16 %v1977, %v1976
    %v1993 = vpack.c.b16 %v1979, %v1978
    %v1995 = vshrl.u32 %v1980, 16
    %v1997 = vshll.u32 %v1980, 16
    %v1999 = vrot.slane %v1997, 1
    %v2000 = vor.u32 %v1995, %v1999
    %v2002 = vshll.u32 %v1981, 16
    %v2004 = vrot.slane %v2002, 1
    %v2005 = vsel %vm1566, %v2000, %v2004
    %v2006 = vshrl.u32 %v1981, 16
    %v2008 = vor.u32 %v2006, %v2004
    %v2010 = vshll.u32 %v1982, 16
    %v2012 = vrot.slane %v2010, 1
    %v2013 = vsel %vm1566, %v2008, %v2012
    %v2014 = vshrl.u32 %v1982, 16
    %v2016 = vor.u32 %v2014, %v2012
    %v2018 = vshll.u32 %v1983, 16
    %v2020 = vrot.slane %v2018, 1
    %v2021 = vsel %vm1566, %v2016, %v2020
    %v2022 = vshrl.u32 %v1983, 16
    %v2024 = vor.u32 %v2022, %v2020
    %v2026 = vshll.u32 %v1984, 16
    %v2028 = vrot.slane %v2026, 1
    %v2029 = vsel %vm1566, %v2024, %v2028
    %v2030 = vshrl.u32 %v1984, 16
    %v2032 = vor.u32 %v2030, %v2028
    %v2034 = vshll.u32 %v1985, 16
    %v2036 = vrot.slane %v2034, 1
    %v2037 = vsel %vm1566, %v2032, %v2036
    %v2038 = vshrl.u32 %v1985, 16
    %v2040 = vor.u32 %v2038, %v2036
    %v2042 = vshll.u32 %v1986, 16
    %v2044 = vrot.slane %v2042, 1
    %v2045 = vsel %vm1566, %v2040, %v2044
    %v2046 = vshrl.u32 %v1986, 16
    %v2048 = vor.u32 %v2046, %v2044
    %v2050 = vshll.u32 %v1987, 16
    %v2052 = vrot.slane %v2050, 1
    %v2053 = vsel %vm1566, %v2048, %v2052
    %v2054 = vshrl.u32 %v1987, 16
    %v2056 = vor.u32 %v2054, %v2052
    %v2058 = vshll.u32 %v1988, 16
    %v2060 = vrot.slane %v2058, 1
    %v2061 = vsel %vm1566, %v2056, %v2060
    %v2062 = vshrl.u32 %v1988, 16
    %v2064 = vor.u32 %v2062, %v2060
    %v2066 = vshll.u32 %v1989, 16
    %v2068 = vrot.slane %v2066, 1
    %v2069 = vsel %vm1566, %v2064, %v2068
    %v2070 = vshrl.u32 %v1989, 16
    %v2072 = vor.u32 %v2070, %v2068
    %v2074 = vshll.u32 %v1990, 16
    %v2076 = vrot.slane %v2074, 1
    %v2077 = vsel %vm1566, %v2072, %v2076
    %v2078 = vshrl.u32 %v1990, 16
    %v2080 = vor.u32 %v2078, %v2076
    %v2082 = vshll.u32 %v1991, 16
    %v2084 = vrot.slane %v2082, 1
    %v2085 = vsel %vm1566, %v2080, %v2084
    %v2086 = vshrl.u32 %v1991, 16
    %v2088 = vor.u32 %v2086, %v2084
    %v2090 = vshll.u32 %v1992, 16
    %v2092 = vrot.slane %v2090, 1
    %v2093 = vsel %vm1566, %v2088, %v2092
    %v2094 = vshrl.u32 %v1992, 16
    %v2096 = vor.u32 %v2094, %v2092
    %v2098 = vshll.u32 %v1993, 16
    %v2100 = vrot.slane %v2098, 1
    %v2101 = vsel %vm1566, %v2096, %v2100
    %v2102 = vshrl.u32 %v1993, 16
    %v2104 = vor.u32 %v2102, %v2100
    %v2106 = vsel %vm934, %v2005, 0
    %v2109 = vsel %vm934, %v2013, 0
    %v2112 = vsel %vm934, %v2021, 0
    %v2115 = vsel %vm934, %v2029, 0
    %v2118 = vsel %vm934, %v2037, 0
    %v2121 = vsel %vm934, %v2045, 0
    %v2124 = vsel %vm934, %v2053, 0
    %v2127 = vsel %vm934, %v2061, 0
    %v2130 = vsel %vm934, %v2069, 0
    %v2133 = vsel %vm934, %v2077, 0
    %v2136 = vsel %vm934, %v2085, 0
    %v2139 = vsel %vm934, %v2093, 0
    %v2142 = vsel %vm934, %v2101, 0
    %v2145 = vsel %vm934, %v2104, 0
    %v2148 = vsel %vm977, %v1923, 0
    %2150 = vmatprep.subr.bf16.mxu0 0
    %2151 = vmatpush1.bf16.msra.mxu0 0
    %2152 = vmatprep.subr.bf16.mxu0 0
    %2153 = vmatpush1.bf16.msra.mxu0 0
    %2154 = vmatprep.subr.bf16.mxu0 0
    %2155 = vmatpush1.bf16.msra.mxu0 0
    %2156 = vmatprep.subr.bf16.mxu0 0
    %2157 = vmatpush1.bf16.msra.mxu0 0
    %2158 = vmatprep.subr.bf16.mxu0 0
    %2159 = vmatpush1.bf16.msra.mxu0 0
    %2160 = vmatprep.subr.bf16.mxu0 0
    %2161 = vmatpush1.bf16.msra.mxu0 0
    %2162 = vmatprep.subr.bf16.mxu0 0
    %2163 = vmatpush1.bf16.msra.mxu0 0
    %2164 = vmatprep.subr.bf16.mxu0 0
    %2165 = vmatpush1.bf16.msra.mxu0 %v2148
    %2166 = vmatprep.subr.bf16.mxu0 0
    %2167 = vmatpush2.bf16.msra.mxu0 0
    %2168 = vmatprep.subr.bf16.mxu0 0
    %2169 = vmatpush2.bf16.msra.mxu0 0
    %2170 = vmatprep.subr.bf16.mxu0 0
    %2171 = vmatpush2.bf16.msra.mxu0 0
    %2172 = vmatprep.subr.bf16.mxu0 0
    %2173 = vmatpush2.bf16.msra.mxu0 0
    %2174 = vmatprep.subr.bf16.mxu0 0
    %2175 = vmatpush2.bf16.msra.mxu0 0
    %2176 = vmatprep.subr.bf16.mxu0 0
    %2177 = vmatpush2.bf16.msra.mxu0 0
    %2178 = vmatprep.subr.bf16.mxu0 0
    %2179 = vmatpush2.bf16.msra.mxu0 0
    %2180 = vmatprep.subr.bf16.mxu0 0
    %2181 = vmatpush2.bf16.msra.mxu0 0
    %2182 = vmatprep.mubr.bf16.mxu0 0
    %2183 = vmatmul.mubr.bf16.gmra.mxu0 %v2106
    %v2184 = vpop.f32.mrf.mxu0
    %v2185 = vadd.f32 0.0, %v2184
    %v2186 = vpop.f32.mrf.mxu0
    %v2187 = vpop.f32.mrf.mxu0
    %v2188 = vadd.f32 0.0, %v2187
    %v2189 = vpop.f32.mrf.mxu0
    %2190 = vmatprep.mubr.bf16.mxu0 0
    %2191 = vmatmul.mubr.bf16.gmra.mxu0 %v2109
    %v2192 = vpop.f32.mrf.mxu0
    %v2193 = vadd.f32 0.0, %v2192
    %v2194 = vpop.f32.mrf.mxu0
    %v2195 = vpop.f32.mrf.mxu0
    %v2196 = vadd.f32 0.0, %v2195
    %v2197 = vpop.f32.mrf.mxu0
    %2198 = vmatprep.mubr.bf16.mxu0 0
    %2199 = vmatmul.mubr.bf16.gmra.mxu0 %v2112
    %v2200 = vpop.f32.mrf.mxu0
    %v2201 = vadd.f32 0.0, %v2200
    %v2202 = vpop.f32.mrf.mxu0
    %v2203 = vpop.f32.mrf.mxu0
    %v2204 = vadd.f32 0.0, %v2203
    %v2205 = vpop.f32.mrf.mxu0
    %2206 = vmatprep.mubr.bf16.mxu0 0
    %2207 = vmatmul.mubr.bf16.gmra.mxu0 %v2115
    %v2208 = vpop.f32.mrf.mxu0
    %v2209 = vadd.f32 0.0, %v2208
    %v2210 = vpop.f32.mrf.mxu0
    %v2211 = vpop.f32.mrf.mxu0
    %v2212 = vadd.f32 0.0, %v2211
    %v2213 = vpop.f32.mrf.mxu0
    %2214 = vmatprep.mubr.bf16.mxu0 0
    %2215 = vmatmul.mubr.bf16.gmra.mxu0 %v2118
    %v2216 = vpop.f32.mrf.mxu0
    %v2217 = vadd.f32 0.0, %v2216
    %v2218 = vpop.f32.mrf.mxu0
    %v2219 = vpop.f32.mrf.mxu0
    %v2220 = vadd.f32 0.0, %v2219
    %v2221 = vpop.f32.mrf.mxu0
    %2222 = vmatprep.mubr.bf16.mxu0 0
    %2223 = vmatmul.mubr.bf16.gmra.mxu0 %v2121
    %v2224 = vpop.f32.mrf.mxu0
    %v2225 = vadd.f32 0.0, %v2224
    %v2226 = vpop.f32.mrf.mxu0
    %v2227 = vpop.f32.mrf.mxu0
    %v2228 = vadd.f32 0.0, %v2227
    %v2229 = vpop.f32.mrf.mxu0
    %2230 = vmatprep.mubr.bf16.mxu0 0
    %2231 = vmatmul.mubr.bf16.gmra.mxu0 %v2124
    %v2232 = vpop.f32.mrf.mxu0
    %v2233 = vadd.f32 0.0, %v2232
    %v2234 = vpop.f32.mrf.mxu0
    %v2235 = vpop.f32.mrf.mxu0
    %v2236 = vadd.f32 0.0, %v2235
    %v2237 = vpop.f32.mrf.mxu0
    %2238 = vmatprep.mubr.bf16.mxu0 0
    %2239 = vmatmul.mubr.bf16.gmra.mxu0 %v2127
    %v2240 = vpop.f32.mrf.mxu0
    %v2241 = vadd.f32 0.0, %v2240
    %v2242 = vpop.f32.mrf.mxu0
    %v2243 = vpop.f32.mrf.mxu0
    %v2244 = vadd.f32 0.0, %v2243
    %v2245 = vpop.f32.mrf.mxu0
    %2246 = vmatprep.mubr.bf16.mxu0 0
    %2247 = vmatmul.mubr.bf16.gmra.mxu0 %v2130
    %v2248 = vpop.f32.mrf.mxu0
    %v2249 = vadd.f32 0.0, %v2248
    %v2250 = vpop.f32.mrf.mxu0
    %v2251 = vpop.f32.mrf.mxu0
    %v2252 = vadd.f32 0.0, %v2251
    %v2253 = vpop.f32.mrf.mxu0
    %2254 = vmatprep.mubr.bf16.mxu0 0
    %2255 = vmatmul.mubr.bf16.gmra.mxu0 %v2133
    %v2256 = vpop.f32.mrf.mxu0
    %v2257 = vadd.f32 0.0, %v2256
    %v2258 = vpop.f32.mrf.mxu0
    %v2259 = vpop.f32.mrf.mxu0
    %v2260 = vadd.f32 0.0, %v2259
    %v2261 = vpop.f32.mrf.mxu0
    %2262 = vmatprep.mubr.bf16.mxu0 0
    %2263 = vmatmul.mubr.bf16.gmra.mxu0 %v2136
    %v2264 = vpop.f32.mrf.mxu0
    %v2265 = vadd.f32 0.0, %v2264
    %v2266 = vpop.f32.mrf.mxu0
    %v2267 = vpop.f32.mrf.mxu0
    %v2268 = vadd.f32 0.0, %v2267
    %v2269 = vpop.f32.mrf.mxu0
    %2270 = vmatprep.mubr.bf16.mxu0 0
    %2271 = vmatmul.mubr.bf16.gmra.mxu0 %v2139
    %v2272 = vpop.f32.mrf.mxu0
    %v2273 = vadd.f32 0.0, %v2272
    %v2274 = vpop.f32.mrf.mxu0
    %v2275 = vpop.f32.mrf.mxu0
    %v2276 = vadd.f32 0.0, %v2275
    %v2277 = vpop.f32.mrf.mxu0
    %2278 = vmatprep.mubr.bf16.mxu0 0
    %2279 = vmatmul.mubr.bf16.gmra.mxu0 %v2142
    %v2280 = vpop.f32.mrf.mxu0
    %v2281 = vadd.f32 0.0, %v2280
    %v2282 = vpop.f32.mrf.mxu0
    %v2283 = vpop.f32.mrf.mxu0
    %v2284 = vadd.f32 0.0, %v2283
    %v2285 = vpop.f32.mrf.mxu0
    %2286 = vmatprep.mubr.bf16.mxu0 0
    %2287 = vmatmul.mubr.bf16.gmra.mxu0 %v2145
    %v2288 = vpop.f32.mrf.mxu0
    %v2289 = vadd.f32 0.0, %v2288
    %v2290 = vpop.f32.mrf.mxu0
    %v2291 = vpop.f32.mrf.mxu0
    %v2292 = vpop.f32.mrf.mxu0
    %2293 = vdwg.mxu0
    %v2294 = vadd.f32 %v1867, %v2185
    %v2295 = vadd.f32 %v1868, %v2188
    %v2296 = vadd.f32 %v1869, %v2193
    %v2297 = vadd.f32 %v1870, %v2196
    %v2298 = vadd.f32 %v1871, %v2201
    %v2299 = vadd.f32 %v1872, %v2204
    %v2300 = vadd.f32 %v1873, %v2209
    %v2301 = vadd.f32 %v1874, %v2212
    %v2302 = vadd.f32 %v1875, %v2217
    %v2303 = vadd.f32 %v1876, %v2220
    %v2304 = vadd.f32 %v1877, %v2225
    %v2305 = vadd.f32 %v1878, %v2228
    %v2306 = vadd.f32 %v1879, %v2233
    %v2307 = vadd.f32 %v1880, %v2236
    %v2308 = vadd.f32 %v1881, %v2241
    %v2309 = vadd.f32 %v1882, %v2244
    %v2310 = vadd.f32 %v1883, %v2249
    %v2311 = vadd.f32 %v1884, %v2252
    %v2312 = vadd.f32 %v1885, %v2257
    %v2313 = vadd.f32 %v1886, %v2260
    %v2314 = vadd.f32 %v1887, %v2265
    %v2315 = vadd.f32 %v1888, %v2268
    %v2316 = vadd.f32 %v1889, %v2273
    %v2317 = vadd.f32 %v1890, %v2276
    %v2318 = vadd.f32 %v1891, %v2281
    %v2319 = vadd.f32 %v1892, %v2284
    %v2320 = vadd.f32 %v1893, %v2289
    %v2321 = vld [vmem:[#allocation2] sm:$0xe]
    %s2322 = scalar_lea.vmem %s2, 16
    %v2323 = vld [vmem:[%s2322] sm:$0xf]
    %v2325 = vunpack.c.l.b16 %v2321
    %v2326 = vpack.c.b16 %v1525, %v2325
    %vm2327 = vcmask 1046528
    %v2328 = vrot.slane %v2326, 1
    %v2329 = vrot.slane %v1553, 1
    %v2330 = vsel %vm2327, %v2328, %v2329
    %v2331 = vrot.slane %v1554, 1
    %v2332 = vsel %vm2327, %v2329, %v2331
    %v2333 = vrot.slane %v1555, 1
    %v2334 = vsel %vm2327, %v2331, %v2333
    %v2335 = vrot.slane %v1556, 1
    %v2336 = vsel %vm2327, %v2333, %v2335
    %v2337 = vrot.slane %v1557, 1
    %v2338 = vsel %vm2327, %v2335, %v2337
    %v2339 = vrot.slane %v1558, 1
    %v2340 = vsel %vm2327, %v2337, %v2339
    %v2341 = vrot.slane %v1559, 1
    %v2342 = vsel %vm2327, %v2339, %v2341
    %v2343 = vrot.slane %v1560, 1
    %v2344 = vsel %vm2327, %v2341, %v2343
    %v2345 = vrot.slane %v1561, 1
    %v2346 = vsel %vm2327, %v2343, %v2345
    %v2347 = vrot.slane %v1562, 1
    %v2348 = vsel %vm2327, %v2345, %v2347
    %v2349 = vrot.slane %v1563, 1
    %v2350 = vsel %vm2327, %v2347, %v2349
    %v2351 = vrot.slane %v1564, 1
    %v2352 = vsel %vm2327, %v2349, %v2351
    %v2353 = vrot.slane %v1565, 1
    %v2354 = vsel %vm2327, %v2351, %v2353
    %v2356 = vsel %vm934, %v2330, 0
    %v2359 = vsel %vm934, %v2332, 0
    %v2362 = vsel %vm934, %v2334, 0
    %v2365 = vsel %vm934, %v2336, 0
    %v2368 = vsel %vm934, %v2338, 0
    %v2371 = vsel %vm934, %v2340, 0
    %v2374 = vsel %vm934, %v2342, 0
    %v2377 = vsel %vm934, %v2344, 0
    %v2380 = vsel %vm934, %v2346, 0
    %v2383 = vsel %vm934, %v2348, 0
    %v2386 = vsel %vm934, %v2350, 0
    %v2389 = vsel %vm934, %v2352, 0
    %v2392 = vsel %vm934, %v2354, 0
    %v2395 = vsel %vm934, %v2353, 0
    %v2398 = vsel %vm977, %v2323, 0
    %2400 = vmatprep.subr.bf16.mxu0 0
    %2401 = vmatpush1.bf16.msra.mxu0 0
    %2402 = vmatprep.subr.bf16.mxu0 0
    %2403 = vmatpush1.bf16.msra.mxu0 0
    %2404 = vmatprep.subr.bf16.mxu0 0
    %2405 = vmatpush1.bf16.msra.mxu0 0
    %2406 = vmatprep.subr.bf16.mxu0 0
    %2407 = vmatpush1.bf16.msra.mxu0 0
    %2408 = vmatprep.subr.bf16.mxu0 0
    %2409 = vmatpush1.bf16.msra.mxu0 0
    %2410 = vmatprep.subr.bf16.mxu0 0
    %2411 = vmatpush1.bf16.msra.mxu0 0
    %2412 = vmatprep.subr.bf16.mxu0 0
    %2413 = vmatpush1.bf16.msra.mxu0 0
    %2414 = vmatprep.subr.bf16.mxu0 0
    %2415 = vmatpush1.bf16.msra.mxu0 %v2398
    %2416 = vmatprep.subr.bf16.mxu0 0
    %2417 = vmatpush2.bf16.msra.mxu0 0
    %2418 = vmatprep.subr.bf16.mxu0 0
    %2419 = vmatpush2.bf16.msra.mxu0 0
    %2420 = vmatprep.subr.bf16.mxu0 0
    %2421 = vmatpush2.bf16.msra.mxu0 0
    %2422 = vmatprep.subr.bf16.mxu0 0
    %2423 = vmatpush2.bf16.msra.mxu0 0
    %2424 = vmatprep.subr.bf16.mxu0 0
    %2425 = vmatpush2.bf16.msra.mxu0 0
    %2426 = vmatprep.subr.bf16.mxu0 0
    %2427 = vmatpush2.bf16.msra.mxu0 0
    %2428 = vmatprep.subr.bf16.mxu0 0
    %2429 = vmatpush2.bf16.msra.mxu0 0
    %2430 = vmatprep.subr.bf16.mxu0 0
    %2431 = vmatpush2.bf16.msra.mxu0 0
    %2432 = vmatprep.mubr.bf16.mxu0 0
    %2433 = vmatmul.mubr.bf16.gmra.mxu0 %v2356
    %v2434 = vpop.f32.mrf.mxu0
    %v2435 = vadd.f32 0.0, %v2434
    %v2436 = vpop.f32.mrf.mxu0
    %v2437 = vpop.f32.mrf.mxu0
    %v2438 = vadd.f32 0.0, %v2437
    %v2439 = vpop.f32.mrf.mxu0
    %2440 = vmatprep.mubr.bf16.mxu0 0
    %2441 = vmatmul.mubr.bf16.gmra.mxu0 %v2359
    %v2442 = vpop.f32.mrf.mxu0
    %v2443 = vadd.f32 0.0, %v2442
    %v2444 = vpop.f32.mrf.mxu0
    %v2445 = vpop.f32.mrf.mxu0
    %v2446 = vadd.f32 0.0, %v2445
    %v2447 = vpop.f32.mrf.mxu0
    %2448 = vmatprep.mubr.bf16.mxu0 0
    %2449 = vmatmul.mubr.bf16.gmra.mxu0 %v2362
    %v2450 = vpop.f32.mrf.mxu0
    %v2451 = vadd.f32 0.0, %v2450
    %v2452 = vpop.f32.mrf.mxu0
    %v2453 = vpop.f32.mrf.mxu0
    %v2454 = vadd.f32 0.0, %v2453
    %v2455 = vpop.f32.mrf.mxu0
    %2456 = vmatprep.mubr.bf16.mxu0 0
    %2457 = vmatmul.mubr.bf16.gmra.mxu0 %v2365
    %v2458 = vpop.f32.mrf.mxu0
    %v2459 = vadd.f32 0.0, %v2458
    %v2460 = vpop.f32.mrf.mxu0
    %v2461 = vpop.f32.mrf.mxu0
    %v2462 = vadd.f32 0.0, %v2461
    %v2463 = vpop.f32.mrf.mxu0
    %2464 = vmatprep.mubr.bf16.mxu0 0
    %2465 = vmatmul.mubr.bf16.gmra.mxu0 %v2368
    %v2466 = vpop.f32.mrf.mxu0
    %v2467 = vadd.f32 0.0, %v2466
    %v2468 = vpop.f32.mrf.mxu0
    %v2469 = vpop.f32.mrf.mxu0
    %v2470 = vadd.f32 0.0, %v2469
    %v2471 = vpop.f32.mrf.mxu0
    %2472 = vmatprep.mubr.bf16.mxu0 0
    %2473 = vmatmul.mubr.bf16.gmra.mxu0 %v2371
    %v2474 = vpop.f32.mrf.mxu0
    %v2475 = vadd.f32 0.0, %v2474
    %v2476 = vpop.f32.mrf.mxu0
    %v2477 = vpop.f32.mrf.mxu0
    %v2478 = vadd.f32 0.0, %v2477
    %v2479 = vpop.f32.mrf.mxu0
    %2480 = vmatprep.mubr.bf16.mxu0 0
    %2481 = vmatmul.mubr.bf16.gmra.mxu0 %v2374
    %v2482 = vpop.f32.mrf.mxu0
    %v2483 = vadd.f32 0.0, %v2482
    %v2484 = vpop.f32.mrf.mxu0
    %v2485 = vpop.f32.mrf.mxu0
    %v2486 = vadd.f32 0.0, %v2485
    %v2487 = vpop.f32.mrf.mxu0
    %2488 = vmatprep.mubr.bf16.mxu0 0
    %2489 = vmatmul.mubr.bf16.gmra.mxu0 %v2377
    %v2490 = vpop.f32.mrf.mxu0
    %v2491 = vadd.f32 0.0, %v2490
    %v2492 = vpop.f32.mrf.mxu0
    %v2493 = vpop.f32.mrf.mxu0
    %v2494 = vadd.f32 0.0, %v2493
    %v2495 = vpop.f32.mrf.mxu0
    %2496 = vmatprep.mubr.bf16.mxu0 0
    %2497 = vmatmul.mubr.bf16.gmra.mxu0 %v2380
    %v2498 = vpop.f32.mrf.mxu0
    %v2499 = vadd.f32 0.0, %v2498
    %v2500 = vpop.f32.mrf.mxu0
    %v2501 = vpop.f32.mrf.mxu0
    %v2502 = vadd.f32 0.0, %v2501
    %v2503 = vpop.f32.mrf.mxu0
    %2504 = vmatprep.mubr.bf16.mxu0 0
    %2505 = vmatmul.mubr.bf16.gmra.mxu0 %v2383
    %v2506 = vpop.f32.mrf.mxu0
    %v2507 = vadd.f32 0.0, %v2506
    %v2508 = vpop.f32.mrf.mxu0
    %v2509 = vpop.f32.mrf.mxu0
    %v2510 = vadd.f32 0.0, %v2509
    %v2511 = vpop.f32.mrf.mxu0
    %2512 = vmatprep.mubr.bf16.mxu0 0
    %2513 = vmatmul.mubr.bf16.gmra.mxu0 %v2386
    %v2514 = vpop.f32.mrf.mxu0
    %v2515 = vadd.f32 0.0, %v2514
    %v2516 = vpop.f32.mrf.mxu0
    %v2517 = vpop.f32.mrf.mxu0
    %v2518 = vadd.f32 0.0, %v2517
    %v2519 = vpop.f32.mrf.mxu0
    %2520 = vmatprep.mubr.bf16.mxu0 0
    %2521 = vmatmul.mubr.bf16.gmra.mxu0 %v2389
    %v2522 = vpop.f32.mrf.mxu0
    %v2523 = vadd.f32 0.0, %v2522
    %v2524 = vpop.f32.mrf.mxu0
    %v2525 = vpop.f32.mrf.mxu0
    %v2526 = vadd.f32 0.0, %v2525
    %v2527 = vpop.f32.mrf.mxu0
    %2528 = vmatprep.mubr.bf16.mxu0 0
    %2529 = vmatmul.mubr.bf16.gmra.mxu0 %v2392
    %v2530 = vpop.f32.mrf.mxu0
    %v2531 = vadd.f32 0.0, %v2530
    %v2532 = vpop.f32.mrf.mxu0
    %v2533 = vpop.f32.mrf.mxu0
    %v2534 = vadd.f32 0.0, %v2533
    %v2535 = vpop.f32.mrf.mxu0
    %2536 = vmatprep.mubr.bf16.mxu0 0
    %2537 = vmatmul.mubr.bf16.gmra.mxu0 %v2395
    %v2538 = vpop.f32.mrf.mxu0
    %v2539 = vadd.f32 0.0, %v2538
    %v2540 = vpop.f32.mrf.mxu0
    %v2541 = vpop.f32.mrf.mxu0
    %v2542 = vpop.f32.mrf.mxu0
    %2543 = vdwg.mxu0
    %v2544 = vadd.f32 %v2294, %v2435
    %v2545 = vadd.f32 %v2295, %v2438
    %v2546 = vadd.f32 %v2296, %v2443
    %v2547 = vadd.f32 %v2297, %v2446
    %v2548 = vadd.f32 %v2298, %v2451
    %v2549 = vadd.f32 %v2299, %v2454
    %v2550 = vadd.f32 %v2300, %v2459
    %v2551 = vadd.f32 %v2301, %v2462
    %v2552 = vadd.f32 %v2302, %v2467
    %v2553 = vadd.f32 %v2303, %v2470
    %v2554 = vadd.f32 %v2304, %v2475
    %v2555 = vadd.f32 %v2305, %v2478
    %v2556 = vadd.f32 %v2306, %v2483
    %v2557 = vadd.f32 %v2307, %v2486
    %v2558 = vadd.f32 %v2308, %v2491
    %v2559 = vadd.f32 %v2309, %v2494
    %v2560 = vadd.f32 %v2310, %v2499
    %v2561 = vadd.f32 %v2311, %v2502
    %v2562 = vadd.f32 %v2312, %v2507
    %v2563 = vadd.f32 %v2313, %v2510
    %v2564 = vadd.f32 %v2314, %v2515
    %v2565 = vadd.f32 %v2315, %v2518
    %v2566 = vadd.f32 %v2316, %v2523
    %v2567 = vadd.f32 %v2317, %v2526
    %v2568 = vadd.f32 %v2318, %v2531
    %v2569 = vadd.f32 %v2319, %v2534
    %v2570 = vadd.f32 %v2320, %v2539
    %s2571 = scalar_lea.vmem [#allocation2], 240
    %v2572 = vld [vmem:[%s2571] sm:$0xf]
    %v2573 = vld [vmem:[%s2571 + $0x4] sm:$0xf]
    %v2574 = vld [vmem:[%s2571 + $0x8] sm:$0xf]
    %v2575 = vld [vmem:[%s2571 + $0xc] sm:$0xf]
    %v2576 = vld [vmem:[%s2571 + $0x10] sm:$0xf]
    %v2577 = vld [vmem:[%s2571 + $0x14] sm:$0xf]
    %v2578 = vld [vmem:[%s2571 + $0x18] sm:$0xf]
    %v2579 = vld [vmem:[%s2571 + $0x1c] sm:$0xf]
    %v2580 = vld [vmem:[%s2571 + $0x20] sm:$0xf]
    %v2581 = vld [vmem:[%s2571 + $0x24] sm:$0xf]
    %v2582 = vld [vmem:[%s2571 + $0x28] sm:$0xf]
    %v2583 = vld [vmem:[%s2571 + $0x2c] sm:$0xf]
    %v2584 = vld [vmem:[%s2571 + $0x30] sm:$0xf]
    %v2585 = vld [vmem:[%s2571 + $0x34] sm:$0xf]
    %v2586 = vld [vmem:[%s2571 + $0x38] sm:$0xf]
    %v2587 = vld [vmem:[%s2571 + $0x3c] sm:$0xf]
    %v2588 = vld [vmem:[%s2571 + $0x40] sm:$0xf]
    %v2589 = vld [vmem:[%s2571 + $0x44] sm:$0xf]
    %v2590 = vld [vmem:[%s2571 + $0x48] sm:$0xf]
    %v2591 = vld [vmem:[%s2571 + $0x4c] sm:$0xf]
    %v2592 = vld [vmem:[%s2571 + $0x50] sm:$0xf]
    %v2593 = vld [vmem:[%s2571 + $0x54] sm:$0xf]
    %v2594 = vld [vmem:[%s2571 + $0x58] sm:$0xf]
    %v2595 = vld [vmem:[%s2571 + $0x5c] sm:$0xf]
    %v2596 = vld [vmem:[%s2571 + $0x60] sm:$0xf]
    %v2597 = vld [vmem:[%s2571 + $0x64] sm:$0xf]
    %v2598 = vld [vmem:[%s2571 + $0x68] sm:$0xf]
    %s2599 = scalar_lea.vmem %s2, 20
    %v2600 = vld [vmem:[%s2599] sm:$0xf]
    %v2628 = vunpack.c.l.b16 %v2572
    %v2629 = vunpack.c.l.b16 %v2573
    %v2630 = vunpack.c.l.b16 %v2574
    %v2631 = vunpack.c.l.b16 %v2575
    %v2632 = vunpack.c.l.b16 %v2576
    %v2633 = vunpack.c.l.b16 %v2577
    %v2634 = vunpack.c.l.b16 %v2578
    %v2635 = vunpack.c.l.b16 %v2579
    %v2636 = vunpack.c.l.b16 %v2580
    %v2637 = vunpack.c.l.b16 %v2581
    %v2638 = vunpack.c.l.b16 %v2582
    %v2639 = vunpack.c.l.b16 %v2583
    %v2640 = vunpack.c.l.b16 %v2584
    %v2641 = vunpack.c.l.b16 %v2585
    %v2642 = vunpack.c.l.b16 %v2586
    %v2643 = vunpack.c.l.b16 %v2587
    %v2644 = vunpack.c.l.b16 %v2588
    %v2645 = vunpack.c.l.b16 %v2589
    %v2646 = vunpack.c.l.b16 %v2590
    %v2647 = vunpack.c.l.b16 %v2591
    %v2648 = vunpack.c.l.b16 %v2592
    %v2649 = vunpack.c.l.b16 %v2593
    %v2650 = vunpack.c.l.b16 %v2594
    %v2651 = vunpack.c.l.b16 %v2595
    %v2652 = vunpack.c.l.b16 %v2596
    %v2653 = vunpack.c.l.b16 %v2597
    %v2654 = vunpack.c.l.b16 %v2598
    %v2655 = vpack.c.b16 %v2629, %v2628
    %v2656 = vpack.c.b16 %v2631, %v2630
    %v2657 = vpack.c.b16 %v2633, %v2632
    %v2658 = vpack.c.b16 %v2635, %v2634
    %v2659 = vpack.c.b16 %v2637, %v2636
    %v2660 = vpack.c.b16 %v2639, %v2638
    %v2661 = vpack.c.b16 %v2641, %v2640
    %v2662 = vpack.c.b16 %v2643, %v2642
    %v2663 = vpack.c.b16 %v2645, %v2644
    %v2664 = vpack.c.b16 %v2647, %v2646
    %v2665 = vpack.c.b16 %v2649, %v2648
    %v2666 = vpack.c.b16 %v2651, %v2650
    %v2667 = vpack.c.b16 %v2653, %v2652
    %v2668 = vpack.c.b16 %v2654, %v2654
    %v2670 = vsel %vm934, %v2655, 0
    %v2673 = vsel %vm934, %v2656, 0
    %v2676 = vsel %vm934, %v2657, 0
    %v2679 = vsel %vm934, %v2658, 0
    %v2682 = vsel %vm934, %v2659, 0
    %v2685 = vsel %vm934, %v2660, 0
    %v2688 = vsel %vm934, %v2661, 0
    %v2691 = vsel %vm934, %v2662, 0
    %v2694 = vsel %vm934, %v2663, 0
    %v2697 = vsel %vm934, %v2664, 0
    %v2700 = vsel %vm934, %v2665, 0
    %v2703 = vsel %vm934, %v2666, 0
    %v2706 = vsel %vm934, %v2667, 0
    %v2709 = vsel %vm934, %v2668, 0
    %v2712 = vsel %vm977, %v2600, 0
    %2714 = vmatprep.subr.bf16.mxu0 0
    %2715 = vmatpush1.bf16.msra.mxu0 0
    %2716 = vmatprep.subr.bf16.mxu0 0
    %2717 = vmatpush1.bf16.msra.mxu0 0
    %2718 = vmatprep.subr.bf16.mxu0 0
    %2719 = vmatpush1.bf16.msra.mxu0 0
    %2720 = vmatprep.subr.bf16.mxu0 0
    %2721 = vmatpush1.bf16.msra.mxu0 0
    %2722 = vmatprep.subr.bf16.mxu0 0
    %2723 = vmatpush1.bf16.msra.mxu0 0
    %2724 = vmatprep.subr.bf16.mxu0 0
    %2725 = vmatpush1.bf16.msra.mxu0 0
    %2726 = vmatprep.subr.bf16.mxu0 0
    %2727 = vmatpush1.bf16.msra.mxu0 0
    %2728 = vmatprep.subr.bf16.mxu0 0
    %2729 = vmatpush1.bf16.msra.mxu0 %v2712
    %2730 = vmatprep.subr.bf16.mxu0 0
    %2731 = vmatpush2.bf16.msra.mxu0 0
    %2732 = vmatprep.subr.bf16.mxu0 0
    %2733 = vmatpush2.bf16.msra.mxu0 0
    %2734 = vmatprep.subr.bf16.mxu0 0
    %2735 = vmatpush2.bf16.msra.mxu0 0
    %2736 = vmatprep.subr.bf16.mxu0 0
    %2737 = vmatpush2.bf16.msra.mxu0 0
    %2738 = vmatprep.subr.bf16.mxu0 0
    %2739 = vmatpush2.bf16.msra.mxu0 0
    %2740 = vmatprep.subr.bf16.mxu0 0
    %2741 = vmatpush2.bf16.msra.mxu0 0
    %2742 = vmatprep.subr.bf16.mxu0 0
    %2743 = vmatpush2.bf16.msra.mxu0 0
    %2744 = vmatprep.subr.bf16.mxu0 0
    %2745 = vmatpush2.bf16.msra.mxu0 0
    %2746 = vmatprep.mubr.bf16.mxu0 0
    %2747 = vmatmul.mubr.bf16.gmra.mxu0 %v2670
    %v2748 = vpop.f32.mrf.mxu0
    %v2749 = vadd.f32 0.0, %v2748
    %v2750 = vpop.f32.mrf.mxu0
    %v2751 = vpop.f32.mrf.mxu0
    %v2752 = vadd.f32 0.0, %v2751
    %v2753 = vpop.f32.mrf.mxu0
    %2754 = vmatprep.mubr.bf16.mxu0 0
    %2755 = vmatmul.mubr.bf16.gmra.mxu0 %v2673
    %v2756 = vpop.f32.mrf.mxu0
    %v2757 = vadd.f32 0.0, %v2756
    %v2758 = vpop.f32.mrf.mxu0
    %v2759 = vpop.f32.mrf.mxu0
    %v2760 = vadd.f32 0.0, %v2759
    %v2761 = vpop.f32.mrf.mxu0
    %2762 = vmatprep.mubr.bf16.mxu0 0
    %2763 = vmatmul.mubr.bf16.gmra.mxu0 %v2676
    %v2764 = vpop.f32.mrf.mxu0
    %v2765 = vadd.f32 0.0, %v2764
    %v2766 = vpop.f32.mrf.mxu0
    %v2767 = vpop.f32.mrf.mxu0
    %v2768 = vadd.f32 0.0, %v2767
    %v2769 = vpop.f32.mrf.mxu0
    %2770 = vmatprep.mubr.bf16.mxu0 0
    %2771 = vmatmul.mubr.bf16.gmra.mxu0 %v2679
    %v2772 = vpop.f32.mrf.mxu0
    %v2773 = vadd.f32 0.0, %v2772
    %v2774 = vpop.f32.mrf.mxu0
    %v2775 = vpop.f32.mrf.mxu0
    %v2776 = vadd.f32 0.0, %v2775
    %v2777 = vpop.f32.mrf.mxu0
    %2778 = vmatprep.mubr.bf16.mxu0 0
    %2779 = vmatmul.mubr.bf16.gmra.mxu0 %v2682
    %v2780 = vpop.f32.mrf.mxu0
    %v2781 = vadd.f32 0.0, %v2780
    %v2782 = vpop.f32.mrf.mxu0
    %v2783 = vpop.f32.mrf.mxu0
    %v2784 = vadd.f32 0.0, %v2783
    %v2785 = vpop.f32.mrf.mxu0
    %2786 = vmatprep.mubr.bf16.mxu0 0
    %2787 = vmatmul.mubr.bf16.gmra.mxu0 %v2685
    %v2788 = vpop.f32.mrf.mxu0
    %v2789 = vadd.f32 0.0, %v2788
    %v2790 = vpop.f32.mrf.mxu0
    %v2791 = vpop.f32.mrf.mxu0
    %v2792 = vadd.f32 0.0, %v2791
    %v2793 = vpop.f32.mrf.mxu0
    %2794 = vmatprep.mubr.bf16.mxu0 0
    %2795 = vmatmul.mubr.bf16.gmra.mxu0 %v2688
    %v2796 = vpop.f32.mrf.mxu0
    %v2797 = vadd.f32 0.0, %v2796
    %v2798 = vpop.f32.mrf.mxu0
    %v2799 = vpop.f32.mrf.mxu0
    %v2800 = vadd.f32 0.0, %v2799
    %v2801 = vpop.f32.mrf.mxu0
    %2802 = vmatprep.mubr.bf16.mxu0 0
    %2803 = vmatmul.mubr.bf16.gmra.mxu0 %v2691
    %v2804 = vpop.f32.mrf.mxu0
    %v2805 = vadd.f32 0.0, %v2804
    %v2806 = vpop.f32.mrf.mxu0
    %v2807 = vpop.f32.mrf.mxu0
    %v2808 = vadd.f32 0.0, %v2807
    %v2809 = vpop.f32.mrf.mxu0
    %2810 = vmatprep.mubr.bf16.mxu0 0
    %2811 = vmatmul.mubr.bf16.gmra.mxu0 %v2694
    %v2812 = vpop.f32.mrf.mxu0
    %v2813 = vadd.f32 0.0, %v2812
    %v2814 = vpop.f32.mrf.mxu0
    %v2815 = vpop.f32.mrf.mxu0
    %v2816 = vadd.f32 0.0, %v2815
    %v2817 = vpop.f32.mrf.mxu0
    %2818 = vmatprep.mubr.bf16.mxu0 0
    %2819 = vmatmul.mubr.bf16.gmra.mxu0 %v2697
    %v2820 = vpop.f32.mrf.mxu0
    %v2821 = vadd.f32 0.0, %v2820
    %v2822 = vpop.f32.mrf.mxu0
    %v2823 = vpop.f32.mrf.mxu0
    %v2824 = vadd.f32 0.0, %v2823
    %v2825 = vpop.f32.mrf.mxu0
    %2826 = vmatprep.mubr.bf16.mxu0 0
    %2827 = vmatmul.mubr.bf16.gmra.mxu0 %v2700
    %v2828 = vpop.f32.mrf.mxu0
    %v2829 = vadd.f32 0.0, %v2828
    %v2830 = vpop.f32.mrf.mxu0
    %v2831 = vpop.f32.mrf.mxu0
    %v2832 = vadd.f32 0.0, %v2831
    %v2833 = vpop.f32.mrf.mxu0
    %2834 = vmatprep.mubr.bf16.mxu0 0
    %2835 = vmatmul.mubr.bf16.gmra.mxu0 %v2703
    %v2836 = vpop.f32.mrf.mxu0
    %v2837 = vadd.f32 0.0, %v2836
    %v2838 = vpop.f32.mrf.mxu0
    %v2839 = vpop.f32.mrf.mxu0
    %v2840 = vadd.f32 0.0, %v2839
    %v2841 = vpop.f32.mrf.mxu0
    %2842 = vmatprep.mubr.bf16.mxu0 0
    %2843 = vmatmul.mubr.bf16.gmra.mxu0 %v2706
    %v2844 = vpop.f32.mrf.mxu0
    %v2845 = vadd.f32 0.0, %v2844
    %v2846 = vpop.f32.mrf.mxu0
    %v2847 = vpop.f32.mrf.mxu0
    %v2848 = vadd.f32 0.0, %v2847
    %v2849 = vpop.f32.mrf.mxu0
    %2850 = vmatprep.mubr.bf16.mxu0 0
    %2851 = vmatmul.mubr.bf16.gmra.mxu0 %v2709
    %v2852 = vpop.f32.mrf.mxu0
    %v2853 = vadd.f32 0.0, %v2852
    %v2854 = vpop.f32.mrf.mxu0
    %v2855 = vpop.f32.mrf.mxu0
    %v2856 = vpop.f32.mrf.mxu0
    %2857 = vdwg.mxu0
    %v2858 = vadd.f32 %v2544, %v2749
    %v2859 = vadd.f32 %v2545, %v2752
    %v2860 = vadd.f32 %v2546, %v2757
    %v2861 = vadd.f32 %v2547, %v2760
    %v2862 = vadd.f32 %v2548, %v2765
    %v2863 = vadd.f32 %v2549, %v2768
    %v2864 = vadd.f32 %v2550, %v2773
    %v2865 = vadd.f32 %v2551, %v2776
    %v2866 = vadd.f32 %v2552, %v2781
    %v2867 = vadd.f32 %v2553, %v2784
    %v2868 = vadd.f32 %v2554, %v2789
    %v2869 = vadd.f32 %v2555, %v2792
    %v2870 = vadd.f32 %v2556, %v2797
    %v2871 = vadd.f32 %v2557, %v2800
    %v2872 = vadd.f32 %v2558, %v2805
    %v2873 = vadd.f32 %v2559, %v2808
    %v2874 = vadd.f32 %v2560, %v2813
    %v2875 = vadd.f32 %v2561, %v2816
    %v2876 = vadd.f32 %v2562, %v2821
    %v2877 = vadd.f32 %v2563, %v2824
    %v2878 = vadd.f32 %v2564, %v2829
    %v2879 = vadd.f32 %v2565, %v2832
    %v2880 = vadd.f32 %v2566, %v2837
    %v2881 = vadd.f32 %v2567, %v2840
    %v2882 = vadd.f32 %v2568, %v2845
    %v2883 = vadd.f32 %v2569, %v2848
    %v2884 = vadd.f32 %v2570, %v2853
    %s2885 = scalar_lea.vmem [#allocation2], 360
    %v2886 = vld [vmem:[%s2885] sm:$0xf]
    %v2887 = vld [vmem:[%s2885 + $0x4] sm:$0xf]
    %v2888 = vld [vmem:[%s2885 + $0x8] sm:$0xf]
    %v2889 = vld [vmem:[%s2885 + $0xc] sm:$0xf]
    %v2890 = vld [vmem:[%s2885 + $0x10] sm:$0xf]
    %v2891 = vld [vmem:[%s2885 + $0x14] sm:$0xf]
    %v2892 = vld [vmem:[%s2885 + $0x18] sm:$0xf]
    %v2893 = vld [vmem:[%s2885 + $0x1c] sm:$0xf]
    %v2894 = vld [vmem:[%s2885 + $0x20] sm:$0xf]
    %v2895 = vld [vmem:[%s2885 + $0x24] sm:$0xf]
    %v2896 = vld [vmem:[%s2885 + $0x28] sm:$0xf]
    %v2897 = vld [vmem:[%s2885 + $0x2c] sm:$0xf]
    %v2898 = vld [vmem:[%s2885 + $0x30] sm:$0xf]
    %v2899 = vld [vmem:[%s2885 + $0x34] sm:$0xf]
    %v2900 = vld [vmem:[%s2885 + $0x38] sm:$0xf]
    %v2901 = vld [vmem:[%s2885 + $0x3c] sm:$0xf]
    %v2902 = vld [vmem:[%s2885 + $0x40] sm:$0xf]
    %v2903 = vld [vmem:[%s2885 + $0x44] sm:$0xf]
    %v2904 = vld [vmem:[%s2885 + $0x48] sm:$0xf]
    %v2905 = vld [vmem:[%s2885 + $0x4c] sm:$0xf]
    %v2906 = vld [vmem:[%s2885 + $0x50] sm:$0xf]
    %v2907 = vld [vmem:[%s2885 + $0x54] sm:$0xf]
    %v2908 = vld [vmem:[%s2885 + $0x58] sm:$0xf]
    %v2909 = vld [vmem:[%s2885 + $0x5c] sm:$0xf]
    %v2910 = vld [vmem:[%s2885 + $0x60] sm:$0xf]
    %v2911 = vld [vmem:[%s2885 + $0x64] sm:$0xf]
    %v2912 = vld [vmem:[%s2885 + $0x68] sm:$0xf]
    %s2913 = scalar_lea.vmem %s2, 24
    %v2914 = vld [vmem:[%s2913] sm:$0xf]
    %v2942 = vunpack.c.l.b16 %v2886
    %v2943 = vunpack.c.l.b16 %v2887
    %v2944 = vunpack.c.l.b16 %v2888
    %v2945 = vunpack.c.l.b16 %v2889
    %v2946 = vunpack.c.l.b16 %v2890
    %v2947 = vunpack.c.l.b16 %v2891
    %v2948 = vunpack.c.l.b16 %v2892
    %v2949 = vunpack.c.l.b16 %v2893
    %v2950 = vunpack.c.l.b16 %v2894
    %v2951 = vunpack.c.l.b16 %v2895
    %v2952 = vunpack.c.l.b16 %v2896
    %v2953 = vunpack.c.l.b16 %v2897
    %v2954 = vunpack.c.l.b16 %v2898
    %v2955 = vunpack.c.l.b16 %v2899
    %v2956 = vunpack.c.l.b16 %v2900
    %v2957 = vunpack.c.l.b16 %v2901
    %v2958 = vunpack.c.l.b16 %v2902
    %v2959 = vunpack.c.l.b16 %v2903
    %v2960 = vunpack.c.l.b16 %v2904
    %v2961 = vunpack.c.l.b16 %v2905
    %v2962 = vunpack.c.l.b16 %v2906
    %v2963 = vunpack.c.l.b16 %v2907
    %v2964 = vunpack.c.l.b16 %v2908
    %v2965 = vunpack.c.l.b16 %v2909
    %v2966 = vunpack.c.l.b16 %v2910
    %v2967 = vunpack.c.l.b16 %v2911
    %v2968 = vunpack.c.l.b16 %v2912
    %v2969 = vpack.c.b16 %v2943, %v2942
    %v2970 = vpack.c.b16 %v2945, %v2944
    %v2971 = vpack.c.b16 %v2947, %v2946
    %v2972 = vpack.c.b16 %v2949, %v2948
    %v2973 = vpack.c.b16 %v2951, %v2950
    %v2974 = vpack.c.b16 %v2953, %v2952
    %v2975 = vpack.c.b16 %v2955, %v2954
    %v2976 = vpack.c.b16 %v2957, %v2956
    %v2977 = vpack.c.b16 %v2959, %v2958
    %v2978 = vpack.c.b16 %v2961, %v2960
    %v2979 = vpack.c.b16 %v2963, %v2962
    %v2980 = vpack.c.b16 %v2965, %v2964
    %v2981 = vpack.c.b16 %v2967, %v2966
    %v2982 = vpack.c.b16 %v2968, %v2968
    %v2984 = vsel %vm934, %v2969, 0
    %v2987 = vsel %vm934, %v2970, 0
    %v2990 = vsel %vm934, %v2971, 0
    %v2993 = vsel %vm934, %v2972, 0
    %v2996 = vsel %vm934, %v2973, 0
    %v2999 = vsel %vm934, %v2974, 0
    %v3002 = vsel %vm934, %v2975, 0
    %v3005 = vsel %vm934, %v2976, 0
    %v3008 = vsel %vm934, %v2977, 0
    %v3011 = vsel %vm934, %v2978, 0
    %v3014 = vsel %vm934, %v2979, 0
    %v3017 = vsel %vm934, %v2980, 0
    %v3020 = vsel %vm934, %v2981, 0
    %v3023 = vsel %vm934, %v2982, 0
    %v3026 = vsel %vm977, %v2914, 0
    %3028 = vmatprep.subr.bf16.mxu0 0
    %3029 = vmatpush1.bf16.msra.mxu0 0
    %3030 = vmatprep.subr.bf16.mxu0 0
    %3031 = vmatpush1.bf16.msra.mxu0 0
    %3032 = vmatprep.subr.bf16.mxu0 0
    %3033 = vmatpush1.bf16.msra.mxu0 0
    %3034 = vmatprep.subr.bf16.mxu0 0
    %3035 = vmatpush1.bf16.msra.mxu0 0
    %3036 = vmatprep.subr.bf16.mxu0 0
    %3037 = vmatpush1.bf16.msra.mxu0 0
    %3038 = vmatprep.subr.bf16.mxu0 0
    %3039 = vmatpush1.bf16.msra.mxu0 0
    %3040 = vmatprep.subr.bf16.mxu0 0
    %3041 = vmatpush1.bf16.msra.mxu0 0
    %3042 = vmatprep.subr.bf16.mxu0 0
    %3043 = vmatpush1.bf16.msra.mxu0 %v3026
    %3044 = vmatprep.subr.bf16.mxu0 0
    %3045 = vmatpush2.bf16.msra.mxu0 0
    %3046 = vmatprep.subr.bf16.mxu0 0
    %3047 = vmatpush2.bf16.msra.mxu0 0
    %3048 = vmatprep.subr.bf16.mxu0 0
    %3049 = vmatpush2.bf16.msra.mxu0 0
    %3050 = vmatprep.subr.bf16.mxu0 0
    %3051 = vmatpush2.bf16.msra.mxu0 0
    %3052 = vmatprep.subr.bf16.mxu0 0
    %3053 = vmatpush2.bf16.msra.mxu0 0
    %3054 = vmatprep.subr.bf16.mxu0 0
    %3055 = vmatpush2.bf16.msra.mxu0 0
    %3056 = vmatprep.subr.bf16.mxu0 0
    %3057 = vmatpush2.bf16.msra.mxu0 0
    %3058 = vmatprep.subr.bf16.mxu0 0
    %3059 = vmatpush2.bf16.msra.mxu0 0
    %3060 = vmatprep.mubr.bf16.mxu0 0
    %3061 = vmatmul.mubr.bf16.gmra.mxu0 %v2984
    %v3062 = vpop.f32.mrf.mxu0
    %v3063 = vadd.f32 0.0, %v3062
    %v3064 = vpop.f32.mrf.mxu0
    %v3065 = vpop.f32.mrf.mxu0
    %v3066 = vadd.f32 0.0, %v3065
    %v3067 = vpop.f32.mrf.mxu0
    %3068 = vmatprep.mubr.bf16.mxu0 0
    %3069 = vmatmul.mubr.bf16.gmra.mxu0 %v2987
    %v3070 = vpop.f32.mrf.mxu0
    %v3071 = vadd.f32 0.0, %v3070
    %v3072 = vpop.f32.mrf.mxu0
    %v3073 = vpop.f32.mrf.mxu0
    %v3074 = vadd.f32 0.0, %v3073
    %v3075 = vpop.f32.mrf.mxu0
    %3076 = vmatprep.mubr.bf16.mxu0 0
    %3077 = vmatmul.mubr.bf16.gmra.mxu0 %v2990
    %v3078 = vpop.f32.mrf.mxu0
    %v3079 = vadd.f32 0.0, %v3078
    %v3080 = vpop.f32.mrf.mxu0
    %v3081 = vpop.f32.mrf.mxu0
    %v3082 = vadd.f32 0.0, %v3081
    %v3083 = vpop.f32.mrf.mxu0
    %3084 = vmatprep.mubr.bf16.mxu0 0
    %3085 = vmatmul.mubr.bf16.gmra.mxu0 %v2993
    %v3086 = vpop.f32.mrf.mxu0
    %v3087 = vadd.f32 0.0, %v3086
    %v3088 = vpop.f32.mrf.mxu0
    %v3089 = vpop.f32.mrf.mxu0
    %v3090 = vadd.f32 0.0, %v3089
    %v3091 = vpop.f32.mrf.mxu0
    %3092 = vmatprep.mubr.bf16.mxu0 0
    %3093 = vmatmul.mubr.bf16.gmra.mxu0 %v2996
    %v3094 = vpop.f32.mrf.mxu0
    %v3095 = vadd.f32 0.0, %v3094
    %v3096 = vpop.f32.mrf.mxu0
    %v3097 = vpop.f32.mrf.mxu0
    %v3098 = vadd.f32 0.0, %v3097
    %v3099 = vpop.f32.mrf.mxu0
    %3100 = vmatprep.mubr.bf16.mxu0 0
    %3101 = vmatmul.mubr.bf16.gmra.mxu0 %v2999
    %v3102 = vpop.f32.mrf.mxu0
    %v3103 = vadd.f32 0.0, %v3102
    %v3104 = vpop.f32.mrf.mxu0
    %v3105 = vpop.f32.mrf.mxu0
    %v3106 = vadd.f32 0.0, %v3105
    %v3107 = vpop.f32.mrf.mxu0
    %3108 = vmatprep.mubr.bf16.mxu0 0
    %3109 = vmatmul.mubr.bf16.gmra.mxu0 %v3002
    %v3110 = vpop.f32.mrf.mxu0
    %v3111 = vadd.f32 0.0, %v3110
    %v3112 = vpop.f32.mrf.mxu0
    %v3113 = vpop.f32.mrf.mxu0
    %v3114 = vadd.f32 0.0, %v3113
    %v3115 = vpop.f32.mrf.mxu0
    %3116 = vmatprep.mubr.bf16.mxu0 0
    %3117 = vmatmul.mubr.bf16.gmra.mxu0 %v3005
    %v3118 = vpop.f32.mrf.mxu0
    %v3119 = vadd.f32 0.0, %v3118
    %v3120 = vpop.f32.mrf.mxu0
    %v3121 = vpop.f32.mrf.mxu0
    %v3122 = vadd.f32 0.0, %v3121
    %v3123 = vpop.f32.mrf.mxu0
    %3124 = vmatprep.mubr.bf16.mxu0 0
    %3125 = vmatmul.mubr.bf16.gmra.mxu0 %v3008
    %v3126 = vpop.f32.mrf.mxu0
    %v3127 = vadd.f32 0.0, %v3126
    %v3128 = vpop.f32.mrf.mxu0
    %v3129 = vpop.f32.mrf.mxu0
    %v3130 = vadd.f32 0.0, %v3129
    %v3131 = vpop.f32.mrf.mxu0
    %3132 = vmatprep.mubr.bf16.mxu0 0
    %3133 = vmatmul.mubr.bf16.gmra.mxu0 %v3011
    %v3134 = vpop.f32.mrf.mxu0
    %v3135 = vadd.f32 0.0, %v3134
    %v3136 = vpop.f32.mrf.mxu0
    %v3137 = vpop.f32.mrf.mxu0
    %v3138 = vadd.f32 0.0, %v3137
    %v3139 = vpop.f32.mrf.mxu0
    %3140 = vmatprep.mubr.bf16.mxu0 0
    %3141 = vmatmul.mubr.bf16.gmra.mxu0 %v3014
    %v3142 = vpop.f32.mrf.mxu0
    %v3143 = vadd.f32 0.0, %v3142
    %v3144 = vpop.f32.mrf.mxu0
    %v3145 = vpop.f32.mrf.mxu0
    %v3146 = vadd.f32 0.0, %v3145
    %v3147 = vpop.f32.mrf.mxu0
    %3148 = vmatprep.mubr.bf16.mxu0 0
    %3149 = vmatmul.mubr.bf16.gmra.mxu0 %v3017
    %v3150 = vpop.f32.mrf.mxu0
    %v3151 = vadd.f32 0.0, %v3150
    %v3152 = vpop.f32.mrf.mxu0
    %v3153 = vpop.f32.mrf.mxu0
    %v3154 = vadd.f32 0.0, %v3153
    %v3155 = vpop.f32.mrf.mxu0
    %3156 = vmatprep.mubr.bf16.mxu0 0
    %3157 = vmatmul.mubr.bf16.gmra.mxu0 %v3020
    %v3158 = vpop.f32.mrf.mxu0
    %v3159 = vadd.f32 0.0, %v3158
    %v3160 = vpop.f32.mrf.mxu0
    %v3161 = vpop.f32.mrf.mxu0
    %v3162 = vadd.f32 0.0, %v3161
    %v3163 = vpop.f32.mrf.mxu0
    %3164 = vmatprep.mubr.bf16.mxu0 0
    %3165 = vmatmul.mubr.bf16.gmra.mxu0 %v3023
    %v3166 = vpop.f32.mrf.mxu0
    %v3167 = vadd.f32 0.0, %v3166
    %v3168 = vpop.f32.mrf.mxu0
    %v3169 = vpop.f32.mrf.mxu0
    %v3170 = vpop.f32.mrf.mxu0
    %3171 = vdwg.mxu0
    %v3172 = vadd.f32 %v2858, %v3063
    %v3173 = vadd.f32 %v2859, %v3066
    %v3174 = vadd.f32 %v2860, %v3071
    %v3175 = vadd.f32 %v2861, %v3074
    %v3176 = vadd.f32 %v2862, %v3079
    %v3177 = vadd.f32 %v2863, %v3082
    %v3178 = vadd.f32 %v2864, %v3087
    %v3179 = vadd.f32 %v2865, %v3090
    %v3180 = vadd.f32 %v2866, %v3095
    %v3181 = vadd.f32 %v2867, %v3098
    %v3182 = vadd.f32 %v2868, %v3103
    %v3183 = vadd.f32 %v2869, %v3106
    %v3184 = vadd.f32 %v2870, %v3111
    %v3185 = vadd.f32 %v2871, %v3114
    %v3186 = vadd.f32 %v2872, %v3119
    %v3187 = vadd.f32 %v2873, %v3122
    %v3188 = vadd.f32 %v2874, %v3127
    %v3189 = vadd.f32 %v2875, %v3130
    %v3190 = vadd.f32 %v2876, %v3135
    %v3191 = vadd.f32 %v2877, %v3138
    %v3192 = vadd.f32 %v2878, %v3143
    %v3193 = vadd.f32 %v2879, %v3146
    %v3194 = vadd.f32 %v2880, %v3151
    %v3195 = vadd.f32 %v2881, %v3154
    %v3196 = vadd.f32 %v2882, %v3159
    %v3197 = vadd.f32 %v2883, %v3162
    %v3198 = vadd.f32 %v2884, %v3167
    %v3199 = vld [vmem:[%s2571] sm:$0xf]
    %v3200 = vld [vmem:[%s2571 + $0x4] sm:$0xf]
    %v3201 = vld [vmem:[%s2571 + $0x8] sm:$0xf]
    %v3202 = vld [vmem:[%s2571 + $0xc] sm:$0xf]
    %v3203 = vld [vmem:[%s2571 + $0x10] sm:$0xf]
    %v3204 = vld [vmem:[%s2571 + $0x14] sm:$0xf]
    %v3205 = vld [vmem:[%s2571 + $0x18] sm:$0xf]
    %v3206 = vld [vmem:[%s2571 + $0x1c] sm:$0xf]
    %v3207 = vld [vmem:[%s2571 + $0x20] sm:$0xf]
    %v3208 = vld [vmem:[%s2571 + $0x24] sm:$0xf]
    %v3209 = vld [vmem:[%s2571 + $0x28] sm:$0xf]
    %v3210 = vld [vmem:[%s2571 + $0x2c] sm:$0xf]
    %v3211 = vld [vmem:[%s2571 + $0x30] sm:$0xf]
    %v3212 = vld [vmem:[%s2571 + $0x34] sm:$0xf]
    %v3213 = vld [vmem:[%s2571 + $0x38] sm:$0xf]
    %v3214 = vld [vmem:[%s2571 + $0x3c] sm:$0xf]
    %v3215 = vld [vmem:[%s2571 + $0x40] sm:$0xf]
    %v3216 = vld [vmem:[%s2571 + $0x44] sm:$0xf]
    %v3217 = vld [vmem:[%s2571 + $0x48] sm:$0xf]
    %v3218 = vld [vmem:[%s2571 + $0x4c] sm:$0xf]
    %v3219 = vld [vmem:[%s2571 + $0x50] sm:$0xf]
    %v3220 = vld [vmem:[%s2571 + $0x54] sm:$0xf]
    %v3221 = vld [vmem:[%s2571 + $0x58] sm:$0xf]
    %v3222 = vld [vmem:[%s2571 + $0x5c] sm:$0xf]
    %v3223 = vld [vmem:[%s2571 + $0x60] sm:$0xf]
    %v3224 = vld [vmem:[%s2571 + $0x64] sm:$0xf]
    %v3225 = vld [vmem:[%s2571 + $0x68] sm:$0xf]
    %v3226 = vld [vmem:[%s2571 + $0x6c] sm:$0x1]
    %s3227 = scalar_lea.vmem %s2, 28
    %v3228 = vld [vmem:[%s3227] sm:$0xf]
    %v3257 = vunpack.c.l.b16 %v3199
    %v3258 = vunpack.c.l.b16 %v3200
    %v3259 = vunpack.c.l.b16 %v3201
    %v3260 = vunpack.c.l.b16 %v3202
    %v3261 = vunpack.c.l.b16 %v3203
    %v3262 = vunpack.c.l.b16 %v3204
    %v3263 = vunpack.c.l.b16 %v3205
    %v3264 = vunpack.c.l.b16 %v3206
    %v3265 = vunpack.c.l.b16 %v3207
    %v3266 = vunpack.c.l.b16 %v3208
    %v3267 = vunpack.c.l.b16 %v3209
    %v3268 = vunpack.c.l.b16 %v3210
    %v3269 = vunpack.c.l.b16 %v3211
    %v3270 = vunpack.c.l.b16 %v3212
    %v3271 = vunpack.c.l.b16 %v3213
    %v3272 = vunpack.c.l.b16 %v3214
    %v3273 = vunpack.c.l.b16 %v3215
    %v3274 = vunpack.c.l.b16 %v3216
    %v3275 = vunpack.c.l.b16 %v3217
    %v3276 = vunpack.c.l.b16 %v3218
    %v3277 = vunpack.c.l.b16 %v3219
    %v3278 = vunpack.c.l.b16 %v3220
    %v3279 = vunpack.c.l.b16 %v3221
    %v3280 = vunpack.c.l.b16 %v3222
    %v3281 = vunpack.c.l.b16 %v3223
    %v3282 = vunpack.c.l.b16 %v3224
    %v3283 = vunpack.c.l.b16 %v3225
    %v3284 = vunpack.c.l.b16 %v3226
    %v3285 = vpack.c.b16 %v3258, %v3257
    %v3286 = vpack.c.b16 %v3260, %v3259
    %v3287 = vpack.c.b16 %v3262, %v3261
    %v3288 = vpack.c.b16 %v3264, %v3263
    %v3289 = vpack.c.b16 %v3266, %v3265
    %v3290 = vpack.c.b16 %v3268, %v3267
    %v3291 = vpack.c.b16 %v3270, %v3269
    %v3292 = vpack.c.b16 %v3272, %v3271
    %v3293 = vpack.c.b16 %v3274, %v3273
    %v3294 = vpack.c.b16 %v3276, %v3275
    %v3295 = vpack.c.b16 %v3278, %v3277
    %v3296 = vpack.c.b16 %v3280, %v3279
    %v3297 = vpack.c.b16 %v3282, %v3281
    %v3298 = vpack.c.b16 %v3284, %v3283
    %v3300 = vshrl.u32 %v3285, 16
    %v3302 = vshll.u32 %v3285, 16
    %v3304 = vrot.slane %v3302, 1
    %v3305 = vor.u32 %v3300, %v3304
    %v3307 = vshll.u32 %v3286, 16
    %v3309 = vrot.slane %v3307, 1
    %v3310 = vsel %vm1566, %v3305, %v3309
    %v3311 = vshrl.u32 %v3286, 16
    %v3313 = vor.u32 %v3311, %v3309
    %v3315 = vshll.u32 %v3287, 16
    %v3317 = vrot.slane %v3315, 1
    %v3318 = vsel %vm1566, %v3313, %v3317
    %v3319 = vshrl.u32 %v3287, 16
    %v3321 = vor.u32 %v3319, %v3317
    %v3323 = vshll.u32 %v3288, 16
    %v3325 = vrot.slane %v3323, 1
    %v3326 = vsel %vm1566, %v3321, %v3325
    %v3327 = vshrl.u32 %v3288, 16
    %v3329 = vor.u32 %v3327, %v3325
    %v3331 = vshll.u32 %v3289, 16
    %v3333 = vrot.slane %v3331, 1
    %v3334 = vsel %vm1566, %v3329, %v3333
    %v3335 = vshrl.u32 %v3289, 16
    %v3337 = vor.u32 %v3335, %v3333
    %v3339 = vshll.u32 %v3290, 16
    %v3341 = vrot.slane %v3339, 1
    %v3342 = vsel %vm1566, %v3337, %v3341
    %v3343 = vshrl.u32 %v3290, 16
    %v3345 = vor.u32 %v3343, %v3341
    %v3347 = vshll.u32 %v3291, 16
    %v3349 = vrot.slane %v3347, 1
    %v3350 = vsel %vm1566, %v3345, %v3349
    %v3351 = vshrl.u32 %v3291, 16
    %v3353 = vor.u32 %v3351, %v3349
    %v3355 = vshll.u32 %v3292, 16
    %v3357 = vrot.slane %v3355, 1
    %v3358 = vsel %vm1566, %v3353, %v3357
    %v3359 = vshrl.u32 %v3292, 16
    %v3361 = vor.u32 %v3359, %v3357
    %v3363 = vshll.u32 %v3293, 16
    %v3365 = vrot.slane %v3363, 1
    %v3366 = vsel %vm1566, %v3361, %v3365
    %v3367 = vshrl.u32 %v3293, 16
    %v3369 = vor.u32 %v3367, %v3365
    %v3371 = vshll.u32 %v3294, 16
    %v3373 = vrot.slane %v3371, 1
    %v3374 = vsel %vm1566, %v3369, %v3373
    %v3375 = vshrl.u32 %v3294, 16
    %v3377 = vor.u32 %v3375, %v3373
    %v3379 = vshll.u32 %v3295, 16
    %v3381 = vrot.slane %v3379, 1
    %v3382 = vsel %vm1566, %v3377, %v3381
    %v3383 = vshrl.u32 %v3295, 16
    %v3385 = vor.u32 %v3383, %v3381
    %v3387 = vshll.u32 %v3296, 16
    %v3389 = vrot.slane %v3387, 1
    %v3390 = vsel %vm1566, %v3385, %v3389
    %v3391 = vshrl.u32 %v3296, 16
    %v3393 = vor.u32 %v3391, %v3389
    %v3395 = vshll.u32 %v3297, 16
    %v3397 = vrot.slane %v3395, 1
    %v3398 = vsel %vm1566, %v3393, %v3397
    %v3399 = vshrl.u32 %v3297, 16
    %v3401 = vor.u32 %v3399, %v3397
    %v3403 = vshll.u32 %v3298, 16
    %v3405 = vrot.slane %v3403, 1
    %v3406 = vsel %vm1566, %v3401, %v3405
    %v3407 = vshrl.u32 %v3298, 16
    %v3409 = vor.u32 %v3407, %v3405
    %v3411 = vsel %vm934, %v3310, 0
    %v3414 = vsel %vm934, %v3318, 0
    %v3417 = vsel %vm934, %v3326, 0
    %v3420 = vsel %vm934, %v3334, 0
    %v3423 = vsel %vm934, %v3342, 0
    %v3426 = vsel %vm934, %v3350, 0
    %v3429 = vsel %vm934, %v3358, 0
    %v3432 = vsel %vm934, %v3366, 0
    %v3435 = vsel %vm934, %v3374, 0
    %v3438 = vsel %vm934, %v3382, 0
    %v3441 = vsel %vm934, %v3390, 0
    %v3444 = vsel %vm934, %v3398, 0
    %v3447 = vsel %vm934, %v3406, 0
    %v3450 = vsel %vm934, %v3409, 0
    %v3453 = vsel %vm977, %v3228, 0
    %3455 = vmatprep.subr.bf16.mxu0 0
    %3456 = vmatpush1.bf16.msra.mxu0 0
    %3457 = vmatprep.subr.bf16.mxu0 0
    %3458 = vmatpush1.bf16.msra.mxu0 0
    %3459 = vmatprep.subr.bf16.mxu0 0
    %3460 = vmatpush1.bf16.msra.mxu0 0
    %3461 = vmatprep.subr.bf16.mxu0 0
    %3462 = vmatpush1.bf16.msra.mxu0 0
    %3463 = vmatprep.subr.bf16.mxu0 0
    %3464 = vmatpush1.bf16.msra.mxu0 0
    %3465 = vmatprep.subr.bf16.mxu0 0
    %3466 = vmatpush1.bf16.msra.mxu0 0
    %3467 = vmatprep.subr.bf16.mxu0 0
    %3468 = vmatpush1.bf16.msra.mxu0 0
    %3469 = vmatprep.subr.bf16.mxu0 0
    %3470 = vmatpush1.bf16.msra.mxu0 %v3453
    %3471 = vmatprep.subr.bf16.mxu0 0
    %3472 = vmatpush2.bf16.msra.mxu0 0
    %3473 = vmatprep.subr.bf16.mxu0 0
    %3474 = vmatpush2.bf16.msra.mxu0 0
    %3475 = vmatprep.subr.bf16.mxu0 0
    %3476 = vmatpush2.bf16.msra.mxu0 0
    %3477 = vmatprep.subr.bf16.mxu0 0
    %3478 = vmatpush2.bf16.msra.mxu0 0
    %3479 = vmatprep.subr.bf16.mxu0 0
    %3480 = vmatpush2.bf16.msra.mxu0 0
    %3481 = vmatprep.subr.bf16.mxu0 0
    %3482 = vmatpush2.bf16.msra.mxu0 0
    %3483 = vmatprep.subr.bf16.mxu0 0
    %3484 = vmatpush2.bf16.msra.mxu0 0
    %3485 = vmatprep.subr.bf16.mxu0 0
    %3486 = vmatpush2.bf16.msra.mxu0 0
    %3487 = vmatprep.mubr.bf16.mxu0 0
    %3488 = vmatmul.mubr.bf16.gmra.mxu0 %v3411
    %v3489 = vpop.f32.mrf.mxu0
    %v3490 = vadd.f32 0.0, %v3489
    %v3491 = vpop.f32.mrf.mxu0
    %v3492 = vpop.f32.mrf.mxu0
    %v3493 = vadd.f32 0.0, %v3492
    %v3494 = vpop.f32.mrf.mxu0
    %3495 = vmatprep.mubr.bf16.mxu0 0
    %3496 = vmatmul.mubr.bf16.gmra.mxu0 %v3414
    %v3497 = vpop.f32.mrf.mxu0
    %v3498 = vadd.f32 0.0, %v3497
    %v3499 = vpop.f32.mrf.mxu0
    %v3500 = vpop.f32.mrf.mxu0
    %v3501 = vadd.f32 0.0, %v3500
    %v3502 = vpop.f32.mrf.mxu0
    %3503 = vmatprep.mubr.bf16.mxu0 0
    %3504 = vmatmul.mubr.bf16.gmra.mxu0 %v3417
    %v3505 = vpop.f32.mrf.mxu0
    %v3506 = vadd.f32 0.0, %v3505
    %v3507 = vpop.f32.mrf.mxu0
    %v3508 = vpop.f32.mrf.mxu0
    %v3509 = vadd.f32 0.0, %v3508
    %v3510 = vpop.f32.mrf.mxu0
    %3511 = vmatprep.mubr.bf16.mxu0 0
    %3512 = vmatmul.mubr.bf16.gmra.mxu0 %v3420
    %v3513 = vpop.f32.mrf.mxu0
    %v3514 = vadd.f32 0.0, %v3513
    %v3515 = vpop.f32.mrf.mxu0
    %v3516 = vpop.f32.mrf.mxu0
    %v3517 = vadd.f32 0.0, %v3516
    %v3518 = vpop.f32.mrf.mxu0
    %3519 = vmatprep.mubr.bf16.mxu0 0
    %3520 = vmatmul.mubr.bf16.gmra.mxu0 %v3423
    %v3521 = vpop.f32.mrf.mxu0
    %v3522 = vadd.f32 0.0, %v3521
    %v3523 = vpop.f32.mrf.mxu0
    %v3524 = vpop.f32.mrf.mxu0
    %v3525 = vadd.f32 0.0, %v3524
    %v3526 = vpop.f32.mrf.mxu0
    %3527 = vmatprep.mubr.bf16.mxu0 0
    %3528 = vmatmul.mubr.bf16.gmra.mxu0 %v3426
    %v3529 = vpop.f32.mrf.mxu0
    %v3530 = vadd.f32 0.0, %v3529
    %v3531 = vpop.f32.mrf.mxu0
    %v3532 = vpop.f32.mrf.mxu0
    %v3533 = vadd.f32 0.0, %v3532
    %v3534 = vpop.f32.mrf.mxu0
    %3535 = vmatprep.mubr.bf16.mxu0 0
    %3536 = vmatmul.mubr.bf16.gmra.mxu0 %v3429
    %v3537 = vpop.f32.mrf.mxu0
    %v3538 = vadd.f32 0.0, %v3537
    %v3539 = vpop.f32.mrf.mxu0
    %v3540 = vpop.f32.mrf.mxu0
    %v3541 = vadd.f32 0.0, %v3540
    %v3542 = vpop.f32.mrf.mxu0
    %3543 = vmatprep.mubr.bf16.mxu0 0
    %3544 = vmatmul.mubr.bf16.gmra.mxu0 %v3432
    %v3545 = vpop.f32.mrf.mxu0
    %v3546 = vadd.f32 0.0, %v3545
    %v3547 = vpop.f32.mrf.mxu0
    %v3548 = vpop.f32.mrf.mxu0
    %v3549 = vadd.f32 0.0, %v3548
    %v3550 = vpop.f32.mrf.mxu0
    %3551 = vmatprep.mubr.bf16.mxu0 0
    %3552 = vmatmul.mubr.bf16.gmra.mxu0 %v3435
    %v3553 = vpop.f32.mrf.mxu0
    %v3554 = vadd.f32 0.0, %v3553
    %v3555 = vpop.f32.mrf.mxu0
    %v3556 = vpop.f32.mrf.mxu0
    %v3557 = vadd.f32 0.0, %v3556
    %v3558 = vpop.f32.mrf.mxu0
    %3559 = vmatprep.mubr.bf16.mxu0 0
    %3560 = vmatmul.mubr.bf16.gmra.mxu0 %v3438
    %v3561 = vpop.f32.mrf.mxu0
    %v3562 = vadd.f32 0.0, %v3561
    %v3563 = vpop.f32.mrf.mxu0
    %v3564 = vpop.f32.mrf.mxu0
    %v3565 = vadd.f32 0.0, %v3564
    %v3566 = vpop.f32.mrf.mxu0
    %3567 = vmatprep.mubr.bf16.mxu0 0
    %3568 = vmatmul.mubr.bf16.gmra.mxu0 %v3441
    %v3569 = vpop.f32.mrf.mxu0
    %v3570 = vadd.f32 0.0, %v3569
    %v3571 = vpop.f32.mrf.mxu0
    %v3572 = vpop.f32.mrf.mxu0
    %v3573 = vadd.f32 0.0, %v3572
    %v3574 = vpop.f32.mrf.mxu0
    %3575 = vmatprep.mubr.bf16.mxu0 0
    %3576 = vmatmul.mubr.bf16.gmra.mxu0 %v3444
    %v3577 = vpop.f32.mrf.mxu0
    %v3578 = vadd.f32 0.0, %v3577
    %v3579 = vpop.f32.mrf.mxu0
    %v3580 = vpop.f32.mrf.mxu0
    %v3581 = vadd.f32 0.0, %v3580
    %v3582 = vpop.f32.mrf.mxu0
    %3583 = vmatprep.mubr.bf16.mxu0 0
    %3584 = vmatmul.mubr.bf16.gmra.mxu0 %v3447
    %v3585 = vpop.f32.mrf.mxu0
    %v3586 = vadd.f32 0.0, %v3585
    %v3587 = vpop.f32.mrf.mxu0
    %v3588 = vpop.f32.mrf.mxu0
    %v3589 = vadd.f32 0.0, %v3588
    %v3590 = vpop.f32.mrf.mxu0
    %3591 = vmatprep.mubr.bf16.mxu0 0
    %3592 = vmatmul.mubr.bf16.gmra.mxu0 %v3450
    %v3593 = vpop.f32.mrf.mxu0
    %v3594 = vadd.f32 0.0, %v3593
    %v3595 = vpop.f32.mrf.mxu0
    %v3596 = vpop.f32.mrf.mxu0
    %v3597 = vpop.f32.mrf.mxu0
    %3598 = vdwg.mxu0
    %v3599 = vadd.f32 %v3172, %v3490
    %v3600 = vadd.f32 %v3173, %v3493
    %v3601 = vadd.f32 %v3174, %v3498
    %v3602 = vadd.f32 %v3175, %v3501
    %v3603 = vadd.f32 %v3176, %v3506
    %v3604 = vadd.f32 %v3177, %v3509
    %v3605 = vadd.f32 %v3178, %v3514
    %v3606 = vadd.f32 %v3179, %v3517
    %v3607 = vadd.f32 %v3180, %v3522
    %v3608 = vadd.f32 %v3181, %v3525
    %v3609 = vadd.f32 %v3182, %v3530
    %v3610 = vadd.f32 %v3183, %v3533
    %v3611 = vadd.f32 %v3184, %v3538
    %v3612 = vadd.f32 %v3185, %v3541
    %v3613 = vadd.f32 %v3186, %v3546
    %v3614 = vadd.f32 %v3187, %v3549
    %v3615 = vadd.f32 %v3188, %v3554
    %v3616 = vadd.f32 %v3189, %v3557
    %v3617 = vadd.f32 %v3190, %v3562
    %v3618 = vadd.f32 %v3191, %v3565
    %v3619 = vadd.f32 %v3192, %v3570
    %v3620 = vadd.f32 %v3193, %v3573
    %v3621 = vadd.f32 %v3194, %v3578
    %v3622 = vadd.f32 %v3195, %v3581
    %v3623 = vadd.f32 %v3196, %v3586
    %v3624 = vadd.f32 %v3197, %v3589
    %v3625 = vadd.f32 %v3198, %v3594
    %v3626 = vld [vmem:[%s2885] sm:$0xf]
    %v3627 = vld [vmem:[%s2885 + $0x4] sm:$0xf]
    %v3628 = vld [vmem:[%s2885 + $0x8] sm:$0xf]
    %v3629 = vld [vmem:[%s2885 + $0xc] sm:$0xf]
    %v3630 = vld [vmem:[%s2885 + $0x10] sm:$0xf]
    %v3631 = vld [vmem:[%s2885 + $0x14] sm:$0xf]
    %v3632 = vld [vmem:[%s2885 + $0x18] sm:$0xf]
    %v3633 = vld [vmem:[%s2885 + $0x1c] sm:$0xf]
    %v3634 = vld [vmem:[%s2885 + $0x20] sm:$0xf]
    %v3635 = vld [vmem:[%s2885 + $0x24] sm:$0xf]
    %v3636 = vld [vmem:[%s2885 + $0x28] sm:$0xf]
    %v3637 = vld [vmem:[%s2885 + $0x2c] sm:$0xf]
    %v3638 = vld [vmem:[%s2885 + $0x30] sm:$0xf]
    %v3639 = vld [vmem:[%s2885 + $0x34] sm:$0xf]
    %v3640 = vld [vmem:[%s2885 + $0x38] sm:$0xf]
    %v3641 = vld [vmem:[%s2885 + $0x3c] sm:$0xf]
    %v3642 = vld [vmem:[%s2885 + $0x40] sm:$0xf]
    %v3643 = vld [vmem:[%s2885 + $0x44] sm:$0xf]
    %v3644 = vld [vmem:[%s2885 + $0x48] sm:$0xf]
    %v3645 = vld [vmem:[%s2885 + $0x4c] sm:$0xf]
    %v3646 = vld [vmem:[%s2885 + $0x50] sm:$0xf]
    %v3647 = vld [vmem:[%s2885 + $0x54] sm:$0xf]
    %v3648 = vld [vmem:[%s2885 + $0x58] sm:$0xf]
    %v3649 = vld [vmem:[%s2885 + $0x5c] sm:$0xf]
    %v3650 = vld [vmem:[%s2885 + $0x60] sm:$0xf]
    %v3651 = vld [vmem:[%s2885 + $0x64] sm:$0xf]
    %v3652 = vld [vmem:[%s2885 + $0x68] sm:$0xf]
    %v3653 = vld [vmem:[%s2885 + $0x6c] sm:$0x1]
    %s3654 = scalar_lea.vmem %s2, 32
    %v3655 = vld [vmem:[%s3654] sm:$0xf]
    %v3684 = vunpack.c.l.b16 %v3626
    %v3685 = vunpack.c.l.b16 %v3627
    %v3686 = vunpack.c.l.b16 %v3628
    %v3687 = vunpack.c.l.b16 %v3629
    %v3688 = vunpack.c.l.b16 %v3630
    %v3689 = vunpack.c.l.b16 %v3631
    %v3690 = vunpack.c.l.b16 %v3632
    %v3691 = vunpack.c.l.b16 %v3633
    %v3692 = vunpack.c.l.b16 %v3634
    %v3693 = vunpack.c.l.b16 %v3635
    %v3694 = vunpack.c.l.b16 %v3636
    %v3695 = vunpack.c.l.b16 %v3637
    %v3696 = vunpack.c.l.b16 %v3638
    %v3697 = vunpack.c.l.b16 %v3639
    %v3698 = vunpack.c.l.b16 %v3640
    %v3699 = vunpack.c.l.b16 %v3641
    %v3700 = vunpack.c.l.b16 %v3642
    %v3701 = vunpack.c.l.b16 %v3643
    %v3702 = vunpack.c.l.b16 %v3644
    %v3703 = vunpack.c.l.b16 %v3645
    %v3704 = vunpack.c.l.b16 %v3646
    %v3705 = vunpack.c.l.b16 %v3647
    %v3706 = vunpack.c.l.b16 %v3648
    %v3707 = vunpack.c.l.b16 %v3649
    %v3708 = vunpack.c.l.b16 %v3650
    %v3709 = vunpack.c.l.b16 %v3651
    %v3710 = vunpack.c.l.b16 %v3652
    %v3711 = vunpack.c.l.b16 %v3653
    %v3712 = vpack.c.b16 %v3685, %v3684
    %v3713 = vpack.c.b16 %v3687, %v3686
    %v3714 = vpack.c.b16 %v3689, %v3688
    %v3715 = vpack.c.b16 %v3691, %v3690
    %v3716 = vpack.c.b16 %v3693, %v3692
    %v3717 = vpack.c.b16 %v3695, %v3694
    %v3718 = vpack.c.b16 %v3697, %v3696
    %v3719 = vpack.c.b16 %v3699, %v3698
    %v3720 = vpack.c.b16 %v3701, %v3700
    %v3721 = vpack.c.b16 %v3703, %v3702
    %v3722 = vpack.c.b16 %v3705, %v3704
    %v3723 = vpack.c.b16 %v3707, %v3706
    %v3724 = vpack.c.b16 %v3709, %v3708
    %v3725 = vpack.c.b16 %v3711, %v3710
    %v3727 = vshrl.u32 %v3712, 16
    %v3729 = vshll.u32 %v3712, 16
    %v3731 = vrot.slane %v3729, 1
    %v3732 = vor.u32 %v3727, %v3731
    %v3734 = vshll.u32 %v3713, 16
    %v3736 = vrot.slane %v3734, 1
    %v3737 = vsel %vm1566, %v3732, %v3736
    %v3738 = vshrl.u32 %v3713, 16
    %v3740 = vor.u32 %v3738, %v3736
    %v3742 = vshll.u32 %v3714, 16
    %v3744 = vrot.slane %v3742, 1
    %v3745 = vsel %vm1566, %v3740, %v3744
    %v3746 = vshrl.u32 %v3714, 16
    %v3748 = vor.u32 %v3746, %v3744
    %v3750 = vshll.u32 %v3715, 16
    %v3752 = vrot.slane %v3750, 1
    %v3753 = vsel %vm1566, %v3748, %v3752
    %v3754 = vshrl.u32 %v3715, 16
    %v3756 = vor.u32 %v3754, %v3752
    %v3758 = vshll.u32 %v3716, 16
    %v3760 = vrot.slane %v3758, 1
    %v3761 = vsel %vm1566, %v3756, %v3760
    %v3762 = vshrl.u32 %v3716, 16
    %v3764 = vor.u32 %v3762, %v3760
    %v3766 = vshll.u32 %v3717, 16
    %v3768 = vrot.slane %v3766, 1
    %v3769 = vsel %vm1566, %v3764, %v3768
    %v3770 = vshrl.u32 %v3717, 16
    %v3772 = vor.u32 %v3770, %v3768
    %v3774 = vshll.u32 %v3718, 16
    %v3776 = vrot.slane %v3774, 1
    %v3777 = vsel %vm1566, %v3772, %v3776
    %v3778 = vshrl.u32 %v3718, 16
    %v3780 = vor.u32 %v3778, %v3776
    %v3782 = vshll.u32 %v3719, 16
    %v3784 = vrot.slane %v3782, 1
    %v3785 = vsel %vm1566, %v3780, %v3784
    %v3786 = vshrl.u32 %v3719, 16
    %v3788 = vor.u32 %v3786, %v3784
    %v3790 = vshll.u32 %v3720, 16
    %v3792 = vrot.slane %v3790, 1
    %v3793 = vsel %vm1566, %v3788, %v3792
    %v3794 = vshrl.u32 %v3720, 16
    %v3796 = vor.u32 %v3794, %v3792
    %v3798 = vshll.u32 %v3721, 16
    %v3800 = vrot.slane %v3798, 1
    %v3801 = vsel %vm1566, %v3796, %v3800
    %v3802 = vshrl.u32 %v3721, 16
    %v3804 = vor.u32 %v3802, %v3800
    %v3806 = vshll.u32 %v3722, 16
    %v3808 = vrot.slane %v3806, 1
    %v3809 = vsel %vm1566, %v3804, %v3808
    %v3810 = vshrl.u32 %v3722, 16
    %v3812 = vor.u32 %v3810, %v3808
    %v3814 = vshll.u32 %v3723, 16
    %v3816 = vrot.slane %v3814, 1
    %v3817 = vsel %vm1566, %v3812, %v3816
    %v3818 = vshrl.u32 %v3723, 16
    %v3820 = vor.u32 %v3818, %v3816
    %v3822 = vshll.u32 %v3724, 16
    %v3824 = vrot.slane %v3822, 1
    %v3825 = vsel %vm1566, %v3820, %v3824
    %v3826 = vshrl.u32 %v3724, 16
    %v3828 = vor.u32 %v3826, %v3824
    %v3830 = vshll.u32 %v3725, 16
    %v3832 = vrot.slane %v3830, 1
    %v3833 = vsel %vm1566, %v3828, %v3832
    %v3834 = vshrl.u32 %v3725, 16
    %v3836 = vor.u32 %v3834, %v3832
    %v3838 = vsel %vm934, %v3737, 0
    %v3841 = vsel %vm934, %v3745, 0
    %v3844 = vsel %vm934, %v3753, 0
    %v3847 = vsel %vm934, %v3761, 0
    %v3850 = vsel %vm934, %v3769, 0
    %v3853 = vsel %vm934, %v3777, 0
    %v3856 = vsel %vm934, %v3785, 0
    %v3859 = vsel %vm934, %v3793, 0
    %v3862 = vsel %vm934, %v3801, 0
    %v3865 = vsel %vm934, %v3809, 0
    %v3868 = vsel %vm934, %v3817, 0
    %v3871 = vsel %vm934, %v3825, 0
    %v3874 = vsel %vm934, %v3833, 0
    %v3877 = vsel %vm934, %v3836, 0
    %v3880 = vsel %vm977, %v3655, 0
    %3882 = vmatprep.subr.bf16.mxu0 0
    %3883 = vmatpush1.bf16.msra.mxu0 0
    %3884 = vmatprep.subr.bf16.mxu0 0
    %3885 = vmatpush1.bf16.msra.mxu0 0
    %3886 = vmatprep.subr.bf16.mxu0 0
    %3887 = vmatpush1.bf16.msra.mxu0 0
    %3888 = vmatprep.subr.bf16.mxu0 0
    %3889 = vmatpush1.bf16.msra.mxu0 0
    %3890 = vmatprep.subr.bf16.mxu0 0
    %3891 = vmatpush1.bf16.msra.mxu0 0
    %3892 = vmatprep.subr.bf16.mxu0 0
    %3893 = vmatpush1.bf16.msra.mxu0 0
    %3894 = vmatprep.subr.bf16.mxu0 0
    %3895 = vmatpush1.bf16.msra.mxu0 0
    %3896 = vmatprep.subr.bf16.mxu0 0
    %3897 = vmatpush1.bf16.msra.mxu0 %v3880
    %3898 = vmatprep.subr.bf16.mxu0 0
    %3899 = vmatpush2.bf16.msra.mxu0 0
    %3900 = vmatprep.subr.bf16.mxu0 0
    %3901 = vmatpush2.bf16.msra.mxu0 0
    %3902 = vmatprep.subr.bf16.mxu0 0
    %3903 = vmatpush2.bf16.msra.mxu0 0
    %3904 = vmatprep.subr.bf16.mxu0 0
    %3905 = vmatpush2.bf16.msra.mxu0 0
    %3906 = vmatprep.subr.bf16.mxu0 0
    %3907 = vmatpush2.bf16.msra.mxu0 0
    %3908 = vmatprep.subr.bf16.mxu0 0
    %3909 = vmatpush2.bf16.msra.mxu0 0
    %3910 = vmatprep.subr.bf16.mxu0 0
    %3911 = vmatpush2.bf16.msra.mxu0 0
    %3912 = vmatprep.subr.bf16.mxu0 0
    %3913 = vmatpush2.bf16.msra.mxu0 0
    %3914 = vmatprep.mubr.bf16.mxu0 0
    %3915 = vmatmul.mubr.bf16.gmra.mxu0 %v3838
    %v3916 = vpop.f32.mrf.mxu0
    %v3917 = vadd.f32 0.0, %v3916
    %v3918 = vpop.f32.mrf.mxu0
    %v3919 = vpop.f32.mrf.mxu0
    %v3920 = vadd.f32 0.0, %v3919
    %v3921 = vpop.f32.mrf.mxu0
    %3922 = vmatprep.mubr.bf16.mxu0 0
    %3923 = vmatmul.mubr.bf16.gmra.mxu0 %v3841
    %v3924 = vpop.f32.mrf.mxu0
    %v3925 = vadd.f32 0.0, %v3924
    %v3926 = vpop.f32.mrf.mxu0
    %v3927 = vpop.f32.mrf.mxu0
    %v3928 = vadd.f32 0.0, %v3927
    %v3929 = vpop.f32.mrf.mxu0
    %3930 = vmatprep.mubr.bf16.mxu0 0
    %3931 = vmatmul.mubr.bf16.gmra.mxu0 %v3844
    %v3932 = vpop.f32.mrf.mxu0
    %v3933 = vadd.f32 0.0, %v3932
    %v3934 = vpop.f32.mrf.mxu0
    %v3935 = vpop.f32.mrf.mxu0
    %v3936 = vadd.f32 0.0, %v3935
    %v3937 = vpop.f32.mrf.mxu0
    %3938 = vmatprep.mubr.bf16.mxu0 0
    %3939 = vmatmul.mubr.bf16.gmra.mxu0 %v3847
    %v3940 = vpop.f32.mrf.mxu0
    %v3941 = vadd.f32 0.0, %v3940
    %v3942 = vpop.f32.mrf.mxu0
    %v3943 = vpop.f32.mrf.mxu0
    %v3944 = vadd.f32 0.0, %v3943
    %v3945 = vpop.f32.mrf.mxu0
    %3946 = vmatprep.mubr.bf16.mxu0 0
    %3947 = vmatmul.mubr.bf16.gmra.mxu0 %v3850
    %v3948 = vpop.f32.mrf.mxu0
    %v3949 = vadd.f32 0.0, %v3948
    %v3950 = vpop.f32.mrf.mxu0
    %v3951 = vpop.f32.mrf.mxu0
    %v3952 = vadd.f32 0.0, %v3951
    %v3953 = vpop.f32.mrf.mxu0
    %3954 = vmatprep.mubr.bf16.mxu0 0
    %3955 = vmatmul.mubr.bf16.gmra.mxu0 %v3853
    %v3956 = vpop.f32.mrf.mxu0
    %v3957 = vadd.f32 0.0, %v3956
    %v3958 = vpop.f32.mrf.mxu0
    %v3959 = vpop.f32.mrf.mxu0
    %v3960 = vadd.f32 0.0, %v3959
    %v3961 = vpop.f32.mrf.mxu0
    %3962 = vmatprep.mubr.bf16.mxu0 0
    %3963 = vmatmul.mubr.bf16.gmra.mxu0 %v3856
    %v3964 = vpop.f32.mrf.mxu0
    %v3965 = vadd.f32 0.0, %v3964
    %v3966 = vpop.f32.mrf.mxu0
    %v3967 = vpop.f32.mrf.mxu0
    %v3968 = vadd.f32 0.0, %v3967
    %v3969 = vpop.f32.mrf.mxu0
    %3970 = vmatprep.mubr.bf16.mxu0 0
    %3971 = vmatmul.mubr.bf16.gmra.mxu0 %v3859
    %v3972 = vpop.f32.mrf.mxu0
    %v3973 = vadd.f32 0.0, %v3972
    %v3974 = vpop.f32.mrf.mxu0
    %v3975 = vpop.f32.mrf.mxu0
    %v3976 = vadd.f32 0.0, %v3975
    %v3977 = vpop.f32.mrf.mxu0
    %3978 = vmatprep.mubr.bf16.mxu0 0
    %3979 = vmatmul.mubr.bf16.gmra.mxu0 %v3862
    %v3980 = vpop.f32.mrf.mxu0
    %v3981 = vadd.f32 0.0, %v3980
    %v3982 = vpop.f32.mrf.mxu0
    %v3983 = vpop.f32.mrf.mxu0
    %v3984 = vadd.f32 0.0, %v3983
    %v3985 = vpop.f32.mrf.mxu0
    %3986 = vmatprep.mubr.bf16.mxu0 0
    %3987 = vmatmul.mubr.bf16.gmra.mxu0 %v3865
    %v3988 = vpop.f32.mrf.mxu0
    %v3989 = vadd.f32 0.0, %v3988
    %v3990 = vpop.f32.mrf.mxu0
    %v3991 = vpop.f32.mrf.mxu0
    %v3992 = vadd.f32 0.0, %v3991
    %v3993 = vpop.f32.mrf.mxu0
    %3994 = vmatprep.mubr.bf16.mxu0 0
    %3995 = vmatmul.mubr.bf16.gmra.mxu0 %v3868
    %v3996 = vpop.f32.mrf.mxu0
    %v3997 = vadd.f32 0.0, %v3996
    %v3998 = vpop.f32.mrf.mxu0
    %v3999 = vpop.f32.mrf.mxu0
    %v4000 = vadd.f32 0.0, %v3999
    %v4001 = vpop.f32.mrf.mxu0
    %4002 = vmatprep.mubr.bf16.mxu0 0
    %4003 = vmatmul.mubr.bf16.gmra.mxu0 %v3871
    %v4004 = vpop.f32.mrf.mxu0
    %v4005 = vadd.f32 0.0, %v4004
    %v4006 = vpop.f32.mrf.mxu0
    %v4007 = vpop.f32.mrf.mxu0
    %v4008 = vadd.f32 0.0, %v4007
    %v4009 = vpop.f32.mrf.mxu0
    %4010 = vmatprep.mubr.bf16.mxu0 0
    %4011 = vmatmul.mubr.bf16.gmra.mxu0 %v3874
    %v4012 = vpop.f32.mrf.mxu0
    %v4013 = vadd.f32 0.0, %v4012
    %v4014 = vpop.f32.mrf.mxu0
    %v4015 = vpop.f32.mrf.mxu0
    %v4016 = vadd.f32 0.0, %v4015
    %v4017 = vpop.f32.mrf.mxu0
    %4018 = vmatprep.mubr.bf16.mxu0 0
    %4019 = vmatmul.mubr.bf16.gmra.mxu0 %v3877
    %v4020 = vpop.f32.mrf.mxu0
    %v4021 = vadd.f32 0.0, %v4020
    %v4022 = vpop.f32.mrf.mxu0
    %v4023 = vpop.f32.mrf.mxu0
    %v4024 = vpop.f32.mrf.mxu0
    %4025 = vdwg.mxu0
    %v4026 = vadd.f32 %v3599, %v3917
    %v4027 = vadd.f32 %v3600, %v3920
    %v4028 = vadd.f32 %v3601, %v3925
    %v4029 = vadd.f32 %v3602, %v3928
    %v4030 = vadd.f32 %v3603, %v3933
    %v4031 = vadd.f32 %v3604, %v3936
    %v4032 = vadd.f32 %v3605, %v3941
    %v4033 = vadd.f32 %v3606, %v3944
    %v4034 = vadd.f32 %v3607, %v3949
    %v4035 = vadd.f32 %v3608, %v3952
    %v4036 = vadd.f32 %v3609, %v3957
    %v4037 = vadd.f32 %v3610, %v3960
    %v4038 = vadd.f32 %v3611, %v3965
    %v4039 = vadd.f32 %v3612, %v3968
    %v4040 = vadd.f32 %v3613, %v3973
    %v4041 = vadd.f32 %v3614, %v3976
    %v4042 = vadd.f32 %v3615, %v3981
    %v4043 = vadd.f32 %v3616, %v3984
    %v4044 = vadd.f32 %v3617, %v3989
    %v4045 = vadd.f32 %v3618, %v3992
    %v4046 = vadd.f32 %v3619, %v3997
    %v4047 = vadd.f32 %v3620, %v4000
    %v4048 = vadd.f32 %v3621, %v4005
    %v4049 = vadd.f32 %v3622, %v4008
    %v4050 = vadd.f32 %v3623, %v4013
    %v4051 = vadd.f32 %v3624, %v4016
    %v4052 = vadd.f32 %v3625, %v4021
    %v4053 = vld [vmem:[%s2571] sm:$0xe]
    %s4054 = scalar_lea.vmem %s2, 36
    %v4055 = vld [vmem:[%s4054] sm:$0xf]
    %v4057 = vunpack.c.l.b16 %v4053
    %v4058 = vpack.c.b16 %v3258, %v4057
    %v4059 = vrot.slane %v4058, 1
    %v4060 = vrot.slane %v3286, 1
    %v4061 = vsel %vm2327, %v4059, %v4060
    %v4062 = vrot.slane %v3287, 1
    %v4063 = vsel %vm2327, %v4060, %v4062
    %v4064 = vrot.slane %v3288, 1
    %v4065 = vsel %vm2327, %v4062, %v4064
    %v4066 = vrot.slane %v3289, 1
    %v4067 = vsel %vm2327, %v4064, %v4066
    %v4068 = vrot.slane %v3290, 1
    %v4069 = vsel %vm2327, %v4066, %v4068
    %v4070 = vrot.slane %v3291, 1
    %v4071 = vsel %vm2327, %v4068, %v4070
    %v4072 = vrot.slane %v3292, 1
    %v4073 = vsel %vm2327, %v4070, %v4072
    %v4074 = vrot.slane %v3293, 1
    %v4075 = vsel %vm2327, %v4072, %v4074
    %v4076 = vrot.slane %v3294, 1
    %v4077 = vsel %vm2327, %v4074, %v4076
    %v4078 = vrot.slane %v3295, 1
    %v4079 = vsel %vm2327, %v4076, %v4078
    %v4080 = vrot.slane %v3296, 1
    %v4081 = vsel %vm2327, %v4078, %v4080
    %v4082 = vrot.slane %v3297, 1
    %v4083 = vsel %vm2327, %v4080, %v4082
    %v4084 = vrot.slane %v3298, 1
    %v4085 = vsel %vm2327, %v4082, %v4084
    %v4087 = vsel %vm934, %v4061, 0
    %v4090 = vsel %vm934, %v4063, 0
    %v4093 = vsel %vm934, %v4065, 0
    %v4096 = vsel %vm934, %v4067, 0
    %v4099 = vsel %vm934, %v4069, 0
    %v4102 = vsel %vm934, %v4071, 0
    %v4105 = vsel %vm934, %v4073, 0
    %v4108 = vsel %vm934, %v4075, 0
    %v4111 = vsel %vm934, %v4077, 0
    %v4114 = vsel %vm934, %v4079, 0
    %v4117 = vsel %vm934, %v4081, 0
    %v4120 = vsel %vm934, %v4083, 0
    %v4123 = vsel %vm934, %v4085, 0
    %v4126 = vsel %vm934, %v4084, 0
    %v4129 = vsel %vm977, %v4055, 0
    %4131 = vmatprep.subr.bf16.mxu0 0
    %4132 = vmatpush1.bf16.msra.mxu0 0
    %4133 = vmatprep.subr.bf16.mxu0 0
    %4134 = vmatpush1.bf16.msra.mxu0 0
    %4135 = vmatprep.subr.bf16.mxu0 0
    %4136 = vmatpush1.bf16.msra.mxu0 0
    %4137 = vmatprep.subr.bf16.mxu0 0
    %4138 = vmatpush1.bf16.msra.mxu0 0
    %4139 = vmatprep.subr.bf16.mxu0 0
    %4140 = vmatpush1.bf16.msra.mxu0 0
    %4141 = vmatprep.subr.bf16.mxu0 0
    %4142 = vmatpush1.bf16.msra.mxu0 0
    %4143 = vmatprep.subr.bf16.mxu0 0
    %4144 = vmatpush1.bf16.msra.mxu0 0
    %4145 = vmatprep.subr.bf16.mxu0 0
    %4146 = vmatpush1.bf16.msra.mxu0 %v4129
    %4147 = vmatprep.subr.bf16.mxu0 0
    %4148 = vmatpush2.bf16.msra.mxu0 0
    %4149 = vmatprep.subr.bf16.mxu0 0
    %4150 = vmatpush2.bf16.msra.mxu0 0
    %4151 = vmatprep.subr.bf16.mxu0 0
    %4152 = vmatpush2.bf16.msra.mxu0 0
    %4153 = vmatprep.subr.bf16.mxu0 0
    %4154 = vmatpush2.bf16.msra.mxu0 0
    %4155 = vmatprep.subr.bf16.mxu0 0
    %4156 = vmatpush2.bf16.msra.mxu0 0
    %4157 = vmatprep.subr.bf16.mxu0 0
    %4158 = vmatpush2.bf16.msra.mxu0 0
    %4159 = vmatprep.subr.bf16.mxu0 0
    %4160 = vmatpush2.bf16.msra.mxu0 0
    %4161 = vmatprep.subr.bf16.mxu0 0
    %4162 = vmatpush2.bf16.msra.mxu0 0
    %4163 = vmatprep.mubr.bf16.mxu0 0
    %4164 = vmatmul.mubr.bf16.gmra.mxu0 %v4087
    %v4165 = vpop.f32.mrf.mxu0
    %v4166 = vadd.f32 0.0, %v4165
    %v4167 = vpop.f32.mrf.mxu0
    %v4168 = vpop.f32.mrf.mxu0
    %v4169 = vadd.f32 0.0, %v4168
    %v4170 = vpop.f32.mrf.mxu0
    %4171 = vmatprep.mubr.bf16.mxu0 0
    %4172 = vmatmul.mubr.bf16.gmra.mxu0 %v4090
    %v4173 = vpop.f32.mrf.mxu0
    %v4174 = vadd.f32 0.0, %v4173
    %v4175 = vpop.f32.mrf.mxu0
    %v4176 = vpop.f32.mrf.mxu0
    %v4177 = vadd.f32 0.0, %v4176
    %v4178 = vpop.f32.mrf.mxu0
    %4179 = vmatprep.mubr.bf16.mxu0 0
    %4180 = vmatmul.mubr.bf16.gmra.mxu0 %v4093
    %v4181 = vpop.f32.mrf.mxu0
    %v4182 = vadd.f32 0.0, %v4181
    %v4183 = vpop.f32.mrf.mxu0
    %v4184 = vpop.f32.mrf.mxu0
    %v4185 = vadd.f32 0.0, %v4184
    %v4186 = vpop.f32.mrf.mxu0
    %4187 = vmatprep.mubr.bf16.mxu0 0
    %4188 = vmatmul.mubr.bf16.gmra.mxu0 %v4096
    %v4189 = vpop.f32.mrf.mxu0
    %v4190 = vadd.f32 0.0, %v4189
    %v4191 = vpop.f32.mrf.mxu0
    %v4192 = vpop.f32.mrf.mxu0
    %v4193 = vadd.f32 0.0, %v4192
    %v4194 = vpop.f32.mrf.mxu0
    %4195 = vmatprep.mubr.bf16.mxu0 0
    %4196 = vmatmul.mubr.bf16.gmra.mxu0 %v4099
    %v4197 = vpop.f32.mrf.mxu0
    %v4198 = vadd.f32 0.0, %v4197
    %v4199 = vpop.f32.mrf.mxu0
    %v4200 = vpop.f32.mrf.mxu0
    %v4201 = vadd.f32 0.0, %v4200
    %v4202 = vpop.f32.mrf.mxu0
    %4203 = vmatprep.mubr.bf16.mxu0 0
    %4204 = vmatmul.mubr.bf16.gmra.mxu0 %v4102
    %v4205 = vpop.f32.mrf.mxu0
    %v4206 = vadd.f32 0.0, %v4205
    %v4207 = vpop.f32.mrf.mxu0
    %v4208 = vpop.f32.mrf.mxu0
    %v4209 = vadd.f32 0.0, %v4208
    %v4210 = vpop.f32.mrf.mxu0
    %4211 = vmatprep.mubr.bf16.mxu0 0
    %4212 = vmatmul.mubr.bf16.gmra.mxu0 %v4105
    %v4213 = vpop.f32.mrf.mxu0
    %v4214 = vadd.f32 0.0, %v4213
    %v4215 = vpop.f32.mrf.mxu0
    %v4216 = vpop.f32.mrf.mxu0
    %v4217 = vadd.f32 0.0, %v4216
    %v4218 = vpop.f32.mrf.mxu0
    %4219 = vmatprep.mubr.bf16.mxu0 0
    %4220 = vmatmul.mubr.bf16.gmra.mxu0 %v4108
    %v4221 = vpop.f32.mrf.mxu0
    %v4222 = vadd.f32 0.0, %v4221
    %v4223 = vpop.f32.mrf.mxu0
    %v4224 = vpop.f32.mrf.mxu0
    %v4225 = vadd.f32 0.0, %v4224
    %v4226 = vpop.f32.mrf.mxu0
    %4227 = vmatprep.mubr.bf16.mxu0 0
    %4228 = vmatmul.mubr.bf16.gmra.mxu0 %v4111
    %v4229 = vpop.f32.mrf.mxu0
    %v4230 = vadd.f32 0.0, %v4229
    %v4231 = vpop.f32.mrf.mxu0
    %v4232 = vpop.f32.mrf.mxu0
    %v4233 = vadd.f32 0.0, %v4232
    %v4234 = vpop.f32.mrf.mxu0
    %4235 = vmatprep.mubr.bf16.mxu0 0
    %4236 = vmatmul.mubr.bf16.gmra.mxu0 %v4114
    %v4237 = vpop.f32.mrf.mxu0
    %v4238 = vadd.f32 0.0, %v4237
    %v4239 = vpop.f32.mrf.mxu0
    %v4240 = vpop.f32.mrf.mxu0
    %v4241 = vadd.f32 0.0, %v4240
    %v4242 = vpop.f32.mrf.mxu0
    %4243 = vmatprep.mubr.bf16.mxu0 0
    %4244 = vmatmul.mubr.bf16.gmra.mxu0 %v4117
    %v4245 = vpop.f32.mrf.mxu0
    %v4246 = vadd.f32 0.0, %v4245
    %v4247 = vpop.f32.mrf.mxu0
    %v4248 = vpop.f32.mrf.mxu0
    %v4249 = vadd.f32 0.0, %v4248
    %v4250 = vpop.f32.mrf.mxu0
    %4251 = vmatprep.mubr.bf16.mxu0 0
    %4252 = vmatmul.mubr.bf16.gmra.mxu0 %v4120
    %v4253 = vpop.f32.mrf.mxu0
    %v4254 = vadd.f32 0.0, %v4253
    %v4255 = vpop.f32.mrf.mxu0
    %v4256 = vpop.f32.mrf.mxu0
    %v4257 = vadd.f32 0.0, %v4256
    %v4258 = vpop.f32.mrf.mxu0
    %4259 = vmatprep.mubr.bf16.mxu0 0
    %4260 = vmatmul.mubr.bf16.gmra.mxu0 %v4123
    %v4261 = vpop.f32.mrf.mxu0
    %v4262 = vadd.f32 0.0, %v4261
    %v4263 = vpop.f32.mrf.mxu0
    %v4264 = vpop.f32.mrf.mxu0
    %v4265 = vadd.f32 0.0, %v4264
    %v4266 = vpop.f32.mrf.mxu0
    %4267 = vmatprep.mubr.bf16.mxu0 0
    %4268 = vmatmul.mubr.bf16.gmra.mxu0 %v4126
    %v4269 = vpop.f32.mrf.mxu0
    %v4270 = vadd.f32 0.0, %v4269
    %v4271 = vpop.f32.mrf.mxu0
    %v4272 = vpop.f32.mrf.mxu0
    %v4273 = vpop.f32.mrf.mxu0
    %4274 = vdwg.mxu0
    %v4275 = vadd.f32 %v4026, %v4166
    %v4276 = vadd.f32 %v4027, %v4169
    %v4277 = vadd.f32 %v4028, %v4174
    %v4278 = vadd.f32 %v4029, %v4177
    %v4279 = vadd.f32 %v4030, %v4182
    %v4280 = vadd.f32 %v4031, %v4185
    %v4281 = vadd.f32 %v4032, %v4190
    %v4282 = vadd.f32 %v4033, %v4193
    %v4283 = vadd.f32 %v4034, %v4198
    %v4284 = vadd.f32 %v4035, %v4201
    %v4285 = vadd.f32 %v4036, %v4206
    %v4286 = vadd.f32 %v4037, %v4209
    %v4287 = vadd.f32 %v4038, %v4214
    %v4288 = vadd.f32 %v4039, %v4217
    %v4289 = vadd.f32 %v4040, %v4222
    %v4290 = vadd.f32 %v4041, %v4225
    %v4291 = vadd.f32 %v4042, %v4230
    %v4292 = vadd.f32 %v4043, %v4233
    %v4293 = vadd.f32 %v4044, %v4238
    %v4294 = vadd.f32 %v4045, %v4241
    %v4295 = vadd.f32 %v4046, %v4246
    %v4296 = vadd.f32 %v4047, %v4249
    %v4297 = vadd.f32 %v4048, %v4254
    %v4298 = vadd.f32 %v4049, %v4257
    %v4299 = vadd.f32 %v4050, %v4262
    %v4300 = vadd.f32 %v4051, %v4265
    %v4301 = vadd.f32 %v4052, %v4270
    %v4302 = vld [vmem:[#allocation2 + $0x4] sm:$0xe]
    %v4303 = vld [vmem:[#allocation2 + $0x8] sm:$0xf]
    %v4304 = vld [vmem:[#allocation2 + $0xc] sm:$0xf]
    %v4305 = vld [vmem:[#allocation2 + $0x10] sm:$0xf]
    %v4306 = vld [vmem:[#allocation2 + $0x14] sm:$0xf]
    %v4307 = vld [vmem:[#allocation2 + $0x18] sm:$0xf]
    %v4308 = vld [vmem:[#allocation2 + $0x1c] sm:$0xf]
    %v4309 = vld [vmem:[#allocation2 + $0x20] sm:$0xf]
    %v4310 = vld [vmem:[#allocation2 + $0x24] sm:$0xf]
    %v4311 = vld [vmem:[#allocation2 + $0x28] sm:$0xf]
    %v4312 = vld [vmem:[#allocation2 + $0x2c] sm:$0xf]
    %v4313 = vld [vmem:[#allocation2 + $0x30] sm:$0xf]
    %v4314 = vld [vmem:[#allocation2 + $0x34] sm:$0xf]
    %v4315 = vld [vmem:[#allocation2 + $0x38] sm:$0xf]
    %v4316 = vld [vmem:[#allocation2 + $0x3c] sm:$0xf]
    %v4317 = vld [vmem:[#allocation2 + $0x40] sm:$0xf]
    %v4318 = vld [vmem:[#allocation2 + $0x44] sm:$0xf]
    %v4319 = vld [vmem:[#allocation2 + $0x48] sm:$0xf]
    %v4320 = vld [vmem:[#allocation2 + $0x4c] sm:$0xf]
    %v4321 = vld [vmem:[#allocation2 + $0x50] sm:$0xf]
    %v4322 = vld [vmem:[#allocation2 + $0x54] sm:$0xf]
    %v4323 = vld [vmem:[#allocation2 + $0x58] sm:$0xf]
    %v4324 = vld [vmem:[#allocation2 + $0x5c] sm:$0xf]
    %v4325 = vld [vmem:[#allocation2 + $0x60] sm:$0xf]
    %v4326 = vld [vmem:[#allocation2 + $0x64] sm:$0xf]
    %v4327 = vld [vmem:[#allocation2 + $0x68] sm:$0xf]
    %v4328 = vld [vmem:[#allocation2 + $0x6c] sm:$0xf]
    %v4329 = vld [vmem:[#allocation2 + $0x70] sm:$0x1]
    %s4330 = scalar_lea.vmem %s2, 40
    %v4331 = vld [vmem:[%s4330] sm:$0xf]
    %v4360 = vunpack.c.l.b16 %v4302
    %v4361 = vunpack.c.l.b16 %v4303
    %v4362 = vunpack.c.l.b16 %v4304
    %v4363 = vunpack.c.l.b16 %v4305
    %v4364 = vunpack.c.l.b16 %v4306
    %v4365 = vunpack.c.l.b16 %v4307
    %v4366 = vunpack.c.l.b16 %v4308
    %v4367 = vunpack.c.l.b16 %v4309
    %v4368 = vunpack.c.l.b16 %v4310
    %v4369 = vunpack.c.l.b16 %v4311
    %v4370 = vunpack.c.l.b16 %v4312
    %v4371 = vunpack.c.l.b16 %v4313
    %v4372 = vunpack.c.l.b16 %v4314
    %v4373 = vunpack.c.l.b16 %v4315
    %v4374 = vunpack.c.l.b16 %v4316
    %v4375 = vunpack.c.l.b16 %v4317
    %v4376 = vunpack.c.l.b16 %v4318
    %v4377 = vunpack.c.l.b16 %v4319
    %v4378 = vunpack.c.l.b16 %v4320
    %v4379 = vunpack.c.l.b16 %v4321
    %v4380 = vunpack.c.l.b16 %v4322
    %v4381 = vunpack.c.l.b16 %v4323
    %v4382 = vunpack.c.l.b16 %v4324
    %v4383 = vunpack.c.l.b16 %v4325
    %v4384 = vunpack.c.l.b16 %v4326
    %v4385 = vunpack.c.l.b16 %v4327
    %v4386 = vunpack.c.l.b16 %v4328
    %v4387 = vunpack.c.l.b16 %v4329
    %v4388 = vpack.c.b16 %v4361, %v4360
    %v4389 = vpack.c.b16 %v4363, %v4362
    %v4390 = vpack.c.b16 %v4365, %v4364
    %v4391 = vpack.c.b16 %v4367, %v4366
    %v4392 = vpack.c.b16 %v4369, %v4368
    %v4393 = vpack.c.b16 %v4371, %v4370
    %v4394 = vpack.c.b16 %v4373, %v4372
    %v4395 = vpack.c.b16 %v4375, %v4374
    %v4396 = vpack.c.b16 %v4377, %v4376
    %v4397 = vpack.c.b16 %v4379, %v4378
    %v4398 = vpack.c.b16 %v4381, %v4380
    %v4399 = vpack.c.b16 %v4383, %v4382
    %v4400 = vpack.c.b16 %v4385, %v4384
    %v4401 = vpack.c.b16 %v4387, %v4386
    %v4402 = vrot.slane %v4388, 1
    %v4403 = vrot.slane %v4389, 1
    %v4404 = vsel %vm2327, %v4402, %v4403
    %v4405 = vrot.slane %v4390, 1
    %v4406 = vsel %vm2327, %v4403, %v4405
    %v4407 = vrot.slane %v4391, 1
    %v4408 = vsel %vm2327, %v4405, %v4407
    %v4409 = vrot.slane %v4392, 1
    %v4410 = vsel %vm2327, %v4407, %v4409
    %v4411 = vrot.slane %v4393, 1
    %v4412 = vsel %vm2327, %v4409, %v4411
    %v4413 = vrot.slane %v4394, 1
    %v4414 = vsel %vm2327, %v4411, %v4413
    %v4415 = vrot.slane %v4395, 1
    %v4416 = vsel %vm2327, %v4413, %v4415
    %v4417 = vrot.slane %v4396, 1
    %v4418 = vsel %vm2327, %v4415, %v4417
    %v4419 = vrot.slane %v4397, 1
    %v4420 = vsel %vm2327, %v4417, %v4419
    %v4421 = vrot.slane %v4398, 1
    %v4422 = vsel %vm2327, %v4419, %v4421
    %v4423 = vrot.slane %v4399, 1
    %v4424 = vsel %vm2327, %v4421, %v4423
    %v4425 = vrot.slane %v4400, 1
    %v4426 = vsel %vm2327, %v4423, %v4425
    %v4427 = vrot.slane %v4401, 1
    %v4428 = vsel %vm2327, %v4425, %v4427
    %v4430 = vsel %vm934, %v4404, 0
    %v4433 = vsel %vm934, %v4406, 0
    %v4436 = vsel %vm934, %v4408, 0
    %v4439 = vsel %vm934, %v4410, 0
    %v4442 = vsel %vm934, %v4412, 0
    %v4445 = vsel %vm934, %v4414, 0
    %v4448 = vsel %vm934, %v4416, 0
    %v4451 = vsel %vm934, %v4418, 0
    %v4454 = vsel %vm934, %v4420, 0
    %v4457 = vsel %vm934, %v4422, 0
    %v4460 = vsel %vm934, %v4424, 0
    %v4463 = vsel %vm934, %v4426, 0
    %v4466 = vsel %vm934, %v4428, 0
    %v4469 = vsel %vm934, %v4427, 0
    %v4472 = vsel %vm977, %v4331, 0
    %4474 = vmatprep.subr.bf16.mxu0 0
    %4475 = vmatpush1.bf16.msra.mxu0 0
    %4476 = vmatprep.subr.bf16.mxu0 0
    %4477 = vmatpush1.bf16.msra.mxu0 0
    %4478 = vmatprep.subr.bf16.mxu0 0
    %4479 = vmatpush1.bf16.msra.mxu0 0
    %4480 = vmatprep.subr.bf16.mxu0 0
    %4481 = vmatpush1.bf16.msra.mxu0 0
    %4482 = vmatprep.subr.bf16.mxu0 0
    %4483 = vmatpush1.bf16.msra.mxu0 0
    %4484 = vmatprep.subr.bf16.mxu0 0
    %4485 = vmatpush1.bf16.msra.mxu0 0
    %4486 = vmatprep.subr.bf16.mxu0 0
    %4487 = vmatpush1.bf16.msra.mxu0 0
    %4488 = vmatprep.subr.bf16.mxu0 0
    %4489 = vmatpush1.bf16.msra.mxu0 %v4472
    %4490 = vmatprep.subr.bf16.mxu0 0
    %4491 = vmatpush2.bf16.msra.mxu0 0
    %4492 = vmatprep.subr.bf16.mxu0 0
    %4493 = vmatpush2.bf16.msra.mxu0 0
    %4494 = vmatprep.subr.bf16.mxu0 0
    %4495 = vmatpush2.bf16.msra.mxu0 0
    %4496 = vmatprep.subr.bf16.mxu0 0
    %4497 = vmatpush2.bf16.msra.mxu0 0
    %4498 = vmatprep.subr.bf16.mxu0 0
    %4499 = vmatpush2.bf16.msra.mxu0 0
    %4500 = vmatprep.subr.bf16.mxu0 0
    %4501 = vmatpush2.bf16.msra.mxu0 0
    %4502 = vmatprep.subr.bf16.mxu0 0
    %4503 = vmatpush2.bf16.msra.mxu0 0
    %4504 = vmatprep.subr.bf16.mxu0 0
    %4505 = vmatpush2.bf16.msra.mxu0 0
    %4506 = vmatprep.mubr.bf16.mxu0 0
    %4507 = vmatmul.mubr.bf16.gmra.mxu0 %v4430
    %v4508 = vpop.f32.mrf.mxu0
    %v4509 = vadd.f32 0.0, %v4508
    %v4510 = vpop.f32.mrf.mxu0
    %v4511 = vpop.f32.mrf.mxu0
    %v4512 = vadd.f32 0.0, %v4511
    %v4513 = vpop.f32.mrf.mxu0
    %4514 = vmatprep.mubr.bf16.mxu0 0
    %4515 = vmatmul.mubr.bf16.gmra.mxu0 %v4433
    %v4516 = vpop.f32.mrf.mxu0
    %v4517 = vadd.f32 0.0, %v4516
    %v4518 = vpop.f32.mrf.mxu0
    %v4519 = vpop.f32.mrf.mxu0
    %v4520 = vadd.f32 0.0, %v4519
    %v4521 = vpop.f32.mrf.mxu0
    %4522 = vmatprep.mubr.bf16.mxu0 0
    %4523 = vmatmul.mubr.bf16.gmra.mxu0 %v4436
    %v4524 = vpop.f32.mrf.mxu0
    %v4525 = vadd.f32 0.0, %v4524
    %v4526 = vpop.f32.mrf.mxu0
    %v4527 = vpop.f32.mrf.mxu0
    %v4528 = vadd.f32 0.0, %v4527
    %v4529 = vpop.f32.mrf.mxu0
    %4530 = vmatprep.mubr.bf16.mxu0 0
    %4531 = vmatmul.mubr.bf16.gmra.mxu0 %v4439
    %v4532 = vpop.f32.mrf.mxu0
    %v4533 = vadd.f32 0.0, %v4532
    %v4534 = vpop.f32.mrf.mxu0
    %v4535 = vpop.f32.mrf.mxu0
    %v4536 = vadd.f32 0.0, %v4535
    %v4537 = vpop.f32.mrf.mxu0
    %4538 = vmatprep.mubr.bf16.mxu0 0
    %4539 = vmatmul.mubr.bf16.gmra.mxu0 %v4442
    %v4540 = vpop.f32.mrf.mxu0
    %v4541 = vadd.f32 0.0, %v4540
    %v4542 = vpop.f32.mrf.mxu0
    %v4543 = vpop.f32.mrf.mxu0
    %v4544 = vadd.f32 0.0, %v4543
    %v4545 = vpop.f32.mrf.mxu0
    %4546 = vmatprep.mubr.bf16.mxu0 0
    %4547 = vmatmul.mubr.bf16.gmra.mxu0 %v4445
    %v4548 = vpop.f32.mrf.mxu0
    %v4549 = vadd.f32 0.0, %v4548
    %v4550 = vpop.f32.mrf.mxu0
    %v4551 = vpop.f32.mrf.mxu0
    %v4552 = vadd.f32 0.0, %v4551
    %v4553 = vpop.f32.mrf.mxu0
    %4554 = vmatprep.mubr.bf16.mxu0 0
    %4555 = vmatmul.mubr.bf16.gmra.mxu0 %v4448
    %v4556 = vpop.f32.mrf.mxu0
    %v4557 = vadd.f32 0.0, %v4556
    %v4558 = vpop.f32.mrf.mxu0
    %v4559 = vpop.f32.mrf.mxu0
    %v4560 = vadd.f32 0.0, %v4559
    %v4561 = vpop.f32.mrf.mxu0
    %4562 = vmatprep.mubr.bf16.mxu0 0
    %4563 = vmatmul.mubr.bf16.gmra.mxu0 %v4451
    %v4564 = vpop.f32.mrf.mxu0
    %v4565 = vadd.f32 0.0, %v4564
    %v4566 = vpop.f32.mrf.mxu0
    %v4567 = vpop.f32.mrf.mxu0
    %v4568 = vadd.f32 0.0, %v4567
    %v4569 = vpop.f32.mrf.mxu0
    %4570 = vmatprep.mubr.bf16.mxu0 0
    %4571 = vmatmul.mubr.bf16.gmra.mxu0 %v4454
    %v4572 = vpop.f32.mrf.mxu0
    %v4573 = vadd.f32 0.0, %v4572
    %v4574 = vpop.f32.mrf.mxu0
    %v4575 = vpop.f32.mrf.mxu0
    %v4576 = vadd.f32 0.0, %v4575
    %v4577 = vpop.f32.mrf.mxu0
    %4578 = vmatprep.mubr.bf16.mxu0 0
    %4579 = vmatmul.mubr.bf16.gmra.mxu0 %v4457
    %v4580 = vpop.f32.mrf.mxu0
    %v4581 = vadd.f32 0.0, %v4580
    %v4582 = vpop.f32.mrf.mxu0
    %v4583 = vpop.f32.mrf.mxu0
    %v4584 = vadd.f32 0.0, %v4583
    %v4585 = vpop.f32.mrf.mxu0
    %4586 = vmatprep.mubr.bf16.mxu0 0
    %4587 = vmatmul.mubr.bf16.gmra.mxu0 %v4460
    %v4588 = vpop.f32.mrf.mxu0
    %v4589 = vadd.f32 0.0, %v4588
    %v4590 = vpop.f32.mrf.mxu0
    %v4591 = vpop.f32.mrf.mxu0
    %v4592 = vadd.f32 0.0, %v4591
    %v4593 = vpop.f32.mrf.mxu0
    %4594 = vmatprep.mubr.bf16.mxu0 0
    %4595 = vmatmul.mubr.bf16.gmra.mxu0 %v4463
    %v4596 = vpop.f32.mrf.mxu0
    %v4597 = vadd.f32 0.0, %v4596
    %v4598 = vpop.f32.mrf.mxu0
    %v4599 = vpop.f32.mrf.mxu0
    %v4600 = vadd.f32 0.0, %v4599
    %v4601 = vpop.f32.mrf.mxu0
    %4602 = vmatprep.mubr.bf16.mxu0 0
    %4603 = vmatmul.mubr.bf16.gmra.mxu0 %v4466
    %v4604 = vpop.f32.mrf.mxu0
    %v4605 = vadd.f32 0.0, %v4604
    %v4606 = vpop.f32.mrf.mxu0
    %v4607 = vpop.f32.mrf.mxu0
    %v4608 = vadd.f32 0.0, %v4607
    %v4609 = vpop.f32.mrf.mxu0
    %4610 = vmatprep.mubr.bf16.mxu0 0
    %4611 = vmatmul.mubr.bf16.gmra.mxu0 %v4469
    %v4612 = vpop.f32.mrf.mxu0
    %v4613 = vadd.f32 0.0, %v4612
    %v4614 = vpop.f32.mrf.mxu0
    %v4615 = vpop.f32.mrf.mxu0
    %v4616 = vpop.f32.mrf.mxu0
    %4617 = vdwg.mxu0
    %v4618 = vadd.f32 %v4275, %v4509
    %v4619 = vadd.f32 %v4276, %v4512
    %v4620 = vadd.f32 %v4277, %v4517
    %v4621 = vadd.f32 %v4278, %v4520
    %v4622 = vadd.f32 %v4279, %v4525
    %v4623 = vadd.f32 %v4280, %v4528
    %v4624 = vadd.f32 %v4281, %v4533
    %v4625 = vadd.f32 %v4282, %v4536
    %v4626 = vadd.f32 %v4283, %v4541
    %v4627 = vadd.f32 %v4284, %v4544
    %v4628 = vadd.f32 %v4285, %v4549
    %v4629 = vadd.f32 %v4286, %v4552
    %v4630 = vadd.f32 %v4287, %v4557
    %v4631 = vadd.f32 %v4288, %v4560
    %v4632 = vadd.f32 %v4289, %v4565
    %v4633 = vadd.f32 %v4290, %v4568
    %v4634 = vadd.f32 %v4291, %v4573
    %v4635 = vadd.f32 %v4292, %v4576
    %v4636 = vadd.f32 %v4293, %v4581
    %v4637 = vadd.f32 %v4294, %v4584
    %v4638 = vadd.f32 %v4295, %v4589
    %v4639 = vadd.f32 %v4296, %v4592
    %v4640 = vadd.f32 %v4297, %v4597
    %v4641 = vadd.f32 %v4298, %v4600
    %v4642 = vadd.f32 %v4299, %v4605
    %v4643 = vadd.f32 %v4300, %v4608
    %v4644 = vadd.f32 %v4301, %v4613
    %v4645 = vld [vmem:[%s1152 + $0x4] sm:$0xe]
    %v4646 = vld [vmem:[%s1152 + $0x8] sm:$0xf]
    %v4647 = vld [vmem:[%s1152 + $0xc] sm:$0xf]
    %v4648 = vld [vmem:[%s1152 + $0x10] sm:$0xf]
    %v4649 = vld [vmem:[%s1152 + $0x14] sm:$0xf]
    %v4650 = vld [vmem:[%s1152 + $0x18] sm:$0xf]
    %v4651 = vld [vmem:[%s1152 + $0x1c] sm:$0xf]
    %v4652 = vld [vmem:[%s1152 + $0x20] sm:$0xf]
    %v4653 = vld [vmem:[%s1152 + $0x24] sm:$0xf]
    %v4654 = vld [vmem:[%s1152 + $0x28] sm:$0xf]
    %v4655 = vld [vmem:[%s1152 + $0x2c] sm:$0xf]
    %v4656 = vld [vmem:[%s1152 + $0x30] sm:$0xf]
    %v4657 = vld [vmem:[%s1152 + $0x34] sm:$0xf]
    %v4658 = vld [vmem:[%s1152 + $0x38] sm:$0xf]
    %v4659 = vld [vmem:[%s1152 + $0x3c] sm:$0xf]
    %v4660 = vld [vmem:[%s1152 + $0x40] sm:$0xf]
    %v4661 = vld [vmem:[%s1152 + $0x44] sm:$0xf]
    %v4662 = vld [vmem:[%s1152 + $0x48] sm:$0xf]
    %v4663 = vld [vmem:[%s1152 + $0x4c] sm:$0xf]
    %v4664 = vld [vmem:[%s1152 + $0x50] sm:$0xf]
    %v4665 = vld [vmem:[%s1152 + $0x54] sm:$0xf]
    %v4666 = vld [vmem:[%s1152 + $0x58] sm:$0xf]
    %v4667 = vld [vmem:[%s1152 + $0x5c] sm:$0xf]
    %v4668 = vld [vmem:[%s1152 + $0x60] sm:$0xf]
    %v4669 = vld [vmem:[%s1152 + $0x64] sm:$0xf]
    %v4670 = vld [vmem:[%s1152 + $0x68] sm:$0xf]
    %v4671 = vld [vmem:[%s1152 + $0x6c] sm:$0xf]
    %v4672 = vld [vmem:[%s1152 + $0x70] sm:$0x1]
    %s4673 = scalar_lea.vmem %s2, 44
    %v4674 = vld [vmem:[%s4673] sm:$0xf]
    %v4703 = vunpack.c.l.b16 %v4645
    %v4704 = vunpack.c.l.b16 %v4646
    %v4705 = vunpack.c.l.b16 %v4647
    %v4706 = vunpack.c.l.b16 %v4648
    %v4707 = vunpack.c.l.b16 %v4649
    %v4708 = vunpack.c.l.b16 %v4650
    %v4709 = vunpack.c.l.b16 %v4651
    %v4710 = vunpack.c.l.b16 %v4652
    %v4711 = vunpack.c.l.b16 %v4653
    %v4712 = vunpack.c.l.b16 %v4654
    %v4713 = vunpack.c.l.b16 %v4655
    %v4714 = vunpack.c.l.b16 %v4656
    %v4715 = vunpack.c.l.b16 %v4657
    %v4716 = vunpack.c.l.b16 %v4658
    %v4717 = vunpack.c.l.b16 %v4659
    %v4718 = vunpack.c.l.b16 %v4660
    %v4719 = vunpack.c.l.b16 %v4661
    %v4720 = vunpack.c.l.b16 %v4662
    %v4721 = vunpack.c.l.b16 %v4663
    %v4722 = vunpack.c.l.b16 %v4664
    %v4723 = vunpack.c.l.b16 %v4665
    %v4724 = vunpack.c.l.b16 %v4666
    %v4725 = vunpack.c.l.b16 %v4667
    %v4726 = vunpack.c.l.b16 %v4668
    %v4727 = vunpack.c.l.b16 %v4669
    %v4728 = vunpack.c.l.b16 %v4670
    %v4729 = vunpack.c.l.b16 %v4671
    %v4730 = vunpack.c.l.b16 %v4672
    %v4731 = vpack.c.b16 %v4704, %v4703
    %v4732 = vpack.c.b16 %v4706, %v4705
    %v4733 = vpack.c.b16 %v4708, %v4707
    %v4734 = vpack.c.b16 %v4710, %v4709
    %v4735 = vpack.c.b16 %v4712, %v4711
    %v4736 = vpack.c.b16 %v4714, %v4713
    %v4737 = vpack.c.b16 %v4716, %v4715
    %v4738 = vpack.c.b16 %v4718, %v4717
    %v4739 = vpack.c.b16 %v4720, %v4719
    %v4740 = vpack.c.b16 %v4722, %v4721
    %v4741 = vpack.c.b16 %v4724, %v4723
    %v4742 = vpack.c.b16 %v4726, %v4725
    %v4743 = vpack.c.b16 %v4728, %v4727
    %v4744 = vpack.c.b16 %v4730, %v4729
    %v4745 = vrot.slane %v4731, 1
    %v4746 = vrot.slane %v4732, 1
    %v4747 = vsel %vm2327, %v4745, %v4746
    %v4748 = vrot.slane %v4733, 1
    %v4749 = vsel %vm2327, %v4746, %v4748
    %v4750 = vrot.slane %v4734, 1
    %v4751 = vsel %vm2327, %v4748, %v4750
    %v4752 = vrot.slane %v4735, 1
    %v4753 = vsel %vm2327, %v4750, %v4752
    %v4754 = vrot.slane %v4736, 1
    %v4755 = vsel %vm2327, %v4752, %v4754
    %v4756 = vrot.slane %v4737, 1
    %v4757 = vsel %vm2327, %v4754, %v4756
    %v4758 = vrot.slane %v4738, 1
    %v4759 = vsel %vm2327, %v4756, %v4758
    %v4760 = vrot.slane %v4739, 1
    %v4761 = vsel %vm2327, %v4758, %v4760
    %v4762 = vrot.slane %v4740, 1
    %v4763 = vsel %vm2327, %v4760, %v4762
    %v4764 = vrot.slane %v4741, 1
    %v4765 = vsel %vm2327, %v4762, %v4764
    %v4766 = vrot.slane %v4742, 1
    %v4767 = vsel %vm2327, %v4764, %v4766
    %v4768 = vrot.slane %v4743, 1
    %v4769 = vsel %vm2327, %v4766, %v4768
    %v4770 = vrot.slane %v4744, 1
    %v4771 = vsel %vm2327, %v4768, %v4770
    %v4773 = vsel %vm934, %v4747, 0
    %v4776 = vsel %vm934, %v4749, 0
    %v4779 = vsel %vm934, %v4751, 0
    %v4782 = vsel %vm934, %v4753, 0
    %v4785 = vsel %vm934, %v4755, 0
    %v4788 = vsel %vm934, %v4757, 0
    %v4791 = vsel %vm934, %v4759, 0
    %v4794 = vsel %vm934, %v4761, 0
    %v4797 = vsel %vm934, %v4763, 0
    %v4800 = vsel %vm934, %v4765, 0
    %v4803 = vsel %vm934, %v4767, 0
    %v4806 = vsel %vm934, %v4769, 0
    %v4809 = vsel %vm934, %v4771, 0
    %v4812 = vsel %vm934, %v4770, 0
    %v4815 = vsel %vm977, %v4674, 0
    %4817 = vmatprep.subr.bf16.mxu0 0
    %4818 = vmatpush1.bf16.msra.mxu0 0
    %4819 = vmatprep.subr.bf16.mxu0 0
    %4820 = vmatpush1.bf16.msra.mxu0 0
    %4821 = vmatprep.subr.bf16.mxu0 0
    %4822 = vmatpush1.bf16.msra.mxu0 0
    %4823 = vmatprep.subr.bf16.mxu0 0
    %4824 = vmatpush1.bf16.msra.mxu0 0
    %4825 = vmatprep.subr.bf16.mxu0 0
    %4826 = vmatpush1.bf16.msra.mxu0 0
    %4827 = vmatprep.subr.bf16.mxu0 0
    %4828 = vmatpush1.bf16.msra.mxu0 0
    %4829 = vmatprep.subr.bf16.mxu0 0
    %4830 = vmatpush1.bf16.msra.mxu0 0
    %4831 = vmatprep.subr.bf16.mxu0 0
    %4832 = vmatpush1.bf16.msra.mxu0 %v4815
    %4833 = vmatprep.subr.bf16.mxu0 0
    %4834 = vmatpush2.bf16.msra.mxu0 0
    %4835 = vmatprep.subr.bf16.mxu0 0
    %4836 = vmatpush2.bf16.msra.mxu0 0
    %4837 = vmatprep.subr.bf16.mxu0 0
    %4838 = vmatpush2.bf16.msra.mxu0 0
    %4839 = vmatprep.subr.bf16.mxu0 0
    %4840 = vmatpush2.bf16.msra.mxu0 0
    %4841 = vmatprep.subr.bf16.mxu0 0
    %4842 = vmatpush2.bf16.msra.mxu0 0
    %4843 = vmatprep.subr.bf16.mxu0 0
    %4844 = vmatpush2.bf16.msra.mxu0 0
    %4845 = vmatprep.subr.bf16.mxu0 0
    %4846 = vmatpush2.bf16.msra.mxu0 0
    %4847 = vmatprep.subr.bf16.mxu0 0
    %4848 = vmatpush2.bf16.msra.mxu0 0
    %4849 = vmatprep.mubr.bf16.mxu0 0
    %4850 = vmatmul.mubr.bf16.gmra.mxu0 %v4773
    %v4851 = vpop.f32.mrf.mxu0
    %v4852 = vadd.f32 0.0, %v4851
    %v4853 = vpop.f32.mrf.mxu0
    %v4854 = vpop.f32.mrf.mxu0
    %v4855 = vadd.f32 0.0, %v4854
    %v4856 = vpop.f32.mrf.mxu0
    %4857 = vmatprep.mubr.bf16.mxu0 0
    %4858 = vmatmul.mubr.bf16.gmra.mxu0 %v4776
    %v4859 = vpop.f32.mrf.mxu0
    %v4860 = vadd.f32 0.0, %v4859
    %v4861 = vpop.f32.mrf.mxu0
    %v4862 = vpop.f32.mrf.mxu0
    %v4863 = vadd.f32 0.0, %v4862
    %v4864 = vpop.f32.mrf.mxu0
    %4865 = vmatprep.mubr.bf16.mxu0 0
    %4866 = vmatmul.mubr.bf16.gmra.mxu0 %v4779
    %v4867 = vpop.f32.mrf.mxu0
    %v4868 = vadd.f32 0.0, %v4867
    %v4869 = vpop.f32.mrf.mxu0
    %v4870 = vpop.f32.mrf.mxu0
    %v4871 = vadd.f32 0.0, %v4870
    %v4872 = vpop.f32.mrf.mxu0
    %4873 = vmatprep.mubr.bf16.mxu0 0
    %4874 = vmatmul.mubr.bf16.gmra.mxu0 %v4782
    %v4875 = vpop.f32.mrf.mxu0
    %v4876 = vadd.f32 0.0, %v4875
    %v4877 = vpop.f32.mrf.mxu0
    %v4878 = vpop.f32.mrf.mxu0
    %v4879 = vadd.f32 0.0, %v4878
    %v4880 = vpop.f32.mrf.mxu0
    %4881 = vmatprep.mubr.bf16.mxu0 0
    %4882 = vmatmul.mubr.bf16.gmra.mxu0 %v4785
    %v4883 = vpop.f32.mrf.mxu0
    %v4884 = vadd.f32 0.0, %v4883
    %v4885 = vpop.f32.mrf.mxu0
    %v4886 = vpop.f32.mrf.mxu0
    %v4887 = vadd.f32 0.0, %v4886
    %v4888 = vpop.f32.mrf.mxu0
    %4889 = vmatprep.mubr.bf16.mxu0 0
    %4890 = vmatmul.mubr.bf16.gmra.mxu0 %v4788
    %v4891 = vpop.f32.mrf.mxu0
    %v4892 = vadd.f32 0.0, %v4891
    %v4893 = vpop.f32.mrf.mxu0
    %v4894 = vpop.f32.mrf.mxu0
    %v4895 = vadd.f32 0.0, %v4894
    %v4896 = vpop.f32.mrf.mxu0
    %4897 = vmatprep.mubr.bf16.mxu0 0
    %4898 = vmatmul.mubr.bf16.gmra.mxu0 %v4791
    %v4899 = vpop.f32.mrf.mxu0
    %v4900 = vadd.f32 0.0, %v4899
    %v4901 = vpop.f32.mrf.mxu0
    %v4902 = vpop.f32.mrf.mxu0
    %v4903 = vadd.f32 0.0, %v4902
    %v4904 = vpop.f32.mrf.mxu0
    %4905 = vmatprep.mubr.bf16.mxu0 0
    %4906 = vmatmul.mubr.bf16.gmra.mxu0 %v4794
    %v4907 = vpop.f32.mrf.mxu0
    %v4908 = vadd.f32 0.0, %v4907
    %v4909 = vpop.f32.mrf.mxu0
    %v4910 = vpop.f32.mrf.mxu0
    %v4911 = vadd.f32 0.0, %v4910
    %v4912 = vpop.f32.mrf.mxu0
    %4913 = vmatprep.mubr.bf16.mxu0 0
    %4914 = vmatmul.mubr.bf16.gmra.mxu0 %v4797
    %v4915 = vpop.f32.mrf.mxu0
    %v4916 = vadd.f32 0.0, %v4915
    %v4917 = vpop.f32.mrf.mxu0
    %v4918 = vpop.f32.mrf.mxu0
    %v4919 = vadd.f32 0.0, %v4918
    %v4920 = vpop.f32.mrf.mxu0
    %4921 = vmatprep.mubr.bf16.mxu0 0
    %4922 = vmatmul.mubr.bf16.gmra.mxu0 %v4800
    %v4923 = vpop.f32.mrf.mxu0
    %v4924 = vadd.f32 0.0, %v4923
    %v4925 = vpop.f32.mrf.mxu0
    %v4926 = vpop.f32.mrf.mxu0
    %v4927 = vadd.f32 0.0, %v4926
    %v4928 = vpop.f32.mrf.mxu0
    %4929 = vmatprep.mubr.bf16.mxu0 0
    %4930 = vmatmul.mubr.bf16.gmra.mxu0 %v4803
    %v4931 = vpop.f32.mrf.mxu0
    %v4932 = vadd.f32 0.0, %v4931
    %v4933 = vpop.f32.mrf.mxu0
    %v4934 = vpop.f32.mrf.mxu0
    %v4935 = vadd.f32 0.0, %v4934
    %v4936 = vpop.f32.mrf.mxu0
    %4937 = vmatprep.mubr.bf16.mxu0 0
    %4938 = vmatmul.mubr.bf16.gmra.mxu0 %v4806
    %v4939 = vpop.f32.mrf.mxu0
    %v4940 = vadd.f32 0.0, %v4939
    %v4941 = vpop.f32.mrf.mxu0
    %v4942 = vpop.f32.mrf.mxu0
    %v4943 = vadd.f32 0.0, %v4942
    %v4944 = vpop.f32.mrf.mxu0
    %4945 = vmatprep.mubr.bf16.mxu0 0
    %4946 = vmatmul.mubr.bf16.gmra.mxu0 %v4809
    %v4947 = vpop.f32.mrf.mxu0
    %v4948 = vadd.f32 0.0, %v4947
    %v4949 = vpop.f32.mrf.mxu0
    %v4950 = vpop.f32.mrf.mxu0
    %v4951 = vadd.f32 0.0, %v4950
    %v4952 = vpop.f32.mrf.mxu0
    %4953 = vmatprep.mubr.bf16.mxu0 0
    %4954 = vmatmul.mubr.bf16.gmra.mxu0 %v4812
    %v4955 = vpop.f32.mrf.mxu0
    %v4956 = vadd.f32 0.0, %v4955
    %v4957 = vpop.f32.mrf.mxu0
    %v4958 = vpop.f32.mrf.mxu0
    %v4959 = vpop.f32.mrf.mxu0
    %4960 = vdwg.mxu0
    %v4961 = vadd.f32 %v4618, %v4852
    %v4962 = vadd.f32 %v4619, %v4855
    %v4963 = vadd.f32 %v4620, %v4860
    %v4964 = vadd.f32 %v4621, %v4863
    %v4965 = vadd.f32 %v4622, %v4868
    %v4966 = vadd.f32 %v4623, %v4871
    %v4967 = vadd.f32 %v4624, %v4876
    %v4968 = vadd.f32 %v4625, %v4879
    %v4969 = vadd.f32 %v4626, %v4884
    %v4970 = vadd.f32 %v4627, %v4887
    %v4971 = vadd.f32 %v4628, %v4892
    %v4972 = vadd.f32 %v4629, %v4895
    %v4973 = vadd.f32 %v4630, %v4900
    %v4974 = vadd.f32 %v4631, %v4903
    %v4975 = vadd.f32 %v4632, %v4908
    %v4976 = vadd.f32 %v4633, %v4911
    %v4977 = vadd.f32 %v4634, %v4916
    %v4978 = vadd.f32 %v4635, %v4919
    %v4979 = vadd.f32 %v4636, %v4924
    %v4980 = vadd.f32 %v4637, %v4927
    %v4981 = vadd.f32 %v4638, %v4932
    %v4982 = vadd.f32 %v4639, %v4935
    %v4983 = vadd.f32 %v4640, %v4940
    %v4984 = vadd.f32 %v4641, %v4943
    %v4985 = vadd.f32 %v4642, %v4948
    %v4986 = vadd.f32 %v4643, %v4951
    %v4987 = vadd.f32 %v4644, %v4956
    %v4988 = vld [vmem:[#allocation2 + $0x70] sm:$0x3]
    %s4989 = scalar_lea.vmem %s2, 48
    %v4990 = vld [vmem:[%s4989] sm:$0xf]
    %v4992 = vunpack.c.l.b16 %v4988
    %v4993 = vpack.c.b16 %v4992, %v4386
    %vm4994 = vsmask.f32 6400
    %v4996 = vshrl.u32 %v4388, 16
    %v4998 = vrot.slane %v4996, 1
    %v4999 = vshll.u32 %v4388, 16
    %v5001 = vrot.slane %v4999, 2
    %v5002 = vor.u32 %v4998, %v5001
    %v5004 = vshrl.u32 %v4389, 16
    %v5006 = vrot.slane %v5004, 1
    %v5007 = vshll.u32 %v4389, 16
    %v5009 = vrot.slane %v5007, 2
    %v5010 = vor.u32 %v5006, %v5009
    %v5011 = vsel %vm4994, %v5002, %v5010
    %v5013 = vshrl.u32 %v4390, 16
    %v5015 = vrot.slane %v5013, 1
    %v5016 = vshll.u32 %v4390, 16
    %v5018 = vrot.slane %v5016, 2
    %v5019 = vor.u32 %v5015, %v5018
    %v5020 = vsel %vm4994, %v5010, %v5019
    %v5022 = vshrl.u32 %v4391, 16
    %v5024 = vrot.slane %v5022, 1
    %v5025 = vshll.u32 %v4391, 16
    %v5027 = vrot.slane %v5025, 2
    %v5028 = vor.u32 %v5024, %v5027
    %v5029 = vsel %vm4994, %v5019, %v5028
    %v5031 = vshrl.u32 %v4392, 16
    %v5033 = vrot.slane %v5031, 1
    %v5034 = vshll.u32 %v4392, 16
    %v5036 = vrot.slane %v5034, 2
    %v5037 = vor.u32 %v5033, %v5036
    %v5038 = vsel %vm4994, %v5028, %v5037
    %v5040 = vshrl.u32 %v4393, 16
    %v5042 = vrot.slane %v5040, 1
    %v5043 = vshll.u32 %v4393, 16
    %v5045 = vrot.slane %v5043, 2
    %v5046 = vor.u32 %v5042, %v5045
    %v5047 = vsel %vm4994, %v5037, %v5046
    %v5049 = vshrl.u32 %v4394, 16
    %v5051 = vrot.slane %v5049, 1
    %v5052 = vshll.u32 %v4394, 16
    %v5054 = vrot.slane %v5052, 2
    %v5055 = vor.u32 %v5051, %v5054
    %v5056 = vsel %vm4994, %v5046, %v5055
    %v5058 = vshrl.u32 %v4395, 16
    %v5060 = vrot.slane %v5058, 1
    %v5061 = vshll.u32 %v4395, 16
    %v5063 = vrot.slane %v5061, 2
    %v5064 = vor.u32 %v5060, %v5063
    %v5065 = vsel %vm4994, %v5055, %v5064
    %v5067 = vshrl.u32 %v4396, 16
    %v5069 = vrot.slane %v5067, 1
    %v5070 = vshll.u32 %v4396, 16
    %v5072 = vrot.slane %v5070, 2
    %v5073 = vor.u32 %v5069, %v5072
    %v5074 = vsel %vm4994, %v5064, %v5073
    %v5076 = vshrl.u32 %v4397, 16
    %v5078 = vrot.slane %v5076, 1
    %v5079 = vshll.u32 %v4397, 16
    %v5081 = vrot.slane %v5079, 2
    %v5082 = vor.u32 %v5078, %v5081
    %v5083 = vsel %vm4994, %v5073, %v5082
    %v5085 = vshrl.u32 %v4398, 16
    %v5087 = vrot.slane %v5085, 1
    %v5088 = vshll.u32 %v4398, 16
    %v5090 = vrot.slane %v5088, 2
    %v5091 = vor.u32 %v5087, %v5090
    %v5092 = vsel %vm4994, %v5082, %v5091
    %v5094 = vshrl.u32 %v4399, 16
    %v5096 = vrot.slane %v5094, 1
    %v5097 = vshll.u32 %v4399, 16
    %v5099 = vrot.slane %v5097, 2
    %v5100 = vor.u32 %v5096, %v5099
    %v5101 = vsel %vm4994, %v5091, %v5100
    %v5103 = vshrl.u32 %v4400, 16
    %v5105 = vrot.slane %v5103, 1
    %v5106 = vshll.u32 %v4400, 16
    %v5108 = vrot.slane %v5106, 2
    %v5109 = vor.u32 %v5105, %v5108
    %v5110 = vsel %vm4994, %v5100, %v5109
    %v5112 = vshrl.u32 %v4993, 16
    %v5114 = vrot.slane %v5112, 1
    %v5115 = vshll.u32 %v4993, 16
    %v5117 = vrot.slane %v5115, 2
    %v5118 = vor.u32 %v5114, %v5117
    %v5119 = vsel %vm4994, %v5109, %v5118
    %v5121 = vsel %vm934, %v5011, 0
    %v5124 = vsel %vm934, %v5020, 0
    %v5127 = vsel %vm934, %v5029, 0
    %v5130 = vsel %vm934, %v5038, 0
    %v5133 = vsel %vm934, %v5047, 0
    %v5136 = vsel %vm934, %v5056, 0
    %v5139 = vsel %vm934, %v5065, 0
    %v5142 = vsel %vm934, %v5074, 0
    %v5145 = vsel %vm934, %v5083, 0
    %v5148 = vsel %vm934, %v5092, 0
    %v5151 = vsel %vm934, %v5101, 0
    %v5154 = vsel %vm934, %v5110, 0
    %v5157 = vsel %vm934, %v5119, 0
    %v5160 = vsel %vm934, %v5118, 0
    %v5163 = vsel %vm977, %v4990, 0
    %5165 = vmatprep.subr.bf16.mxu0 0
    %5166 = vmatpush1.bf16.msra.mxu0 0
    %5167 = vmatprep.subr.bf16.mxu0 0
    %5168 = vmatpush1.bf16.msra.mxu0 0
    %5169 = vmatprep.subr.bf16.mxu0 0
    %5170 = vmatpush1.bf16.msra.mxu0 0
    %5171 = vmatprep.subr.bf16.mxu0 0
    %5172 = vmatpush1.bf16.msra.mxu0 0
    %5173 = vmatprep.subr.bf16.mxu0 0
    %5174 = vmatpush1.bf16.msra.mxu0 0
    %5175 = vmatprep.subr.bf16.mxu0 0
    %5176 = vmatpush1.bf16.msra.mxu0 0
    %5177 = vmatprep.subr.bf16.mxu0 0
    %5178 = vmatpush1.bf16.msra.mxu0 0
    %5179 = vmatprep.subr.bf16.mxu0 0
    %5180 = vmatpush1.bf16.msra.mxu0 %v5163
    %5181 = vmatprep.subr.bf16.mxu0 0
    %5182 = vmatpush2.bf16.msra.mxu0 0
    %5183 = vmatprep.subr.bf16.mxu0 0
    %5184 = vmatpush2.bf16.msra.mxu0 0
    %5185 = vmatprep.subr.bf16.mxu0 0
    %5186 = vmatpush2.bf16.msra.mxu0 0
    %5187 = vmatprep.subr.bf16.mxu0 0
    %5188 = vmatpush2.bf16.msra.mxu0 0
    %5189 = vmatprep.subr.bf16.mxu0 0
    %5190 = vmatpush2.bf16.msra.mxu0 0
    %5191 = vmatprep.subr.bf16.mxu0 0
    %5192 = vmatpush2.bf16.msra.mxu0 0
    %5193 = vmatprep.subr.bf16.mxu0 0
    %5194 = vmatpush2.bf16.msra.mxu0 0
    %5195 = vmatprep.subr.bf16.mxu0 0
    %5196 = vmatpush2.bf16.msra.mxu0 0
    %5197 = vmatprep.mubr.bf16.mxu0 0
    %5198 = vmatmul.mubr.bf16.gmra.mxu0 %v5121
    %v5199 = vpop.f32.mrf.mxu0
    %v5200 = vadd.f32 0.0, %v5199
    %v5201 = vpop.f32.mrf.mxu0
    %v5202 = vpop.f32.mrf.mxu0
    %v5203 = vadd.f32 0.0, %v5202
    %v5204 = vpop.f32.mrf.mxu0
    %5205 = vmatprep.mubr.bf16.mxu0 0
    %5206 = vmatmul.mubr.bf16.gmra.mxu0 %v5124
    %v5207 = vpop.f32.mrf.mxu0
    %v5208 = vadd.f32 0.0, %v5207
    %v5209 = vpop.f32.mrf.mxu0
    %v5210 = vpop.f32.mrf.mxu0
    %v5211 = vadd.f32 0.0, %v5210
    %v5212 = vpop.f32.mrf.mxu0
    %5213 = vmatprep.mubr.bf16.mxu0 0
    %5214 = vmatmul.mubr.bf16.gmra.mxu0 %v5127
    %v5215 = vpop.f32.mrf.mxu0
    %v5216 = vadd.f32 0.0, %v5215
    %v5217 = vpop.f32.mrf.mxu0
    %v5218 = vpop.f32.mrf.mxu0
    %v5219 = vadd.f32 0.0, %v5218
    %v5220 = vpop.f32.mrf.mxu0
    %5221 = vmatprep.mubr.bf16.mxu0 0
    %5222 = vmatmul.mubr.bf16.gmra.mxu0 %v5130
    %v5223 = vpop.f32.mrf.mxu0
    %v5224 = vadd.f32 0.0, %v5223
    %v5225 = vpop.f32.mrf.mxu0
    %v5226 = vpop.f32.mrf.mxu0
    %v5227 = vadd.f32 0.0, %v5226
    %v5228 = vpop.f32.mrf.mxu0
    %5229 = vmatprep.mubr.bf16.mxu0 0
    %5230 = vmatmul.mubr.bf16.gmra.mxu0 %v5133
    %v5231 = vpop.f32.mrf.mxu0
    %v5232 = vadd.f32 0.0, %v5231
    %v5233 = vpop.f32.mrf.mxu0
    %v5234 = vpop.f32.mrf.mxu0
    %v5235 = vadd.f32 0.0, %v5234
    %v5236 = vpop.f32.mrf.mxu0
    %5237 = vmatprep.mubr.bf16.mxu0 0
    %5238 = vmatmul.mubr.bf16.gmra.mxu0 %v5136
    %v5239 = vpop.f32.mrf.mxu0
    %v5240 = vadd.f32 0.0, %v5239
    %v5241 = vpop.f32.mrf.mxu0
    %v5242 = vpop.f32.mrf.mxu0
    %v5243 = vadd.f32 0.0, %v5242
    %v5244 = vpop.f32.mrf.mxu0
    %5245 = vmatprep.mubr.bf16.mxu0 0
    %5246 = vmatmul.mubr.bf16.gmra.mxu0 %v5139
    %v5247 = vpop.f32.mrf.mxu0
    %v5248 = vadd.f32 0.0, %v5247
    %v5249 = vpop.f32.mrf.mxu0
    %v5250 = vpop.f32.mrf.mxu0
    %v5251 = vadd.f32 0.0, %v5250
    %v5252 = vpop.f32.mrf.mxu0
    %5253 = vmatprep.mubr.bf16.mxu0 0
    %5254 = vmatmul.mubr.bf16.gmra.mxu0 %v5142
    %v5255 = vpop.f32.mrf.mxu0
    %v5256 = vadd.f32 0.0, %v5255
    %v5257 = vpop.f32.mrf.mxu0
    %v5258 = vpop.f32.mrf.mxu0
    %v5259 = vadd.f32 0.0, %v5258
    %v5260 = vpop.f32.mrf.mxu0
    %5261 = vmatprep.mubr.bf16.mxu0 0
    %5262 = vmatmul.mubr.bf16.gmra.mxu0 %v5145
    %v5263 = vpop.f32.mrf.mxu0
    %v5264 = vadd.f32 0.0, %v5263
    %v5265 = vpop.f32.mrf.mxu0
    %v5266 = vpop.f32.mrf.mxu0
    %v5267 = vadd.f32 0.0, %v5266
    %v5268 = vpop.f32.mrf.mxu0
    %5269 = vmatprep.mubr.bf16.mxu0 0
    %5270 = vmatmul.mubr.bf16.gmra.mxu0 %v5148
    %v5271 = vpop.f32.mrf.mxu0
    %v5272 = vadd.f32 0.0, %v5271
    %v5273 = vpop.f32.mrf.mxu0
    %v5274 = vpop.f32.mrf.mxu0
    %v5275 = vadd.f32 0.0, %v5274
    %v5276 = vpop.f32.mrf.mxu0
    %5277 = vmatprep.mubr.bf16.mxu0 0
    %5278 = vmatmul.mubr.bf16.gmra.mxu0 %v5151
    %v5279 = vpop.f32.mrf.mxu0
    %v5280 = vadd.f32 0.0, %v5279
    %v5281 = vpop.f32.mrf.mxu0
    %v5282 = vpop.f32.mrf.mxu0
    %v5283 = vadd.f32 0.0, %v5282
    %v5284 = vpop.f32.mrf.mxu0
    %5285 = vmatprep.mubr.bf16.mxu0 0
    %5286 = vmatmul.mubr.bf16.gmra.mxu0 %v5154
    %v5287 = vpop.f32.mrf.mxu0
    %v5288 = vadd.f32 0.0, %v5287
    %v5289 = vpop.f32.mrf.mxu0
    %v5290 = vpop.f32.mrf.mxu0
    %v5291 = vadd.f32 0.0, %v5290
    %v5292 = vpop.f32.mrf.mxu0
    %5293 = vmatprep.mubr.bf16.mxu0 0
    %5294 = vmatmul.mubr.bf16.gmra.mxu0 %v5157
    %v5295 = vpop.f32.mrf.mxu0
    %v5296 = vadd.f32 0.0, %v5295
    %v5297 = vpop.f32.mrf.mxu0
    %v5298 = vpop.f32.mrf.mxu0
    %v5299 = vadd.f32 0.0, %v5298
    %v5300 = vpop.f32.mrf.mxu0
    %5301 = vmatprep.mubr.bf16.mxu0 0
    %5302 = vmatmul.mubr.bf16.gmra.mxu0 %v5160
    %v5303 = vpop.f32.mrf.mxu0
    %v5304 = vadd.f32 0.0, %v5303
    %v5305 = vpop.f32.mrf.mxu0
    %v5306 = vpop.f32.mrf.mxu0
    %v5307 = vpop.f32.mrf.mxu0
    %5308 = vdwg.mxu0
    %v5309 = vadd.f32 %v4961, %v5200
    %v5310 = vadd.f32 %v4962, %v5203
    %v5311 = vadd.f32 %v4963, %v5208
    %v5312 = vadd.f32 %v4964, %v5211
    %v5313 = vadd.f32 %v4965, %v5216
    %v5314 = vadd.f32 %v4966, %v5219
    %v5315 = vadd.f32 %v4967, %v5224
    %v5316 = vadd.f32 %v4968, %v5227
    %v5317 = vadd.f32 %v4969, %v5232
    %v5318 = vadd.f32 %v4970, %v5235
    %v5319 = vadd.f32 %v4971, %v5240
    %v5320 = vadd.f32 %v4972, %v5243
    %v5321 = vadd.f32 %v4973, %v5248
    %v5322 = vadd.f32 %v4974, %v5251
    %v5323 = vadd.f32 %v4975, %v5256
    %v5324 = vadd.f32 %v4976, %v5259
    %v5325 = vadd.f32 %v4977, %v5264
    %v5326 = vadd.f32 %v4978, %v5267
    %v5327 = vadd.f32 %v4979, %v5272
    %v5328 = vadd.f32 %v4980, %v5275
    %v5329 = vadd.f32 %v4981, %v5280
    %v5330 = vadd.f32 %v4982, %v5283
    %v5331 = vadd.f32 %v4983, %v5288
    %v5332 = vadd.f32 %v4984, %v5291
    %v5333 = vadd.f32 %v4985, %v5296
    %v5334 = vadd.f32 %v4986, %v5299
    %v5335 = vadd.f32 %v4987, %v5304
    %v5336 = vld [vmem:[%s1152 + $0x70] sm:$0x3]
    %s5337 = scalar_lea.vmem %s2, 52
    %v5338 = vld [vmem:[%s5337] sm:$0xf]
    %v5340 = vunpack.c.l.b16 %v5336
    %v5341 = vpack.c.b16 %v5340, %v4729
    %v5343 = vshrl.u32 %v4731, 16
    %v5345 = vrot.slane %v5343, 1
    %v5346 = vshll.u32 %v4731, 16
    %v5348 = vrot.slane %v5346, 2
    %v5349 = vor.u32 %v5345, %v5348
    %v5351 = vshrl.u32 %v4732, 16
    %v5353 = vrot.slane %v5351, 1
    %v5354 = vshll.u32 %v4732, 16
    %v5356 = vrot.slane %v5354, 2
    %v5357 = vor.u32 %v5353, %v5356
    %v5358 = vsel %vm4994, %v5349, %v5357
    %v5360 = vshrl.u32 %v4733, 16
    %v5362 = vrot.slane %v5360, 1
    %v5363 = vshll.u32 %v4733, 16
    %v5365 = vrot.slane %v5363, 2
    %v5366 = vor.u32 %v5362, %v5365
    %v5367 = vsel %vm4994, %v5357, %v5366
    %v5369 = vshrl.u32 %v4734, 16
    %v5371 = vrot.slane %v5369, 1
    %v5372 = vshll.u32 %v4734, 16
    %v5374 = vrot.slane %v5372, 2
    %v5375 = vor.u32 %v5371, %v5374
    %v5376 = vsel %vm4994, %v5366, %v5375
    %v5378 = vshrl.u32 %v4735, 16
    %v5380 = vrot.slane %v5378, 1
    %v5381 = vshll.u32 %v4735, 16
    %v5383 = vrot.slane %v5381, 2
    %v5384 = vor.u32 %v5380, %v5383
    %v5385 = vsel %vm4994, %v5375, %v5384
    %v5387 = vshrl.u32 %v4736, 16
    %v5389 = vrot.slane %v5387, 1
    %v5390 = vshll.u32 %v4736, 16
    %v5392 = vrot.slane %v5390, 2
    %v5393 = vor.u32 %v5389, %v5392
    %v5394 = vsel %vm4994, %v5384, %v5393
    %v5396 = vshrl.u32 %v4737, 16
    %v5398 = vrot.slane %v5396, 1
    %v5399 = vshll.u32 %v4737, 16
    %v5401 = vrot.slane %v5399, 2
    %v5402 = vor.u32 %v5398, %v5401
    %v5403 = vsel %vm4994, %v5393, %v5402
    %v5405 = vshrl.u32 %v4738, 16
    %v5407 = vrot.slane %v5405, 1
    %v5408 = vshll.u32 %v4738, 16
    %v5410 = vrot.slane %v5408, 2
    %v5411 = vor.u32 %v5407, %v5410
    %v5412 = vsel %vm4994, %v5402, %v5411
    %v5414 = vshrl.u32 %v4739, 16
    %v5416 = vrot.slane %v5414, 1
    %v5417 = vshll.u32 %v4739, 16
    %v5419 = vrot.slane %v5417, 2
    %v5420 = vor.u32 %v5416, %v5419
    %v5421 = vsel %vm4994, %v5411, %v5420
    %v5423 = vshrl.u32 %v4740, 16
    %v5425 = vrot.slane %v5423, 1
    %v5426 = vshll.u32 %v4740, 16
    %v5428 = vrot.slane %v5426, 2
    %v5429 = vor.u32 %v5425, %v5428
    %v5430 = vsel %vm4994, %v5420, %v5429
    %v5432 = vshrl.u32 %v4741, 16
    %v5434 = vrot.slane %v5432, 1
    %v5435 = vshll.u32 %v4741, 16
    %v5437 = vrot.slane %v5435, 2
    %v5438 = vor.u32 %v5434, %v5437
    %v5439 = vsel %vm4994, %v5429, %v5438
    %v5441 = vshrl.u32 %v4742, 16
    %v5443 = vrot.slane %v5441, 1
    %v5444 = vshll.u32 %v4742, 16
    %v5446 = vrot.slane %v5444, 2
    %v5447 = vor.u32 %v5443, %v5446
    %v5448 = vsel %vm4994, %v5438, %v5447
    %v5450 = vshrl.u32 %v4743, 16
    %v5452 = vrot.slane %v5450, 1
    %v5453 = vshll.u32 %v4743, 16
    %v5455 = vrot.slane %v5453, 2
    %v5456 = vor.u32 %v5452, %v5455
    %v5457 = vsel %vm4994, %v5447, %v5456
    %v5459 = vshrl.u32 %v5341, 16
    %v5461 = vrot.slane %v5459, 1
    %v5462 = vshll.u32 %v5341, 16
    %v5464 = vrot.slane %v5462, 2
    %v5465 = vor.u32 %v5461, %v5464
    %v5466 = vsel %vm4994, %v5456, %v5465
    %v5468 = vsel %vm934, %v5358, 0
    %v5471 = vsel %vm934, %v5367, 0
    %v5474 = vsel %vm934, %v5376, 0
    %v5477 = vsel %vm934, %v5385, 0
    %v5480 = vsel %vm934, %v5394, 0
    %v5483 = vsel %vm934, %v5403, 0
    %v5486 = vsel %vm934, %v5412, 0
    %v5489 = vsel %vm934, %v5421, 0
    %v5492 = vsel %vm934, %v5430, 0
    %v5495 = vsel %vm934, %v5439, 0
    %v5498 = vsel %vm934, %v5448, 0
    %v5501 = vsel %vm934, %v5457, 0
    %v5504 = vsel %vm934, %v5466, 0
    %v5507 = vsel %vm934, %v5465, 0
    %v5510 = vsel %vm977, %v5338, 0
    %5512 = vmatprep.subr.bf16.mxu0 0
    %5513 = vmatpush1.bf16.msra.mxu0 0
    %5514 = vmatprep.subr.bf16.mxu0 0
    %5515 = vmatpush1.bf16.msra.mxu0 0
    %5516 = vmatprep.subr.bf16.mxu0 0
    %5517 = vmatpush1.bf16.msra.mxu0 0
    %5518 = vmatprep.subr.bf16.mxu0 0
    %5519 = vmatpush1.bf16.msra.mxu0 0
    %5520 = vmatprep.subr.bf16.mxu0 0
    %5521 = vmatpush1.bf16.msra.mxu0 0
    %5522 = vmatprep.subr.bf16.mxu0 0
    %5523 = vmatpush1.bf16.msra.mxu0 0
    %5524 = vmatprep.subr.bf16.mxu0 0
    %5525 = vmatpush1.bf16.msra.mxu0 0
    %5526 = vmatprep.subr.bf16.mxu0 0
    %5527 = vmatpush1.bf16.msra.mxu0 %v5510
    %5528 = vmatprep.subr.bf16.mxu0 0
    %5529 = vmatpush2.bf16.msra.mxu0 0
    %5530 = vmatprep.subr.bf16.mxu0 0
    %5531 = vmatpush2.bf16.msra.mxu0 0
    %5532 = vmatprep.subr.bf16.mxu0 0
    %5533 = vmatpush2.bf16.msra.mxu0 0
    %5534 = vmatprep.subr.bf16.mxu0 0
    %5535 = vmatpush2.bf16.msra.mxu0 0
    %5536 = vmatprep.subr.bf16.mxu0 0
    %5537 = vmatpush2.bf16.msra.mxu0 0
    %5538 = vmatprep.subr.bf16.mxu0 0
    %5539 = vmatpush2.bf16.msra.mxu0 0
    %5540 = vmatprep.subr.bf16.mxu0 0
    %5541 = vmatpush2.bf16.msra.mxu0 0
    %5542 = vmatprep.subr.bf16.mxu0 0
    %5543 = vmatpush2.bf16.msra.mxu0 0
    %5544 = vmatprep.mubr.bf16.mxu0 0
    %5545 = vmatmul.mubr.bf16.gmra.mxu0 %v5468
    %v5546 = vpop.f32.mrf.mxu0
    %v5547 = vadd.f32 0.0, %v5546
    %v5548 = vpop.f32.mrf.mxu0
    %v5549 = vpop.f32.mrf.mxu0
    %v5550 = vadd.f32 0.0, %v5549
    %v5551 = vpop.f32.mrf.mxu0
    %5552 = vmatprep.mubr.bf16.mxu0 0
    %5553 = vmatmul.mubr.bf16.gmra.mxu0 %v5471
    %v5554 = vpop.f32.mrf.mxu0
    %v5555 = vadd.f32 0.0, %v5554
    %v5556 = vpop.f32.mrf.mxu0
    %v5557 = vpop.f32.mrf.mxu0
    %v5558 = vadd.f32 0.0, %v5557
    %v5559 = vpop.f32.mrf.mxu0
    %5560 = vmatprep.mubr.bf16.mxu0 0
    %5561 = vmatmul.mubr.bf16.gmra.mxu0 %v5474
    %v5562 = vpop.f32.mrf.mxu0
    %v5563 = vadd.f32 0.0, %v5562
    %v5564 = vpop.f32.mrf.mxu0
    %v5565 = vpop.f32.mrf.mxu0
    %v5566 = vadd.f32 0.0, %v5565
    %v5567 = vpop.f32.mrf.mxu0
    %5568 = vmatprep.mubr.bf16.mxu0 0
    %5569 = vmatmul.mubr.bf16.gmra.mxu0 %v5477
    %v5570 = vpop.f32.mrf.mxu0
    %v5571 = vadd.f32 0.0, %v5570
    %v5572 = vpop.f32.mrf.mxu0
    %v5573 = vpop.f32.mrf.mxu0
    %v5574 = vadd.f32 0.0, %v5573
    %v5575 = vpop.f32.mrf.mxu0
    %5576 = vmatprep.mubr.bf16.mxu0 0
    %5577 = vmatmul.mubr.bf16.gmra.mxu0 %v5480
    %v5578 = vpop.f32.mrf.mxu0
    %v5579 = vadd.f32 0.0, %v5578
    %v5580 = vpop.f32.mrf.mxu0
    %v5581 = vpop.f32.mrf.mxu0
    %v5582 = vadd.f32 0.0, %v5581
    %v5583 = vpop.f32.mrf.mxu0
    %5584 = vmatprep.mubr.bf16.mxu0 0
    %5585 = vmatmul.mubr.bf16.gmra.mxu0 %v5483
    %v5586 = vpop.f32.mrf.mxu0
    %v5587 = vadd.f32 0.0, %v5586
    %v5588 = vpop.f32.mrf.mxu0
    %v5589 = vpop.f32.mrf.mxu0
    %v5590 = vadd.f32 0.0, %v5589
    %v5591 = vpop.f32.mrf.mxu0
    %5592 = vmatprep.mubr.bf16.mxu0 0
    %5593 = vmatmul.mubr.bf16.gmra.mxu0 %v5486
    %v5594 = vpop.f32.mrf.mxu0
    %v5595 = vadd.f32 0.0, %v5594
    %v5596 = vpop.f32.mrf.mxu0
    %v5597 = vpop.f32.mrf.mxu0
    %v5598 = vadd.f32 0.0, %v5597
    %v5599 = vpop.f32.mrf.mxu0
    %5600 = vmatprep.mubr.bf16.mxu0 0
    %5601 = vmatmul.mubr.bf16.gmra.mxu0 %v5489
    %v5602 = vpop.f32.mrf.mxu0
    %v5603 = vadd.f32 0.0, %v5602
    %v5604 = vpop.f32.mrf.mxu0
    %v5605 = vpop.f32.mrf.mxu0
    %v5606 = vadd.f32 0.0, %v5605
    %v5607 = vpop.f32.mrf.mxu0
    %5608 = vmatprep.mubr.bf16.mxu0 0
    %5609 = vmatmul.mubr.bf16.gmra.mxu0 %v5492
    %v5610 = vpop.f32.mrf.mxu0
    %v5611 = vadd.f32 0.0, %v5610
    %v5612 = vpop.f32.mrf.mxu0
    %v5613 = vpop.f32.mrf.mxu0
    %v5614 = vadd.f32 0.0, %v5613
    %v5615 = vpop.f32.mrf.mxu0
    %5616 = vmatprep.mubr.bf16.mxu0 0
    %5617 = vmatmul.mubr.bf16.gmra.mxu0 %v5495
    %v5618 = vpop.f32.mrf.mxu0
    %v5619 = vadd.f32 0.0, %v5618
    %v5620 = vpop.f32.mrf.mxu0
    %v5621 = vpop.f32.mrf.mxu0
    %v5622 = vadd.f32 0.0, %v5621
    %v5623 = vpop.f32.mrf.mxu0
    %5624 = vmatprep.mubr.bf16.mxu0 0
    %5625 = vmatmul.mubr.bf16.gmra.mxu0 %v5498
    %v5626 = vpop.f32.mrf.mxu0
    %v5627 = vadd.f32 0.0, %v5626
    %v5628 = vpop.f32.mrf.mxu0
    %v5629 = vpop.f32.mrf.mxu0
    %v5630 = vadd.f32 0.0, %v5629
    %v5631 = vpop.f32.mrf.mxu0
    %5632 = vmatprep.mubr.bf16.mxu0 0
    %5633 = vmatmul.mubr.bf16.gmra.mxu0 %v5501
    %v5634 = vpop.f32.mrf.mxu0
    %v5635 = vadd.f32 0.0, %v5634
    %v5636 = vpop.f32.mrf.mxu0
    %v5637 = vpop.f32.mrf.mxu0
    %v5638 = vadd.f32 0.0, %v5637
    %v5639 = vpop.f32.mrf.mxu0
    %5640 = vmatprep.mubr.bf16.mxu0 0
    %5641 = vmatmul.mubr.bf16.gmra.mxu0 %v5504
    %v5642 = vpop.f32.mrf.mxu0
    %v5643 = vadd.f32 0.0, %v5642
    %v5644 = vpop.f32.mrf.mxu0
    %v5645 = vpop.f32.mrf.mxu0
    %v5646 = vadd.f32 0.0, %v5645
    %v5647 = vpop.f32.mrf.mxu0
    %5648 = vmatprep.mubr.bf16.mxu0 0
    %5649 = vmatmul.mubr.bf16.gmra.mxu0 %v5507
    %v5650 = vpop.f32.mrf.mxu0
    %v5651 = vadd.f32 0.0, %v5650
    %v5652 = vpop.f32.mrf.mxu0
    %v5653 = vpop.f32.mrf.mxu0
    %v5654 = vpop.f32.mrf.mxu0
    %5655 = vdwg.mxu0
    %v5656 = vadd.f32 %v5309, %v5547
    %v5657 = vadd.f32 %v5310, %v5550
    %v5658 = vadd.f32 %v5311, %v5555
    %v5659 = vadd.f32 %v5312, %v5558
    %v5660 = vadd.f32 %v5313, %v5563
    %v5661 = vadd.f32 %v5314, %v5566
    %v5662 = vadd.f32 %v5315, %v5571
    %v5663 = vadd.f32 %v5316, %v5574
    %v5664 = vadd.f32 %v5317, %v5579
    %v5665 = vadd.f32 %v5318, %v5582
    %v5666 = vadd.f32 %v5319, %v5587
    %v5667 = vadd.f32 %v5320, %v5590
    %v5668 = vadd.f32 %v5321, %v5595
    %v5669 = vadd.f32 %v5322, %v5598
    %v5670 = vadd.f32 %v5323, %v5603
    %v5671 = vadd.f32 %v5324, %v5606
    %v5672 = vadd.f32 %v5325, %v5611
    %v5673 = vadd.f32 %v5326, %v5614
    %v5674 = vadd.f32 %v5327, %v5619
    %v5675 = vadd.f32 %v5328, %v5622
    %v5676 = vadd.f32 %v5329, %v5627
    %v5677 = vadd.f32 %v5330, %v5630
    %v5678 = vadd.f32 %v5331, %v5635
    %v5679 = vadd.f32 %v5332, %v5638
    %v5680 = vadd.f32 %v5333, %v5643
    %v5681 = vadd.f32 %v5334, %v5646
    %v5682 = vadd.f32 %v5335, %v5651
    %v5683 = vld [vmem:[#allocation2 + $0x4] sm:$0xc]
    %s5684 = scalar_lea.vmem %s2, 56
    %v5685 = vld [vmem:[%s5684] sm:$0xf]
    %v5687 = vunpack.c.l.b16 %v5683
    %v5688 = vpack.c.b16 %v4361, %v5687
    %vm5689 = vcmask 1045504
    %v5690 = vrot.slane %v5688, 2
    %v5691 = vrot.slane %v4389, 2
    %v5692 = vsel %vm5689, %v5690, %v5691
    %v5693 = vrot.slane %v4390, 2
    %v5694 = vsel %vm5689, %v5691, %v5693
    %v5695 = vrot.slane %v4391, 2
    %v5696 = vsel %vm5689, %v5693, %v5695
    %v5697 = vrot.slane %v4392, 2
    %v5698 = vsel %vm5689, %v5695, %v5697
    %v5699 = vrot.slane %v4393, 2
    %v5700 = vsel %vm5689, %v5697, %v5699
    %v5701 = vrot.slane %v4394, 2
    %v5702 = vsel %vm5689, %v5699, %v5701
    %v5703 = vrot.slane %v4395, 2
    %v5704 = vsel %vm5689, %v5701, %v5703
    %v5705 = vrot.slane %v4396, 2
    %v5706 = vsel %vm5689, %v5703, %v5705
    %v5707 = vrot.slane %v4397, 2
    %v5708 = vsel %vm5689, %v5705, %v5707
    %v5709 = vrot.slane %v4398, 2
    %v5710 = vsel %vm5689, %v5707, %v5709
    %v5711 = vrot.slane %v4399, 2
    %v5712 = vsel %vm5689, %v5709, %v5711
    %v5713 = vrot.slane %v4400, 2
    %v5714 = vsel %vm5689, %v5711, %v5713
    %v5715 = vrot.slane %v4993, 2
    %v5716 = vsel %vm5689, %v5713, %v5715
    %v5718 = vsel %vm934, %v5692, 0
    %v5721 = vsel %vm934, %v5694, 0
    %v5724 = vsel %vm934, %v5696, 0
    %v5727 = vsel %vm934, %v5698, 0
    %v5730 = vsel %vm934, %v5700, 0
    %v5733 = vsel %vm934, %v5702, 0
    %v5736 = vsel %vm934, %v5704, 0
    %v5739 = vsel %vm934, %v5706, 0
    %v5742 = vsel %vm934, %v5708, 0
    %v5745 = vsel %vm934, %v5710, 0
    %v5748 = vsel %vm934, %v5712, 0
    %v5751 = vsel %vm934, %v5714, 0
    %v5754 = vsel %vm934, %v5716, 0
    %v5757 = vsel %vm934, %v5715, 0
    %v5760 = vsel %vm977, %v5685, 0
    %5762 = vmatprep.subr.bf16.mxu0 0
    %5763 = vmatpush1.bf16.msra.mxu0 0
    %5764 = vmatprep.subr.bf16.mxu0 0
    %5765 = vmatpush1.bf16.msra.mxu0 0
    %5766 = vmatprep.subr.bf16.mxu0 0
    %5767 = vmatpush1.bf16.msra.mxu0 0
    %5768 = vmatprep.subr.bf16.mxu0 0
    %5769 = vmatpush1.bf16.msra.mxu0 0
    %5770 = vmatprep.subr.bf16.mxu0 0
    %5771 = vmatpush1.bf16.msra.mxu0 0
    %5772 = vmatprep.subr.bf16.mxu0 0
    %5773 = vmatpush1.bf16.msra.mxu0 0
    %5774 = vmatprep.subr.bf16.mxu0 0
    %5775 = vmatpush1.bf16.msra.mxu0 0
    %5776 = vmatprep.subr.bf16.mxu0 0
    %5777 = vmatpush1.bf16.msra.mxu0 %v5760
    %5778 = vmatprep.subr.bf16.mxu0 0
    %5779 = vmatpush2.bf16.msra.mxu0 0
    %5780 = vmatprep.subr.bf16.mxu0 0
    %5781 = vmatpush2.bf16.msra.mxu0 0
    %5782 = vmatprep.subr.bf16.mxu0 0
    %5783 = vmatpush2.bf16.msra.mxu0 0
    %5784 = vmatprep.subr.bf16.mxu0 0
    %5785 = vmatpush2.bf16.msra.mxu0 0
    %5786 = vmatprep.subr.bf16.mxu0 0
    %5787 = vmatpush2.bf16.msra.mxu0 0
    %5788 = vmatprep.subr.bf16.mxu0 0
    %5789 = vmatpush2.bf16.msra.mxu0 0
    %5790 = vmatprep.subr.bf16.mxu0 0
    %5791 = vmatpush2.bf16.msra.mxu0 0
    %5792 = vmatprep.subr.bf16.mxu0 0
    %5793 = vmatpush2.bf16.msra.mxu0 0
    %5794 = vmatprep.mubr.bf16.mxu0 0
    %5795 = vmatmul.mubr.bf16.gmra.mxu0 %v5718
    %v5796 = vpop.f32.mrf.mxu0
    %v5797 = vadd.f32 0.0, %v5796
    %v5798 = vpop.f32.mrf.mxu0
    %v5799 = vpop.f32.mrf.mxu0
    %v5800 = vadd.f32 0.0, %v5799
    %v5801 = vpop.f32.mrf.mxu0
    %5802 = vmatprep.mubr.bf16.mxu0 0
    %5803 = vmatmul.mubr.bf16.gmra.mxu0 %v5721
    %v5804 = vpop.f32.mrf.mxu0
    %v5805 = vadd.f32 0.0, %v5804
    %v5806 = vpop.f32.mrf.mxu0
    %v5807 = vpop.f32.mrf.mxu0
    %v5808 = vadd.f32 0.0, %v5807
    %v5809 = vpop.f32.mrf.mxu0
    %5810 = vmatprep.mubr.bf16.mxu0 0
    %5811 = vmatmul.mubr.bf16.gmra.mxu0 %v5724
    %v5812 = vpop.f32.mrf.mxu0
    %v5813 = vadd.f32 0.0, %v5812
    %v5814 = vpop.f32.mrf.mxu0
    %v5815 = vpop.f32.mrf.mxu0
    %v5816 = vadd.f32 0.0, %v5815
    %v5817 = vpop.f32.mrf.mxu0
    %5818 = vmatprep.mubr.bf16.mxu0 0
    %5819 = vmatmul.mubr.bf16.gmra.mxu0 %v5727
    %v5820 = vpop.f32.mrf.mxu0
    %v5821 = vadd.f32 0.0, %v5820
    %v5822 = vpop.f32.mrf.mxu0
    %v5823 = vpop.f32.mrf.mxu0
    %v5824 = vadd.f32 0.0, %v5823
    %v5825 = vpop.f32.mrf.mxu0
    %5826 = vmatprep.mubr.bf16.mxu0 0
    %5827 = vmatmul.mubr.bf16.gmra.mxu0 %v5730
    %v5828 = vpop.f32.mrf.mxu0
    %v5829 = vadd.f32 0.0, %v5828
    %v5830 = vpop.f32.mrf.mxu0
    %v5831 = vpop.f32.mrf.mxu0
    %v5832 = vadd.f32 0.0, %v5831
    %v5833 = vpop.f32.mrf.mxu0
    %5834 = vmatprep.mubr.bf16.mxu0 0
    %5835 = vmatmul.mubr.bf16.gmra.mxu0 %v5733
    %v5836 = vpop.f32.mrf.mxu0
    %v5837 = vadd.f32 0.0, %v5836
    %v5838 = vpop.f32.mrf.mxu0
    %v5839 = vpop.f32.mrf.mxu0
    %v5840 = vadd.f32 0.0, %v5839
    %v5841 = vpop.f32.mrf.mxu0
    %5842 = vmatprep.mubr.bf16.mxu0 0
    %5843 = vmatmul.mubr.bf16.gmra.mxu0 %v5736
    %v5844 = vpop.f32.mrf.mxu0
    %v5845 = vadd.f32 0.0, %v5844
    %v5846 = vpop.f32.mrf.mxu0
    %v5847 = vpop.f32.mrf.mxu0
    %v5848 = vadd.f32 0.0, %v5847
    %v5849 = vpop.f32.mrf.mxu0
    %5850 = vmatprep.mubr.bf16.mxu0 0
    %5851 = vmatmul.mubr.bf16.gmra.mxu0 %v5739
    %v5852 = vpop.f32.mrf.mxu0
    %v5853 = vadd.f32 0.0, %v5852
    %v5854 = vpop.f32.mrf.mxu0
    %v5855 = vpop.f32.mrf.mxu0
    %v5856 = vadd.f32 0.0, %v5855
    %v5857 = vpop.f32.mrf.mxu0
    %5858 = vmatprep.mubr.bf16.mxu0 0
    %5859 = vmatmul.mubr.bf16.gmra.mxu0 %v5742
    %v5860 = vpop.f32.mrf.mxu0
    %v5861 = vadd.f32 0.0, %v5860
    %v5862 = vpop.f32.mrf.mxu0
    %v5863 = vpop.f32.mrf.mxu0
    %v5864 = vadd.f32 0.0, %v5863
    %v5865 = vpop.f32.mrf.mxu0
    %5866 = vmatprep.mubr.bf16.mxu0 0
    %5867 = vmatmul.mubr.bf16.gmra.mxu0 %v5745
    %v5868 = vpop.f32.mrf.mxu0
    %v5869 = vadd.f32 0.0, %v5868
    %v5870 = vpop.f32.mrf.mxu0
    %v5871 = vpop.f32.mrf.mxu0
    %v5872 = vadd.f32 0.0, %v5871
    %v5873 = vpop.f32.mrf.mxu0
    %5874 = vmatprep.mubr.bf16.mxu0 0
    %5875 = vmatmul.mubr.bf16.gmra.mxu0 %v5748
    %v5876 = vpop.f32.mrf.mxu0
    %v5877 = vadd.f32 0.0, %v5876
    %v5878 = vpop.f32.mrf.mxu0
    %v5879 = vpop.f32.mrf.mxu0
    %v5880 = vadd.f32 0.0, %v5879
    %v5881 = vpop.f32.mrf.mxu0
    %5882 = vmatprep.mubr.bf16.mxu0 0
    %5883 = vmatmul.mubr.bf16.gmra.mxu0 %v5751
    %v5884 = vpop.f32.mrf.mxu0
    %v5885 = vadd.f32 0.0, %v5884
    %v5886 = vpop.f32.mrf.mxu0
    %v5887 = vpop.f32.mrf.mxu0
    %v5888 = vadd.f32 0.0, %v5887
    %v5889 = vpop.f32.mrf.mxu0
    %5890 = vmatprep.mubr.bf16.mxu0 0
    %5891 = vmatmul.mubr.bf16.gmra.mxu0 %v5754
    %v5892 = vpop.f32.mrf.mxu0
    %v5893 = vadd.f32 0.0, %v5892
    %v5894 = vpop.f32.mrf.mxu0
    %v5895 = vpop.f32.mrf.mxu0
    %v5896 = vadd.f32 0.0, %v5895
    %v5897 = vpop.f32.mrf.mxu0
    %5898 = vmatprep.mubr.bf16.mxu0 0
    %5899 = vmatmul.mubr.bf16.gmra.mxu0 %v5757
    %v5900 = vpop.f32.mrf.mxu0
    %v5901 = vadd.f32 0.0, %v5900
    %v5902 = vpop.f32.mrf.mxu0
    %v5903 = vpop.f32.mrf.mxu0
    %v5904 = vpop.f32.mrf.mxu0
    %5905 = vdwg.mxu0
    %v5906 = vadd.f32 %v5656, %v5797
    %v5907 = vadd.f32 %v5657, %v5800
    %v5908 = vadd.f32 %v5658, %v5805
    %v5909 = vadd.f32 %v5659, %v5808
    %v5910 = vadd.f32 %v5660, %v5813
    %v5911 = vadd.f32 %v5661, %v5816
    %v5912 = vadd.f32 %v5662, %v5821
    %v5913 = vadd.f32 %v5663, %v5824
    %v5914 = vadd.f32 %v5664, %v5829
    %v5915 = vadd.f32 %v5665, %v5832
    %v5916 = vadd.f32 %v5666, %v5837
    %v5917 = vadd.f32 %v5667, %v5840
    %v5918 = vadd.f32 %v5668, %v5845
    %v5919 = vadd.f32 %v5669, %v5848
    %v5920 = vadd.f32 %v5670, %v5853
    %v5921 = vadd.f32 %v5671, %v5856
    %v5922 = vadd.f32 %v5672, %v5861
    %v5923 = vadd.f32 %v5673, %v5864
    %v5924 = vadd.f32 %v5674, %v5869
    %v5925 = vadd.f32 %v5675, %v5872
    %v5926 = vadd.f32 %v5676, %v5877
    %v5927 = vadd.f32 %v5677, %v5880
    %v5928 = vadd.f32 %v5678, %v5885
    %v5929 = vadd.f32 %v5679, %v5888
    %v5930 = vadd.f32 %v5680, %v5893
    %v5931 = vadd.f32 %v5681, %v5896
    %v5932 = vadd.f32 %v5682, %v5901
    %v5933 = vld [vmem:[%s2571 + $0x4] sm:$0xe]
    %v5934 = vld [vmem:[%s2571 + $0x8] sm:$0xf]
    %v5935 = vld [vmem:[%s2571 + $0xc] sm:$0xf]
    %v5936 = vld [vmem:[%s2571 + $0x10] sm:$0xf]
    %v5937 = vld [vmem:[%s2571 + $0x14] sm:$0xf]
    %v5938 = vld [vmem:[%s2571 + $0x18] sm:$0xf]
    %v5939 = vld [vmem:[%s2571 + $0x1c] sm:$0xf]
    %v5940 = vld [vmem:[%s2571 + $0x20] sm:$0xf]
    %v5941 = vld [vmem:[%s2571 + $0x24] sm:$0xf]
    %v5942 = vld [vmem:[%s2571 + $0x28] sm:$0xf]
    %v5943 = vld [vmem:[%s2571 + $0x2c] sm:$0xf]
    %v5944 = vld [vmem:[%s2571 + $0x30] sm:$0xf]
    %v5945 = vld [vmem:[%s2571 + $0x34] sm:$0xf]
    %v5946 = vld [vmem:[%s2571 + $0x38] sm:$0xf]
    %v5947 = vld [vmem:[%s2571 + $0x3c] sm:$0xf]
    %v5948 = vld [vmem:[%s2571 + $0x40] sm:$0xf]
    %v5949 = vld [vmem:[%s2571 + $0x44] sm:$0xf]
    %v5950 = vld [vmem:[%s2571 + $0x48] sm:$0xf]
    %v5951 = vld [vmem:[%s2571 + $0x4c] sm:$0xf]
    %v5952 = vld [vmem:[%s2571 + $0x50] sm:$0xf]
    %v5953 = vld [vmem:[%s2571 + $0x54] sm:$0xf]
    %v5954 = vld [vmem:[%s2571 + $0x58] sm:$0xf]
    %v5955 = vld [vmem:[%s2571 + $0x5c] sm:$0xf]
    %v5956 = vld [vmem:[%s2571 + $0x60] sm:$0xf]
    %v5957 = vld [vmem:[%s2571 + $0x64] sm:$0xf]
    %v5958 = vld [vmem:[%s2571 + $0x68] sm:$0xf]
    %v5959 = vld [vmem:[%s2571 + $0x6c] sm:$0xf]
    %v5960 = vld [vmem:[%s2571 + $0x70] sm:$0x1]
    %s5961 = scalar_lea.vmem %s2, 60
    %v5962 = vld [vmem:[%s5961] sm:$0xf]
    %v5991 = vunpack.c.l.b16 %v5933
    %v5992 = vunpack.c.l.b16 %v5934
    %v5993 = vunpack.c.l.b16 %v5935
    %v5994 = vunpack.c.l.b16 %v5936
    %v5995 = vunpack.c.l.b16 %v5937
    %v5996 = vunpack.c.l.b16 %v5938
    %v5997 = vunpack.c.l.b16 %v5939
    %v5998 = vunpack.c.l.b16 %v5940
    %v5999 = vunpack.c.l.b16 %v5941
    %v6000 = vunpack.c.l.b16 %v5942
    %v6001 = vunpack.c.l.b16 %v5943
    %v6002 = vunpack.c.l.b16 %v5944
    %v6003 = vunpack.c.l.b16 %v5945
    %v6004 = vunpack.c.l.b16 %v5946
    %v6005 = vunpack.c.l.b16 %v5947
    %v6006 = vunpack.c.l.b16 %v5948
    %v6007 = vunpack.c.l.b16 %v5949
    %v6008 = vunpack.c.l.b16 %v5950
    %v6009 = vunpack.c.l.b16 %v5951
    %v6010 = vunpack.c.l.b16 %v5952
    %v6011 = vunpack.c.l.b16 %v5953
    %v6012 = vunpack.c.l.b16 %v5954
    %v6013 = vunpack.c.l.b16 %v5955
    %v6014 = vunpack.c.l.b16 %v5956
    %v6015 = vunpack.c.l.b16 %v5957
    %v6016 = vunpack.c.l.b16 %v5958
    %v6017 = vunpack.c.l.b16 %v5959
    %v6018 = vunpack.c.l.b16 %v5960
    %v6019 = vpack.c.b16 %v5992, %v5991
    %v6020 = vpack.c.b16 %v5994, %v5993
    %v6021 = vpack.c.b16 %v5996, %v5995
    %v6022 = vpack.c.b16 %v5998, %v5997
    %v6023 = vpack.c.b16 %v6000, %v5999
    %v6024 = vpack.c.b16 %v6002, %v6001
    %v6025 = vpack.c.b16 %v6004, %v6003
    %v6026 = vpack.c.b16 %v6006, %v6005
    %v6027 = vpack.c.b16 %v6008, %v6007
    %v6028 = vpack.c.b16 %v6010, %v6009
    %v6029 = vpack.c.b16 %v6012, %v6011
    %v6030 = vpack.c.b16 %v6014, %v6013
    %v6031 = vpack.c.b16 %v6016, %v6015
    %v6032 = vpack.c.b16 %v6018, %v6017
    %v6033 = vrot.slane %v6019, 1
    %v6034 = vrot.slane %v6020, 1
    %v6035 = vsel %vm2327, %v6033, %v6034
    %v6036 = vrot.slane %v6021, 1
    %v6037 = vsel %vm2327, %v6034, %v6036
    %v6038 = vrot.slane %v6022, 1
    %v6039 = vsel %vm2327, %v6036, %v6038
    %v6040 = vrot.slane %v6023, 1
    %v6041 = vsel %vm2327, %v6038, %v6040
    %v6042 = vrot.slane %v6024, 1
    %v6043 = vsel %vm2327, %v6040, %v6042
    %v6044 = vrot.slane %v6025, 1
    %v6045 = vsel %vm2327, %v6042, %v6044
    %v6046 = vrot.slane %v6026, 1
    %v6047 = vsel %vm2327, %v6044, %v6046
    %v6048 = vrot.slane %v6027, 1
    %v6049 = vsel %vm2327, %v6046, %v6048
    %v6050 = vrot.slane %v6028, 1
    %v6051 = vsel %vm2327, %v6048, %v6050
    %v6052 = vrot.slane %v6029, 1
    %v6053 = vsel %vm2327, %v6050, %v6052
    %v6054 = vrot.slane %v6030, 1
    %v6055 = vsel %vm2327, %v6052, %v6054
    %v6056 = vrot.slane %v6031, 1
    %v6057 = vsel %vm2327, %v6054, %v6056
    %v6058 = vrot.slane %v6032, 1
    %v6059 = vsel %vm2327, %v6056, %v6058
    %v6061 = vsel %vm934, %v6035, 0
    %v6064 = vsel %vm934, %v6037, 0
    %v6067 = vsel %vm934, %v6039, 0
    %v6070 = vsel %vm934, %v6041, 0
    %v6073 = vsel %vm934, %v6043, 0
    %v6076 = vsel %vm934, %v6045, 0
    %v6079 = vsel %vm934, %v6047, 0
    %v6082 = vsel %vm934, %v6049, 0
    %v6085 = vsel %vm934, %v6051, 0
    %v6088 = vsel %vm934, %v6053, 0
    %v6091 = vsel %vm934, %v6055, 0
    %v6094 = vsel %vm934, %v6057, 0
    %v6097 = vsel %vm934, %v6059, 0
    %v6100 = vsel %vm934, %v6058, 0
    %v6103 = vsel %vm977, %v5962, 0
    %6105 = vmatprep.subr.bf16.mxu0 0
    %6106 = vmatpush1.bf16.msra.mxu0 0
    %6107 = vmatprep.subr.bf16.mxu0 0
    %6108 = vmatpush1.bf16.msra.mxu0 0
    %6109 = vmatprep.subr.bf16.mxu0 0
    %6110 = vmatpush1.bf16.msra.mxu0 0
    %6111 = vmatprep.subr.bf16.mxu0 0
    %6112 = vmatpush1.bf16.msra.mxu0 0
    %6113 = vmatprep.subr.bf16.mxu0 0
    %6114 = vmatpush1.bf16.msra.mxu0 0
    %6115 = vmatprep.subr.bf16.mxu0 0
    %6116 = vmatpush1.bf16.msra.mxu0 0
    %6117 = vmatprep.subr.bf16.mxu0 0
    %6118 = vmatpush1.bf16.msra.mxu0 0
    %6119 = vmatprep.subr.bf16.mxu0 0
    %6120 = vmatpush1.bf16.msra.mxu0 %v6103
    %6121 = vmatprep.subr.bf16.mxu0 0
    %6122 = vmatpush2.bf16.msra.mxu0 0
    %6123 = vmatprep.subr.bf16.mxu0 0
    %6124 = vmatpush2.bf16.msra.mxu0 0
    %6125 = vmatprep.subr.bf16.mxu0 0
    %6126 = vmatpush2.bf16.msra.mxu0 0
    %6127 = vmatprep.subr.bf16.mxu0 0
    %6128 = vmatpush2.bf16.msra.mxu0 0
    %6129 = vmatprep.subr.bf16.mxu0 0
    %6130 = vmatpush2.bf16.msra.mxu0 0
    %6131 = vmatprep.subr.bf16.mxu0 0
    %6132 = vmatpush2.bf16.msra.mxu0 0
    %6133 = vmatprep.subr.bf16.mxu0 0
    %6134 = vmatpush2.bf16.msra.mxu0 0
    %6135 = vmatprep.subr.bf16.mxu0 0
    %6136 = vmatpush2.bf16.msra.mxu0 0
    %6137 = vmatprep.mubr.bf16.mxu0 0
    %6138 = vmatmul.mubr.bf16.gmra.mxu0 %v6061
    %v6139 = vpop.f32.mrf.mxu0
    %v6140 = vadd.f32 0.0, %v6139
    %v6141 = vpop.f32.mrf.mxu0
    %v6142 = vpop.f32.mrf.mxu0
    %v6143 = vadd.f32 0.0, %v6142
    %v6144 = vpop.f32.mrf.mxu0
    %6145 = vmatprep.mubr.bf16.mxu0 0
    %6146 = vmatmul.mubr.bf16.gmra.mxu0 %v6064
    %v6147 = vpop.f32.mrf.mxu0
    %v6148 = vadd.f32 0.0, %v6147
    %v6149 = vpop.f32.mrf.mxu0
    %v6150 = vpop.f32.mrf.mxu0
    %v6151 = vadd.f32 0.0, %v6150
    %v6152 = vpop.f32.mrf.mxu0
    %6153 = vmatprep.mubr.bf16.mxu0 0
    %6154 = vmatmul.mubr.bf16.gmra.mxu0 %v6067
    %v6155 = vpop.f32.mrf.mxu0
    %v6156 = vadd.f32 0.0, %v6155
    %v6157 = vpop.f32.mrf.mxu0
    %v6158 = vpop.f32.mrf.mxu0
    %v6159 = vadd.f32 0.0, %v6158
    %v6160 = vpop.f32.mrf.mxu0
    %6161 = vmatprep.mubr.bf16.mxu0 0
    %6162 = vmatmul.mubr.bf16.gmra.mxu0 %v6070
    %v6163 = vpop.f32.mrf.mxu0
    %v6164 = vadd.f32 0.0, %v6163
    %v6165 = vpop.f32.mrf.mxu0
    %v6166 = vpop.f32.mrf.mxu0
    %v6167 = vadd.f32 0.0, %v6166
    %v6168 = vpop.f32.mrf.mxu0
    %6169 = vmatprep.mubr.bf16.mxu0 0
    %6170 = vmatmul.mubr.bf16.gmra.mxu0 %v6073
    %v6171 = vpop.f32.mrf.mxu0
    %v6172 = vadd.f32 0.0, %v6171
    %v6173 = vpop.f32.mrf.mxu0
    %v6174 = vpop.f32.mrf.mxu0
    %v6175 = vadd.f32 0.0, %v6174
    %v6176 = vpop.f32.mrf.mxu0
    %6177 = vmatprep.mubr.bf16.mxu0 0
    %6178 = vmatmul.mubr.bf16.gmra.mxu0 %v6076
    %v6179 = vpop.f32.mrf.mxu0
    %v6180 = vadd.f32 0.0, %v6179
    %v6181 = vpop.f32.mrf.mxu0
    %v6182 = vpop.f32.mrf.mxu0
    %v6183 = vadd.f32 0.0, %v6182
    %v6184 = vpop.f32.mrf.mxu0
    %6185 = vmatprep.mubr.bf16.mxu0 0
    %6186 = vmatmul.mubr.bf16.gmra.mxu0 %v6079
    %v6187 = vpop.f32.mrf.mxu0
    %v6188 = vadd.f32 0.0, %v6187
    %v6189 = vpop.f32.mrf.mxu0
    %v6190 = vpop.f32.mrf.mxu0
    %v6191 = vadd.f32 0.0, %v6190
    %v6192 = vpop.f32.mrf.mxu0
    %6193 = vmatprep.mubr.bf16.mxu0 0
    %6194 = vmatmul.mubr.bf16.gmra.mxu0 %v6082
    %v6195 = vpop.f32.mrf.mxu0
    %v6196 = vadd.f32 0.0, %v6195
    %v6197 = vpop.f32.mrf.mxu0
    %v6198 = vpop.f32.mrf.mxu0
    %v6199 = vadd.f32 0.0, %v6198
    %v6200 = vpop.f32.mrf.mxu0
    %6201 = vmatprep.mubr.bf16.mxu0 0
    %6202 = vmatmul.mubr.bf16.gmra.mxu0 %v6085
    %v6203 = vpop.f32.mrf.mxu0
    %v6204 = vadd.f32 0.0, %v6203
    %v6205 = vpop.f32.mrf.mxu0
    %v6206 = vpop.f32.mrf.mxu0
    %v6207 = vadd.f32 0.0, %v6206
    %v6208 = vpop.f32.mrf.mxu0
    %6209 = vmatprep.mubr.bf16.mxu0 0
    %6210 = vmatmul.mubr.bf16.gmra.mxu0 %v6088
    %v6211 = vpop.f32.mrf.mxu0
    %v6212 = vadd.f32 0.0, %v6211
    %v6213 = vpop.f32.mrf.mxu0
    %v6214 = vpop.f32.mrf.mxu0
    %v6215 = vadd.f32 0.0, %v6214
    %v6216 = vpop.f32.mrf.mxu0
    %6217 = vmatprep.mubr.bf16.mxu0 0
    %6218 = vmatmul.mubr.bf16.gmra.mxu0 %v6091
    %v6219 = vpop.f32.mrf.mxu0
    %v6220 = vadd.f32 0.0, %v6219
    %v6221 = vpop.f32.mrf.mxu0
    %v6222 = vpop.f32.mrf.mxu0
    %v6223 = vadd.f32 0.0, %v6222
    %v6224 = vpop.f32.mrf.mxu0
    %6225 = vmatprep.mubr.bf16.mxu0 0
    %6226 = vmatmul.mubr.bf16.gmra.mxu0 %v6094
    %v6227 = vpop.f32.mrf.mxu0
    %v6228 = vadd.f32 0.0, %v6227
    %v6229 = vpop.f32.mrf.mxu0
    %v6230 = vpop.f32.mrf.mxu0
    %v6231 = vadd.f32 0.0, %v6230
    %v6232 = vpop.f32.mrf.mxu0
    %6233 = vmatprep.mubr.bf16.mxu0 0
    %6234 = vmatmul.mubr.bf16.gmra.mxu0 %v6097
    %v6235 = vpop.f32.mrf.mxu0
    %v6236 = vadd.f32 0.0, %v6235
    %v6237 = vpop.f32.mrf.mxu0
    %v6238 = vpop.f32.mrf.mxu0
    %v6239 = vadd.f32 0.0, %v6238
    %v6240 = vpop.f32.mrf.mxu0
    %6241 = vmatprep.mubr.bf16.mxu0 0
    %6242 = vmatmul.mubr.bf16.gmra.mxu0 %v6100
    %v6243 = vpop.f32.mrf.mxu0
    %v6244 = vadd.f32 0.0, %v6243
    %v6245 = vpop.f32.mrf.mxu0
    %v6246 = vpop.f32.mrf.mxu0
    %v6247 = vpop.f32.mrf.mxu0
    %6248 = vdwg.mxu0
    %v6249 = vadd.f32 %v5906, %v6140
    %v6250 = vadd.f32 %v5907, %v6143
    %v6251 = vadd.f32 %v5908, %v6148
    %v6252 = vadd.f32 %v5909, %v6151
    %v6253 = vadd.f32 %v5910, %v6156
    %v6254 = vadd.f32 %v5911, %v6159
    %v6255 = vadd.f32 %v5912, %v6164
    %v6256 = vadd.f32 %v5913, %v6167
    %v6257 = vadd.f32 %v5914, %v6172
    %v6258 = vadd.f32 %v5915, %v6175
    %v6259 = vadd.f32 %v5916, %v6180
    %v6260 = vadd.f32 %v5917, %v6183
    %v6261 = vadd.f32 %v5918, %v6188
    %v6262 = vadd.f32 %v5919, %v6191
    %v6263 = vadd.f32 %v5920, %v6196
    %v6264 = vadd.f32 %v5921, %v6199
    %v6265 = vadd.f32 %v5922, %v6204
    %v6266 = vadd.f32 %v5923, %v6207
    %v6267 = vadd.f32 %v5924, %v6212
    %v6268 = vadd.f32 %v5925, %v6215
    %v6269 = vadd.f32 %v5926, %v6220
    %v6270 = vadd.f32 %v5927, %v6223
    %v6271 = vadd.f32 %v5928, %v6228
    %v6272 = vadd.f32 %v5929, %v6231
    %v6273 = vadd.f32 %v5930, %v6236
    %v6274 = vadd.f32 %v5931, %v6239
    %v6275 = vadd.f32 %v5932, %v6244
    %v6276 = vld [vmem:[%s2885 + $0x4] sm:$0xe]
    %v6277 = vld [vmem:[%s2885 + $0x8] sm:$0xf]
    %v6278 = vld [vmem:[%s2885 + $0xc] sm:$0xf]
    %v6279 = vld [vmem:[%s2885 + $0x10] sm:$0xf]
    %v6280 = vld [vmem:[%s2885 + $0x14] sm:$0xf]
    %v6281 = vld [vmem:[%s2885 + $0x18] sm:$0xf]
    %v6282 = vld [vmem:[%s2885 + $0x1c] sm:$0xf]
    %v6283 = vld [vmem:[%s2885 + $0x20] sm:$0xf]
    %v6284 = vld [vmem:[%s2885 + $0x24] sm:$0xf]
    %v6285 = vld [vmem:[%s2885 + $0x28] sm:$0xf]
    %v6286 = vld [vmem:[%s2885 + $0x2c] sm:$0xf]
    %v6287 = vld [vmem:[%s2885 + $0x30] sm:$0xf]
    %v6288 = vld [vmem:[%s2885 + $0x34] sm:$0xf]
    %v6289 = vld [vmem:[%s2885 + $0x38] sm:$0xf]
    %v6290 = vld [vmem:[%s2885 + $0x3c] sm:$0xf]
    %v6291 = vld [vmem:[%s2885 + $0x40] sm:$0xf]
    %v6292 = vld [vmem:[%s2885 + $0x44] sm:$0xf]
    %v6293 = vld [vmem:[%s2885 + $0x48] sm:$0xf]
    %v6294 = vld [vmem:[%s2885 + $0x4c] sm:$0xf]
    %v6295 = vld [vmem:[%s2885 + $0x50] sm:$0xf]
    %v6296 = vld [vmem:[%s2885 + $0x54] sm:$0xf]
    %v6297 = vld [vmem:[%s2885 + $0x58] sm:$0xf]
    %v6298 = vld [vmem:[%s2885 + $0x5c] sm:$0xf]
    %v6299 = vld [vmem:[%s2885 + $0x60] sm:$0xf]
    %v6300 = vld [vmem:[%s2885 + $0x64] sm:$0xf]
    %v6301 = vld [vmem:[%s2885 + $0x68] sm:$0xf]
    %v6302 = vld [vmem:[%s2885 + $0x6c] sm:$0xf]
    %v6303 = vld [vmem:[%s2885 + $0x70] sm:$0x1]
    %s6304 = scalar_lea.vmem %s2, 64
    %v6305 = vld [vmem:[%s6304] sm:$0xf]
    %v6334 = vunpack.c.l.b16 %v6276
    %v6335 = vunpack.c.l.b16 %v6277
    %v6336 = vunpack.c.l.b16 %v6278
    %v6337 = vunpack.c.l.b16 %v6279
    %v6338 = vunpack.c.l.b16 %v6280
    %v6339 = vunpack.c.l.b16 %v6281
    %v6340 = vunpack.c.l.b16 %v6282
    %v6341 = vunpack.c.l.b16 %v6283
    %v6342 = vunpack.c.l.b16 %v6284
    %v6343 = vunpack.c.l.b16 %v6285
    %v6344 = vunpack.c.l.b16 %v6286
    %v6345 = vunpack.c.l.b16 %v6287
    %v6346 = vunpack.c.l.b16 %v6288
    %v6347 = vunpack.c.l.b16 %v6289
    %v6348 = vunpack.c.l.b16 %v6290
    %v6349 = vunpack.c.l.b16 %v6291
    %v6350 = vunpack.c.l.b16 %v6292
    %v6351 = vunpack.c.l.b16 %v6293
    %v6352 = vunpack.c.l.b16 %v6294
    %v6353 = vunpack.c.l.b16 %v6295
    %v6354 = vunpack.c.l.b16 %v6296
    %v6355 = vunpack.c.l.b16 %v6297
    %v6356 = vunpack.c.l.b16 %v6298
    %v6357 = vunpack.c.l.b16 %v6299
    %v6358 = vunpack.c.l.b16 %v6300
    %v6359 = vunpack.c.l.b16 %v6301
    %v6360 = vunpack.c.l.b16 %v6302
    %v6361 = vunpack.c.l.b16 %v6303
    %v6362 = vpack.c.b16 %v6335, %v6334
    %v6363 = vpack.c.b16 %v6337, %v6336
    %v6364 = vpack.c.b16 %v6339, %v6338
    %v6365 = vpack.c.b16 %v6341, %v6340
    %v6366 = vpack.c.b16 %v6343, %v6342
    %v6367 = vpack.c.b16 %v6345, %v6344
    %v6368 = vpack.c.b16 %v6347, %v6346
    %v6369 = vpack.c.b16 %v6349, %v6348
    %v6370 = vpack.c.b16 %v6351, %v6350
    %v6371 = vpack.c.b16 %v6353, %v6352
    %v6372 = vpack.c.b16 %v6355, %v6354
    %v6373 = vpack.c.b16 %v6357, %v6356
    %v6374 = vpack.c.b16 %v6359, %v6358
    %v6375 = vpack.c.b16 %v6361, %v6360
    %v6376 = vrot.slane %v6362, 1
    %v6377 = vrot.slane %v6363, 1
    %v6378 = vsel %vm2327, %v6376, %v6377
    %v6379 = vrot.slane %v6364, 1
    %v6380 = vsel %vm2327, %v6377, %v6379
    %v6381 = vrot.slane %v6365, 1
    %v6382 = vsel %vm2327, %v6379, %v6381
    %v6383 = vrot.slane %v6366, 1
    %v6384 = vsel %vm2327, %v6381, %v6383
    %v6385 = vrot.slane %v6367, 1
    %v6386 = vsel %vm2327, %v6383, %v6385
    %v6387 = vrot.slane %v6368, 1
    %v6388 = vsel %vm2327, %v6385, %v6387
    %v6389 = vrot.slane %v6369, 1
    %v6390 = vsel %vm2327, %v6387, %v6389
    %v6391 = vrot.slane %v6370, 1
    %v6392 = vsel %vm2327, %v6389, %v6391
    %v6393 = vrot.slane %v6371, 1
    %v6394 = vsel %vm2327, %v6391, %v6393
    %v6395 = vrot.slane %v6372, 1
    %v6396 = vsel %vm2327, %v6393, %v6395
    %v6397 = vrot.slane %v6373, 1
    %v6398 = vsel %vm2327, %v6395, %v6397
    %v6399 = vrot.slane %v6374, 1
    %v6400 = vsel %vm2327, %v6397, %v6399
    %v6401 = vrot.slane %v6375, 1
    %v6402 = vsel %vm2327, %v6399, %v6401
    %v6404 = vsel %vm934, %v6378, 0
    %v6407 = vsel %vm934, %v6380, 0
    %v6410 = vsel %vm934, %v6382, 0
    %v6413 = vsel %vm934, %v6384, 0
    %v6416 = vsel %vm934, %v6386, 0
    %v6419 = vsel %vm934, %v6388, 0
    %v6422 = vsel %vm934, %v6390, 0
    %v6425 = vsel %vm934, %v6392, 0
    %v6428 = vsel %vm934, %v6394, 0
    %v6431 = vsel %vm934, %v6396, 0
    %v6434 = vsel %vm934, %v6398, 0
    %v6437 = vsel %vm934, %v6400, 0
    %v6440 = vsel %vm934, %v6402, 0
    %v6443 = vsel %vm934, %v6401, 0
    %v6446 = vsel %vm977, %v6305, 0
    %6448 = vmatprep.subr.bf16.mxu0 0
    %6449 = vmatpush1.bf16.msra.mxu0 0
    %6450 = vmatprep.subr.bf16.mxu0 0
    %6451 = vmatpush1.bf16.msra.mxu0 0
    %6452 = vmatprep.subr.bf16.mxu0 0
    %6453 = vmatpush1.bf16.msra.mxu0 0
    %6454 = vmatprep.subr.bf16.mxu0 0
    %6455 = vmatpush1.bf16.msra.mxu0 0
    %6456 = vmatprep.subr.bf16.mxu0 0
    %6457 = vmatpush1.bf16.msra.mxu0 0
    %6458 = vmatprep.subr.bf16.mxu0 0
    %6459 = vmatpush1.bf16.msra.mxu0 0
    %6460 = vmatprep.subr.bf16.mxu0 0
    %6461 = vmatpush1.bf16.msra.mxu0 0
    %6462 = vmatprep.subr.bf16.mxu0 0
    %6463 = vmatpush1.bf16.msra.mxu0 %v6446
    %6464 = vmatprep.subr.bf16.mxu0 0
    %6465 = vmatpush2.bf16.msra.mxu0 0
    %6466 = vmatprep.subr.bf16.mxu0 0
    %6467 = vmatpush2.bf16.msra.mxu0 0
    %6468 = vmatprep.subr.bf16.mxu0 0
    %6469 = vmatpush2.bf16.msra.mxu0 0
    %6470 = vmatprep.subr.bf16.mxu0 0
    %6471 = vmatpush2.bf16.msra.mxu0 0
    %6472 = vmatprep.subr.bf16.mxu0 0
    %6473 = vmatpush2.bf16.msra.mxu0 0
    %6474 = vmatprep.subr.bf16.mxu0 0
    %6475 = vmatpush2.bf16.msra.mxu0 0
    %6476 = vmatprep.subr.bf16.mxu0 0
    %6477 = vmatpush2.bf16.msra.mxu0 0
    %6478 = vmatprep.subr.bf16.mxu0 0
    %6479 = vmatpush2.bf16.msra.mxu0 0
    %6480 = vmatprep.mubr.bf16.mxu0 0
    %6481 = vmatmul.mubr.bf16.gmra.mxu0 %v6404
    %v6482 = vpop.f32.mrf.mxu0
    %v6483 = vadd.f32 0.0, %v6482
    %v6484 = vpop.f32.mrf.mxu0
    %v6485 = vpop.f32.mrf.mxu0
    %v6486 = vadd.f32 0.0, %v6485
    %v6487 = vpop.f32.mrf.mxu0
    %6488 = vmatprep.mubr.bf16.mxu0 0
    %6489 = vmatmul.mubr.bf16.gmra.mxu0 %v6407
    %v6490 = vpop.f32.mrf.mxu0
    %v6491 = vadd.f32 0.0, %v6490
    %v6492 = vpop.f32.mrf.mxu0
    %v6493 = vpop.f32.mrf.mxu0
    %v6494 = vadd.f32 0.0, %v6493
    %v6495 = vpop.f32.mrf.mxu0
    %6496 = vmatprep.mubr.bf16.mxu0 0
    %6497 = vmatmul.mubr.bf16.gmra.mxu0 %v6410
    %v6498 = vpop.f32.mrf.mxu0
    %v6499 = vadd.f32 0.0, %v6498
    %v6500 = vpop.f32.mrf.mxu0
    %v6501 = vpop.f32.mrf.mxu0
    %v6502 = vadd.f32 0.0, %v6501
    %v6503 = vpop.f32.mrf.mxu0
    %6504 = vmatprep.mubr.bf16.mxu0 0
    %6505 = vmatmul.mubr.bf16.gmra.mxu0 %v6413
    %v6506 = vpop.f32.mrf.mxu0
    %v6507 = vadd.f32 0.0, %v6506
    %v6508 = vpop.f32.mrf.mxu0
    %v6509 = vpop.f32.mrf.mxu0
    %v6510 = vadd.f32 0.0, %v6509
    %v6511 = vpop.f32.mrf.mxu0
    %6512 = vmatprep.mubr.bf16.mxu0 0
    %6513 = vmatmul.mubr.bf16.gmra.mxu0 %v6416
    %v6514 = vpop.f32.mrf.mxu0
    %v6515 = vadd.f32 0.0, %v6514
    %v6516 = vpop.f32.mrf.mxu0
    %v6517 = vpop.f32.mrf.mxu0
    %v6518 = vadd.f32 0.0, %v6517
    %v6519 = vpop.f32.mrf.mxu0
    %6520 = vmatprep.mubr.bf16.mxu0 0
    %6521 = vmatmul.mubr.bf16.gmra.mxu0 %v6419
    %v6522 = vpop.f32.mrf.mxu0
    %v6523 = vadd.f32 0.0, %v6522
    %v6524 = vpop.f32.mrf.mxu0
    %v6525 = vpop.f32.mrf.mxu0
    %v6526 = vadd.f32 0.0, %v6525
    %v6527 = vpop.f32.mrf.mxu0
    %6528 = vmatprep.mubr.bf16.mxu0 0
    %6529 = vmatmul.mubr.bf16.gmra.mxu0 %v6422
    %v6530 = vpop.f32.mrf.mxu0
    %v6531 = vadd.f32 0.0, %v6530
    %v6532 = vpop.f32.mrf.mxu0
    %v6533 = vpop.f32.mrf.mxu0
    %v6534 = vadd.f32 0.0, %v6533
    %v6535 = vpop.f32.mrf.mxu0
    %6536 = vmatprep.mubr.bf16.mxu0 0
    %6537 = vmatmul.mubr.bf16.gmra.mxu0 %v6425
    %v6538 = vpop.f32.mrf.mxu0
    %v6539 = vadd.f32 0.0, %v6538
    %v6540 = vpop.f32.mrf.mxu0
    %v6541 = vpop.f32.mrf.mxu0
    %v6542 = vadd.f32 0.0, %v6541
    %v6543 = vpop.f32.mrf.mxu0
    %6544 = vmatprep.mubr.bf16.mxu0 0
    %6545 = vmatmul.mubr.bf16.gmra.mxu0 %v6428
    %v6546 = vpop.f32.mrf.mxu0
    %v6547 = vadd.f32 0.0, %v6546
    %v6548 = vpop.f32.mrf.mxu0
    %v6549 = vpop.f32.mrf.mxu0
    %v6550 = vadd.f32 0.0, %v6549
    %v6551 = vpop.f32.mrf.mxu0
    %6552 = vmatprep.mubr.bf16.mxu0 0
    %6553 = vmatmul.mubr.bf16.gmra.mxu0 %v6431
    %v6554 = vpop.f32.mrf.mxu0
    %v6555 = vadd.f32 0.0, %v6554
    %v6556 = vpop.f32.mrf.mxu0
    %v6557 = vpop.f32.mrf.mxu0
    %v6558 = vadd.f32 0.0, %v6557
    %v6559 = vpop.f32.mrf.mxu0
    %6560 = vmatprep.mubr.bf16.mxu0 0
    %6561 = vmatmul.mubr.bf16.gmra.mxu0 %v6434
    %v6562 = vpop.f32.mrf.mxu0
    %v6563 = vadd.f32 0.0, %v6562
    %v6564 = vpop.f32.mrf.mxu0
    %v6565 = vpop.f32.mrf.mxu0
    %v6566 = vadd.f32 0.0, %v6565
    %v6567 = vpop.f32.mrf.mxu0
    %6568 = vmatprep.mubr.bf16.mxu0 0
    %6569 = vmatmul.mubr.bf16.gmra.mxu0 %v6437
    %v6570 = vpop.f32.mrf.mxu0
    %v6571 = vadd.f32 0.0, %v6570
    %v6572 = vpop.f32.mrf.mxu0
    %v6573 = vpop.f32.mrf.mxu0
    %v6574 = vadd.f32 0.0, %v6573
    %v6575 = vpop.f32.mrf.mxu0
    %6576 = vmatprep.mubr.bf16.mxu0 0
    %6577 = vmatmul.mubr.bf16.gmra.mxu0 %v6440
    %v6578 = vpop.f32.mrf.mxu0
    %v6579 = vadd.f32 0.0, %v6578
    %v6580 = vpop.f32.mrf.mxu0
    %v6581 = vpop.f32.mrf.mxu0
    %v6582 = vadd.f32 0.0, %v6581
    %v6583 = vpop.f32.mrf.mxu0
    %6584 = vmatprep.mubr.bf16.mxu0 0
    %6585 = vmatmul.mubr.bf16.gmra.mxu0 %v6443
    %v6586 = vpop.f32.mrf.mxu0
    %v6587 = vadd.f32 0.0, %v6586
    %v6588 = vpop.f32.mrf.mxu0
    %v6589 = vpop.f32.mrf.mxu0
    %v6590 = vpop.f32.mrf.mxu0
    %6591 = vdwg.mxu0
    %v6592 = vadd.f32 %v6249, %v6483
    %v6593 = vadd.f32 %v6250, %v6486
    %v6594 = vadd.f32 %v6251, %v6491
    %v6595 = vadd.f32 %v6252, %v6494
    %v6596 = vadd.f32 %v6253, %v6499
    %v6597 = vadd.f32 %v6254, %v6502
    %v6598 = vadd.f32 %v6255, %v6507
    %v6599 = vadd.f32 %v6256, %v6510
    %v6600 = vadd.f32 %v6257, %v6515
    %v6601 = vadd.f32 %v6258, %v6518
    %v6602 = vadd.f32 %v6259, %v6523
    %v6603 = vadd.f32 %v6260, %v6526
    %v6604 = vadd.f32 %v6261, %v6531
    %v6605 = vadd.f32 %v6262, %v6534
    %v6606 = vadd.f32 %v6263, %v6539
    %v6607 = vadd.f32 %v6264, %v6542
    %v6608 = vadd.f32 %v6265, %v6547
    %v6609 = vadd.f32 %v6266, %v6550
    %v6610 = vadd.f32 %v6267, %v6555
    %v6611 = vadd.f32 %v6268, %v6558
    %v6612 = vadd.f32 %v6269, %v6563
    %v6613 = vadd.f32 %v6270, %v6566
    %v6614 = vadd.f32 %v6271, %v6571
    %v6615 = vadd.f32 %v6272, %v6574
    %v6616 = vadd.f32 %v6273, %v6579
    %v6617 = vadd.f32 %v6274, %v6582
    %v6618 = vadd.f32 %v6275, %v6587
    %v6619 = vld [vmem:[%s2571 + $0x70] sm:$0x3]
    %s6620 = scalar_lea.vmem %s2, 68
    %v6621 = vld [vmem:[%s6620] sm:$0xf]
    %v6623 = vunpack.c.l.b16 %v6619
    %v6624 = vpack.c.b16 %v6623, %v6017
    %v6626 = vshrl.u32 %v6019, 16
    %v6628 = vrot.slane %v6626, 1
    %v6629 = vshll.u32 %v6019, 16
    %v6631 = vrot.slane %v6629, 2
    %v6632 = vor.u32 %v6628, %v6631
    %v6634 = vshrl.u32 %v6020, 16
    %v6636 = vrot.slane %v6634, 1
    %v6637 = vshll.u32 %v6020, 16
    %v6639 = vrot.slane %v6637, 2
    %v6640 = vor.u32 %v6636, %v6639
    %v6641 = vsel %vm4994, %v6632, %v6640
    %v6643 = vshrl.u32 %v6021, 16
    %v6645 = vrot.slane %v6643, 1
    %v6646 = vshll.u32 %v6021, 16
    %v6648 = vrot.slane %v6646, 2
    %v6649 = vor.u32 %v6645, %v6648
    %v6650 = vsel %vm4994, %v6640, %v6649
    %v6652 = vshrl.u32 %v6022, 16
    %v6654 = vrot.slane %v6652, 1
    %v6655 = vshll.u32 %v6022, 16
    %v6657 = vrot.slane %v6655, 2
    %v6658 = vor.u32 %v6654, %v6657
    %v6659 = vsel %vm4994, %v6649, %v6658
    %v6661 = vshrl.u32 %v6023, 16
    %v6663 = vrot.slane %v6661, 1
    %v6664 = vshll.u32 %v6023, 16
    %v6666 = vrot.slane %v6664, 2
    %v6667 = vor.u32 %v6663, %v6666
    %v6668 = vsel %vm4994, %v6658, %v6667
    %v6670 = vshrl.u32 %v6024, 16
    %v6672 = vrot.slane %v6670, 1
    %v6673 = vshll.u32 %v6024, 16
    %v6675 = vrot.slane %v6673, 2
    %v6676 = vor.u32 %v6672, %v6675
    %v6677 = vsel %vm4994, %v6667, %v6676
    %v6679 = vshrl.u32 %v6025, 16
    %v6681 = vrot.slane %v6679, 1
    %v6682 = vshll.u32 %v6025, 16
    %v6684 = vrot.slane %v6682, 2
    %v6685 = vor.u32 %v6681, %v6684
    %v6686 = vsel %vm4994, %v6676, %v6685
    %v6688 = vshrl.u32 %v6026, 16
    %v6690 = vrot.slane %v6688, 1
    %v6691 = vshll.u32 %v6026, 16
    %v6693 = vrot.slane %v6691, 2
    %v6694 = vor.u32 %v6690, %v6693
    %v6695 = vsel %vm4994, %v6685, %v6694
    %v6697 = vshrl.u32 %v6027, 16
    %v6699 = vrot.slane %v6697, 1
    %v6700 = vshll.u32 %v6027, 16
    %v6702 = vrot.slane %v6700, 2
    %v6703 = vor.u32 %v6699, %v6702
    %v6704 = vsel %vm4994, %v6694, %v6703
    %v6706 = vshrl.u32 %v6028, 16
    %v6708 = vrot.slane %v6706, 1
    %v6709 = vshll.u32 %v6028, 16
    %v6711 = vrot.slane %v6709, 2
    %v6712 = vor.u32 %v6708, %v6711
    %v6713 = vsel %vm4994, %v6703, %v6712
    %v6715 = vshrl.u32 %v6029, 16
    %v6717 = vrot.slane %v6715, 1
    %v6718 = vshll.u32 %v6029, 16
    %v6720 = vrot.slane %v6718, 2
    %v6721 = vor.u32 %v6717, %v6720
    %v6722 = vsel %vm4994, %v6712, %v6721
    %v6724 = vshrl.u32 %v6030, 16
    %v6726 = vrot.slane %v6724, 1
    %v6727 = vshll.u32 %v6030, 16
    %v6729 = vrot.slane %v6727, 2
    %v6730 = vor.u32 %v6726, %v6729
    %v6731 = vsel %vm4994, %v6721, %v6730
    %v6733 = vshrl.u32 %v6031, 16
    %v6735 = vrot.slane %v6733, 1
    %v6736 = vshll.u32 %v6031, 16
    %v6738 = vrot.slane %v6736, 2
    %v6739 = vor.u32 %v6735, %v6738
    %v6740 = vsel %vm4994, %v6730, %v6739
    %v6742 = vshrl.u32 %v6624, 16
    %v6744 = vrot.slane %v6742, 1
    %v6745 = vshll.u32 %v6624, 16
    %v6747 = vrot.slane %v6745, 2
    %v6748 = vor.u32 %v6744, %v6747
    %v6749 = vsel %vm4994, %v6739, %v6748
    %v6751 = vsel %vm934, %v6641, 0
    %v6754 = vsel %vm934, %v6650, 0
    %v6757 = vsel %vm934, %v6659, 0
    %v6760 = vsel %vm934, %v6668, 0
    %v6763 = vsel %vm934, %v6677, 0
    %v6766 = vsel %vm934, %v6686, 0
    %v6769 = vsel %vm934, %v6695, 0
    %v6772 = vsel %vm934, %v6704, 0
    %v6775 = vsel %vm934, %v6713, 0
    %v6778 = vsel %vm934, %v6722, 0
    %v6781 = vsel %vm934, %v6731, 0
    %v6784 = vsel %vm934, %v6740, 0
    %v6787 = vsel %vm934, %v6749, 0
    %v6790 = vsel %vm934, %v6748, 0
    %v6793 = vsel %vm977, %v6621, 0
    %6795 = vmatprep.subr.bf16.mxu0 0
    %6796 = vmatpush1.bf16.msra.mxu0 0
    %6797 = vmatprep.subr.bf16.mxu0 0
    %6798 = vmatpush1.bf16.msra.mxu0 0
    %6799 = vmatprep.subr.bf16.mxu0 0
    %6800 = vmatpush1.bf16.msra.mxu0 0
    %6801 = vmatprep.subr.bf16.mxu0 0
    %6802 = vmatpush1.bf16.msra.mxu0 0
    %6803 = vmatprep.subr.bf16.mxu0 0
    %6804 = vmatpush1.bf16.msra.mxu0 0
    %6805 = vmatprep.subr.bf16.mxu0 0
    %6806 = vmatpush1.bf16.msra.mxu0 0
    %6807 = vmatprep.subr.bf16.mxu0 0
    %6808 = vmatpush1.bf16.msra.mxu0 0
    %6809 = vmatprep.subr.bf16.mxu0 0
    %6810 = vmatpush1.bf16.msra.mxu0 %v6793
    %6811 = vmatprep.subr.bf16.mxu0 0
    %6812 = vmatpush2.bf16.msra.mxu0 0
    %6813 = vmatprep.subr.bf16.mxu0 0
    %6814 = vmatpush2.bf16.msra.mxu0 0
    %6815 = vmatprep.subr.bf16.mxu0 0
    %6816 = vmatpush2.bf16.msra.mxu0 0
    %6817 = vmatprep.subr.bf16.mxu0 0
    %6818 = vmatpush2.bf16.msra.mxu0 0
    %6819 = vmatprep.subr.bf16.mxu0 0
    %6820 = vmatpush2.bf16.msra.mxu0 0
    %6821 = vmatprep.subr.bf16.mxu0 0
    %6822 = vmatpush2.bf16.msra.mxu0 0
    %6823 = vmatprep.subr.bf16.mxu0 0
    %6824 = vmatpush2.bf16.msra.mxu0 0
    %6825 = vmatprep.subr.bf16.mxu0 0
    %6826 = vmatpush2.bf16.msra.mxu0 0
    %6827 = vmatprep.mubr.bf16.mxu0 0
    %6828 = vmatmul.mubr.bf16.gmra.mxu0 %v6751
    %v6829 = vpop.f32.mrf.mxu0
    %v6830 = vadd.f32 0.0, %v6829
    %v6831 = vpop.f32.mrf.mxu0
    %v6832 = vpop.f32.mrf.mxu0
    %v6833 = vadd.f32 0.0, %v6832
    %v6834 = vpop.f32.mrf.mxu0
    %6835 = vmatprep.mubr.bf16.mxu0 0
    %6836 = vmatmul.mubr.bf16.gmra.mxu0 %v6754
    %v6837 = vpop.f32.mrf.mxu0
    %v6838 = vadd.f32 0.0, %v6837
    %v6839 = vpop.f32.mrf.mxu0
    %v6840 = vpop.f32.mrf.mxu0
    %v6841 = vadd.f32 0.0, %v6840
    %v6842 = vpop.f32.mrf.mxu0
    %6843 = vmatprep.mubr.bf16.mxu0 0
    %6844 = vmatmul.mubr.bf16.gmra.mxu0 %v6757
    %v6845 = vpop.f32.mrf.mxu0
    %v6846 = vadd.f32 0.0, %v6845
    %v6847 = vpop.f32.mrf.mxu0
    %v6848 = vpop.f32.mrf.mxu0
    %v6849 = vadd.f32 0.0, %v6848
    %v6850 = vpop.f32.mrf.mxu0
    %6851 = vmatprep.mubr.bf16.mxu0 0
    %6852 = vmatmul.mubr.bf16.gmra.mxu0 %v6760
    %v6853 = vpop.f32.mrf.mxu0
    %v6854 = vadd.f32 0.0, %v6853
    %v6855 = vpop.f32.mrf.mxu0
    %v6856 = vpop.f32.mrf.mxu0
    %v6857 = vadd.f32 0.0, %v6856
    %v6858 = vpop.f32.mrf.mxu0
    %6859 = vmatprep.mubr.bf16.mxu0 0
    %6860 = vmatmul.mubr.bf16.gmra.mxu0 %v6763
    %v6861 = vpop.f32.mrf.mxu0
    %v6862 = vadd.f32 0.0, %v6861
    %v6863 = vpop.f32.mrf.mxu0
    %v6864 = vpop.f32.mrf.mxu0
    %v6865 = vadd.f32 0.0, %v6864
    %v6866 = vpop.f32.mrf.mxu0
    %6867 = vmatprep.mubr.bf16.mxu0 0
    %6868 = vmatmul.mubr.bf16.gmra.mxu0 %v6766
    %v6869 = vpop.f32.mrf.mxu0
    %v6870 = vadd.f32 0.0, %v6869
    %v6871 = vpop.f32.mrf.mxu0
    %v6872 = vpop.f32.mrf.mxu0
    %v6873 = vadd.f32 0.0, %v6872
    %v6874 = vpop.f32.mrf.mxu0
    %6875 = vmatprep.mubr.bf16.mxu0 0
    %6876 = vmatmul.mubr.bf16.gmra.mxu0 %v6769
    %v6877 = vpop.f32.mrf.mxu0
    %v6878 = vadd.f32 0.0, %v6877
    %v6879 = vpop.f32.mrf.mxu0
    %v6880 = vpop.f32.mrf.mxu0
    %v6881 = vadd.f32 0.0, %v6880
    %v6882 = vpop.f32.mrf.mxu0
    %6883 = vmatprep.mubr.bf16.mxu0 0
    %6884 = vmatmul.mubr.bf16.gmra.mxu0 %v6772
    %v6885 = vpop.f32.mrf.mxu0
    %v6886 = vadd.f32 0.0, %v6885
    %v6887 = vpop.f32.mrf.mxu0
    %v6888 = vpop.f32.mrf.mxu0
    %v6889 = vadd.f32 0.0, %v6888
    %v6890 = vpop.f32.mrf.mxu0
    %6891 = vmatprep.mubr.bf16.mxu0 0
    %6892 = vmatmul.mubr.bf16.gmra.mxu0 %v6775
    %v6893 = vpop.f32.mrf.mxu0
    %v6894 = vadd.f32 0.0, %v6893
    %v6895 = vpop.f32.mrf.mxu0
    %v6896 = vpop.f32.mrf.mxu0
    %v6897 = vadd.f32 0.0, %v6896
    %v6898 = vpop.f32.mrf.mxu0
    %6899 = vmatprep.mubr.bf16.mxu0 0
    %6900 = vmatmul.mubr.bf16.gmra.mxu0 %v6778
    %v6901 = vpop.f32.mrf.mxu0
    %v6902 = vadd.f32 0.0, %v6901
    %v6903 = vpop.f32.mrf.mxu0
    %v6904 = vpop.f32.mrf.mxu0
    %v6905 = vadd.f32 0.0, %v6904
    %v6906 = vpop.f32.mrf.mxu0
    %6907 = vmatprep.mubr.bf16.mxu0 0
    %6908 = vmatmul.mubr.bf16.gmra.mxu0 %v6781
    %v6909 = vpop.f32.mrf.mxu0
    %v6910 = vadd.f32 0.0, %v6909
    %v6911 = vpop.f32.mrf.mxu0
    %v6912 = vpop.f32.mrf.mxu0
    %v6913 = vadd.f32 0.0, %v6912
    %v6914 = vpop.f32.mrf.mxu0
    %6915 = vmatprep.mubr.bf16.mxu0 0
    %6916 = vmatmul.mubr.bf16.gmra.mxu0 %v6784
    %v6917 = vpop.f32.mrf.mxu0
    %v6918 = vadd.f32 0.0, %v6917
    %v6919 = vpop.f32.mrf.mxu0
    %v6920 = vpop.f32.mrf.mxu0
    %v6921 = vadd.f32 0.0, %v6920
    %v6922 = vpop.f32.mrf.mxu0
    %6923 = vmatprep.mubr.bf16.mxu0 0
    %6924 = vmatmul.mubr.bf16.gmra.mxu0 %v6787
    %v6925 = vpop.f32.mrf.mxu0
    %v6926 = vadd.f32 0.0, %v6925
    %v6927 = vpop.f32.mrf.mxu0
    %v6928 = vpop.f32.mrf.mxu0
    %v6929 = vadd.f32 0.0, %v6928
    %v6930 = vpop.f32.mrf.mxu0
    %6931 = vmatprep.mubr.bf16.mxu0 0
    %6932 = vmatmul.mubr.bf16.gmra.mxu0 %v6790
    %v6933 = vpop.f32.mrf.mxu0
    %v6934 = vadd.f32 0.0, %v6933
    %v6935 = vpop.f32.mrf.mxu0
    %v6936 = vpop.f32.mrf.mxu0
    %v6937 = vpop.f32.mrf.mxu0
    %6938 = vdwg.mxu0
    %v6939 = vadd.f32 %v6592, %v6830
    %v6940 = vadd.f32 %v6593, %v6833
    %v6941 = vadd.f32 %v6594, %v6838
    %v6942 = vadd.f32 %v6595, %v6841
    %v6943 = vadd.f32 %v6596, %v6846
    %v6944 = vadd.f32 %v6597, %v6849
    %v6945 = vadd.f32 %v6598, %v6854
    %v6946 = vadd.f32 %v6599, %v6857
    %v6947 = vadd.f32 %v6600, %v6862
    %v6948 = vadd.f32 %v6601, %v6865
    %v6949 = vadd.f32 %v6602, %v6870
    %v6950 = vadd.f32 %v6603, %v6873
    %v6951 = vadd.f32 %v6604, %v6878
    %v6952 = vadd.f32 %v6605, %v6881
    %v6953 = vadd.f32 %v6606, %v6886
    %v6954 = vadd.f32 %v6607, %v6889
    %v6955 = vadd.f32 %v6608, %v6894
    %v6956 = vadd.f32 %v6609, %v6897
    %v6957 = vadd.f32 %v6610, %v6902
    %v6958 = vadd.f32 %v6611, %v6905
    %v6959 = vadd.f32 %v6612, %v6910
    %v6960 = vadd.f32 %v6613, %v6913
    %v6961 = vadd.f32 %v6614, %v6918
    %v6962 = vadd.f32 %v6615, %v6921
    %v6963 = vadd.f32 %v6616, %v6926
    %v6964 = vadd.f32 %v6617, %v6929
    %v6965 = vadd.f32 %v6618, %v6934
    %v6966 = vld [vmem:[%s2885 + $0x70] sm:$0x3]
    %s6967 = scalar_lea.vmem %s2, 72
    %v6968 = vld [vmem:[%s6967] sm:$0xf]
    %v6970 = vunpack.c.l.b16 %v6966
    %v6971 = vpack.c.b16 %v6970, %v6360
    %v6973 = vshrl.u32 %v6362, 16
    %v6975 = vrot.slane %v6973, 1
    %v6976 = vshll.u32 %v6362, 16
    %v6978 = vrot.slane %v6976, 2
    %v6979 = vor.u32 %v6975, %v6978
    %v6981 = vshrl.u32 %v6363, 16
    %v6983 = vrot.slane %v6981, 1
    %v6984 = vshll.u32 %v6363, 16
    %v6986 = vrot.slane %v6984, 2
    %v6987 = vor.u32 %v6983, %v6986
    %v6988 = vsel %vm4994, %v6979, %v6987
    %v6990 = vshrl.u32 %v6364, 16
    %v6992 = vrot.slane %v6990, 1
    %v6993 = vshll.u32 %v6364, 16
    %v6995 = vrot.slane %v6993, 2
    %v6996 = vor.u32 %v6992, %v6995
    %v6997 = vsel %vm4994, %v6987, %v6996
    %v6999 = vshrl.u32 %v6365, 16
    %v7001 = vrot.slane %v6999, 1
    %v7002 = vshll.u32 %v6365, 16
    %v7004 = vrot.slane %v7002, 2
    %v7005 = vor.u32 %v7001, %v7004
    %v7006 = vsel %vm4994, %v6996, %v7005
    %v7008 = vshrl.u32 %v6366, 16
    %v7010 = vrot.slane %v7008, 1
    %v7011 = vshll.u32 %v6366, 16
    %v7013 = vrot.slane %v7011, 2
    %v7014 = vor.u32 %v7010, %v7013
    %v7015 = vsel %vm4994, %v7005, %v7014
    %v7017 = vshrl.u32 %v6367, 16
    %v7019 = vrot.slane %v7017, 1
    %v7020 = vshll.u32 %v6367, 16
    %v7022 = vrot.slane %v7020, 2
    %v7023 = vor.u32 %v7019, %v7022
    %v7024 = vsel %vm4994, %v7014, %v7023
    %v7026 = vshrl.u32 %v6368, 16
    %v7028 = vrot.slane %v7026, 1
    %v7029 = vshll.u32 %v6368, 16
    %v7031 = vrot.slane %v7029, 2
    %v7032 = vor.u32 %v7028, %v7031
    %v7033 = vsel %vm4994, %v7023, %v7032
    %v7035 = vshrl.u32 %v6369, 16
    %v7037 = vrot.slane %v7035, 1
    %v7038 = vshll.u32 %v6369, 16
    %v7040 = vrot.slane %v7038, 2
    %v7041 = vor.u32 %v7037, %v7040
    %v7042 = vsel %vm4994, %v7032, %v7041
    %v7044 = vshrl.u32 %v6370, 16
    %v7046 = vrot.slane %v7044, 1
    %v7047 = vshll.u32 %v6370, 16
    %v7049 = vrot.slane %v7047, 2
    %v7050 = vor.u32 %v7046, %v7049
    %v7051 = vsel %vm4994, %v7041, %v7050
    %v7053 = vshrl.u32 %v6371, 16
    %v7055 = vrot.slane %v7053, 1
    %v7056 = vshll.u32 %v6371, 16
    %v7058 = vrot.slane %v7056, 2
    %v7059 = vor.u32 %v7055, %v7058
    %v7060 = vsel %vm4994, %v7050, %v7059
    %v7062 = vshrl.u32 %v6372, 16
    %v7064 = vrot.slane %v7062, 1
    %v7065 = vshll.u32 %v6372, 16
    %v7067 = vrot.slane %v7065, 2
    %v7068 = vor.u32 %v7064, %v7067
    %v7069 = vsel %vm4994, %v7059, %v7068
    %v7071 = vshrl.u32 %v6373, 16
    %v7073 = vrot.slane %v7071, 1
    %v7074 = vshll.u32 %v6373, 16
    %v7076 = vrot.slane %v7074, 2
    %v7077 = vor.u32 %v7073, %v7076
    %v7078 = vsel %vm4994, %v7068, %v7077
    %v7080 = vshrl.u32 %v6374, 16
    %v7082 = vrot.slane %v7080, 1
    %v7083 = vshll.u32 %v6374, 16
    %v7085 = vrot.slane %v7083, 2
    %v7086 = vor.u32 %v7082, %v7085
    %v7087 = vsel %vm4994, %v7077, %v7086
    %v7089 = vshrl.u32 %v6971, 16
    %v7091 = vrot.slane %v7089, 1
    %v7092 = vshll.u32 %v6971, 16
    %v7094 = vrot.slane %v7092, 2
    %v7095 = vor.u32 %v7091, %v7094
    %v7096 = vsel %vm4994, %v7086, %v7095
    %v7098 = vsel %vm934, %v6988, 0
    %v7101 = vsel %vm934, %v6997, 0
    %v7104 = vsel %vm934, %v7006, 0
    %v7107 = vsel %vm934, %v7015, 0
    %v7110 = vsel %vm934, %v7024, 0
    %v7113 = vsel %vm934, %v7033, 0
    %v7116 = vsel %vm934, %v7042, 0
    %v7119 = vsel %vm934, %v7051, 0
    %v7122 = vsel %vm934, %v7060, 0
    %v7125 = vsel %vm934, %v7069, 0
    %v7128 = vsel %vm934, %v7078, 0
    %v7131 = vsel %vm934, %v7087, 0
    %v7134 = vsel %vm934, %v7096, 0
    %v7137 = vsel %vm934, %v7095, 0
    %v7140 = vsel %vm977, %v6968, 0
    %7142 = vmatprep.subr.bf16.mxu0 0
    %7143 = vmatpush1.bf16.msra.mxu0 0
    %7144 = vmatprep.subr.bf16.mxu0 0
    %7145 = vmatpush1.bf16.msra.mxu0 0
    %7146 = vmatprep.subr.bf16.mxu0 0
    %7147 = vmatpush1.bf16.msra.mxu0 0
    %7148 = vmatprep.subr.bf16.mxu0 0
    %7149 = vmatpush1.bf16.msra.mxu0 0
    %7150 = vmatprep.subr.bf16.mxu0 0
    %7151 = vmatpush1.bf16.msra.mxu0 0
    %7152 = vmatprep.subr.bf16.mxu0 0
    %7153 = vmatpush1.bf16.msra.mxu0 0
    %7154 = vmatprep.subr.bf16.mxu0 0
    %7155 = vmatpush1.bf16.msra.mxu0 0
    %7156 = vmatprep.subr.bf16.mxu0 0
    %7157 = vmatpush1.bf16.msra.mxu0 %v7140
    %7158 = vmatprep.subr.bf16.mxu0 0
    %7159 = vmatpush2.bf16.msra.mxu0 0
    %7160 = vmatprep.subr.bf16.mxu0 0
    %7161 = vmatpush2.bf16.msra.mxu0 0
    %7162 = vmatprep.subr.bf16.mxu0 0
    %7163 = vmatpush2.bf16.msra.mxu0 0
    %7164 = vmatprep.subr.bf16.mxu0 0
    %7165 = vmatpush2.bf16.msra.mxu0 0
    %7166 = vmatprep.subr.bf16.mxu0 0
    %7167 = vmatpush2.bf16.msra.mxu0 0
    %7168 = vmatprep.subr.bf16.mxu0 0
    %7169 = vmatpush2.bf16.msra.mxu0 0
    %7170 = vmatprep.subr.bf16.mxu0 0
    %7171 = vmatpush2.bf16.msra.mxu0 0
    %7172 = vmatprep.subr.bf16.mxu0 0
    %7173 = vmatpush2.bf16.msra.mxu0 0
    %7174 = vmatprep.mubr.bf16.mxu0 0
    %7175 = vmatmul.mubr.bf16.gmra.mxu0 %v7098
    %v7176 = vpop.f32.mrf.mxu0
    %v7177 = vadd.f32 0.0, %v7176
    %v7178 = vpop.f32.mrf.mxu0
    %v7179 = vpop.f32.mrf.mxu0
    %v7180 = vadd.f32 0.0, %v7179
    %v7181 = vpop.f32.mrf.mxu0
    %7182 = vmatprep.mubr.bf16.mxu0 0
    %7183 = vmatmul.mubr.bf16.gmra.mxu0 %v7101
    %v7184 = vpop.f32.mrf.mxu0
    %v7185 = vadd.f32 0.0, %v7184
    %v7186 = vpop.f32.mrf.mxu0
    %v7187 = vpop.f32.mrf.mxu0
    %v7188 = vadd.f32 0.0, %v7187
    %v7189 = vpop.f32.mrf.mxu0
    %7190 = vmatprep.mubr.bf16.mxu0 0
    %7191 = vmatmul.mubr.bf16.gmra.mxu0 %v7104
    %v7192 = vpop.f32.mrf.mxu0
    %v7193 = vadd.f32 0.0, %v7192
    %v7194 = vpop.f32.mrf.mxu0
    %v7195 = vpop.f32.mrf.mxu0
    %v7196 = vadd.f32 0.0, %v7195
    %v7197 = vpop.f32.mrf.mxu0
    %7198 = vmatprep.mubr.bf16.mxu0 0
    %7199 = vmatmul.mubr.bf16.gmra.mxu0 %v7107
    %v7200 = vpop.f32.mrf.mxu0
    %v7201 = vadd.f32 0.0, %v7200
    %v7202 = vpop.f32.mrf.mxu0
    %v7203 = vpop.f32.mrf.mxu0
    %v7204 = vadd.f32 0.0, %v7203
    %v7205 = vpop.f32.mrf.mxu0
    %7206 = vmatprep.mubr.bf16.mxu0 0
    %7207 = vmatmul.mubr.bf16.gmra.mxu0 %v7110
    %v7208 = vpop.f32.mrf.mxu0
    %v7209 = vadd.f32 0.0, %v7208
    %v7210 = vpop.f32.mrf.mxu0
    %v7211 = vpop.f32.mrf.mxu0
    %v7212 = vadd.f32 0.0, %v7211
    %v7213 = vpop.f32.mrf.mxu0
    %7214 = vmatprep.mubr.bf16.mxu0 0
    %7215 = vmatmul.mubr.bf16.gmra.mxu0 %v7113
    %v7216 = vpop.f32.mrf.mxu0
    %v7217 = vadd.f32 0.0, %v7216
    %v7218 = vpop.f32.mrf.mxu0
    %v7219 = vpop.f32.mrf.mxu0
    %v7220 = vadd.f32 0.0, %v7219
    %v7221 = vpop.f32.mrf.mxu0
    %7222 = vmatprep.mubr.bf16.mxu0 0
    %7223 = vmatmul.mubr.bf16.gmra.mxu0 %v7116
    %v7224 = vpop.f32.mrf.mxu0
    %v7225 = vadd.f32 0.0, %v7224
    %v7226 = vpop.f32.mrf.mxu0
    %v7227 = vpop.f32.mrf.mxu0
    %v7228 = vadd.f32 0.0, %v7227
    %v7229 = vpop.f32.mrf.mxu0
    %7230 = vmatprep.mubr.bf16.mxu0 0
    %7231 = vmatmul.mubr.bf16.gmra.mxu0 %v7119
    %v7232 = vpop.f32.mrf.mxu0
    %v7233 = vadd.f32 0.0, %v7232
    %v7234 = vpop.f32.mrf.mxu0
    %v7235 = vpop.f32.mrf.mxu0
    %v7236 = vadd.f32 0.0, %v7235
    %v7237 = vpop.f32.mrf.mxu0
    %7238 = vmatprep.mubr.bf16.mxu0 0
    %7239 = vmatmul.mubr.bf16.gmra.mxu0 %v7122
    %v7240 = vpop.f32.mrf.mxu0
    %v7241 = vadd.f32 0.0, %v7240
    %v7242 = vpop.f32.mrf.mxu0
    %v7243 = vpop.f32.mrf.mxu0
    %v7244 = vadd.f32 0.0, %v7243
    %v7245 = vpop.f32.mrf.mxu0
    %7246 = vmatprep.mubr.bf16.mxu0 0
    %7247 = vmatmul.mubr.bf16.gmra.mxu0 %v7125
    %v7248 = vpop.f32.mrf.mxu0
    %v7249 = vadd.f32 0.0, %v7248
    %v7250 = vpop.f32.mrf.mxu0
    %v7251 = vpop.f32.mrf.mxu0
    %v7252 = vadd.f32 0.0, %v7251
    %v7253 = vpop.f32.mrf.mxu0
    %7254 = vmatprep.mubr.bf16.mxu0 0
    %7255 = vmatmul.mubr.bf16.gmra.mxu0 %v7128
    %v7256 = vpop.f32.mrf.mxu0
    %v7257 = vadd.f32 0.0, %v7256
    %v7258 = vpop.f32.mrf.mxu0
    %v7259 = vpop.f32.mrf.mxu0
    %v7260 = vadd.f32 0.0, %v7259
    %v7261 = vpop.f32.mrf.mxu0
    %7262 = vmatprep.mubr.bf16.mxu0 0
    %7263 = vmatmul.mubr.bf16.gmra.mxu0 %v7131
    %v7264 = vpop.f32.mrf.mxu0
    %v7265 = vadd.f32 0.0, %v7264
    %v7266 = vpop.f32.mrf.mxu0
    %v7267 = vpop.f32.mrf.mxu0
    %v7268 = vadd.f32 0.0, %v7267
    %v7269 = vpop.f32.mrf.mxu0
    %7270 = vmatprep.mubr.bf16.mxu0 0
    %7271 = vmatmul.mubr.bf16.gmra.mxu0 %v7134
    %v7272 = vpop.f32.mrf.mxu0
    %v7273 = vadd.f32 0.0, %v7272
    %v7274 = vpop.f32.mrf.mxu0
    %v7275 = vpop.f32.mrf.mxu0
    %v7276 = vadd.f32 0.0, %v7275
    %v7277 = vpop.f32.mrf.mxu0
    %7278 = vmatprep.mubr.bf16.mxu0 0
    %7279 = vmatmul.mubr.bf16.gmra.mxu0 %v7137
    %v7280 = vpop.f32.mrf.mxu0
    %v7281 = vadd.f32 0.0, %v7280
    %v7282 = vpop.f32.mrf.mxu0
    %v7283 = vpop.f32.mrf.mxu0
    %v7284 = vpop.f32.mrf.mxu0
    %7285 = vdwg.mxu0
    %v7286 = vadd.f32 %v6939, %v7177
    %v7287 = vadd.f32 %v6940, %v7180
    %v7288 = vadd.f32 %v6941, %v7185
    %v7289 = vadd.f32 %v6942, %v7188
    %v7290 = vadd.f32 %v6943, %v7193
    %v7291 = vadd.f32 %v6944, %v7196
    %v7292 = vadd.f32 %v6945, %v7201
    %v7293 = vadd.f32 %v6946, %v7204
    %v7294 = vadd.f32 %v6947, %v7209
    %v7295 = vadd.f32 %v6948, %v7212
    %v7296 = vadd.f32 %v6949, %v7217
    %v7297 = vadd.f32 %v6950, %v7220
    %v7298 = vadd.f32 %v6951, %v7225
    %v7299 = vadd.f32 %v6952, %v7228
    %v7300 = vadd.f32 %v6953, %v7233
    %v7301 = vadd.f32 %v6954, %v7236
    %v7302 = vadd.f32 %v6955, %v7241
    %v7303 = vadd.f32 %v6956, %v7244
    %v7304 = vadd.f32 %v6957, %v7249
    %v7305 = vadd.f32 %v6958, %v7252
    %v7306 = vadd.f32 %v6959, %v7257
    %v7307 = vadd.f32 %v6960, %v7260
    %v7308 = vadd.f32 %v6961, %v7265
    %v7309 = vadd.f32 %v6962, %v7268
    %v7310 = vadd.f32 %v6963, %v7273
    %v7311 = vadd.f32 %v6964, %v7276
    %v7312 = vadd.f32 %v6965, %v7281
    %v7313 = vld [vmem:[%s2571 + $0x4] sm:$0xc]
    %s7314 = scalar_lea.vmem %s2, 76
    %v7315 = vld [vmem:[%s7314] sm:$0xf]
    %v7317 = vunpack.c.l.b16 %v7313
    %v7318 = vpack.c.b16 %v5992, %v7317
    %v7319 = vrot.slane %v7318, 2
    %v7320 = vrot.slane %v6020, 2
    %v7321 = vsel %vm5689, %v7319, %v7320
    %v7322 = vrot.slane %v6021, 2
    %v7323 = vsel %vm5689, %v7320, %v7322
    %v7324 = vrot.slane %v6022, 2
    %v7325 = vsel %vm5689, %v7322, %v7324
    %v7326 = vrot.slane %v6023, 2
    %v7327 = vsel %vm5689, %v7324, %v7326
    %v7328 = vrot.slane %v6024, 2
    %v7329 = vsel %vm5689, %v7326, %v7328
    %v7330 = vrot.slane %v6025, 2
    %v7331 = vsel %vm5689, %v7328, %v7330
    %v7332 = vrot.slane %v6026, 2
    %v7333 = vsel %vm5689, %v7330, %v7332
    %v7334 = vrot.slane %v6027, 2
    %v7335 = vsel %vm5689, %v7332, %v7334
    %v7336 = vrot.slane %v6028, 2
    %v7337 = vsel %vm5689, %v7334, %v7336
    %v7338 = vrot.slane %v6029, 2
    %v7339 = vsel %vm5689, %v7336, %v7338
    %v7340 = vrot.slane %v6030, 2
    %v7341 = vsel %vm5689, %v7338, %v7340
    %v7342 = vrot.slane %v6031, 2
    %v7343 = vsel %vm5689, %v7340, %v7342
    %v7344 = vrot.slane %v6624, 2
    %v7345 = vsel %vm5689, %v7342, %v7344
    %v7347 = vsel %vm934, %v7321, 0
    %v7350 = vsel %vm934, %v7323, 0
    %v7353 = vsel %vm934, %v7325, 0
    %v7356 = vsel %vm934, %v7327, 0
    %v7359 = vsel %vm934, %v7329, 0
    %v7362 = vsel %vm934, %v7331, 0
    %v7365 = vsel %vm934, %v7333, 0
    %v7368 = vsel %vm934, %v7335, 0
    %v7371 = vsel %vm934, %v7337, 0
    %v7374 = vsel %vm934, %v7339, 0
    %v7377 = vsel %vm934, %v7341, 0
    %v7380 = vsel %vm934, %v7343, 0
    %v7383 = vsel %vm934, %v7345, 0
    %v7386 = vsel %vm934, %v7344, 0
    %v7389 = vsel %vm977, %v7315, 0
    %7391 = vmatprep.subr.bf16.mxu0 0
    %7392 = vmatpush1.bf16.msra.mxu0 0
    %7393 = vmatprep.subr.bf16.mxu0 0
    %7394 = vmatpush1.bf16.msra.mxu0 0
    %7395 = vmatprep.subr.bf16.mxu0 0
    %7396 = vmatpush1.bf16.msra.mxu0 0
    %7397 = vmatprep.subr.bf16.mxu0 0
    %7398 = vmatpush1.bf16.msra.mxu0 0
    %7399 = vmatprep.subr.bf16.mxu0 0
    %7400 = vmatpush1.bf16.msra.mxu0 0
    %7401 = vmatprep.subr.bf16.mxu0 0
    %7402 = vmatpush1.bf16.msra.mxu0 0
    %7403 = vmatprep.subr.bf16.mxu0 0
    %7404 = vmatpush1.bf16.msra.mxu0 0
    %7405 = vmatprep.subr.bf16.mxu0 0
    %7406 = vmatpush1.bf16.msra.mxu0 %v7389
    %7407 = vmatprep.subr.bf16.mxu0 0
    %7408 = vmatpush2.bf16.msra.mxu0 0
    %7409 = vmatprep.subr.bf16.mxu0 0
    %7410 = vmatpush2.bf16.msra.mxu0 0
    %7411 = vmatprep.subr.bf16.mxu0 0
    %7412 = vmatpush2.bf16.msra.mxu0 0
    %7413 = vmatprep.subr.bf16.mxu0 0
    %7414 = vmatpush2.bf16.msra.mxu0 0
    %7415 = vmatprep.subr.bf16.mxu0 0
    %7416 = vmatpush2.bf16.msra.mxu0 0
    %7417 = vmatprep.subr.bf16.mxu0 0
    %7418 = vmatpush2.bf16.msra.mxu0 0
    %7419 = vmatprep.subr.bf16.mxu0 0
    %7420 = vmatpush2.bf16.msra.mxu0 0
    %7421 = vmatprep.subr.bf16.mxu0 0
    %7422 = vmatpush2.bf16.msra.mxu0 0
    %7423 = vmatprep.mubr.bf16.mxu0 0
    %7424 = vmatmul.mubr.bf16.gmra.mxu0 %v7347
    %v7425 = vpop.f32.mrf.mxu0
    %v7426 = vadd.f32 0.0, %v7425
    %v7427 = vpop.f32.mrf.mxu0
    %v7428 = vpop.f32.mrf.mxu0
    %v7429 = vadd.f32 0.0, %v7428
    %v7430 = vpop.f32.mrf.mxu0
    %7431 = vmatprep.mubr.bf16.mxu0 0
    %7432 = vmatmul.mubr.bf16.gmra.mxu0 %v7350
    %v7433 = vpop.f32.mrf.mxu0
    %v7434 = vadd.f32 0.0, %v7433
    %v7435 = vpop.f32.mrf.mxu0
    %v7436 = vpop.f32.mrf.mxu0
    %v7437 = vadd.f32 0.0, %v7436
    %v7438 = vpop.f32.mrf.mxu0
    %7439 = vmatprep.mubr.bf16.mxu0 0
    %7440 = vmatmul.mubr.bf16.gmra.mxu0 %v7353
    %v7441 = vpop.f32.mrf.mxu0
    %v7442 = vadd.f32 0.0, %v7441
    %v7443 = vpop.f32.mrf.mxu0
    %v7444 = vpop.f32.mrf.mxu0
    %v7445 = vadd.f32 0.0, %v7444
    %v7446 = vpop.f32.mrf.mxu0
    %7447 = vmatprep.mubr.bf16.mxu0 0
    %7448 = vmatmul.mubr.bf16.gmra.mxu0 %v7356
    %v7449 = vpop.f32.mrf.mxu0
    %v7450 = vadd.f32 0.0, %v7449
    %v7451 = vpop.f32.mrf.mxu0
    %v7452 = vpop.f32.mrf.mxu0
    %v7453 = vadd.f32 0.0, %v7452
    %v7454 = vpop.f32.mrf.mxu0
    %7455 = vmatprep.mubr.bf16.mxu0 0
    %7456 = vmatmul.mubr.bf16.gmra.mxu0 %v7359
    %v7457 = vpop.f32.mrf.mxu0
    %v7458 = vadd.f32 0.0, %v7457
    %v7459 = vpop.f32.mrf.mxu0
    %v7460 = vpop.f32.mrf.mxu0
    %v7461 = vadd.f32 0.0, %v7460
    %v7462 = vpop.f32.mrf.mxu0
    %7463 = vmatprep.mubr.bf16.mxu0 0
    %7464 = vmatmul.mubr.bf16.gmra.mxu0 %v7362
    %v7465 = vpop.f32.mrf.mxu0
    %v7466 = vadd.f32 0.0, %v7465
    %v7467 = vpop.f32.mrf.mxu0
    %v7468 = vpop.f32.mrf.mxu0
    %v7469 = vadd.f32 0.0, %v7468
    %v7470 = vpop.f32.mrf.mxu0
    %7471 = vmatprep.mubr.bf16.mxu0 0
    %7472 = vmatmul.mubr.bf16.gmra.mxu0 %v7365
    %v7473 = vpop.f32.mrf.mxu0
    %v7474 = vadd.f32 0.0, %v7473
    %v7475 = vpop.f32.mrf.mxu0
    %v7476 = vpop.f32.mrf.mxu0
    %v7477 = vadd.f32 0.0, %v7476
    %v7478 = vpop.f32.mrf.mxu0
    %7479 = vmatprep.mubr.bf16.mxu0 0
    %7480 = vmatmul.mubr.bf16.gmra.mxu0 %v7368
    %v7481 = vpop.f32.mrf.mxu0
    %v7482 = vadd.f32 0.0, %v7481
    %v7483 = vpop.f32.mrf.mxu0
    %v7484 = vpop.f32.mrf.mxu0
    %v7485 = vadd.f32 0.0, %v7484
    %v7486 = vpop.f32.mrf.mxu0
    %7487 = vmatprep.mubr.bf16.mxu0 0
    %7488 = vmatmul.mubr.bf16.gmra.mxu0 %v7371
    %v7489 = vpop.f32.mrf.mxu0
    %v7490 = vadd.f32 0.0, %v7489
    %v7491 = vpop.f32.mrf.mxu0
    %v7492 = vpop.f32.mrf.mxu0
    %v7493 = vadd.f32 0.0, %v7492
    %v7494 = vpop.f32.mrf.mxu0
    %7495 = vmatprep.mubr.bf16.mxu0 0
    %7496 = vmatmul.mubr.bf16.gmra.mxu0 %v7374
    %v7497 = vpop.f32.mrf.mxu0
    %v7498 = vadd.f32 0.0, %v7497
    %v7499 = vpop.f32.mrf.mxu0
    %v7500 = vpop.f32.mrf.mxu0
    %v7501 = vadd.f32 0.0, %v7500
    %v7502 = vpop.f32.mrf.mxu0
    %7503 = vmatprep.mubr.bf16.mxu0 0
    %7504 = vmatmul.mubr.bf16.gmra.mxu0 %v7377
    %v7505 = vpop.f32.mrf.mxu0
    %v7506 = vadd.f32 0.0, %v7505
    %v7507 = vpop.f32.mrf.mxu0
    %v7508 = vpop.f32.mrf.mxu0
    %v7509 = vadd.f32 0.0, %v7508
    %v7510 = vpop.f32.mrf.mxu0
    %7511 = vmatprep.mubr.bf16.mxu0 0
    %7512 = vmatmul.mubr.bf16.gmra.mxu0 %v7380
    %v7513 = vpop.f32.mrf.mxu0
    %v7514 = vadd.f32 0.0, %v7513
    %v7515 = vpop.f32.mrf.mxu0
    %v7516 = vpop.f32.mrf.mxu0
    %v7517 = vadd.f32 0.0, %v7516
    %v7518 = vpop.f32.mrf.mxu0
    %7519 = vmatprep.mubr.bf16.mxu0 0
    %7520 = vmatmul.mubr.bf16.gmra.mxu0 %v7383
    %v7521 = vpop.f32.mrf.mxu0
    %v7522 = vadd.f32 0.0, %v7521
    %v7523 = vpop.f32.mrf.mxu0
    %v7524 = vpop.f32.mrf.mxu0
    %v7525 = vadd.f32 0.0, %v7524
    %v7526 = vpop.f32.mrf.mxu0
    %7527 = vmatprep.mubr.bf16.mxu0 0
    %7528 = vmatmul.mubr.bf16.gmra.mxu0 %v7386
    %v7529 = vpop.f32.mrf.mxu0
    %v7530 = vadd.f32 0.0, %v7529
    %v7531 = vpop.f32.mrf.mxu0
    %v7532 = vpop.f32.mrf.mxu0
    %v7533 = vpop.f32.mrf.mxu0
    %7534 = vdwg.mxu0
    %v7535 = vadd.f32 %v7286, %v7426
    %v7536 = vadd.f32 %v7287, %v7429
    %v7537 = vadd.f32 %v7288, %v7434
    %v7538 = vadd.f32 %v7289, %v7437
    %v7539 = vadd.f32 %v7290, %v7442
    %v7540 = vadd.f32 %v7291, %v7445
    %v7541 = vadd.f32 %v7292, %v7450
    %v7542 = vadd.f32 %v7293, %v7453
    %v7543 = vadd.f32 %v7294, %v7458
    %v7544 = vadd.f32 %v7295, %v7461
    %v7545 = vadd.f32 %v7296, %v7466
    %v7546 = vadd.f32 %v7297, %v7469
    %v7547 = vadd.f32 %v7298, %v7474
    %v7548 = vadd.f32 %v7299, %v7477
    %v7549 = vadd.f32 %v7300, %v7482
    %v7550 = vadd.f32 %v7301, %v7485
    %v7551 = vadd.f32 %v7302, %v7490
    %v7552 = vadd.f32 %v7303, %v7493
    %v7553 = vadd.f32 %v7304, %v7498
    %v7554 = vadd.f32 %v7305, %v7501
    %v7555 = vadd.f32 %v7306, %v7506
    %v7556 = vadd.f32 %v7307, %v7509
    %v7557 = vadd.f32 %v7308, %v7514
    %v7558 = vadd.f32 %v7309, %v7517
    %v7559 = vadd.f32 %v7310, %v7522
    %v7560 = vadd.f32 %v7311, %v7525
    %v7561 = vadd.f32 %v7312, %v7530
    %v7562 = vld [vmem:[#allocation2 + $0x8] sm:$0xc]
    %v7563 = vld [vmem:[#allocation2 + $0xc] sm:$0xf]
    %v7564 = vld [vmem:[#allocation2 + $0x10] sm:$0xf]
    %v7565 = vld [vmem:[#allocation2 + $0x14] sm:$0xf]
    %v7566 = vld [vmem:[#allocation2 + $0x18] sm:$0xf]
    %v7567 = vld [vmem:[#allocation2 + $0x1c] sm:$0xf]
    %v7568 = vld [vmem:[#allocation2 + $0x20] sm:$0xf]
    %v7569 = vld [vmem:[#allocation2 + $0x24] sm:$0xf]
    %v7570 = vld [vmem:[#allocation2 + $0x28] sm:$0xf]
    %v7571 = vld [vmem:[#allocation2 + $0x2c] sm:$0xf]
    %v7572 = vld [vmem:[#allocation2 + $0x30] sm:$0xf]
    %v7573 = vld [vmem:[#allocation2 + $0x34] sm:$0xf]
    %v7574 = vld [vmem:[#allocation2 + $0x38] sm:$0xf]
    %v7575 = vld [vmem:[#allocation2 + $0x3c] sm:$0xf]
    %v7576 = vld [vmem:[#allocation2 + $0x40] sm:$0xf]
    %v7577 = vld [vmem:[#allocation2 + $0x44] sm:$0xf]
    %v7578 = vld [vmem:[#allocation2 + $0x48] sm:$0xf]
    %v7579 = vld [vmem:[#allocation2 + $0x4c] sm:$0xf]
    %v7580 = vld [vmem:[#allocation2 + $0x50] sm:$0xf]
    %v7581 = vld [vmem:[#allocation2 + $0x54] sm:$0xf]
    %v7582 = vld [vmem:[#allocation2 + $0x58] sm:$0xf]
    %v7583 = vld [vmem:[#allocation2 + $0x5c] sm:$0xf]
    %v7584 = vld [vmem:[#allocation2 + $0x60] sm:$0xf]
    %v7585 = vld [vmem:[#allocation2 + $0x64] sm:$0xf]
    %v7586 = vld [vmem:[#allocation2 + $0x68] sm:$0xf]
    %v7587 = vld [vmem:[#allocation2 + $0x6c] sm:$0xf]
    %v7588 = vld [vmem:[#allocation2 + $0x70] sm:$0xf]
    %v7589 = vld [vmem:[#allocation2 + $0x74] sm:$0x3]
    %s7590 = scalar_lea.vmem %s2, 80
    %v7591 = vld [vmem:[%s7590] sm:$0xf]
    %v7620 = vunpack.c.l.b16 %v7562
    %v7621 = vunpack.c.l.b16 %v7563
    %v7622 = vunpack.c.l.b16 %v7564
    %v7623 = vunpack.c.l.b16 %v7565
    %v7624 = vunpack.c.l.b16 %v7566
    %v7625 = vunpack.c.l.b16 %v7567
    %v7626 = vunpack.c.l.b16 %v7568
    %v7627 = vunpack.c.l.b16 %v7569
    %v7628 = vunpack.c.l.b16 %v7570
    %v7629 = vunpack.c.l.b16 %v7571
    %v7630 = vunpack.c.l.b16 %v7572
    %v7631 = vunpack.c.l.b16 %v7573
    %v7632 = vunpack.c.l.b16 %v7574
    %v7633 = vunpack.c.l.b16 %v7575
    %v7634 = vunpack.c.l.b16 %v7576
    %v7635 = vunpack.c.l.b16 %v7577
    %v7636 = vunpack.c.l.b16 %v7578
    %v7637 = vunpack.c.l.b16 %v7579
    %v7638 = vunpack.c.l.b16 %v7580
    %v7639 = vunpack.c.l.b16 %v7581
    %v7640 = vunpack.c.l.b16 %v7582
    %v7641 = vunpack.c.l.b16 %v7583
    %v7642 = vunpack.c.l.b16 %v7584
    %v7643 = vunpack.c.l.b16 %v7585
    %v7644 = vunpack.c.l.b16 %v7586
    %v7645 = vunpack.c.l.b16 %v7587
    %v7646 = vunpack.c.l.b16 %v7588
    %v7647 = vunpack.c.l.b16 %v7589
    %v7648 = vpack.c.b16 %v7621, %v7620
    %v7649 = vpack.c.b16 %v7623, %v7622
    %v7650 = vpack.c.b16 %v7625, %v7624
    %v7651 = vpack.c.b16 %v7627, %v7626
    %v7652 = vpack.c.b16 %v7629, %v7628
    %v7653 = vpack.c.b16 %v7631, %v7630
    %v7654 = vpack.c.b16 %v7633, %v7632
    %v7655 = vpack.c.b16 %v7635, %v7634
    %v7656 = vpack.c.b16 %v7637, %v7636
    %v7657 = vpack.c.b16 %v7639, %v7638
    %v7658 = vpack.c.b16 %v7641, %v7640
    %v7659 = vpack.c.b16 %v7643, %v7642
    %v7660 = vpack.c.b16 %v7645, %v7644
    %v7661 = vpack.c.b16 %v7647, %v7646
    %v7662 = vrot.slane %v7648, 2
    %v7663 = vrot.slane %v7649, 2
    %v7664 = vsel %vm5689, %v7662, %v7663
    %v7665 = vrot.slane %v7650, 2
    %v7666 = vsel %vm5689, %v7663, %v7665
    %v7667 = vrot.slane %v7651, 2
    %v7668 = vsel %vm5689, %v7665, %v7667
    %v7669 = vrot.slane %v7652, 2
    %v7670 = vsel %vm5689, %v7667, %v7669
    %v7671 = vrot.slane %v7653, 2
    %v7672 = vsel %vm5689, %v7669, %v7671
    %v7673 = vrot.slane %v7654, 2
    %v7674 = vsel %vm5689, %v7671, %v7673
    %v7675 = vrot.slane %v7655, 2
    %v7676 = vsel %vm5689, %v7673, %v7675
    %v7677 = vrot.slane %v7656, 2
    %v7678 = vsel %vm5689, %v7675, %v7677
    %v7679 = vrot.slane %v7657, 2
    %v7680 = vsel %vm5689, %v7677, %v7679
    %v7681 = vrot.slane %v7658, 2
    %v7682 = vsel %vm5689, %v7679, %v7681
    %v7683 = vrot.slane %v7659, 2
    %v7684 = vsel %vm5689, %v7681, %v7683
    %v7685 = vrot.slane %v7660, 2
    %v7686 = vsel %vm5689, %v7683, %v7685
    %v7687 = vrot.slane %v7661, 2
    %v7688 = vsel %vm5689, %v7685, %v7687
    %v7690 = vsel %vm934, %v7664, 0
    %v7693 = vsel %vm934, %v7666, 0
    %v7696 = vsel %vm934, %v7668, 0
    %v7699 = vsel %vm934, %v7670, 0
    %v7702 = vsel %vm934, %v7672, 0
    %v7705 = vsel %vm934, %v7674, 0
    %v7708 = vsel %vm934, %v7676, 0
    %v7711 = vsel %vm934, %v7678, 0
    %v7714 = vsel %vm934, %v7680, 0
    %v7717 = vsel %vm934, %v7682, 0
    %v7720 = vsel %vm934, %v7684, 0
    %v7723 = vsel %vm934, %v7686, 0
    %v7726 = vsel %vm934, %v7688, 0
    %v7729 = vsel %vm934, %v7687, 0
    %v7732 = vsel %vm977, %v7591, 0
    %7734 = vmatprep.subr.bf16.mxu0 0
    %7735 = vmatpush1.bf16.msra.mxu0 0
    %7736 = vmatprep.subr.bf16.mxu0 0
    %7737 = vmatpush1.bf16.msra.mxu0 0
    %7738 = vmatprep.subr.bf16.mxu0 0
    %7739 = vmatpush1.bf16.msra.mxu0 0
    %7740 = vmatprep.subr.bf16.mxu0 0
    %7741 = vmatpush1.bf16.msra.mxu0 0
    %7742 = vmatprep.subr.bf16.mxu0 0
    %7743 = vmatpush1.bf16.msra.mxu0 0
    %7744 = vmatprep.subr.bf16.mxu0 0
    %7745 = vmatpush1.bf16.msra.mxu0 0
    %7746 = vmatprep.subr.bf16.mxu0 0
    %7747 = vmatpush1.bf16.msra.mxu0 0
    %7748 = vmatprep.subr.bf16.mxu0 0
    %7749 = vmatpush1.bf16.msra.mxu0 %v7732
    %7750 = vmatprep.subr.bf16.mxu0 0
    %7751 = vmatpush2.bf16.msra.mxu0 0
    %7752 = vmatprep.subr.bf16.mxu0 0
    %7753 = vmatpush2.bf16.msra.mxu0 0
    %7754 = vmatprep.subr.bf16.mxu0 0
    %7755 = vmatpush2.bf16.msra.mxu0 0
    %7756 = vmatprep.subr.bf16.mxu0 0
    %7757 = vmatpush2.bf16.msra.mxu0 0
    %7758 = vmatprep.subr.bf16.mxu0 0
    %7759 = vmatpush2.bf16.msra.mxu0 0
    %7760 = vmatprep.subr.bf16.mxu0 0
    %7761 = vmatpush2.bf16.msra.mxu0 0
    %7762 = vmatprep.subr.bf16.mxu0 0
    %7763 = vmatpush2.bf16.msra.mxu0 0
    %7764 = vmatprep.subr.bf16.mxu0 0
    %7765 = vmatpush2.bf16.msra.mxu0 0
    %7766 = vmatprep.mubr.bf16.mxu0 0
    %7767 = vmatmul.mubr.bf16.gmra.mxu0 %v7690
    %v7768 = vpop.f32.mrf.mxu0
    %v7769 = vadd.f32 0.0, %v7768
    %v7770 = vpop.f32.mrf.mxu0
    %v7771 = vpop.f32.mrf.mxu0
    %v7772 = vadd.f32 0.0, %v7771
    %v7773 = vpop.f32.mrf.mxu0
    %7774 = vmatprep.mubr.bf16.mxu0 0
    %7775 = vmatmul.mubr.bf16.gmra.mxu0 %v7693
    %v7776 = vpop.f32.mrf.mxu0
    %v7777 = vadd.f32 0.0, %v7776
    %v7778 = vpop.f32.mrf.mxu0
    %v7779 = vpop.f32.mrf.mxu0
    %v7780 = vadd.f32 0.0, %v7779
    %v7781 = vpop.f32.mrf.mxu0
    %7782 = vmatprep.mubr.bf16.mxu0 0
    %7783 = vmatmul.mubr.bf16.gmra.mxu0 %v7696
    %v7784 = vpop.f32.mrf.mxu0
    %v7785 = vadd.f32 0.0, %v7784
    %v7786 = vpop.f32.mrf.mxu0
    %v7787 = vpop.f32.mrf.mxu0
    %v7788 = vadd.f32 0.0, %v7787
    %v7789 = vpop.f32.mrf.mxu0
    %7790 = vmatprep.mubr.bf16.mxu0 0
    %7791 = vmatmul.mubr.bf16.gmra.mxu0 %v7699
    %v7792 = vpop.f32.mrf.mxu0
    %v7793 = vadd.f32 0.0, %v7792
    %v7794 = vpop.f32.mrf.mxu0
    %v7795 = vpop.f32.mrf.mxu0
    %v7796 = vadd.f32 0.0, %v7795
    %v7797 = vpop.f32.mrf.mxu0
    %7798 = vmatprep.mubr.bf16.mxu0 0
    %7799 = vmatmul.mubr.bf16.gmra.mxu0 %v7702
    %v7800 = vpop.f32.mrf.mxu0
    %v7801 = vadd.f32 0.0, %v7800
    %v7802 = vpop.f32.mrf.mxu0
    %v7803 = vpop.f32.mrf.mxu0
    %v7804 = vadd.f32 0.0, %v7803
    %v7805 = vpop.f32.mrf.mxu0
    %7806 = vmatprep.mubr.bf16.mxu0 0
    %7807 = vmatmul.mubr.bf16.gmra.mxu0 %v7705
    %v7808 = vpop.f32.mrf.mxu0
    %v7809 = vadd.f32 0.0, %v7808
    %v7810 = vpop.f32.mrf.mxu0
    %v7811 = vpop.f32.mrf.mxu0
    %v7812 = vadd.f32 0.0, %v7811
    %v7813 = vpop.f32.mrf.mxu0
    %7814 = vmatprep.mubr.bf16.mxu0 0
    %7815 = vmatmul.mubr.bf16.gmra.mxu0 %v7708
    %v7816 = vpop.f32.mrf.mxu0
    %v7817 = vadd.f32 0.0, %v7816
    %v7818 = vpop.f32.mrf.mxu0
    %v7819 = vpop.f32.mrf.mxu0
    %v7820 = vadd.f32 0.0, %v7819
    %v7821 = vpop.f32.mrf.mxu0
    %7822 = vmatprep.mubr.bf16.mxu0 0
    %7823 = vmatmul.mubr.bf16.gmra.mxu0 %v7711
    %v7824 = vpop.f32.mrf.mxu0
    %v7825 = vadd.f32 0.0, %v7824
    %v7826 = vpop.f32.mrf.mxu0
    %v7827 = vpop.f32.mrf.mxu0
    %v7828 = vadd.f32 0.0, %v7827
    %v7829 = vpop.f32.mrf.mxu0
    %7830 = vmatprep.mubr.bf16.mxu0 0
    %7831 = vmatmul.mubr.bf16.gmra.mxu0 %v7714
    %v7832 = vpop.f32.mrf.mxu0
    %v7833 = vadd.f32 0.0, %v7832
    %v7834 = vpop.f32.mrf.mxu0
    %v7835 = vpop.f32.mrf.mxu0
    %v7836 = vadd.f32 0.0, %v7835
    %v7837 = vpop.f32.mrf.mxu0
    %7838 = vmatprep.mubr.bf16.mxu0 0
    %7839 = vmatmul.mubr.bf16.gmra.mxu0 %v7717
    %v7840 = vpop.f32.mrf.mxu0
    %v7841 = vadd.f32 0.0, %v7840
    %v7842 = vpop.f32.mrf.mxu0
    %v7843 = vpop.f32.mrf.mxu0
    %v7844 = vadd.f32 0.0, %v7843
    %v7845 = vpop.f32.mrf.mxu0
    %7846 = vmatprep.mubr.bf16.mxu0 0
    %7847 = vmatmul.mubr.bf16.gmra.mxu0 %v7720
    %v7848 = vpop.f32.mrf.mxu0
    %v7849 = vadd.f32 0.0, %v7848
    %v7850 = vpop.f32.mrf.mxu0
    %v7851 = vpop.f32.mrf.mxu0
    %v7852 = vadd.f32 0.0, %v7851
    %v7853 = vpop.f32.mrf.mxu0
    %7854 = vmatprep.mubr.bf16.mxu0 0
    %7855 = vmatmul.mubr.bf16.gmra.mxu0 %v7723
    %v7856 = vpop.f32.mrf.mxu0
    %v7857 = vadd.f32 0.0, %v7856
    %v7858 = vpop.f32.mrf.mxu0
    %v7859 = vpop.f32.mrf.mxu0
    %v7860 = vadd.f32 0.0, %v7859
    %v7861 = vpop.f32.mrf.mxu0
    %7862 = vmatprep.mubr.bf16.mxu0 0
    %7863 = vmatmul.mubr.bf16.gmra.mxu0 %v7726
    %v7864 = vpop.f32.mrf.mxu0
    %v7865 = vadd.f32 0.0, %v7864
    %v7866 = vpop.f32.mrf.mxu0
    %v7867 = vpop.f32.mrf.mxu0
    %v7868 = vadd.f32 0.0, %v7867
    %v7869 = vpop.f32.mrf.mxu0
    %7870 = vmatprep.mubr.bf16.mxu0 0
    %7871 = vmatmul.mubr.bf16.gmra.mxu0 %v7729
    %v7872 = vpop.f32.mrf.mxu0
    %v7873 = vadd.f32 0.0, %v7872
    %v7874 = vpop.f32.mrf.mxu0
    %v7875 = vpop.f32.mrf.mxu0
    %v7876 = vpop.f32.mrf.mxu0
    %7877 = vdwg.mxu0
    %v7878 = vadd.f32 %v7535, %v7769
    %v7879 = vadd.f32 %v7536, %v7772
    %v7880 = vadd.f32 %v7537, %v7777
    %v7881 = vadd.f32 %v7538, %v7780
    %v7882 = vadd.f32 %v7539, %v7785
    %v7883 = vadd.f32 %v7540, %v7788
    %v7884 = vadd.f32 %v7541, %v7793
    %v7885 = vadd.f32 %v7542, %v7796
    %v7886 = vadd.f32 %v7543, %v7801
    %v7887 = vadd.f32 %v7544, %v7804
    %v7888 = vadd.f32 %v7545, %v7809
    %v7889 = vadd.f32 %v7546, %v7812
    %v7890 = vadd.f32 %v7547, %v7817
    %v7891 = vadd.f32 %v7548, %v7820
    %v7892 = vadd.f32 %v7549, %v7825
    %v7893 = vadd.f32 %v7550, %v7828
    %v7894 = vadd.f32 %v7551, %v7833
    %v7895 = vadd.f32 %v7552, %v7836
    %v7896 = vadd.f32 %v7553, %v7841
    %v7897 = vadd.f32 %v7554, %v7844
    %v7898 = vadd.f32 %v7555, %v7849
    %v7899 = vadd.f32 %v7556, %v7852
    %v7900 = vadd.f32 %v7557, %v7857
    %v7901 = vadd.f32 %v7558, %v7860
    %v7902 = vadd.f32 %v7559, %v7865
    %v7903 = vadd.f32 %v7560, %v7868
    %v7904 = vadd.f32 %v7561, %v7873
    %v7905 = vld [vmem:[%s1152 + $0x8] sm:$0xc]
    %v7906 = vld [vmem:[%s1152 + $0xc] sm:$0xf]
    %v7907 = vld [vmem:[%s1152 + $0x10] sm:$0xf]
    %v7908 = vld [vmem:[%s1152 + $0x14] sm:$0xf]
    %v7909 = vld [vmem:[%s1152 + $0x18] sm:$0xf]
    %v7910 = vld [vmem:[%s1152 + $0x1c] sm:$0xf]
    %v7911 = vld [vmem:[%s1152 + $0x20] sm:$0xf]
    %v7912 = vld [vmem:[%s1152 + $0x24] sm:$0xf]
    %v7913 = vld [vmem:[%s1152 + $0x28] sm:$0xf]
    %v7914 = vld [vmem:[%s1152 + $0x2c] sm:$0xf]
    %v7915 = vld [vmem:[%s1152 + $0x30] sm:$0xf]
    %v7916 = vld [vmem:[%s1152 + $0x34] sm:$0xf]
    %v7917 = vld [vmem:[%s1152 + $0x38] sm:$0xf]
    %v7918 = vld [vmem:[%s1152 + $0x3c] sm:$0xf]
    %v7919 = vld [vmem:[%s1152 + $0x40] sm:$0xf]
    %v7920 = vld [vmem:[%s1152 + $0x44] sm:$0xf]
    %v7921 = vld [vmem:[%s1152 + $0x48] sm:$0xf]
    %v7922 = vld [vmem:[%s1152 + $0x4c] sm:$0xf]
    %v7923 = vld [vmem:[%s1152 + $0x50] sm:$0xf]
    %v7924 = vld [vmem:[%s1152 + $0x54] sm:$0xf]
    %v7925 = vld [vmem:[%s1152 + $0x58] sm:$0xf]
    %v7926 = vld [vmem:[%s1152 + $0x5c] sm:$0xf]
    %v7927 = vld [vmem:[%s1152 + $0x60] sm:$0xf]
    %v7928 = vld [vmem:[%s1152 + $0x64] sm:$0xf]
    %v7929 = vld [vmem:[%s1152 + $0x68] sm:$0xf]
    %v7930 = vld [vmem:[%s1152 + $0x6c] sm:$0xf]
    %v7931 = vld [vmem:[%s1152 + $0x70] sm:$0xf]
    %v7932 = vld [vmem:[%s1152 + $0x74] sm:$0x3]
    %s7933 = scalar_lea.vmem %s2, 84
    %v7934 = vld [vmem:[%s7933] sm:$0xf]
    %v7963 = vunpack.c.l.b16 %v7905
    %v7964 = vunpack.c.l.b16 %v7906
    %v7965 = vunpack.c.l.b16 %v7907
    %v7966 = vunpack.c.l.b16 %v7908
    %v7967 = vunpack.c.l.b16 %v7909
    %v7968 = vunpack.c.l.b16 %v7910
    %v7969 = vunpack.c.l.b16 %v7911
    %v7970 = vunpack.c.l.b16 %v7912
    %v7971 = vunpack.c.l.b16 %v7913
    %v7972 = vunpack.c.l.b16 %v7914
    %v7973 = vunpack.c.l.b16 %v7915
    %v7974 = vunpack.c.l.b16 %v7916
    %v7975 = vunpack.c.l.b16 %v7917
    %v7976 = vunpack.c.l.b16 %v7918
    %v7977 = vunpack.c.l.b16 %v7919
    %v7978 = vunpack.c.l.b16 %v7920
    %v7979 = vunpack.c.l.b16 %v7921
    %v7980 = vunpack.c.l.b16 %v7922
    %v7981 = vunpack.c.l.b16 %v7923
    %v7982 = vunpack.c.l.b16 %v7924
    %v7983 = vunpack.c.l.b16 %v7925
    %v7984 = vunpack.c.l.b16 %v7926
    %v7985 = vunpack.c.l.b16 %v7927
    %v7986 = vunpack.c.l.b16 %v7928
    %v7987 = vunpack.c.l.b16 %v7929
    %v7988 = vunpack.c.l.b16 %v7930
    %v7989 = vunpack.c.l.b16 %v7931
    %v7990 = vunpack.c.l.b16 %v7932
    %v7991 = vpack.c.b16 %v7964, %v7963
    %v7992 = vpack.c.b16 %v7966, %v7965
    %v7993 = vpack.c.b16 %v7968, %v7967
    %v7994 = vpack.c.b16 %v7970, %v7969
    %v7995 = vpack.c.b16 %v7972, %v7971
    %v7996 = vpack.c.b16 %v7974, %v7973
    %v7997 = vpack.c.b16 %v7976, %v7975
    %v7998 = vpack.c.b16 %v7978, %v7977
    %v7999 = vpack.c.b16 %v7980, %v7979
    %v8000 = vpack.c.b16 %v7982, %v7981
    %v8001 = vpack.c.b16 %v7984, %v7983
    %v8002 = vpack.c.b16 %v7986, %v7985
    %v8003 = vpack.c.b16 %v7988, %v7987
    %v8004 = vpack.c.b16 %v7990, %v7989
    %v8005 = vrot.slane %v7991, 2
    %v8006 = vrot.slane %v7992, 2
    %v8007 = vsel %vm5689, %v8005, %v8006
    %v8008 = vrot.slane %v7993, 2
    %v8009 = vsel %vm5689, %v8006, %v8008
    %v8010 = vrot.slane %v7994, 2
    %v8011 = vsel %vm5689, %v8008, %v8010
    %v8012 = vrot.slane %v7995, 2
    %v8013 = vsel %vm5689, %v8010, %v8012
    %v8014 = vrot.slane %v7996, 2
    %v8015 = vsel %vm5689, %v8012, %v8014
    %v8016 = vrot.slane %v7997, 2
    %v8017 = vsel %vm5689, %v8014, %v8016
    %v8018 = vrot.slane %v7998, 2
    %v8019 = vsel %vm5689, %v8016, %v8018
    %v8020 = vrot.slane %v7999, 2
    %v8021 = vsel %vm5689, %v8018, %v8020
    %v8022 = vrot.slane %v8000, 2
    %v8023 = vsel %vm5689, %v8020, %v8022
    %v8024 = vrot.slane %v8001, 2
    %v8025 = vsel %vm5689, %v8022, %v8024
    %v8026 = vrot.slane %v8002, 2
    %v8027 = vsel %vm5689, %v8024, %v8026
    %v8028 = vrot.slane %v8003, 2
    %v8029 = vsel %vm5689, %v8026, %v8028
    %v8030 = vrot.slane %v8004, 2
    %v8031 = vsel %vm5689, %v8028, %v8030
    %v8033 = vsel %vm934, %v8007, 0
    %v8036 = vsel %vm934, %v8009, 0
    %v8039 = vsel %vm934, %v8011, 0
    %v8042 = vsel %vm934, %v8013, 0
    %v8045 = vsel %vm934, %v8015, 0
    %v8048 = vsel %vm934, %v8017, 0
    %v8051 = vsel %vm934, %v8019, 0
    %v8054 = vsel %vm934, %v8021, 0
    %v8057 = vsel %vm934, %v8023, 0
    %v8060 = vsel %vm934, %v8025, 0
    %v8063 = vsel %vm934, %v8027, 0
    %v8066 = vsel %vm934, %v8029, 0
    %v8069 = vsel %vm934, %v8031, 0
    %v8072 = vsel %vm934, %v8030, 0
    %v8075 = vsel %vm977, %v7934, 0
    %8077 = vmatprep.subr.bf16.mxu0 0
    %8078 = vmatpush1.bf16.msra.mxu0 0
    %8079 = vmatprep.subr.bf16.mxu0 0
    %8080 = vmatpush1.bf16.msra.mxu0 0
    %8081 = vmatprep.subr.bf16.mxu0 0
    %8082 = vmatpush1.bf16.msra.mxu0 0
    %8083 = vmatprep.subr.bf16.mxu0 0
    %8084 = vmatpush1.bf16.msra.mxu0 0
    %8085 = vmatprep.subr.bf16.mxu0 0
    %8086 = vmatpush1.bf16.msra.mxu0 0
    %8087 = vmatprep.subr.bf16.mxu0 0
    %8088 = vmatpush1.bf16.msra.mxu0 0
    %8089 = vmatprep.subr.bf16.mxu0 0
    %8090 = vmatpush1.bf16.msra.mxu0 0
    %8091 = vmatprep.subr.bf16.mxu0 0
    %8092 = vmatpush1.bf16.msra.mxu0 %v8075
    %8093 = vmatprep.subr.bf16.mxu0 0
    %8094 = vmatpush2.bf16.msra.mxu0 0
    %8095 = vmatprep.subr.bf16.mxu0 0
    %8096 = vmatpush2.bf16.msra.mxu0 0
    %8097 = vmatprep.subr.bf16.mxu0 0
    %8098 = vmatpush2.bf16.msra.mxu0 0
    %8099 = vmatprep.subr.bf16.mxu0 0
    %8100 = vmatpush2.bf16.msra.mxu0 0
    %8101 = vmatprep.subr.bf16.mxu0 0
    %8102 = vmatpush2.bf16.msra.mxu0 0
    %8103 = vmatprep.subr.bf16.mxu0 0
    %8104 = vmatpush2.bf16.msra.mxu0 0
    %8105 = vmatprep.subr.bf16.mxu0 0
    %8106 = vmatpush2.bf16.msra.mxu0 0
    %8107 = vmatprep.subr.bf16.mxu0 0
    %8108 = vmatpush2.bf16.msra.mxu0 0
    %8109 = vmatprep.mubr.bf16.mxu0 0
    %8110 = vmatmul.mubr.bf16.gmra.mxu0 %v8033
    %v8111 = vpop.f32.mrf.mxu0
    %v8112 = vadd.f32 0.0, %v8111
    %v8113 = vpop.f32.mrf.mxu0
    %v8114 = vpop.f32.mrf.mxu0
    %v8115 = vadd.f32 0.0, %v8114
    %v8116 = vpop.f32.mrf.mxu0
    %8117 = vmatprep.mubr.bf16.mxu0 0
    %8118 = vmatmul.mubr.bf16.gmra.mxu0 %v8036
    %v8119 = vpop.f32.mrf.mxu0
    %v8120 = vadd.f32 0.0, %v8119
    %v8121 = vpop.f32.mrf.mxu0
    %v8122 = vpop.f32.mrf.mxu0
    %v8123 = vadd.f32 0.0, %v8122
    %v8124 = vpop.f32.mrf.mxu0
    %8125 = vmatprep.mubr.bf16.mxu0 0
    %8126 = vmatmul.mubr.bf16.gmra.mxu0 %v8039
    %v8127 = vpop.f32.mrf.mxu0
    %v8128 = vadd.f32 0.0, %v8127
    %v8129 = vpop.f32.mrf.mxu0
    %v8130 = vpop.f32.mrf.mxu0
    %v8131 = vadd.f32 0.0, %v8130
    %v8132 = vpop.f32.mrf.mxu0
    %8133 = vmatprep.mubr.bf16.mxu0 0
    %8134 = vmatmul.mubr.bf16.gmra.mxu0 %v8042
    %v8135 = vpop.f32.mrf.mxu0
    %v8136 = vadd.f32 0.0, %v8135
    %v8137 = vpop.f32.mrf.mxu0
    %v8138 = vpop.f32.mrf.mxu0
    %v8139 = vadd.f32 0.0, %v8138
    %v8140 = vpop.f32.mrf.mxu0
    %8141 = vmatprep.mubr.bf16.mxu0 0
    %8142 = vmatmul.mubr.bf16.gmra.mxu0 %v8045
    %v8143 = vpop.f32.mrf.mxu0
    %v8144 = vadd.f32 0.0, %v8143
    %v8145 = vpop.f32.mrf.mxu0
    %v8146 = vpop.f32.mrf.mxu0
    %v8147 = vadd.f32 0.0, %v8146
    %v8148 = vpop.f32.mrf.mxu0
    %8149 = vmatprep.mubr.bf16.mxu0 0
    %8150 = vmatmul.mubr.bf16.gmra.mxu0 %v8048
    %v8151 = vpop.f32.mrf.mxu0
    %v8152 = vadd.f32 0.0, %v8151
    %v8153 = vpop.f32.mrf.mxu0
    %v8154 = vpop.f32.mrf.mxu0
    %v8155 = vadd.f32 0.0, %v8154
    %v8156 = vpop.f32.mrf.mxu0
    %8157 = vmatprep.mubr.bf16.mxu0 0
    %8158 = vmatmul.mubr.bf16.gmra.mxu0 %v8051
    %v8159 = vpop.f32.mrf.mxu0
    %v8160 = vadd.f32 0.0, %v8159
    %v8161 = vpop.f32.mrf.mxu0
    %v8162 = vpop.f32.mrf.mxu0
    %v8163 = vadd.f32 0.0, %v8162
    %v8164 = vpop.f32.mrf.mxu0
    %8165 = vmatprep.mubr.bf16.mxu0 0
    %8166 = vmatmul.mubr.bf16.gmra.mxu0 %v8054
    %v8167 = vpop.f32.mrf.mxu0
    %v8168 = vadd.f32 0.0, %v8167
    %v8169 = vpop.f32.mrf.mxu0
    %v8170 = vpop.f32.mrf.mxu0
    %v8171 = vadd.f32 0.0, %v8170
    %v8172 = vpop.f32.mrf.mxu0
    %8173 = vmatprep.mubr.bf16.mxu0 0
    %8174 = vmatmul.mubr.bf16.gmra.mxu0 %v8057
    %v8175 = vpop.f32.mrf.mxu0
    %v8176 = vadd.f32 0.0, %v8175
    %v8177 = vpop.f32.mrf.mxu0
    %v8178 = vpop.f32.mrf.mxu0
    %v8179 = vadd.f32 0.0, %v8178
    %v8180 = vpop.f32.mrf.mxu0
    %8181 = vmatprep.mubr.bf16.mxu0 0
    %8182 = vmatmul.mubr.bf16.gmra.mxu0 %v8060
    %v8183 = vpop.f32.mrf.mxu0
    %v8184 = vadd.f32 0.0, %v8183
    %v8185 = vpop.f32.mrf.mxu0
    %v8186 = vpop.f32.mrf.mxu0
    %v8187 = vadd.f32 0.0, %v8186
    %v8188 = vpop.f32.mrf.mxu0
    %8189 = vmatprep.mubr.bf16.mxu0 0
    %8190 = vmatmul.mubr.bf16.gmra.mxu0 %v8063
    %v8191 = vpop.f32.mrf.mxu0
    %v8192 = vadd.f32 0.0, %v8191
    %v8193 = vpop.f32.mrf.mxu0
    %v8194 = vpop.f32.mrf.mxu0
    %v8195 = vadd.f32 0.0, %v8194
    %v8196 = vpop.f32.mrf.mxu0
    %8197 = vmatprep.mubr.bf16.mxu0 0
    %8198 = vmatmul.mubr.bf16.gmra.mxu0 %v8066
    %v8199 = vpop.f32.mrf.mxu0
    %v8200 = vadd.f32 0.0, %v8199
    %v8201 = vpop.f32.mrf.mxu0
    %v8202 = vpop.f32.mrf.mxu0
    %v8203 = vadd.f32 0.0, %v8202
    %v8204 = vpop.f32.mrf.mxu0
    %8205 = vmatprep.mubr.bf16.mxu0 0
    %8206 = vmatmul.mubr.bf16.gmra.mxu0 %v8069
    %v8207 = vpop.f32.mrf.mxu0
    %v8208 = vadd.f32 0.0, %v8207
    %v8209 = vpop.f32.mrf.mxu0
    %v8210 = vpop.f32.mrf.mxu0
    %v8211 = vadd.f32 0.0, %v8210
    %v8212 = vpop.f32.mrf.mxu0
    %8213 = vmatprep.mubr.bf16.mxu0 0
    %8214 = vmatmul.mubr.bf16.gmra.mxu0 %v8072
    %v8215 = vpop.f32.mrf.mxu0
    %v8216 = vadd.f32 0.0, %v8215
    %v8217 = vpop.f32.mrf.mxu0
    %v8218 = vpop.f32.mrf.mxu0
    %v8219 = vpop.f32.mrf.mxu0
    %8220 = vdwg.mxu0
    %v8221 = vadd.f32 %v7878, %v8112
    %v8222 = vadd.f32 %v7879, %v8115
    %v8223 = vadd.f32 %v7880, %v8120
    %v8224 = vadd.f32 %v7881, %v8123
    %v8225 = vadd.f32 %v7882, %v8128
    %v8226 = vadd.f32 %v7883, %v8131
    %v8227 = vadd.f32 %v7884, %v8136
    %v8228 = vadd.f32 %v7885, %v8139
    %v8229 = vadd.f32 %v7886, %v8144
    %v8230 = vadd.f32 %v7887, %v8147
    %v8231 = vadd.f32 %v7888, %v8152
    %v8232 = vadd.f32 %v7889, %v8155
    %v8233 = vadd.f32 %v7890, %v8160
    %v8234 = vadd.f32 %v7891, %v8163
    %v8235 = vadd.f32 %v7892, %v8168
    %v8236 = vadd.f32 %v7893, %v8171
    %v8237 = vadd.f32 %v7894, %v8176
    %v8238 = vadd.f32 %v7895, %v8179
    %v8239 = vadd.f32 %v7896, %v8184
    %v8240 = vadd.f32 %v7897, %v8187
    %v8241 = vadd.f32 %v7898, %v8192
    %v8242 = vadd.f32 %v7899, %v8195
    %v8243 = vadd.f32 %v7900, %v8200
    %v8244 = vadd.f32 %v7901, %v8203
    %v8245 = vadd.f32 %v7902, %v8208
    %v8246 = vadd.f32 %v7903, %v8211
    %v8247 = vadd.f32 %v7904, %v8216
    %v8248 = vld [vmem:[#allocation2 + $0x74] sm:$0x7]
    %s8249 = scalar_lea.vmem %s2, 88
    %v8250 = vld [vmem:[%s8249] sm:$0xf]
    %v8252 = vunpack.c.l.b16 %v8248
    %v8253 = vpack.c.b16 %v8252, %v7646
    %vm8254 = vsmask.f32 5376
    %v8256 = vshrl.u32 %v7648, 16
    %v8258 = vrot.slane %v8256, 2
    %v8259 = vshll.u32 %v7648, 16
    %v8261 = vrot.slane %v8259, 3
    %v8262 = vor.u32 %v8258, %v8261
    %v8264 = vshrl.u32 %v7649, 16
    %v8266 = vrot.slane %v8264, 2
    %v8267 = vshll.u32 %v7649, 16
    %v8269 = vrot.slane %v8267, 3
    %v8270 = vor.u32 %v8266, %v8269
    %v8271 = vsel %vm8254, %v8262, %v8270
    %v8273 = vshrl.u32 %v7650, 16
    %v8275 = vrot.slane %v8273, 2
    %v8276 = vshll.u32 %v7650, 16
    %v8278 = vrot.slane %v8276, 3
    %v8279 = vor.u32 %v8275, %v8278
    %v8280 = vsel %vm8254, %v8270, %v8279
    %v8282 = vshrl.u32 %v7651, 16
    %v8284 = vrot.slane %v8282, 2
    %v8285 = vshll.u32 %v7651, 16
    %v8287 = vrot.slane %v8285, 3
    %v8288 = vor.u32 %v8284, %v8287
    %v8289 = vsel %vm8254, %v8279, %v8288
    %v8291 = vshrl.u32 %v7652, 16
    %v8293 = vrot.slane %v8291, 2
    %v8294 = vshll.u32 %v7652, 16
    %v8296 = vrot.slane %v8294, 3
    %v8297 = vor.u32 %v8293, %v8296
    %v8298 = vsel %vm8254, %v8288, %v8297
    %v8300 = vshrl.u32 %v7653, 16
    %v8302 = vrot.slane %v8300, 2
    %v8303 = vshll.u32 %v7653, 16
    %v8305 = vrot.slane %v8303, 3
    %v8306 = vor.u32 %v8302, %v8305
    %v8307 = vsel %vm8254, %v8297, %v8306
    %v8309 = vshrl.u32 %v7654, 16
    %v8311 = vrot.slane %v8309, 2
    %v8312 = vshll.u32 %v7654, 16
    %v8314 = vrot.slane %v8312, 3
    %v8315 = vor.u32 %v8311, %v8314
    %v8316 = vsel %vm8254, %v8306, %v8315
    %v8318 = vshrl.u32 %v7655, 16
    %v8320 = vrot.slane %v8318, 2
    %v8321 = vshll.u32 %v7655, 16
    %v8323 = vrot.slane %v8321, 3
    %v8324 = vor.u32 %v8320, %v8323
    %v8325 = vsel %vm8254, %v8315, %v8324
    %v8327 = vshrl.u32 %v7656, 16
    %v8329 = vrot.slane %v8327, 2
    %v8330 = vshll.u32 %v7656, 16
    %v8332 = vrot.slane %v8330, 3
    %v8333 = vor.u32 %v8329, %v8332
    %v8334 = vsel %vm8254, %v8324, %v8333
    %v8336 = vshrl.u32 %v7657, 16
    %v8338 = vrot.slane %v8336, 2
    %v8339 = vshll.u32 %v7657, 16
    %v8341 = vrot.slane %v8339, 3
    %v8342 = vor.u32 %v8338, %v8341
    %v8343 = vsel %vm8254, %v8333, %v8342
    %v8345 = vshrl.u32 %v7658, 16
    %v8347 = vrot.slane %v8345, 2
    %v8348 = vshll.u32 %v7658, 16
    %v8350 = vrot.slane %v8348, 3
    %v8351 = vor.u32 %v8347, %v8350
    %v8352 = vsel %vm8254, %v8342, %v8351
    %v8354 = vshrl.u32 %v7659, 16
    %v8356 = vrot.slane %v8354, 2
    %v8357 = vshll.u32 %v7659, 16
    %v8359 = vrot.slane %v8357, 3
    %v8360 = vor.u32 %v8356, %v8359
    %v8361 = vsel %vm8254, %v8351, %v8360
    %v8363 = vshrl.u32 %v7660, 16
    %v8365 = vrot.slane %v8363, 2
    %v8366 = vshll.u32 %v7660, 16
    %v8368 = vrot.slane %v8366, 3
    %v8369 = vor.u32 %v8365, %v8368
    %v8370 = vsel %vm8254, %v8360, %v8369
    %v8372 = vshrl.u32 %v8253, 16
    %v8374 = vrot.slane %v8372, 2
    %v8375 = vshll.u32 %v8253, 16
    %v8377 = vrot.slane %v8375, 3
    %v8378 = vor.u32 %v8374, %v8377
    %v8379 = vsel %vm8254, %v8369, %v8378
    %v8381 = vsel %vm934, %v8271, 0
    %v8384 = vsel %vm934, %v8280, 0
    %v8387 = vsel %vm934, %v8289, 0
    %v8390 = vsel %vm934, %v8298, 0
    %v8393 = vsel %vm934, %v8307, 0
    %v8396 = vsel %vm934, %v8316, 0
    %v8399 = vsel %vm934, %v8325, 0
    %v8402 = vsel %vm934, %v8334, 0
    %v8405 = vsel %vm934, %v8343, 0
    %v8408 = vsel %vm934, %v8352, 0
    %v8411 = vsel %vm934, %v8361, 0
    %v8414 = vsel %vm934, %v8370, 0
    %v8417 = vsel %vm934, %v8379, 0
    %v8420 = vsel %vm934, %v8378, 0
    %v8423 = vsel %vm977, %v8250, 0
    %8425 = vmatprep.subr.bf16.mxu0 0
    %8426 = vmatpush1.bf16.msra.mxu0 0
    %8427 = vmatprep.subr.bf16.mxu0 0
    %8428 = vmatpush1.bf16.msra.mxu0 0
    %8429 = vmatprep.subr.bf16.mxu0 0
    %8430 = vmatpush1.bf16.msra.mxu0 0
    %8431 = vmatprep.subr.bf16.mxu0 0
    %8432 = vmatpush1.bf16.msra.mxu0 0
    %8433 = vmatprep.subr.bf16.mxu0 0
    %8434 = vmatpush1.bf16.msra.mxu0 0
    %8435 = vmatprep.subr.bf16.mxu0 0
    %8436 = vmatpush1.bf16.msra.mxu0 0
    %8437 = vmatprep.subr.bf16.mxu0 0
    %8438 = vmatpush1.bf16.msra.mxu0 0
    %8439 = vmatprep.subr.bf16.mxu0 0
    %8440 = vmatpush1.bf16.msra.mxu0 %v8423
    %8441 = vmatprep.subr.bf16.mxu0 0
    %8442 = vmatpush2.bf16.msra.mxu0 0
    %8443 = vmatprep.subr.bf16.mxu0 0
    %8444 = vmatpush2.bf16.msra.mxu0 0
    %8445 = vmatprep.subr.bf16.mxu0 0
    %8446 = vmatpush2.bf16.msra.mxu0 0
    %8447 = vmatprep.subr.bf16.mxu0 0
    %8448 = vmatpush2.bf16.msra.mxu0 0
    %8449 = vmatprep.subr.bf16.mxu0 0
    %8450 = vmatpush2.bf16.msra.mxu0 0
    %8451 = vmatprep.subr.bf16.mxu0 0
    %8452 = vmatpush2.bf16.msra.mxu0 0
    %8453 = vmatprep.subr.bf16.mxu0 0
    %8454 = vmatpush2.bf16.msra.mxu0 0
    %8455 = vmatprep.subr.bf16.mxu0 0
    %8456 = vmatpush2.bf16.msra.mxu0 0
    %8457 = vmatprep.mubr.bf16.mxu0 0
    %8458 = vmatmul.mubr.bf16.gmra.mxu0 %v8381
    %v8459 = vpop.f32.mrf.mxu0
    %v8460 = vadd.f32 0.0, %v8459
    %v8461 = vpop.f32.mrf.mxu0
    %v8462 = vpop.f32.mrf.mxu0
    %v8463 = vadd.f32 0.0, %v8462
    %v8464 = vpop.f32.mrf.mxu0
    %8465 = vmatprep.mubr.bf16.mxu0 0
    %8466 = vmatmul.mubr.bf16.gmra.mxu0 %v8384
    %v8467 = vpop.f32.mrf.mxu0
    %v8468 = vadd.f32 0.0, %v8467
    %v8469 = vpop.f32.mrf.mxu0
    %v8470 = vpop.f32.mrf.mxu0
    %v8471 = vadd.f32 0.0, %v8470
    %v8472 = vpop.f32.mrf.mxu0
    %8473 = vmatprep.mubr.bf16.mxu0 0
    %8474 = vmatmul.mubr.bf16.gmra.mxu0 %v8387
    %v8475 = vpop.f32.mrf.mxu0
    %v8476 = vadd.f32 0.0, %v8475
    %v8477 = vpop.f32.mrf.mxu0
    %v8478 = vpop.f32.mrf.mxu0
    %v8479 = vadd.f32 0.0, %v8478
    %v8480 = vpop.f32.mrf.mxu0
    %8481 = vmatprep.mubr.bf16.mxu0 0
    %8482 = vmatmul.mubr.bf16.gmra.mxu0 %v8390
    %v8483 = vpop.f32.mrf.mxu0
    %v8484 = vadd.f32 0.0, %v8483
    %v8485 = vpop.f32.mrf.mxu0
    %v8486 = vpop.f32.mrf.mxu0
    %v8487 = vadd.f32 0.0, %v8486
    %v8488 = vpop.f32.mrf.mxu0
    %8489 = vmatprep.mubr.bf16.mxu0 0
    %8490 = vmatmul.mubr.bf16.gmra.mxu0 %v8393
    %v8491 = vpop.f32.mrf.mxu0
    %v8492 = vadd.f32 0.0, %v8491
    %v8493 = vpop.f32.mrf.mxu0
    %v8494 = vpop.f32.mrf.mxu0
    %v8495 = vadd.f32 0.0, %v8494
    %v8496 = vpop.f32.mrf.mxu0
    %8497 = vmatprep.mubr.bf16.mxu0 0
    %8498 = vmatmul.mubr.bf16.gmra.mxu0 %v8396
    %v8499 = vpop.f32.mrf.mxu0
    %v8500 = vadd.f32 0.0, %v8499
    %v8501 = vpop.f32.mrf.mxu0
    %v8502 = vpop.f32.mrf.mxu0
    %v8503 = vadd.f32 0.0, %v8502
    %v8504 = vpop.f32.mrf.mxu0
    %8505 = vmatprep.mubr.bf16.mxu0 0
    %8506 = vmatmul.mubr.bf16.gmra.mxu0 %v8399
    %v8507 = vpop.f32.mrf.mxu0
    %v8508 = vadd.f32 0.0, %v8507
    %v8509 = vpop.f32.mrf.mxu0
    %v8510 = vpop.f32.mrf.mxu0
    %v8511 = vadd.f32 0.0, %v8510
    %v8512 = vpop.f32.mrf.mxu0
    %8513 = vmatprep.mubr.bf16.mxu0 0
    %8514 = vmatmul.mubr.bf16.gmra.mxu0 %v8402
    %v8515 = vpop.f32.mrf.mxu0
    %v8516 = vadd.f32 0.0, %v8515
    %v8517 = vpop.f32.mrf.mxu0
    %v8518 = vpop.f32.mrf.mxu0
    %v8519 = vadd.f32 0.0, %v8518
    %v8520 = vpop.f32.mrf.mxu0
    %8521 = vmatprep.mubr.bf16.mxu0 0
    %8522 = vmatmul.mubr.bf16.gmra.mxu0 %v8405
    %v8523 = vpop.f32.mrf.mxu0
    %v8524 = vadd.f32 0.0, %v8523
    %v8525 = vpop.f32.mrf.mxu0
    %v8526 = vpop.f32.mrf.mxu0
    %v8527 = vadd.f32 0.0, %v8526
    %v8528 = vpop.f32.mrf.mxu0
    %8529 = vmatprep.mubr.bf16.mxu0 0
    %8530 = vmatmul.mubr.bf16.gmra.mxu0 %v8408
    %v8531 = vpop.f32.mrf.mxu0
    %v8532 = vadd.f32 0.0, %v8531
    %v8533 = vpop.f32.mrf.mxu0
    %v8534 = vpop.f32.mrf.mxu0
    %v8535 = vadd.f32 0.0, %v8534
    %v8536 = vpop.f32.mrf.mxu0
    %8537 = vmatprep.mubr.bf16.mxu0 0
    %8538 = vmatmul.mubr.bf16.gmra.mxu0 %v8411
    %v8539 = vpop.f32.mrf.mxu0
    %v8540 = vadd.f32 0.0, %v8539
    %v8541 = vpop.f32.mrf.mxu0
    %v8542 = vpop.f32.mrf.mxu0
    %v8543 = vadd.f32 0.0, %v8542
    %v8544 = vpop.f32.mrf.mxu0
    %8545 = vmatprep.mubr.bf16.mxu0 0
    %8546 = vmatmul.mubr.bf16.gmra.mxu0 %v8414
    %v8547 = vpop.f32.mrf.mxu0
    %v8548 = vadd.f32 0.0, %v8547
    %v8549 = vpop.f32.mrf.mxu0
    %v8550 = vpop.f32.mrf.mxu0
    %v8551 = vadd.f32 0.0, %v8550
    %v8552 = vpop.f32.mrf.mxu0
    %8553 = vmatprep.mubr.bf16.mxu0 0
    %8554 = vmatmul.mubr.bf16.gmra.mxu0 %v8417
    %v8555 = vpop.f32.mrf.mxu0
    %v8556 = vadd.f32 0.0, %v8555
    %v8557 = vpop.f32.mrf.mxu0
    %v8558 = vpop.f32.mrf.mxu0
    %v8559 = vadd.f32 0.0, %v8558
    %v8560 = vpop.f32.mrf.mxu0
    %8561 = vmatprep.mubr.bf16.mxu0 0
    %8562 = vmatmul.mubr.bf16.gmra.mxu0 %v8420
    %v8563 = vpop.f32.mrf.mxu0
    %v8564 = vadd.f32 0.0, %v8563
    %v8565 = vpop.f32.mrf.mxu0
    %v8566 = vpop.f32.mrf.mxu0
    %v8567 = vpop.f32.mrf.mxu0
    %8568 = vdwg.mxu0
    %v8569 = vadd.f32 %v8221, %v8460
    %v8570 = vadd.f32 %v8222, %v8463
    %v8571 = vadd.f32 %v8223, %v8468
    %v8572 = vadd.f32 %v8224, %v8471
    %v8573 = vadd.f32 %v8225, %v8476
    %v8574 = vadd.f32 %v8226, %v8479
    %v8575 = vadd.f32 %v8227, %v8484
    %v8576 = vadd.f32 %v8228, %v8487
    %v8577 = vadd.f32 %v8229, %v8492
    %v8578 = vadd.f32 %v8230, %v8495
    %v8579 = vadd.f32 %v8231, %v8500
    %v8580 = vadd.f32 %v8232, %v8503
    %v8581 = vadd.f32 %v8233, %v8508
    %v8582 = vadd.f32 %v8234, %v8511
    %v8583 = vadd.f32 %v8235, %v8516
    %v8584 = vadd.f32 %v8236, %v8519
    %v8585 = vadd.f32 %v8237, %v8524
    %v8586 = vadd.f32 %v8238, %v8527
    %v8587 = vadd.f32 %v8239, %v8532
    %v8588 = vadd.f32 %v8240, %v8535
    %v8589 = vadd.f32 %v8241, %v8540
    %v8590 = vadd.f32 %v8242, %v8543
    %v8591 = vadd.f32 %v8243, %v8548
    %v8592 = vadd.f32 %v8244, %v8551
    %v8593 = vadd.f32 %v8245, %v8556
    %v8594 = vadd.f32 %v8246, %v8559
    %v8595 = vadd.f32 %v8247, %v8564
    %v8596 = vld [vmem:[%s1152 + $0x74] sm:$0x7]
    %s8597 = scalar_lea.vmem %s2, 92
    %v8598 = vld [vmem:[%s8597] sm:$0xf]
    %v8600 = vunpack.c.l.b16 %v8596
    %v8601 = vpack.c.b16 %v8600, %v7989
    %v8603 = vshrl.u32 %v7991, 16
    %v8605 = vrot.slane %v8603, 2
    %v8606 = vshll.u32 %v7991, 16
    %v8608 = vrot.slane %v8606, 3
    %v8609 = vor.u32 %v8605, %v8608
    %v8611 = vshrl.u32 %v7992, 16
    %v8613 = vrot.slane %v8611, 2
    %v8614 = vshll.u32 %v7992, 16
    %v8616 = vrot.slane %v8614, 3
    %v8617 = vor.u32 %v8613, %v8616
    %v8618 = vsel %vm8254, %v8609, %v8617
    %v8620 = vshrl.u32 %v7993, 16
    %v8622 = vrot.slane %v8620, 2
    %v8623 = vshll.u32 %v7993, 16
    %v8625 = vrot.slane %v8623, 3
    %v8626 = vor.u32 %v8622, %v8625
    %v8627 = vsel %vm8254, %v8617, %v8626
    %v8629 = vshrl.u32 %v7994, 16
    %v8631 = vrot.slane %v8629, 2
    %v8632 = vshll.u32 %v7994, 16
    %v8634 = vrot.slane %v8632, 3
    %v8635 = vor.u32 %v8631, %v8634
    %v8636 = vsel %vm8254, %v8626, %v8635
    %v8638 = vshrl.u32 %v7995, 16
    %v8640 = vrot.slane %v8638, 2
    %v8641 = vshll.u32 %v7995, 16
    %v8643 = vrot.slane %v8641, 3
    %v8644 = vor.u32 %v8640, %v8643
    %v8645 = vsel %vm8254, %v8635, %v8644
    %v8647 = vshrl.u32 %v7996, 16
    %v8649 = vrot.slane %v8647, 2
    %v8650 = vshll.u32 %v7996, 16
    %v8652 = vrot.slane %v8650, 3
    %v8653 = vor.u32 %v8649, %v8652
    %v8654 = vsel %vm8254, %v8644, %v8653
    %v8656 = vshrl.u32 %v7997, 16
    %v8658 = vrot.slane %v8656, 2
    %v8659 = vshll.u32 %v7997, 16
    %v8661 = vrot.slane %v8659, 3
    %v8662 = vor.u32 %v8658, %v8661
    %v8663 = vsel %vm8254, %v8653, %v8662
    %v8665 = vshrl.u32 %v7998, 16
    %v8667 = vrot.slane %v8665, 2
    %v8668 = vshll.u32 %v7998, 16
    %v8670 = vrot.slane %v8668, 3
    %v8671 = vor.u32 %v8667, %v8670
    %v8672 = vsel %vm8254, %v8662, %v8671
    %v8674 = vshrl.u32 %v7999, 16
    %v8676 = vrot.slane %v8674, 2
    %v8677 = vshll.u32 %v7999, 16
    %v8679 = vrot.slane %v8677, 3
    %v8680 = vor.u32 %v8676, %v8679
    %v8681 = vsel %vm8254, %v8671, %v8680
    %v8683 = vshrl.u32 %v8000, 16
    %v8685 = vrot.slane %v8683, 2
    %v8686 = vshll.u32 %v8000, 16
    %v8688 = vrot.slane %v8686, 3
    %v8689 = vor.u32 %v8685, %v8688
    %v8690 = vsel %vm8254, %v8680, %v8689
    %v8692 = vshrl.u32 %v8001, 16
    %v8694 = vrot.slane %v8692, 2
    %v8695 = vshll.u32 %v8001, 16
    %v8697 = vrot.slane %v8695, 3
    %v8698 = vor.u32 %v8694, %v8697
    %v8699 = vsel %vm8254, %v8689, %v8698
    %v8701 = vshrl.u32 %v8002, 16
    %v8703 = vrot.slane %v8701, 2
    %v8704 = vshll.u32 %v8002, 16
    %v8706 = vrot.slane %v8704, 3
    %v8707 = vor.u32 %v8703, %v8706
    %v8708 = vsel %vm8254, %v8698, %v8707
    %v8710 = vshrl.u32 %v8003, 16
    %v8712 = vrot.slane %v8710, 2
    %v8713 = vshll.u32 %v8003, 16
    %v8715 = vrot.slane %v8713, 3
    %v8716 = vor.u32 %v8712, %v8715
    %v8717 = vsel %vm8254, %v8707, %v8716
    %v8719 = vshrl.u32 %v8601, 16
    %v8721 = vrot.slane %v8719, 2
    %v8722 = vshll.u32 %v8601, 16
    %v8724 = vrot.slane %v8722, 3
    %v8725 = vor.u32 %v8721, %v8724
    %v8726 = vsel %vm8254, %v8716, %v8725
    %v8728 = vsel %vm934, %v8618, 0
    %v8731 = vsel %vm934, %v8627, 0
    %v8734 = vsel %vm934, %v8636, 0
    %v8737 = vsel %vm934, %v8645, 0
    %v8740 = vsel %vm934, %v8654, 0
    %v8743 = vsel %vm934, %v8663, 0
    %v8746 = vsel %vm934, %v8672, 0
    %v8749 = vsel %vm934, %v8681, 0
    %v8752 = vsel %vm934, %v8690, 0
    %v8755 = vsel %vm934, %v8699, 0
    %v8758 = vsel %vm934, %v8708, 0
    %v8761 = vsel %vm934, %v8717, 0
    %v8764 = vsel %vm934, %v8726, 0
    %v8767 = vsel %vm934, %v8725, 0
    %v8770 = vsel %vm977, %v8598, 0
    %8772 = vmatprep.subr.bf16.mxu0 0
    %8773 = vmatpush1.bf16.msra.mxu0 0
    %8774 = vmatprep.subr.bf16.mxu0 0
    %8775 = vmatpush1.bf16.msra.mxu0 0
    %8776 = vmatprep.subr.bf16.mxu0 0
    %8777 = vmatpush1.bf16.msra.mxu0 0
    %8778 = vmatprep.subr.bf16.mxu0 0
    %8779 = vmatpush1.bf16.msra.mxu0 0
    %8780 = vmatprep.subr.bf16.mxu0 0
    %8781 = vmatpush1.bf16.msra.mxu0 0
    %8782 = vmatprep.subr.bf16.mxu0 0
    %8783 = vmatpush1.bf16.msra.mxu0 0
    %8784 = vmatprep.subr.bf16.mxu0 0
    %8785 = vmatpush1.bf16.msra.mxu0 0
    %8786 = vmatprep.subr.bf16.mxu0 0
    %8787 = vmatpush1.bf16.msra.mxu0 %v8770
    %8788 = vmatprep.subr.bf16.mxu0 0
    %8789 = vmatpush2.bf16.msra.mxu0 0
    %8790 = vmatprep.subr.bf16.mxu0 0
    %8791 = vmatpush2.bf16.msra.mxu0 0
    %8792 = vmatprep.subr.bf16.mxu0 0
    %8793 = vmatpush2.bf16.msra.mxu0 0
    %8794 = vmatprep.subr.bf16.mxu0 0
    %8795 = vmatpush2.bf16.msra.mxu0 0
    %8796 = vmatprep.subr.bf16.mxu0 0
    %8797 = vmatpush2.bf16.msra.mxu0 0
    %8798 = vmatprep.subr.bf16.mxu0 0
    %8799 = vmatpush2.bf16.msra.mxu0 0
    %8800 = vmatprep.subr.bf16.mxu0 0
    %8801 = vmatpush2.bf16.msra.mxu0 0
    %8802 = vmatprep.subr.bf16.mxu0 0
    %8803 = vmatpush2.bf16.msra.mxu0 0
    %8804 = vmatprep.mubr.bf16.mxu0 0
    %8805 = vmatmul.mubr.bf16.gmra.mxu0 %v8728
    %v8806 = vpop.f32.mrf.mxu0
    %v8807 = vadd.f32 0.0, %v8806
    %v8808 = vpop.f32.mrf.mxu0
    %v8809 = vpop.f32.mrf.mxu0
    %v8810 = vadd.f32 0.0, %v8809
    %v8811 = vpop.f32.mrf.mxu0
    %8812 = vmatprep.mubr.bf16.mxu0 0
    %8813 = vmatmul.mubr.bf16.gmra.mxu0 %v8731
    %v8814 = vpop.f32.mrf.mxu0
    %v8815 = vadd.f32 0.0, %v8814
    %v8816 = vpop.f32.mrf.mxu0
    %v8817 = vpop.f32.mrf.mxu0
    %v8818 = vadd.f32 0.0, %v8817
    %v8819 = vpop.f32.mrf.mxu0
    %8820 = vmatprep.mubr.bf16.mxu0 0
    %8821 = vmatmul.mubr.bf16.gmra.mxu0 %v8734
    %v8822 = vpop.f32.mrf.mxu0
    %v8823 = vadd.f32 0.0, %v8822
    %v8824 = vpop.f32.mrf.mxu0
    %v8825 = vpop.f32.mrf.mxu0
    %v8826 = vadd.f32 0.0, %v8825
    %v8827 = vpop.f32.mrf.mxu0
    %8828 = vmatprep.mubr.bf16.mxu0 0
    %8829 = vmatmul.mubr.bf16.gmra.mxu0 %v8737
    %v8830 = vpop.f32.mrf.mxu0
    %v8831 = vadd.f32 0.0, %v8830
    %v8832 = vpop.f32.mrf.mxu0
    %v8833 = vpop.f32.mrf.mxu0
    %v8834 = vadd.f32 0.0, %v8833
    %v8835 = vpop.f32.mrf.mxu0
    %8836 = vmatprep.mubr.bf16.mxu0 0
    %8837 = vmatmul.mubr.bf16.gmra.mxu0 %v8740
    %v8838 = vpop.f32.mrf.mxu0
    %v8839 = vadd.f32 0.0, %v8838
    %v8840 = vpop.f32.mrf.mxu0
    %v8841 = vpop.f32.mrf.mxu0
    %v8842 = vadd.f32 0.0, %v8841
    %v8843 = vpop.f32.mrf.mxu0
    %8844 = vmatprep.mubr.bf16.mxu0 0
    %8845 = vmatmul.mubr.bf16.gmra.mxu0 %v8743
    %v8846 = vpop.f32.mrf.mxu0
    %v8847 = vadd.f32 0.0, %v8846
    %v8848 = vpop.f32.mrf.mxu0
    %v8849 = vpop.f32.mrf.mxu0
    %v8850 = vadd.f32 0.0, %v8849
    %v8851 = vpop.f32.mrf.mxu0
    %8852 = vmatprep.mubr.bf16.mxu0 0
    %8853 = vmatmul.mubr.bf16.gmra.mxu0 %v8746
    %v8854 = vpop.f32.mrf.mxu0
    %v8855 = vadd.f32 0.0, %v8854
    %v8856 = vpop.f32.mrf.mxu0
    %v8857 = vpop.f32.mrf.mxu0
    %v8858 = vadd.f32 0.0, %v8857
    %v8859 = vpop.f32.mrf.mxu0
    %8860 = vmatprep.mubr.bf16.mxu0 0
    %8861 = vmatmul.mubr.bf16.gmra.mxu0 %v8749
    %v8862 = vpop.f32.mrf.mxu0
    %v8863 = vadd.f32 0.0, %v8862
    %v8864 = vpop.f32.mrf.mxu0
    %v8865 = vpop.f32.mrf.mxu0
    %v8866 = vadd.f32 0.0, %v8865
    %v8867 = vpop.f32.mrf.mxu0
    %8868 = vmatprep.mubr.bf16.mxu0 0
    %8869 = vmatmul.mubr.bf16.gmra.mxu0 %v8752
    %v8870 = vpop.f32.mrf.mxu0
    %v8871 = vadd.f32 0.0, %v8870
    %v8872 = vpop.f32.mrf.mxu0
    %v8873 = vpop.f32.mrf.mxu0
    %v8874 = vadd.f32 0.0, %v8873
    %v8875 = vpop.f32.mrf.mxu0
    %8876 = vmatprep.mubr.bf16.mxu0 0
    %8877 = vmatmul.mubr.bf16.gmra.mxu0 %v8755
    %v8878 = vpop.f32.mrf.mxu0
    %v8879 = vadd.f32 0.0, %v8878
    %v8880 = vpop.f32.mrf.mxu0
    %v8881 = vpop.f32.mrf.mxu0
    %v8882 = vadd.f32 0.0, %v8881
    %v8883 = vpop.f32.mrf.mxu0
    %8884 = vmatprep.mubr.bf16.mxu0 0
    %8885 = vmatmul.mubr.bf16.gmra.mxu0 %v8758
    %v8886 = vpop.f32.mrf.mxu0
    %v8887 = vadd.f32 0.0, %v8886
    %v8888 = vpop.f32.mrf.mxu0
    %v8889 = vpop.f32.mrf.mxu0
    %v8890 = vadd.f32 0.0, %v8889
    %v8891 = vpop.f32.mrf.mxu0
    %8892 = vmatprep.mubr.bf16.mxu0 0
    %8893 = vmatmul.mubr.bf16.gmra.mxu0 %v8761
    %v8894 = vpop.f32.mrf.mxu0
    %v8895 = vadd.f32 0.0, %v8894
    %v8896 = vpop.f32.mrf.mxu0
    %v8897 = vpop.f32.mrf.mxu0
    %v8898 = vadd.f32 0.0, %v8897
    %v8899 = vpop.f32.mrf.mxu0
    %8900 = vmatprep.mubr.bf16.mxu0 0
    %8901 = vmatmul.mubr.bf16.gmra.mxu0 %v8764
    %v8902 = vpop.f32.mrf.mxu0
    %v8903 = vadd.f32 0.0, %v8902
    %v8904 = vpop.f32.mrf.mxu0
    %v8905 = vpop.f32.mrf.mxu0
    %v8906 = vadd.f32 0.0, %v8905
    %v8907 = vpop.f32.mrf.mxu0
    %8908 = vmatprep.mubr.bf16.mxu0 0
    %8909 = vmatmul.mubr.bf16.gmra.mxu0 %v8767
    %v8910 = vpop.f32.mrf.mxu0
    %v8911 = vadd.f32 0.0, %v8910
    %v8912 = vpop.f32.mrf.mxu0
    %v8913 = vpop.f32.mrf.mxu0
    %v8914 = vpop.f32.mrf.mxu0
    %8915 = vdwg.mxu0
    %v8916 = vadd.f32 %v8569, %v8807
    %v8917 = vadd.f32 %v8570, %v8810
    %v8918 = vadd.f32 %v8571, %v8815
    %v8919 = vadd.f32 %v8572, %v8818
    %v8920 = vadd.f32 %v8573, %v8823
    %v8921 = vadd.f32 %v8574, %v8826
    %v8922 = vadd.f32 %v8575, %v8831
    %v8923 = vadd.f32 %v8576, %v8834
    %v8924 = vadd.f32 %v8577, %v8839
    %v8925 = vadd.f32 %v8578, %v8842
    %v8926 = vadd.f32 %v8579, %v8847
    %v8927 = vadd.f32 %v8580, %v8850
    %v8928 = vadd.f32 %v8581, %v8855
    %v8929 = vadd.f32 %v8582, %v8858
    %v8930 = vadd.f32 %v8583, %v8863
    %v8931 = vadd.f32 %v8584, %v8866
    %v8932 = vadd.f32 %v8585, %v8871
    %v8933 = vadd.f32 %v8586, %v8874
    %v8934 = vadd.f32 %v8587, %v8879
    %v8935 = vadd.f32 %v8588, %v8882
    %v8936 = vadd.f32 %v8589, %v8887
    %v8937 = vadd.f32 %v8590, %v8890
    %v8938 = vadd.f32 %v8591, %v8895
    %v8939 = vadd.f32 %v8592, %v8898
    %v8940 = vadd.f32 %v8593, %v8903
    %v8941 = vadd.f32 %v8594, %v8906
    %v8942 = vadd.f32 %v8595, %v8911
    %v8943 = vld [vmem:[#allocation2 + $0x8] sm:$0x8]
    %s8944 = scalar_lea.vmem %s2, 96
    %v8945 = vld [vmem:[%s8944] sm:$0xf]
    %v8947 = vunpack.c.l.b16 %v8943
    %v8948 = vpack.c.b16 %v7621, %v8947
    %vm8949 = vcmask 1044480
    %v8950 = vrot.slane %v8948, 3
    %v8951 = vrot.slane %v7649, 3
    %v8952 = vsel %vm8949, %v8950, %v8951
    %v8953 = vrot.slane %v7650, 3
    %v8954 = vsel %vm8949, %v8951, %v8953
    %v8955 = vrot.slane %v7651, 3
    %v8956 = vsel %vm8949, %v8953, %v8955
    %v8957 = vrot.slane %v7652, 3
    %v8958 = vsel %vm8949, %v8955, %v8957
    %v8959 = vrot.slane %v7653, 3
    %v8960 = vsel %vm8949, %v8957, %v8959
    %v8961 = vrot.slane %v7654, 3
    %v8962 = vsel %vm8949, %v8959, %v8961
    %v8963 = vrot.slane %v7655, 3
    %v8964 = vsel %vm8949, %v8961, %v8963
    %v8965 = vrot.slane %v7656, 3
    %v8966 = vsel %vm8949, %v8963, %v8965
    %v8967 = vrot.slane %v7657, 3
    %v8968 = vsel %vm8949, %v8965, %v8967
    %v8969 = vrot.slane %v7658, 3
    %v8970 = vsel %vm8949, %v8967, %v8969
    %v8971 = vrot.slane %v7659, 3
    %v8972 = vsel %vm8949, %v8969, %v8971
    %v8973 = vrot.slane %v7660, 3
    %v8974 = vsel %vm8949, %v8971, %v8973
    %v8975 = vrot.slane %v8253, 3
    %v8976 = vsel %vm8949, %v8973, %v8975
    %v8978 = vsel %vm934, %v8952, 0
    %v8981 = vsel %vm934, %v8954, 0
    %v8984 = vsel %vm934, %v8956, 0
    %v8987 = vsel %vm934, %v8958, 0
    %v8990 = vsel %vm934, %v8960, 0
    %v8993 = vsel %vm934, %v8962, 0
    %v8996 = vsel %vm934, %v8964, 0
    %v8999 = vsel %vm934, %v8966, 0
    %v9002 = vsel %vm934, %v8968, 0
    %v9005 = vsel %vm934, %v8970, 0
    %v9008 = vsel %vm934, %v8972, 0
    %v9011 = vsel %vm934, %v8974, 0
    %v9014 = vsel %vm934, %v8976, 0
    %v9017 = vsel %vm934, %v8975, 0
    %v9020 = vsel %vm977, %v8945, 0
    %9022 = vmatprep.subr.bf16.mxu0 0
    %9023 = vmatpush1.bf16.msra.mxu0 0
    %9024 = vmatprep.subr.bf16.mxu0 0
    %9025 = vmatpush1.bf16.msra.mxu0 0
    %9026 = vmatprep.subr.bf16.mxu0 0
    %9027 = vmatpush1.bf16.msra.mxu0 0
    %9028 = vmatprep.subr.bf16.mxu0 0
    %9029 = vmatpush1.bf16.msra.mxu0 0
    %9030 = vmatprep.subr.bf16.mxu0 0
    %9031 = vmatpush1.bf16.msra.mxu0 0
    %9032 = vmatprep.subr.bf16.mxu0 0
    %9033 = vmatpush1.bf16.msra.mxu0 0
    %9034 = vmatprep.subr.bf16.mxu0 0
    %9035 = vmatpush1.bf16.msra.mxu0 0
    %9036 = vmatprep.subr.bf16.mxu0 0
    %9037 = vmatpush1.bf16.msra.mxu0 %v9020
    %9038 = vmatprep.subr.bf16.mxu0 0
    %9039 = vmatpush2.bf16.msra.mxu0 0
    %9040 = vmatprep.subr.bf16.mxu0 0
    %9041 = vmatpush2.bf16.msra.mxu0 0
    %9042 = vmatprep.subr.bf16.mxu0 0
    %9043 = vmatpush2.bf16.msra.mxu0 0
    %9044 = vmatprep.subr.bf16.mxu0 0
    %9045 = vmatpush2.bf16.msra.mxu0 0
    %9046 = vmatprep.subr.bf16.mxu0 0
    %9047 = vmatpush2.bf16.msra.mxu0 0
    %9048 = vmatprep.subr.bf16.mxu0 0
    %9049 = vmatpush2.bf16.msra.mxu0 0
    %9050 = vmatprep.subr.bf16.mxu0 0
    %9051 = vmatpush2.bf16.msra.mxu0 0
    %9052 = vmatprep.subr.bf16.mxu0 0
    %9053 = vmatpush2.bf16.msra.mxu0 0
    %9054 = vmatprep.mubr.bf16.mxu0 0
    %9055 = vmatmul.mubr.bf16.gmra.mxu0 %v8978
    %v9056 = vpop.f32.mrf.mxu0
    %v9057 = vadd.f32 0.0, %v9056
    %v9058 = vpop.f32.mrf.mxu0
    %v9059 = vpop.f32.mrf.mxu0
    %v9060 = vadd.f32 0.0, %v9059
    %v9061 = vpop.f32.mrf.mxu0
    %9062 = vmatprep.mubr.bf16.mxu0 0
    %9063 = vmatmul.mubr.bf16.gmra.mxu0 %v8981
    %v9064 = vpop.f32.mrf.mxu0
    %v9065 = vadd.f32 0.0, %v9064
    %v9066 = vpop.f32.mrf.mxu0
    %v9067 = vpop.f32.mrf.mxu0
    %v9068 = vadd.f32 0.0, %v9067
    %v9069 = vpop.f32.mrf.mxu0
    %9070 = vmatprep.mubr.bf16.mxu0 0
    %9071 = vmatmul.mubr.bf16.gmra.mxu0 %v8984
    %v9072 = vpop.f32.mrf.mxu0
    %v9073 = vadd.f32 0.0, %v9072
    %v9074 = vpop.f32.mrf.mxu0
    %v9075 = vpop.f32.mrf.mxu0
    %v9076 = vadd.f32 0.0, %v9075
    %v9077 = vpop.f32.mrf.mxu0
    %9078 = vmatprep.mubr.bf16.mxu0 0
    %9079 = vmatmul.mubr.bf16.gmra.mxu0 %v8987
    %v9080 = vpop.f32.mrf.mxu0
    %v9081 = vadd.f32 0.0, %v9080
    %v9082 = vpop.f32.mrf.mxu0
    %v9083 = vpop.f32.mrf.mxu0
    %v9084 = vadd.f32 0.0, %v9083
    %v9085 = vpop.f32.mrf.mxu0
    %9086 = vmatprep.mubr.bf16.mxu0 0
    %9087 = vmatmul.mubr.bf16.gmra.mxu0 %v8990
    %v9088 = vpop.f32.mrf.mxu0
    %v9089 = vadd.f32 0.0, %v9088
    %v9090 = vpop.f32.mrf.mxu0
    %v9091 = vpop.f32.mrf.mxu0
    %v9092 = vadd.f32 0.0, %v9091
    %v9093 = vpop.f32.mrf.mxu0
    %9094 = vmatprep.mubr.bf16.mxu0 0
    %9095 = vmatmul.mubr.bf16.gmra.mxu0 %v8993
    %v9096 = vpop.f32.mrf.mxu0
    %v9097 = vadd.f32 0.0, %v9096
    %v9098 = vpop.f32.mrf.mxu0
    %v9099 = vpop.f32.mrf.mxu0
    %v9100 = vadd.f32 0.0, %v9099
    %v9101 = vpop.f32.mrf.mxu0
    %9102 = vmatprep.mubr.bf16.mxu0 0
    %9103 = vmatmul.mubr.bf16.gmra.mxu0 %v8996
    %v9104 = vpop.f32.mrf.mxu0
    %v9105 = vadd.f32 0.0, %v9104
    %v9106 = vpop.f32.mrf.mxu0
    %v9107 = vpop.f32.mrf.mxu0
    %v9108 = vadd.f32 0.0, %v9107
    %v9109 = vpop.f32.mrf.mxu0
    %9110 = vmatprep.mubr.bf16.mxu0 0
    %9111 = vmatmul.mubr.bf16.gmra.mxu0 %v8999
    %v9112 = vpop.f32.mrf.mxu0
    %v9113 = vadd.f32 0.0, %v9112
    %v9114 = vpop.f32.mrf.mxu0
    %v9115 = vpop.f32.mrf.mxu0
    %v9116 = vadd.f32 0.0, %v9115
    %v9117 = vpop.f32.mrf.mxu0
    %9118 = vmatprep.mubr.bf16.mxu0 0
    %9119 = vmatmul.mubr.bf16.gmra.mxu0 %v9002
    %v9120 = vpop.f32.mrf.mxu0
    %v9121 = vadd.f32 0.0, %v9120
    %v9122 = vpop.f32.mrf.mxu0
    %v9123 = vpop.f32.mrf.mxu0
    %v9124 = vadd.f32 0.0, %v9123
    %v9125 = vpop.f32.mrf.mxu0
    %9126 = vmatprep.mubr.bf16.mxu0 0
    %9127 = vmatmul.mubr.bf16.gmra.mxu0 %v9005
    %v9128 = vpop.f32.mrf.mxu0
    %v9129 = vadd.f32 0.0, %v9128
    %v9130 = vpop.f32.mrf.mxu0
    %v9131 = vpop.f32.mrf.mxu0
    %v9132 = vadd.f32 0.0, %v9131
    %v9133 = vpop.f32.mrf.mxu0
    %9134 = vmatprep.mubr.bf16.mxu0 0
    %9135 = vmatmul.mubr.bf16.gmra.mxu0 %v9008
    %v9136 = vpop.f32.mrf.mxu0
    %v9137 = vadd.f32 0.0, %v9136
    %v9138 = vpop.f32.mrf.mxu0
    %v9139 = vpop.f32.mrf.mxu0
    %v9140 = vadd.f32 0.0, %v9139
    %v9141 = vpop.f32.mrf.mxu0
    %9142 = vmatprep.mubr.bf16.mxu0 0
    %9143 = vmatmul.mubr.bf16.gmra.mxu0 %v9011
    %v9144 = vpop.f32.mrf.mxu0
    %v9145 = vadd.f32 0.0, %v9144
    %v9146 = vpop.f32.mrf.mxu0
    %v9147 = vpop.f32.mrf.mxu0
    %v9148 = vadd.f32 0.0, %v9147
    %v9149 = vpop.f32.mrf.mxu0
    %9150 = vmatprep.mubr.bf16.mxu0 0
    %9151 = vmatmul.mubr.bf16.gmra.mxu0 %v9014
    %v9152 = vpop.f32.mrf.mxu0
    %v9153 = vadd.f32 0.0, %v9152
    %v9154 = vpop.f32.mrf.mxu0
    %v9155 = vpop.f32.mrf.mxu0
    %v9156 = vadd.f32 0.0, %v9155
    %v9157 = vpop.f32.mrf.mxu0
    %9158 = vmatprep.mubr.bf16.mxu0 0
    %9159 = vmatmul.mubr.bf16.gmra.mxu0 %v9017
    %v9160 = vpop.f32.mrf.mxu0
    %v9161 = vadd.f32 0.0, %v9160
    %v9162 = vpop.f32.mrf.mxu0
    %v9163 = vpop.f32.mrf.mxu0
    %v9164 = vpop.f32.mrf.mxu0
    %9165 = vdwg.mxu0
    %v9166 = vadd.f32 %v8916, %v9057
    %v9167 = vadd.f32 %v8917, %v9060
    %v9168 = vadd.f32 %v8918, %v9065
    %v9169 = vadd.f32 %v8919, %v9068
    %v9170 = vadd.f32 %v8920, %v9073
    %v9171 = vadd.f32 %v8921, %v9076
    %v9172 = vadd.f32 %v8922, %v9081
    %v9173 = vadd.f32 %v8923, %v9084
    %v9174 = vadd.f32 %v8924, %v9089
    %v9175 = vadd.f32 %v8925, %v9092
    %v9176 = vadd.f32 %v8926, %v9097
    %v9177 = vadd.f32 %v8927, %v9100
    %v9178 = vadd.f32 %v8928, %v9105
    %v9179 = vadd.f32 %v8929, %v9108
    %v9180 = vadd.f32 %v8930, %v9113
    %v9181 = vadd.f32 %v8931, %v9116
    %v9182 = vadd.f32 %v8932, %v9121
    %v9183 = vadd.f32 %v8933, %v9124
    %v9184 = vadd.f32 %v8934, %v9129
    %v9185 = vadd.f32 %v8935, %v9132
    %v9186 = vadd.f32 %v8936, %v9137
    %v9187 = vadd.f32 %v8937, %v9140
    %v9188 = vadd.f32 %v8938, %v9145
    %v9189 = vadd.f32 %v8939, %v9148
    %v9190 = vadd.f32 %v8940, %v9153
    %v9191 = vadd.f32 %v8941, %v9156
    %v9192 = vadd.f32 %v8942, %v9161
    %v9193 = vmul.f32 %v9166, %v9166
    %v9194 = vmul.f32 %v9167, %v9167
    %v9195 = vmul.f32 %v9168, %v9168
    %v9196 = vmul.f32 %v9169, %v9169
    %v9197 = vmul.f32 %v9170, %v9170
    %v9198 = vmul.f32 %v9171, %v9171
    %v9199 = vmul.f32 %v9172, %v9172
    %v9200 = vmul.f32 %v9173, %v9173
    %v9201 = vmul.f32 %v9174, %v9174
    %v9202 = vmul.f32 %v9175, %v9175
    %v9203 = vmul.f32 %v9176, %v9176
    %v9204 = vmul.f32 %v9177, %v9177
    %v9205 = vmul.f32 %v9178, %v9178
    %v9206 = vmul.f32 %v9179, %v9179
    %v9207 = vmul.f32 %v9180, %v9180
    %v9208 = vmul.f32 %v9181, %v9181
    %v9209 = vmul.f32 %v9182, %v9182
    %v9210 = vmul.f32 %v9183, %v9183
    %v9211 = vmul.f32 %v9184, %v9184
    %v9212 = vmul.f32 %v9185, %v9185
    %v9213 = vmul.f32 %v9186, %v9186
    %v9214 = vmul.f32 %v9187, %v9187
    %v9215 = vmul.f32 %v9188, %v9188
    %v9216 = vmul.f32 %v9189, %v9189
    %v9217 = vmul.f32 %v9190, %v9190
    %v9218 = vmul.f32 %v9191, %v9191
    %v9219 = vmul.f32 %v9192, %v9192
    %v9220 = vpack.c.bf16 %v9194, %v9193
    %v9221 = vpack.c.bf16 %v9196, %v9195
    %v9222 = vpack.c.bf16 %v9198, %v9197
    %v9223 = vpack.c.bf16 %v9200, %v9199
    %v9224 = vpack.c.bf16 %v9202, %v9201
    %v9225 = vpack.c.bf16 %v9204, %v9203
    %v9226 = vpack.c.bf16 %v9206, %v9205
    %v9227 = vpack.c.bf16 %v9208, %v9207
    %v9228 = vpack.c.bf16 %v9210, %v9209
    %v9229 = vpack.c.bf16 %v9212, %v9211
    %v9230 = vpack.c.bf16 %v9214, %v9213
    %v9231 = vpack.c.bf16 %v9216, %v9215
    %v9232 = vpack.c.bf16 %v9218, %v9217
    %v9233 = vpack.c.bf16 %v9219, %v9219
    %v9234 = vld [vmem:[%s4] sm:$0xf]
    %v9235 = vld [vmem:[%s4 + $0x4] sm:$0xf]
    %v9236 = vld [vmem:[%s5] sm:$0x1]
    %v9238 = vlaneseq
    %v9239 = vshrl.u32 %v9238, 7
    %v9240 = vsub.s32 0, %v9239
    %v9241 = vrot.slane %v9236, %v9240
    %v9245 = vunpack.c.l.b16 %v9234
    %v9246 = vunpack.c.l.b16 %v9235
    %v9247 = vpack.c.b16 %v9246, %v9245
    %vm9249 = vcmask 130048
    %v9251 = vsel %vm9249, %v9220, 0
    %v9254 = vsel %vm9249, %v9221, 0
    %v9257 = vsel %vm9249, %v9222, 0
    %v9260 = vsel %vm9249, %v9223, 0
    %v9263 = vsel %vm9249, %v9224, 0
    %v9266 = vsel %vm9249, %v9225, 0
    %v9269 = vsel %vm9249, %v9226, 0
    %v9272 = vsel %vm9249, %v9227, 0
    %v9275 = vsel %vm9249, %v9228, 0
    %v9278 = vsel %vm9249, %v9229, 0
    %v9281 = vsel %vm9249, %v9230, 0
    %v9284 = vsel %vm9249, %v9231, 0
    %v9287 = vsel %vm9249, %v9232, 0
    %v9290 = vsel %vm9249, %v9233, 0
    %9292 = vmatprep.subr.bf16.mxu0 0
    %9293 = vmatpush1.bf16.msra.mxu0 0
    %9294 = vmatprep.subr.bf16.mxu0 0
    %9295 = vmatpush1.bf16.msra.mxu0 0
    %9296 = vmatprep.subr.bf16.mxu0 0
    %9297 = vmatpush1.bf16.msra.mxu0 0
    %9298 = vmatprep.subr.bf16.mxu0 0
    %9299 = vmatpush1.bf16.msra.mxu0 0
    %9300 = vmatprep.subr.bf16.mxu0 0
    %9301 = vmatpush1.bf16.msra.mxu0 0
    %9302 = vmatprep.subr.bf16.mxu0 0
    %9303 = vmatpush1.bf16.msra.mxu0 0
    %9304 = vmatprep.subr.bf16.mxu0 0
    %9305 = vmatpush1.bf16.msra.mxu0 0
    %9306 = vmatprep.subr.bf16.mxu0 0
    %9307 = vmatpush1.bf16.msra.mxu0 %v9247
    %9308 = vmatprep.subr.bf16.mxu0 0
    %9309 = vmatpush2.bf16.msra.mxu0 0
    %9310 = vmatprep.subr.bf16.mxu0 0
    %9311 = vmatpush2.bf16.msra.mxu0 0
    %9312 = vmatprep.subr.bf16.mxu0 0
    %9313 = vmatpush2.bf16.msra.mxu0 0
    %9314 = vmatprep.subr.bf16.mxu0 0
    %9315 = vmatpush2.bf16.msra.mxu0 0
    %9316 = vmatprep.subr.bf16.mxu0 0
    %9317 = vmatpush2.bf16.msra.mxu0 0
    %9318 = vmatprep.subr.bf16.mxu0 0
    %9319 = vmatpush2.bf16.msra.mxu0 0
    %9320 = vmatprep.subr.bf16.mxu0 0
    %9321 = vmatpush2.bf16.msra.mxu0 0
    %9322 = vmatprep.subr.bf16.mxu0 0
    %9323 = vmatpush2.bf16.msra.mxu0 0
    %9324 = vmatprep.mubr.bf16.mxu0 0
    %9325 = vmatmul.mubr.bf16.gmra.mxu0 %v9251
    %v9326 = vpop.f32.mrf.mxu0
    %v9327 = vadd.f32 %v9241, %v9326
    %v9328 = vpop.f32.mrf.mxu0
    %v9329 = vpop.f32.mrf.mxu0
    %v9330 = vadd.f32 %v9241, %v9329
    %v9331 = vpop.f32.mrf.mxu0
    %9332 = vmatprep.mubr.bf16.mxu0 0
    %9333 = vmatmul.mubr.bf16.gmra.mxu0 %v9254
    %v9334 = vpop.f32.mrf.mxu0
    %v9335 = vadd.f32 %v9241, %v9334
    %v9336 = vpop.f32.mrf.mxu0
    %v9337 = vpop.f32.mrf.mxu0
    %v9338 = vadd.f32 %v9241, %v9337
    %v9339 = vpop.f32.mrf.mxu0
    %9340 = vmatprep.mubr.bf16.mxu0 0
    %9341 = vmatmul.mubr.bf16.gmra.mxu0 %v9257
    %v9342 = vpop.f32.mrf.mxu0
    %v9343 = vadd.f32 %v9241, %v9342
    %v9344 = vpop.f32.mrf.mxu0
    %v9345 = vpop.f32.mrf.mxu0
    %v9346 = vadd.f32 %v9241, %v9345
    %v9347 = vpop.f32.mrf.mxu0
    %9348 = vmatprep.mubr.bf16.mxu0 0
    %9349 = vmatmul.mubr.bf16.gmra.mxu0 %v9260
    %v9350 = vpop.f32.mrf.mxu0
    %v9351 = vadd.f32 %v9241, %v9350
    %v9352 = vpop.f32.mrf.mxu0
    %v9353 = vpop.f32.mrf.mxu0
    %v9354 = vadd.f32 %v9241, %v9353
    %v9355 = vpop.f32.mrf.mxu0
    %9356 = vmatprep.mubr.bf16.mxu0 0
    %9357 = vmatmul.mubr.bf16.gmra.mxu0 %v9263
    %v9358 = vpop.f32.mrf.mxu0
    %v9359 = vadd.f32 %v9241, %v9358
    %v9360 = vpop.f32.mrf.mxu0
    %v9361 = vpop.f32.mrf.mxu0
    %v9362 = vadd.f32 %v9241, %v9361
    %v9363 = vpop.f32.mrf.mxu0
    %9364 = vmatprep.mubr.bf16.mxu0 0
    %9365 = vmatmul.mubr.bf16.gmra.mxu0 %v9266
    %v9366 = vpop.f32.mrf.mxu0
    %v9367 = vadd.f32 %v9241, %v9366
    %v9368 = vpop.f32.mrf.mxu0
    %v9369 = vpop.f32.mrf.mxu0
    %v9370 = vadd.f32 %v9241, %v9369
    %v9371 = vpop.f32.mrf.mxu0
    %9372 = vmatprep.mubr.bf16.mxu0 0
    %9373 = vmatmul.mubr.bf16.gmra.mxu0 %v9269
    %v9374 = vpop.f32.mrf.mxu0
    %v9375 = vadd.f32 %v9241, %v9374
    %v9376 = vpop.f32.mrf.mxu0
    %v9377 = vpop.f32.mrf.mxu0
    %v9378 = vadd.f32 %v9241, %v9377
    %v9379 = vpop.f32.mrf.mxu0
    %9380 = vmatprep.mubr.bf16.mxu0 0
    %9381 = vmatmul.mubr.bf16.gmra.mxu0 %v9272
    %v9382 = vpop.f32.mrf.mxu0
    %v9383 = vadd.f32 %v9241, %v9382
    %v9384 = vpop.f32.mrf.mxu0
    %v9385 = vpop.f32.mrf.mxu0
    %v9386 = vadd.f32 %v9241, %v9385
    %v9387 = vpop.f32.mrf.mxu0
    %9388 = vmatprep.mubr.bf16.mxu0 0
    %9389 = vmatmul.mubr.bf16.gmra.mxu0 %v9275
    %v9390 = vpop.f32.mrf.mxu0
    %v9391 = vadd.f32 %v9241, %v9390
    %v9392 = vpop.f32.mrf.mxu0
    %v9393 = vpop.f32.mrf.mxu0
    %v9394 = vadd.f32 %v9241, %v9393
    %v9395 = vpop.f32.mrf.mxu0
    %9396 = vmatprep.mubr.bf16.mxu0 0
    %9397 = vmatmul.mubr.bf16.gmra.mxu0 %v9278
    %v9398 = vpop.f32.mrf.mxu0
    %v9399 = vadd.f32 %v9241, %v9398
    %v9400 = vpop.f32.mrf.mxu0
    %v9401 = vpop.f32.mrf.mxu0
    %v9402 = vadd.f32 %v9241, %v9401
    %v9403 = vpop.f32.mrf.mxu0
    %9404 = vmatprep.mubr.bf16.mxu0 0
    %9405 = vmatmul.mubr.bf16.gmra.mxu0 %v9281
    %v9406 = vpop.f32.mrf.mxu0
    %v9407 = vadd.f32 %v9241, %v9406
    %v9408 = vpop.f32.mrf.mxu0
    %v9409 = vpop.f32.mrf.mxu0
    %v9410 = vadd.f32 %v9241, %v9409
    %v9411 = vpop.f32.mrf.mxu0
    %9412 = vmatprep.mubr.bf16.mxu0 0
    %9413 = vmatmul.mubr.bf16.gmra.mxu0 %v9284
    %v9414 = vpop.f32.mrf.mxu0
    %v9415 = vadd.f32 %v9241, %v9414
    %v9416 = vpop.f32.mrf.mxu0
    %v9417 = vpop.f32.mrf.mxu0
    %v9418 = vadd.f32 %v9241, %v9417
    %v9419 = vpop.f32.mrf.mxu0
    %9420 = vmatprep.mubr.bf16.mxu0 0
    %9421 = vmatmul.mubr.bf16.gmra.mxu0 %v9287
    %v9422 = vpop.f32.mrf.mxu0
    %v9423 = vadd.f32 %v9241, %v9422
    %v9424 = vpop.f32.mrf.mxu0
    %v9425 = vpop.f32.mrf.mxu0
    %v9426 = vadd.f32 %v9241, %v9425
    %v9427 = vpop.f32.mrf.mxu0
    %9428 = vmatprep.mubr.bf16.mxu0 0
    %9429 = vmatmul.mubr.bf16.gmra.mxu0 %v9290
    %v9430 = vpop.f32.mrf.mxu0
    %v9431 = vadd.f32 %v9241, %v9430
    %v9432 = vpop.f32.mrf.mxu0
    %v9433 = vpop.f32.mrf.mxu0
    %v9434 = vpop.f32.mrf.mxu0
    %9435 = vdwg.mxu0
    %v9436 = vrsqrt.pop %v9327
    %v9437 = vrsqrt.pop %v9330
    %v9438 = vrsqrt.pop %v9335
    %v9439 = vrsqrt.pop %v9338
    %v9440 = vrsqrt.pop %v9343
    %v9441 = vrsqrt.pop %v9346
    %v9442 = vrsqrt.pop %v9351
    %v9443 = vrsqrt.pop %v9354
    %v9444 = vrsqrt.pop %v9359
    %v9445 = vrsqrt.pop %v9362
    %v9446 = vrsqrt.pop %v9367
    %v9447 = vrsqrt.pop %v9370
    %v9448 = vrsqrt.pop %v9375
    %v9449 = vrsqrt.pop %v9378
    %v9450 = vrsqrt.pop %v9383
    %v9451 = vrsqrt.pop %v9386
    %v9452 = vrsqrt.pop %v9391
    %v9453 = vrsqrt.pop %v9394
    %v9454 = vrsqrt.pop %v9399
    %v9455 = vrsqrt.pop %v9402
    %v9456 = vrsqrt.pop %v9407
    %v9457 = vrsqrt.pop %v9410
    %v9458 = vrsqrt.pop %v9415
    %v9459 = vrsqrt.pop %v9418
    %v9460 = vrsqrt.pop %v9423
    %v9461 = vrsqrt.pop %v9426
    %v9462 = vrsqrt.pop %v9431
    %v9463 = vmul.f32 %v9166, %v9436
    %v9464 = vmul.f32 %v9167, %v9437
    %v9465 = vmul.f32 %v9168, %v9438
    %v9466 = vmul.f32 %v9169, %v9439
    %v9467 = vmul.f32 %v9170, %v9440
    %v9468 = vmul.f32 %v9171, %v9441
    %v9469 = vmul.f32 %v9172, %v9442
    %v9470 = vmul.f32 %v9173, %v9443
    %v9471 = vmul.f32 %v9174, %v9444
    %v9472 = vmul.f32 %v9175, %v9445
    %v9473 = vmul.f32 %v9176, %v9446
    %v9474 = vmul.f32 %v9177, %v9447
    %v9475 = vmul.f32 %v9178, %v9448
    %v9476 = vmul.f32 %v9179, %v9449
    %v9477 = vmul.f32 %v9180, %v9450
    %v9478 = vmul.f32 %v9181, %v9451
    %v9479 = vmul.f32 %v9182, %v9452
    %v9480 = vmul.f32 %v9183, %v9453
    %v9481 = vmul.f32 %v9184, %v9454
    %v9482 = vmul.f32 %v9185, %v9455
    %v9483 = vmul.f32 %v9186, %v9456
    %v9484 = vmul.f32 %v9187, %v9457
    %v9485 = vmul.f32 %v9188, %v9458
    %v9486 = vmul.f32 %v9189, %v9459
    %v9487 = vmul.f32 %v9190, %v9460
    %v9488 = vmul.f32 %v9191, %v9461
    %v9489 = vmul.f32 %v9192, %v9462
    %9490 = vst.msk [vmem:[%s6] sm:$0xff] %vm9249, %v9463
    %9491 = vst.msk [vmem:[%s6 + $0x8] sm:$0xff] %vm9249, %v9464
    %9492 = vst.msk [vmem:[%s6 + $0x10] sm:$0xff] %vm9249, %v9465
    %9493 = vst.msk [vmem:[%s6 + $0x18] sm:$0xff] %vm9249, %v9466
    %9494 = vst.msk [vmem:[%s6 + $0x20] sm:$0xff] %vm9249, %v9467
    %9495 = vst.msk [vmem:[%s6 + $0x28] sm:$0xff] %vm9249, %v9468
    %9496 = vst.msk [vmem:[%s6 + $0x30] sm:$0xff] %vm9249, %v9469
    %9497 = vst.msk [vmem:[%s6 + $0x38] sm:$0xff] %vm9249, %v9470
    %9498 = vst.msk [vmem:[%s6 + $0x40] sm:$0xff] %vm9249, %v9471
    %9499 = vst.msk [vmem:[%s6 + $0x48] sm:$0xff] %vm9249, %v9472
    %9500 = vst.msk [vmem:[%s6 + $0x50] sm:$0xff] %vm9249, %v9473
    %9501 = vst.msk [vmem:[%s6 + $0x58] sm:$0xff] %vm9249, %v9474
    %9502 = vst.msk [vmem:[%s6 + $0x60] sm:$0xff] %vm9249, %v9475
    %9503 = vst.msk [vmem:[%s6 + $0x68] sm:$0xff] %vm9249, %v9476
    %9504 = vst.msk [vmem:[%s6 + $0x70] sm:$0xff] %vm9249, %v9477
    %9505 = vst.msk [vmem:[%s6 + $0x78] sm:$0xff] %vm9249, %v9478
    %9506 = vst.msk [vmem:[%s6 + $0x80] sm:$0xff] %vm9249, %v9479
    %9507 = vst.msk [vmem:[%s6 + $0x88] sm:$0xff] %vm9249, %v9480
    %9508 = vst.msk [vmem:[%s6 + $0x90] sm:$0xff] %vm9249, %v9481
    %9509 = vst.msk [vmem:[%s6 + $0x98] sm:$0xff] %vm9249, %v9482
    %9510 = vst.msk [vmem:[%s6 + $0xa0] sm:$0xff] %vm9249, %v9483
    %9511 = vst.msk [vmem:[%s6 + $0xa8] sm:$0xff] %vm9249, %v9484
    %9512 = vst.msk [vmem:[%s6 + $0xb0] sm:$0xff] %vm9249, %v9485
    %9513 = vst.msk [vmem:[%s6 + $0xb8] sm:$0xff] %vm9249, %v9486
    %9514 = vst.msk [vmem:[%s6 + $0xc0] sm:$0xff] %vm9249, %v9487
    %9515 = vst.msk [vmem:[%s6 + $0xc8] sm:$0xff] %vm9249, %v9488
    %9516 = vst.msk [vmem:[%s6 + $0xd0] sm:$0xff] %vm9249, %v9489
    // Predicated region
    $region108: #{tpu_custom_call.1} parent=1 // pred_check
      _
    $region109: #{tpu_custom_call.1} parent=1 // pred_check_branch
      %9518 = sbr.rel (0) target = $region111
    $region110: #{tpu_custom_call.1} parent=1 // pred_region
      _
    $region111: #{tpu_custom_call.1} parent=1 // pred_fallthru
      _
    // Predicated region
    $region112: #{tpu_custom_call.1} parent=1 // pred_check
      _
    $region113: #{tpu_custom_call.1} parent=1 // pred_check_branch
      %9520 = sbr.rel (0) target = $region115
    $region114: #{tpu_custom_call.1} parent=1 // pred_region
      _
    $region115: #{tpu_custom_call.1} parent=1 // pred_fallthru
      _

</llo_original>
